<compile_context>
chip_gen: v7x
topology: tpu7x:2x2x1
jax: 0.10.0
libtpu: 0.0.40
codegen_flags: <defaults>
</compile_context>

<pallas_src>
import functools

import jax
import jax.numpy as jnp
import numpy as np
from jax import lax
from jax.experimental import pallas as pl
from jax.experimental.pallas import tpu as pltpu

EPS = 1e-5
LANE = 128


def _round_up(x, m):
    return (x + m - 1) // m * m


def _pick_tile(m, target, gran):
    """Largest multiple-of-`gran` divisor of m that is <= target (else m itself)."""
    t = min(target, m)
    t -= t % gran
    while t >= gran:
        if m % t == 0:
            return t
        t -= gran
    return m


def _hw_defaults():
    """(vmem_limit_bytes, default row tile) gated on the TPU generation."""
    vmem_budget, rows = 32 * 1024 * 1024, 512
    try:
        info_fn = getattr(pltpu, "get_tpu_info", None)
        if info_fn is not None:
            cap = getattr(info_fn(), "vmem_capacity_bytes", None)
            if cap is not None:
                if cap >= 96 * 1024 * 1024:      # v5e / v6e: 128 MiB physical VMEM
                    vmem_budget, rows = 64 * 1024 * 1024, 1024
                else:                            # v7x: 64 MiB per TensorCore
                    vmem_budget, rows = 40 * 1024 * 1024, 512
    except Exception:
        pass
    return vmem_budget, rows


# ---------------------------- Pallas kernels ----------------------------

def _mm_stats_kernel(x_ref, w_ref, y_ref, sum_ref, sq_ref):
    """y = x @ w (raw, un-normalized); per-tile channel sum / sumsq partials."""
    y = jnp.dot(x_ref[...], w_ref[...], preferred_element_type=jnp.float32)
    y_ref[...] = y.astype(y_ref.dtype)
    c = y.shape[1]
    sum_ref[0] = jnp.broadcast_to(jnp.sum(y, axis=0, keepdims=True), (8, c))
    sq_ref[0] = jnp.broadcast_to(jnp.sum(y * y, axis=0, keepdims=True), (8, c))


def _bn_mm_stats_kernel(x_ref, sc_ref, sh_ref, w_ref, y_ref, sum_ref, sq_ref):
    """y = relu(x*scale+shift) @ w; per-tile channel sum / sumsq partials."""
    a = jnp.maximum(x_ref[...].astype(jnp.float32) * sc_ref[...] + sh_ref[...], 0.0)
    y = jnp.dot(a.astype(w_ref.dtype), w_ref[...],
                preferred_element_type=jnp.float32)
    y_ref[...] = y.astype(y_ref.dtype)
    c = y.shape[1]
    sum_ref[0] = jnp.broadcast_to(jnp.sum(y, axis=0, keepdims=True), (8, c))
    sq_ref[0] = jnp.broadcast_to(jnp.sum(y * y, axis=0, keepdims=True), (8, c))


def _conv3x3_stats_kernel(y1_ref, sc_ref, sh_ref, w2_ref,
                          y2_ref, sum_ref, sq_ref, ap_ref, acc_ref,
                          *, H, W, C, PW):
    """3x3 stride-1 pad-1 conv of relu(bn1(y1)) for one image (grid over N).

    y1_ref : (1, H*W, C) raw conv1 output, row-major (h, w) flattened.
    w2_ref : (9*C, C)    tap (ky, kx) weights at rows [(3*ky+kx)*C : +C].
    ap_ref : (PW + H*W + PW, C) f32 VMEM scratch: zero-halo'd flat activation
             (PW = round_up(W, 8) -> aligned slices).
    acc_ref: (H*W, C) f32 VMEM accumulator (ref accumulation, no vreg spill).
    """
    HW = H * W

    # Zero the vertical halo every grid step (grid is "parallel": no cross-step state).
    zeros_pad = jnp.zeros((PW, C), ap_ref.dtype)
    ap_ref[0:PW, :] = zeros_pad
    ap_ref[PW + HW:PW + HW + PW, :] = zeros_pad

    # BN1 + ReLU fused into the load of y1 (saves an HBM round trip of y1).
    a = jnp.maximum(y1_ref[0].astype(jnp.float32) * sc_ref[...] + sh_ref[...], 0.0)
    ap_ref[PW:PW + HW, :] = a.astype(ap_ref.dtype)

    # Masks killing the horizontal wrap-around of the flattened row layout.
    col = lax.broadcasted_iota(jnp.int32, (HW, 1), 0) % W
    m_left = col != 0          # dx = -1 invalid where output col == 0
    m_right = col != (W - 1)   # dx = +1 invalid where output col == W-1

    # TODO(synk): fold the 3 dx taps of each dy into one K=3C matmul to raise
    #             MXU K-occupancy on v6e/v7x when C < 256.
    for t in range(9):                               # unrolled 9-tap accumulation
        dy, dx = t // 3 - 1, t % 3 - 1
        base = PW + dy * W                           # multiple of 8 when W % 8 == 0
        lhs = ap_ref[base:base + HW, :]              # aligned sublane slice
        if dx != 0:
            # want lhs[i] = a_dy[i + dx]  =>  roll shift = -dx (mod HW); wrap rows
            # are killed by the column masks below.
            lhs = pltpu.roll(lhs, shift=(-dx) % HW, axis=0)
        lhs = lhs.astype(w2_ref.dtype)
        if dx == -1:
            lhs = jnp.where(m_left, lhs, jnp.zeros_like(lhs))
        elif dx == 1:
            lhs = jnp.where(m_right, lhs, jnp.zeros_like(lhs))
        contrib = jnp.dot(lhs, w2_ref[t * C:(t + 1) * C, :],
                          preferred_element_type=jnp.float32)
        if t == 0:
            acc_ref[...] = contrib
        else:
            acc_ref[...] += contrib

    acc = acc_ref[...]
    y2_ref[0] = acc.astype(y2_ref.dtype)
    sum_ref[0] = jnp.broadcast_to(jnp.sum(acc, axis=0, keepdims=True), (8, C))
    sq_ref[0] = jnp.broadcast_to(jnp.sum(acc * acc, axis=0, keepdims=True), (8, C))


def _bn_add_relu_kernel(y_ref, sc_ref, sh_ref, res_ref, o_ref):
    y = y_ref[...].astype(jnp.float32) * sc_ref[...] + sh_ref[...]
    o_ref[...] = jnp.maximum(y + res_ref[...].astype(jnp.float32),
                             0.0).astype(o_ref.dtype)


# ---------------------------- pallas_call wrappers ----------------------------

def _matmul_stats(x2d, wmat, tm, vmem_limit):
    M, K = x2d.shape
    C = wmat.shape[1]
    g = M // tm
    itm = x2d.dtype.itemsize
    return pl.pallas_call(
        _mm_stats_kernel,
        out_shape=(jax.ShapeDtypeStruct((M, C), x2d.dtype),
                   jax.ShapeDtypeStruct((g, 8, C), jnp.float32),
                   jax.ShapeDtypeStruct((g, 8, C), jnp.float32)),
        grid=(g,),
        in_specs=[pl.BlockSpec((tm, K), lambda i: (i, 0)),
                  pl.BlockSpec((K, C), lambda i: (0, 0))],
        out_specs=(pl.BlockSpec((tm, C), lambda i: (i, 0)),
                   pl.BlockSpec((1, 8, C), lambda i: (i, 0, 0)),
                   pl.BlockSpec((1, 8, C), lambda i: (i, 0, 0))),
        compiler_params=pltpu.CompilerParams(
            dimension_semantics=("parallel",),       # per-tile stats -> megacore OK
            vmem_limit_bytes=vmem_limit),
        cost_estimate=pl.CostEstimate(
            flops=2 * M * K * C, transcendentals=0,
            bytes_accessed=(M * K + K * C + M * C) * itm + 2 * g * 8 * C * 4),
    )(x2d, wmat)


def _bn_matmul_stats(x2d, scale, shift, wmat, tm, vmem_limit):
    M, K = x2d.shape
    C = wmat.shape[1]
    g = M // tm
    itm = x2d.dtype.itemsize
    return pl.pallas_call(
        _bn_mm_stats_kernel,
        out_shape=(jax.ShapeDtypeStruct((M, C), x2d.dtype),
                   jax.ShapeDtypeStruct((g, 8, C), jnp.float32),
                   jax.ShapeDtypeStruct((g, 8, C), jnp.float32)),
        grid=(g,),
        in_specs=[pl.BlockSpec((tm, K), lambda i: (i, 0)),
                  pl.BlockSpec((1, K), lambda i: (0, 0)),
                  pl.BlockSpec((1, K), lambda i: (0, 0)),
                  pl.BlockSpec((K, C), lambda i: (0, 0))],
        out_specs=(pl.BlockSpec((tm, C), lambda i: (i, 0)),
                   pl.BlockSpec((1, 8, C), lambda i: (i, 0, 0)),
                   pl.BlockSpec((1, 8, C), lambda i: (i, 0, 0))),
        compiler_params=pltpu.CompilerParams(
            dimension_semantics=("parallel",),
            vmem_limit_bytes=vmem_limit),
        cost_estimate=pl.CostEstimate(
            flops=2 * M * K * C + 3 * M * K, transcendentals=0,
            bytes_accessed=(M * K + K * C + M * C) * itm
            + 4 * K * 4 + 2 * g * 8 * C * 4),
    )(x2d, scale, shift, wmat)


def _conv3x3_stats(y1_sp, scale1, shift1, w2mat, H, W, vmem_limit):
    N, HW, C = y1_sp.shape
    PW = _round_up(W, 8)
    itm = y1_sp.dtype.itemsize
    kern = functools.partial(_conv3x3_stats_kernel, H=H, W=W, C=C, PW=PW)
    return pl.pallas_call(
        kern,
        out_shape=(jax.ShapeDtypeStruct((N, HW, C), y1_sp.dtype),
                   jax.ShapeDtypeStruct((N, 8, C), jnp.float32),
                   jax.ShapeDtypeStruct((N, 8, C), jnp.float32)),
        grid=(N,),
        in_specs=[pl.BlockSpec((1, HW, C), lambda i: (i, 0, 0)),
                  pl.BlockSpec((1, C), lambda i: (0, 0)),
                  pl.BlockSpec((1, C), lambda i: (0, 0)),
                  pl.BlockSpec((9 * C, C), lambda i: (0, 0))],
        out_specs=(pl.BlockSpec((1, HW, C), lambda i: (i, 0, 0)),
                   pl.BlockSpec((1, 8, C), lambda i: (i, 0, 0)),
                   pl.BlockSpec((1, 8, C), lambda i: (i, 0, 0))),
        scratch_shapes=[pltpu.VMEM((HW + 2 * PW, C), jnp.float32),
                        pltpu.VMEM((HW, C), jnp.float32)],
        compiler_params=pltpu.CompilerParams(
            dimension_semantics=("parallel",),       # per-image stats -> megacore OK
            vmem_limit_bytes=vmem_limit),
        cost_estimate=pl.CostEstimate(
            flops=2 * N * HW * 9 * C * C, transcendentals=0,
            bytes_accessed=2 * N * HW * C * itm + 9 * C * C * itm
            + 2 * N * 8 * C * 4),
    )(y1_sp, scale1, shift1, w2mat)


def _bn_add_relu(y2d, scale, shift, res2d, tm, vmem_limit):
    # TODO(synk): emit bf16 here when chaining blocks; f32 kept for the module boundary.
    M, C = y2d.shape
    return pl.pallas_call(
        _bn_add_relu_kernel,
        out_shape=jax.ShapeDtypeStruct((M, C), jnp.float32),
        grid=(M // tm,),
        in_specs=[pl.BlockSpec((tm, C), lambda i: (i, 0)),
                  pl.BlockSpec((1, C), lambda i: (0, 0)),
                  pl.BlockSpec((1, C), lambda i: (0, 0)),
                  pl.BlockSpec((tm, C), lambda i: (i, 0))],
        out_specs=pl.BlockSpec((tm, C), lambda i: (i, 0)),
        compiler_params=pltpu.CompilerParams(
            dimension_semantics=("parallel",),
            vmem_limit_bytes=vmem_limit),
    )(y2d, scale, shift, res2d)


# ---------------------------- BN finalize (tiny XLA glue) ----------------------------

def _bn_scale_shift(s_part, q_part, count, gamma, beta):
    """Reduce per-tile partials (rows of each 8-row block are identical copies)."""
    s = s_part[:, 0, :].sum(axis=0, keepdims=True)
    q = q_part[:, 0, :].sum(axis=0, keepdims=True)
    mean = s / count
    var = jnp.maximum(q / count - mean * mean, 0.0)   # clamp: two-pass var can go < 0
    inv = lax.rsqrt(var + EPS)
    scale = gamma * inv
    shift = beta - mean * scale
    return scale, shift


# ---------------------------- Bottleneck forward ----------------------------

def bottleneck_forward(x_nchw, params, *, compute_dtype=jnp.bfloat16,
                       block_rows=None):
    """x_nchw: (N, Cin, H, W) f32, Cin == planes*4, stride=1, no downsample."""
    (w1, g1, b1, w2, g2, b2, w3, g3, b3) = params
    n, cin, h, w = x_nchw.shape
    planes = w1.shape[1]
    assert cin == planes * 4, "stride=1 / identity-skip configuration only"

    vmem_limit, default_rows = _hw_defaults()
    if block_rows is None:
        block_rows = default_rows
    M = n * h * w
    gran = 16 if compute_dtype == jnp.bfloat16 else 8
    tm = _pick_tile(M, block_rows, gran)

    # Lane-dense channel padding (multiple of 128): unmasked stores, full MXU columns.
    Pp = _round_up(planes, LANE)
    Cp = _round_up(cin, LANE)

    # NCHW -> NHWC once at the module boundary.
    # TODO(synk): keep NHWC as the inter-block contract when chaining blocks to avoid
    #             the full-HBM relayout per block.
    x_nhwc = jnp.transpose(x_nchw, (0, 2, 3, 1))
    x2d = x_nhwc.reshape(M, cin)
    x2d_p = jnp.pad(x2d, ((0, 0), (0, Cp - cin))).astype(compute_dtype)

    w1p = jnp.pad(w1, ((0, Cp - cin), (0, Pp - planes))).astype(compute_dtype)
    w2p = jnp.pad(w2.reshape(9, planes, planes),
                  ((0, 0), (0, Pp - planes), (0, Pp - planes))
                  ).reshape(9 * Pp, Pp).astype(compute_dtype)
    w3p = jnp.pad(w3, ((0, Pp - planes), (0, Cp - cin))).astype(compute_dtype)
    g1p = jnp.pad(g1, ((0, 0), (0, Pp - planes)))
    b1p = jnp.pad(b1, ((0, 0), (0, Pp - planes)))
    g2p = jnp.pad(g2, ((0, 0), (0, Pp - planes)))
    b2p = jnp.pad(b2, ((0, 0), (0, Pp - planes)))
    g3p = jnp.pad(g3, ((0, 0), (0, Cp - cin)))
    b3p = jnp.pad(b3, ((0, 0), (0, Cp - cin)))

    # --- stage A: conv1 (1x1) + BN1 statistics (per-tile partials, parallel grid) ---
    y1_raw, s1, q1 = _matmul_stats(x2d_p, w1p, tm, vmem_limit)
    scale1, shift1 = _bn_scale_shift(s1, q1, float(M), g1p, b1p)

    # --- stage B: conv2 (3x3) with BN1+ReLU fused on load + BN2 statistics ---
    y1_sp = y1_raw.reshape(n, h * w, Pp)
    y2_raw, s2, q2 = _conv3x3_stats(y1_sp, scale1, shift1, w2p, h, w, vmem_limit)
    scale2, shift2 = _bn_scale_shift(s2, q2, float(M), g2p, b2p)

    # --- stage C: conv3 (1x1) with BN2+ReLU fused on load + BN3 statistics ---
    y3_raw, s3, q3 = _bn_matmul_stats(y2_raw.reshape(M, Pp), scale2, shift2, w3p,
                                      tm, vmem_limit)
    scale3, shift3 = _bn_scale_shift(s3, q3, float(M), g3p, b3p)

    # --- stage D: BN3 apply + residual add (compute-dtype residual) + ReLU ---
    out2d = _bn_add_relu(y3_raw, scale3, shift3, x2d_p, tm, vmem_limit)
    out = out2d[:, :cin].reshape(n, h, w, cin)
    return jnp.transpose(out, (0, 3, 1, 2))            # back to NCHW


# ---------------------------- pure-JAX reference ----------------------------

def _bn_ref(y_nhwc, gamma, beta):
    mean = jnp.mean(y_nhwc, axis=(0, 1, 2), keepdims=True)
    var = jnp.mean(jnp.square(y_nhwc - mean), axis=(0, 1, 2), keepdims=True)
    return (y_nhwc - mean) * lax.rsqrt(var + EPS) * gamma.reshape(1, 1, 1, -1) \
        + beta.reshape(1, 1, 1, -1)


def bottleneck_ref(x_nchw, params):
    (w1, g1, b1, w2, g2, b2, w3, g3, b3) = params
    planes = w1.shape[1]
    x = jnp.transpose(x_nchw, (0, 2, 3, 1))
    dn = ("NHWC", "HWIO", "NHWC")
    y = lax.conv_general_dilated(x, w1[None, None], (1, 1), "VALID",
                                 dimension_numbers=dn)
    y = jnp.maximum(_bn_ref(y, g1[0], b1[0]), 0.0)
    w2_hwio = w2.reshape(3, 3, planes, planes)
    y = lax.conv_general_dilated(y, w2_hwio, (1, 1), ((1, 1), (1, 1)),
                                 dimension_numbers=dn)
    y = jnp.maximum(_bn_ref(y, g2[0], b2[0]), 0.0)
    y = lax.conv_general_dilated(y, w3[None, None], (1, 1), "VALID",
                                 dimension_numbers=dn)
    y = _bn_ref(y, g3[0], b3[0])
    y = jnp.maximum(y + x, 0.0)
    return jnp.transpose(y, (0, 3, 1, 2))


# ---------------------------- main ----------------------------

if __name__ == "__main__":
    key = jax.random.PRNGKey(0)
    N, H, W = 2, 16, 16
    planes = 8
    inplanes = planes * 4     # 32; identity skip requires inplanes == 4*planes

    ks = jax.random.split(key, 10)
    # weights in matmul layout: (Cin, Cout) / (9*Cin, Cout) with row order (ky, kx, ci)
    w1 = jax.random.normal(ks[0], (inplanes, planes), jnp.float32) * 0.1
    w2 = jax.random.normal(ks[1], (3 * 3 * planes, planes), jnp.float32) * 0.1
    w3 = jax.random.normal(ks[2], (planes, planes * 4), jnp.float32) * 0.1
    g1 = 1.0 + 0.1 * jax.random.normal(ks[3], (1, planes), jnp.float32)
    b1 = 0.1 * jax.random.normal(ks[4], (1, planes), jnp.float32)
    g2 = 1.0 + 0.1 * jax.random.normal(ks[5], (1, planes), jnp.float32)
    b2 = 0.1 * jax.random.normal(ks[6], (1, planes), jnp.float32)
    g3 = 1.0 + 0.1 * jax.random.normal(ks[7], (1, planes * 4), jnp.float32)
    b3 = 0.1 * jax.random.normal(ks[8], (1, planes * 4), jnp.float32)
    params = (w1, g1, b1, w2, g2, b2, w3, g3, b3)

    x = jax.random.normal(ks[9], (N, inplanes, H, W), jnp.float32)   # NCHW, like PyTorch

    ref = bottleneck_ref(x, params)

    # f32 compute path: tight check of tiling / two-pass BN / rolled 3x3 conv math.
    fwd_f32 = jax.jit(functools.partial(bottleneck_forward, params=params,
                                        compute_dtype=jnp.float32))
    out_f32 = fwd_f32(x)
    jax.block_until_ready(out_f32)
    np.testing.assert_allclose(np.asarray(out_f32), np.asarray(ref),
                               atol=1e-3, rtol=1e-3)

    # bf16 compute path (production MXU setting): looser tolerance.
    fwd_bf16 = jax.jit(functools.partial(bottleneck_forward, params=params,
                                         compute_dtype=jnp.bfloat16))
    out_bf16 = fwd_bf16(x)
    jax.block_until_ready(out_bf16)
    np.testing.assert_allclose(np.asarray(out_bf16), np.asarray(ref),
                               atol=1e-1, rtol=1e-1)

    print("KERNEL_OK")
</pallas_src>

<mosaic_0001>
module attributes {stable_mosaic.version = 11 : i64} {
  func.func @_mm_stats_kernel(%arg0: i32, %arg1: memref<512x128xf32, #tpu.memory_space<vmem>>, %arg2: memref<128x128xf32, #tpu.memory_space<vmem>>, %arg3: memref<512x128xf32, #tpu.memory_space<vmem>>, %arg4: memref<1x8x128xf32, #tpu.memory_space<vmem>>, %arg5: memref<1x8x128xf32, #tpu.memory_space<vmem>>) attributes {dimension_semantics = [#tpu.dimension_semantics<parallel>], iteration_bounds = array<i64: 1>, scalar_prefetch = 0 : i64, scratch_operands = 0 : i64, tpu.core_type = #tpu.core_type<tc>, window_params = [{transform_indices = @transform_0, window_bounds = array<i64: 512, 128>}, {pipeline_mode = #tpu.pipeline_mode<synchronous>, transform_indices = @transform_1, window_bounds = array<i64: 128, 128>}, {transform_indices = @transform_2, window_bounds = array<i64: 512, 128>}, {transform_indices = @transform_3, window_bounds = array<i64: 1, 8, 128>}, {transform_indices = @transform_4, window_bounds = array<i64: 1, 8, 128>}]} {
    %c0 = arith.constant 0 : index
    %c0_0 = arith.constant 0 : index
    %0 = vector.load %arg1[%c0, %c0_0] : memref<512x128xf32, #tpu.memory_space<vmem>>, vector<512x128xf32>
    %c0_1 = arith.constant 0 : index
    %c0_2 = arith.constant 0 : index
    %1 = vector.load %arg2[%c0_1, %c0_2] : memref<128x128xf32, #tpu.memory_space<vmem>>, vector<128x128xf32>
    %cst = arith.constant dense<0.000000e+00> : vector<512x128xf32>
    %2 = tpu.matmul %0, %1, %cst {dimension_numbers = #tpu.dot_dimension_numbers<[1], [0], [0], [1], [0, 0, 1, 1], [], []>} : vector<512x128xf32>, vector<128x128xf32>, vector<512x128xf32> -> vector<512x128xf32>
    %c0_3 = arith.constant 0 : index
    %c0_4 = arith.constant 0 : index
    %3 = vector.load %arg3[%c0_3, %c0_4] : memref<512x128xf32, #tpu.memory_space<vmem>>, vector<512x128xf32>
    tpu.vector_store %arg3[%c0_3, %c0_4], %2 {strides = array<i32>} : memref<512x128xf32, #tpu.memory_space<vmem>>, vector<512x128xf32>,
    %cst_5 = arith.constant dense<0.000000e+00> : vector<128xf32>
    %4 = vector.multi_reduction <add>, %2, %cst_5 [0] : vector<512x128xf32> to vector<128xf32>
    %5 = vector.shape_cast %4 : vector<128xf32> to vector<1x128xf32>
    %6 = vector.shape_cast %5 : vector<1x128xf32> to vector<1x128xf32>
    %7 = vector.broadcast %6 : vector<1x128xf32> to vector<8x128xf32>
    %c0_6 = arith.constant 0 : index
    %c0_7 = arith.constant 0 : index
    %c0_8 = arith.constant 0 : index
    %8 = vector.load %arg4[%c0_6, %c0_7, %c0_8] : memref<1x8x128xf32, #tpu.memory_space<vmem>>, vector<1x8x128xf32>
    %9 = vector.shape_cast %8 : vector<1x8x128xf32> to vector<8x128xf32>
    %10 = vector.shape_cast %7 : vector<8x128xf32> to vector<1x8x128xf32>
    tpu.vector_store %arg4[%c0_6, %c0_7, %c0_8], %10 {strides = array<i32>} : memref<1x8x128xf32, #tpu.memory_space<vmem>>, vector<1x8x128xf32>,
    %11 = arith.mulf %2, %2 : vector<512x128xf32>
    %cst_9 = arith.constant dense<0.000000e+00> : vector<128xf32>
    %12 = vector.multi_reduction <add>, %11, %cst_9 [0] : vector<512x128xf32> to vector<128xf32>
    %13 = vector.shape_cast %12 : vector<128xf32> to vector<1x128xf32>
    %14 = vector.shape_cast %13 : vector<1x128xf32> to vector<1x128xf32>
    %15 = vector.broadcast %14 : vector<1x128xf32> to vector<8x128xf32>
    %c0_10 = arith.constant 0 : index
    %c0_11 = arith.constant 0 : index
    %c0_12 = arith.constant 0 : index
    %16 = vector.load %arg5[%c0_10, %c0_11, %c0_12] : memref<1x8x128xf32, #tpu.memory_space<vmem>>, vector<1x8x128xf32>
    %17 = vector.shape_cast %16 : vector<1x8x128xf32> to vector<8x128xf32>
    %18 = vector.shape_cast %15 : vector<8x128xf32> to vector<1x8x128xf32>
    tpu.vector_store %arg5[%c0_10, %c0_11, %c0_12], %18 {strides = array<i32>} : memref<1x8x128xf32, #tpu.memory_space<vmem>>, vector<1x8x128xf32>,
    return
  }
  func.func @transform_0(%arg0: i32) -> (i32, i32) {
    %c0_i32 = arith.constant 0 : i32
    %c0_i32_0 = arith.constant 0 : i32
    return %arg0, %c0_i32 : i32, i32
  }
  func.func @transform_1(%arg0: i32) -> (i32, i32) {
    %c0_i32 = arith.constant 0 : i32
    %c0_i32_0 = arith.constant 0 : i32
    %c0_i32_1 = arith.constant 0 : i32
    return %c0_i32, %c0_i32_0 : i32, i32
  }
  func.func @transform_2(%arg0: i32) -> (i32, i32) {
    %c0_i32 = arith.constant 0 : i32
    %c0_i32_0 = arith.constant 0 : i32
    return %arg0, %c0_i32 : i32, i32
  }
  func.func @transform_3(%arg0: i32) -> (i32, i32, i32) {
    %c0_i32 = arith.constant 0 : i32
    %c0_i32_0 = arith.constant 0 : i32
    %c0_i32_1 = arith.constant 0 : i32
    return %arg0, %c0_i32, %c0_i32_0 : i32, i32, i32
  }
  func.func @transform_4(%arg0: i32) -> (i32, i32, i32) {
    %c0_i32 = arith.constant 0 : i32
    %c0_i32_0 = arith.constant 0 : i32
    %c0_i32_1 = arith.constant 0 : i32
    return %arg0, %c0_i32, %c0_i32_0 : i32, i32, i32
  }
}

module attributes {stable_mosaic.version = 11 : i64} {
  func.func @_bn_mm_stats_kernel(%arg0: i32, %arg1: memref<512x128xf32, #tpu.memory_space<vmem>>, %arg2: memref<1x128xf32, #tpu.memory_space<vmem>>, %arg3: memref<1x128xf32, #tpu.memory_space<vmem>>, %arg4: memref<128x128xf32, #tpu.memory_space<vmem>>, %arg5: memref<512x128xf32, #tpu.memory_space<vmem>>, %arg6: memref<1x8x128xf32, #tpu.memory_space<vmem>>, %arg7: memref<1x8x128xf32, #tpu.memory_space<vmem>>) attributes {dimension_semantics = [#tpu.dimension_semantics<parallel>], iteration_bounds = array<i64: 1>, scalar_prefetch = 0 : i64, scratch_operands = 0 : i64, tpu.core_type = #tpu.core_type<tc>, window_params = [{transform_indices = @transform_0, window_bounds = array<i64: 512, 128>}, {pipeline_mode = #tpu.pipeline_mode<synchronous>, transform_indices = @transform_1, window_bounds = array<i64: 1, 128>}, {pipeline_mode = #tpu.pipeline_mode<synchronous>, transform_indices = @transform_2, window_bounds = array<i64: 1, 128>}, {pipeline_mode = #tpu.pipeline_mode<synchronous>, transform_indices = @transform_3, window_bounds = array<i64: 128, 128>}, {transform_indices = @transform_4, window_bounds = array<i64: 512, 128>}, {transform_indices = @transform_5, window_bounds = array<i64: 1, 8, 128>}, {transform_indices = @transform_6, window_bounds = array<i64: 1, 8, 128>}]} {
    %c0 = arith.constant 0 : index
    %c0_0 = arith.constant 0 : index
    %0 = vector.load %arg1[%c0, %c0_0] : memref<512x128xf32, #tpu.memory_space<vmem>>, vector<512x128xf32>
    %c0_1 = arith.constant 0 : index
    %c0_2 = arith.constant 0 : index
    %1 = vector.load %arg2[%c0_1, %c0_2] : memref<1x128xf32, #tpu.memory_space<vmem>>, vector<1x128xf32>
    %2 = vector.broadcast %1 : vector<1x128xf32> to vector<512x128xf32>
    %3 = arith.mulf %0, %2 : vector<512x128xf32>
    %c0_3 = arith.constant 0 : index
    %c0_4 = arith.constant 0 : index
    %4 = vector.load %arg3[%c0_3, %c0_4] : memref<1x128xf32, #tpu.memory_space<vmem>>, vector<1x128xf32>
    %5 = vector.broadcast %4 : vector<1x128xf32> to vector<512x128xf32>
    %6 = arith.addf %3, %5 : vector<512x128xf32>
    %cst = arith.constant 0.000000e+00 : f32
    %7 = vector.broadcast %cst : f32 to vector<512x128xf32>
    %8 = arith.maximumf %6, %7 : vector<512x128xf32>
    %c0_5 = arith.constant 0 : index
    %c0_6 = arith.constant 0 : index
    %9 = vector.load %arg4[%c0_5, %c0_6] : memref<128x128xf32, #tpu.memory_space<vmem>>, vector<128x128xf32>
    %cst_7 = arith.constant dense<0.000000e+00> : vector<512x128xf32>
    %10 = tpu.matmul %8, %9, %cst_7 {dimension_numbers = #tpu.dot_dimension_numbers<[1], [0], [0], [1], [0, 0, 1, 1], [], []>} : vector<512x128xf32>, vector<128x128xf32>, vector<512x128xf32> -> vector<512x128xf32>
    %c0_8 = arith.constant 0 : index
    %c0_9 = arith.constant 0 : index
    %11 = vector.load %arg5[%c0_8, %c0_9] : memref<512x128xf32, #tpu.memory_space<vmem>>, vector<512x128xf32>
    tpu.vector_store %arg5[%c0_8, %c0_9], %10 {strides = array<i32>} : memref<512x128xf32, #tpu.memory_space<vmem>>, vector<512x128xf32>,
    %cst_10 = arith.constant dense<0.000000e+00> : vector<128xf32>
    %12 = vector.multi_reduction <add>, %10, %cst_10 [0] : vector<512x128xf32> to vector<128xf32>
    %13 = vector.shape_cast %12 : vector<128xf32> to vector<1x128xf32>
    %14 = vector.shape_cast %13 : vector<1x128xf32> to vector<1x128xf32>
    %15 = vector.broadcast %14 : vector<1x128xf32> to vector<8x128xf32>
    %c0_11 = arith.constant 0 : index
    %c0_12 = arith.constant 0 : index
    %c0_13 = arith.constant 0 : index
    %16 = vector.load %arg6[%c0_11, %c0_12, %c0_13] : memref<1x8x128xf32, #tpu.memory_space<vmem>>, vector<1x8x128xf32>
    %17 = vector.shape_cast %16 : vector<1x8x128xf32> to vector<8x128xf32>
    %18 = vector.shape_cast %15 : vector<8x128xf32> to vector<1x8x128xf32>
    tpu.vector_store %arg6[%c0_11, %c0_12, %c0_13], %18 {strides = array<i32>} : memref<1x8x128xf32, #tpu.memory_space<vmem>>, vector<1x8x128xf32>,
    %19 = arith.mulf %10, %10 : vector<512x128xf32>
    %cst_14 = arith.constant dense<0.000000e+00> : vector<128xf32>
    %20 = vector.multi_reduction <add>, %19, %cst_14 [0] : vector<512x128xf32> to vector<128xf32>
    %21 = vector.shape_cast %20 : vector<128xf32> to vector<1x128xf32>
    %22 = vector.shape_cast %21 : vector<1x128xf32> to vector<1x128xf32>
    %23 = vector.broadcast %22 : vector<1x128xf32> to vector<8x128xf32>
    %c0_15 = arith.constant 0 : index
    %c0_16 = arith.constant 0 : index
    %c0_17 = arith.constant 0 : index
    %24 = vector.load %arg7[%c0_15, %c0_16, %c0_17] : memref<1x8x128xf32, #tpu.memory_space<vmem>>, vector<1x8x128xf32>
    %25 = vector.shape_cast %24 : vector<1x8x128xf32> to vector<8x128xf32>
    %26 = vector.shape_cast %23 : vector<8x128xf32> to vector<1x8x128xf32>
    tpu.vector_store %arg7[%c0_15, %c0_16, %c0_17], %26 {strides = array<i32>} : memref<1x8x128xf32, #tpu.memory_space<vmem>>, vector<1x8x128xf32>,
    return
  }
  func.func @transform_0(%arg0: i32) -> (i32, i32) {
    %c0_i32 = arith.constant 0 : i32
    %c0_i32_0 = arith.constant 0 : i32
    return %arg0, %c0_i32 : i32, i32
  }
  func.func @transform_1(%arg0: i32) -> (i32, i32) {
    %c0_i32 = arith.constant 0 : i32
    %c0_i32_0 = arith.constant 0 : i32
    %c0_i32_1 = arith.constant 0 : i32
    return %c0_i32, %c0_i32_0 : i32, i32
  }
  func.func @transform_2(%arg0: i32) -> (i32, i32) {
    %c0_i32 = arith.constant 0 : i32
    %c0_i32_0 = arith.constant 0 : i32
    %c0_i32_1 = arith.constant 0 : i32
    return %c0_i32, %c0_i32_0 : i32, i32
  }
  func.func @transform_3(%arg0: i32) -> (i32, i32) {
    %c0_i32 = arith.constant 0 : i32
    %c0_i32_0 = arith.constant 0 : i32
    %c0_i32_1 = arith.constant 0 : i32
    return %c0_i32, %c0_i32_0 : i32, i32
  }
  func.func @transform_4(%arg0: i32) -> (i32, i32) {
    %c0_i32 = arith.constant 0 : i32
    %c0_i32_0 = arith.constant 0 : i32
    return %arg0, %c0_i32 : i32, i32
  }
  func.func @transform_5(%arg0: i32) -> (i32, i32, i32) {
    %c0_i32 = arith.constant 0 : i32
    %c0_i32_0 = arith.constant 0 : i32
    %c0_i32_1 = arith.constant 0 : i32
    return %arg0, %c0_i32, %c0_i32_0 : i32, i32, i32
  }
  func.func @transform_6(%arg0: i32) -> (i32, i32, i32) {
    %c0_i32 = arith.constant 0 : i32
    %c0_i32_0 = arith.constant 0 : i32
    %c0_i32_1 = arith.constant 0 : i32
    return %arg0, %c0_i32, %c0_i32_0 : i32, i32, i32
  }
}

module attributes {stable_mosaic.version = 11 : i64} {
  func.func @_conv3x3_stats_kernel(%arg0: i32, %arg1: memref<1x256x128xf32, #tpu.memory_space<vmem>>, %arg2: memref<1x128xf32, #tpu.memory_space<vmem>>, %arg3: memref<1x128xf32, #tpu.memory_space<vmem>>, %arg4: memref<1152x128xf32, #tpu.memory_space<vmem>>, %arg5: memref<1x256x128xf32, #tpu.memory_space<vmem>>, %arg6: memref<1x8x128xf32, #tpu.memory_space<vmem>>, %arg7: memref<1x8x128xf32, #tpu.memory_space<vmem>>, %arg8: memref<288x128xf32, #tpu.memory_space<vmem>>, %arg9: memref<256x128xf32, #tpu.memory_space<vmem>>) attributes {dimension_semantics = [#tpu.dimension_semantics<parallel>], iteration_bounds = array<i64: 2>, scalar_prefetch = 0 : i64, scratch_operands = 2 : i64, tpu.core_type = #tpu.core_type<tc>, window_params = [{transform_indices = @transform_0, window_bounds = array<i64: 1, 256, 128>}, {pipeline_mode = #tpu.pipeline_mode<synchronous>, transform_indices = @transform_1, window_bounds = array<i64: 1, 128>}, {pipeline_mode = #tpu.pipeline_mode<synchronous>, transform_indices = @transform_2, window_bounds = array<i64: 1, 128>}, {pipeline_mode = #tpu.pipeline_mode<synchronous>, transform_indices = @transform_3, window_bounds = array<i64: 1152, 128>}, {transform_indices = @transform_4, window_bounds = array<i64: 1, 256, 128>}, {transform_indices = @transform_5, window_bounds = array<i64: 1, 8, 128>}, {transform_indices = @transform_6, window_bounds = array<i64: 1, 8, 128>}]} {
    %cst = arith.constant 0.000000e+00 : f32
    %0 = vector.broadcast %cst : f32 to vector<16x128xf32>
    %c0 = arith.constant 0 : index
    %c0_0 = arith.constant 0 : index
    %1 = vector.load %arg8[%c0, %c0_0] : memref<288x128xf32, #tpu.memory_space<vmem>>, vector<16x128xf32>
    tpu.vector_store %arg8[%c0, %c0_0], %0 {strides = array<i32>} : memref<288x128xf32, #tpu.memory_space<vmem>>, vector<16x128xf32>,
    %c272 = arith.constant 272 : index
    %c0_1 = arith.constant 0 : index
    %2 = vector.load %arg8[%c272, %c0_1] : memref<288x128xf32, #tpu.memory_space<vmem>>, vector<16x128xf32>
    tpu.vector_store %arg8[%c272, %c0_1], %0 {strides = array<i32>} : memref<288x128xf32, #tpu.memory_space<vmem>>, vector<16x128xf32>,
    %c0_2 = arith.constant 0 : index
    %c0_3 = arith.constant 0 : index
    %c0_4 = arith.constant 0 : index
    %3 = vector.load %arg1[%c0_2, %c0_3, %c0_4] : memref<1x256x128xf32, #tpu.memory_space<vmem>>, vector<1x256x128xf32>
    %4 = vector.shape_cast %3 : vector<1x256x128xf32> to vector<256x128xf32>
    %c0_5 = arith.constant 0 : index
    %c0_6 = arith.constant 0 : index
    %5 = vector.load %arg2[%c0_5, %c0_6] : memref<1x128xf32, #tpu.memory_space<vmem>>, vector<1x128xf32>
    %6 = vector.broadcast %5 : vector<1x128xf32> to vector<256x128xf32>
    %7 = arith.mulf %4, %6 : vector<256x128xf32>
    %c0_7 = arith.constant 0 : index
    %c0_8 = arith.constant 0 : index
    %8 = vector.load %arg3[%c0_7, %c0_8] : memref<1x128xf32, #tpu.memory_space<vmem>>, vector<1x128xf32>
    %9 = vector.broadcast %8 : vector<1x128xf32> to vector<256x128xf32>
    %10 = arith.addf %7, %9 : vector<256x128xf32>
    %cst_9 = arith.constant 0.000000e+00 : f32
    %11 = vector.broadcast %cst_9 : f32 to vector<256x128xf32>
    %12 = arith.maximumf %10, %11 : vector<256x128xf32>
    %c16 = arith.constant 16 : index
    %c0_10 = arith.constant 0 : index
    %13 = vector.load %arg8[%c16, %c0_10] : memref<288x128xf32, #tpu.memory_space<vmem>>, vector<256x128xf32>
    tpu.vector_store %arg8[%c16, %c0_10], %12 {strides = array<i32>} : memref<288x128xf32, #tpu.memory_space<vmem>>, vector<256x128xf32>,
    %14 = tpu.iota {dimensions = array<i32: 0>} : vector<256x1xi32>
    %c16_i32 = arith.constant 16 : i32
    %c0_i32 = arith.constant 0 : i32
    %15 = arith.cmpi eq, %c16_i32, %c0_i32 : i32
    %c1_i32 = arith.constant 1 : i32
    %16 = arith.select %15, %c1_i32, %c16_i32 : i32
    %17 = vector.broadcast %16 : i32 to vector<256x1xi32>
    %18 = arith.remsi %14, %17 : vector<256x1xi32>
    %c0_i32_11 = arith.constant 0 : i32
    %19 = vector.broadcast %c0_i32_11 : i32 to vector<256x1xi32>
    %20 = arith.cmpi ne, %18, %19 : vector<256x1xi32>
    %c0_i32_12 = arith.constant 0 : i32
    %21 = vector.broadcast %c0_i32_12 : i32 to vector<256x1xi32>
    %22 = arith.cmpi slt, %18, %21 : vector<256x1xi32>
    %c0_i32_13 = arith.constant 0 : i32
    %23 = arith.cmpi slt, %16, %c0_i32_13 : i32
    %24 = vector.broadcast %23 : i1 to vector<256x1xi1>
    %25 = vector.broadcast %24 : vector<256x1xi1> to vector<256x1xi1>
    %26 = arith.xori %22, %25 : vector<256x1xi1>
    %27 = arith.andi %26, %20 : vector<256x1xi1>
    %28 = vector.broadcast %16 : i32 to vector<256x1xi32>
    %29 = arith.addi %18, %28 : vector<256x1xi32>
    %30 = arith.select %27, %29, %18 : vector<256x1xi1>, vector<256x1xi32>
    %c0_i32_14 = arith.constant 0 : i32
    %31 = vector.broadcast %c0_i32_14 : i32 to vector<256x1xi32>
    %32 = arith.cmpi ne, %30, %31 : vector<256x1xi32>
    %c15_i32 = arith.constant 15 : i32
    %33 = vector.broadcast %c15_i32 : i32 to vector<256x1xi32>
    %34 = arith.cmpi ne, %30, %33 : vector<256x1xi32>
    %c0_15 = arith.constant 0 : index
    %c0_16 = arith.constant 0 : index
    %35 = vector.load %arg8[%c0_15, %c0_16] : memref<288x128xf32, #tpu.memory_space<vmem>>, vector<256x128xf32>
    %c1_i32_17 = arith.constant 1 : i32
    %36 = tpu.dynamic_rotate %35 by %c1_i32_17 dim 0 : vector<256x128xf32>, i32 -> vector<256x128xf32>
    %cst_18 = arith.constant 0.000000e+00 : f32
    %37 = vector.broadcast %cst_18 : f32 to vector<256x128xf32>
    %38 = vector.shape_cast %32 : vector<256x1xi1> to vector<256x1xi1>
    %39 = vector.broadcast %38 : vector<256x1xi1> to vector<256x128xi1>
    %40 = arith.select %39, %36, %37 : vector<256x128xi1>, vector<256x128xf32>
    %c0_19 = arith.constant 0 : index
    %c0_20 = arith.constant 0 : index
    %41 = vector.load %arg4[%c0_19, %c0_20] : memref<1152x128xf32, #tpu.memory_space<vmem>>, vector<128x128xf32>
    %cst_21 = arith.constant dense<0.000000e+00> : vector<256x128xf32>
    %42 = tpu.matmul %40, %41, %cst_21 {dimension_numbers = #tpu.dot_dimension_numbers<[1], [0], [0], [1], [0, 0, 1, 1], [], []>} : vector<256x128xf32>, vector<128x128xf32>, vector<256x128xf32> -> vector<256x128xf32>
    %c0_22 = arith.constant 0 : index
    %c0_23 = arith.constant 0 : index
    %43 = vector.load %arg9[%c0_22, %c0_23] : memref<256x128xf32, #tpu.memory_space<vmem>>, vector<256x128xf32>
    tpu.vector_store %arg9[%c0_22, %c0_23], %42 {strides = array<i32>} : memref<256x128xf32, #tpu.memory_space<vmem>>, vector<256x128xf32>,
    %c0_24 = arith.constant 0 : index
    %c0_25 = arith.constant 0 : index
    %44 = vector.load %arg8[%c0_24, %c0_25] : memref<288x128xf32, #tpu.memory_space<vmem>>, vector<256x128xf32>
    %c128 = arith.constant 128 : index
    %c0_26 = arith.constant 0 : index
    %45 = vector.load %arg4[%c128, %c0_26] : memref<1152x128xf32, #tpu.memory_space<vmem>>, vector<128x128xf32>
    %cst_27 = arith.constant dense<0.000000e+00> : vector<256x128xf32>
    %46 = tpu.matmul %44, %45, %cst_27 {dimension_numbers = #tpu.dot_dimension_numbers<[1], [0], [0], [1], [0, 0, 1, 1], [], []>} : vector<256x128xf32>, vector<128x128xf32>, vector<256x128xf32> -> vector<256x128xf32>
    %c0_28 = arith.constant 0 : index
    %c0_29 = arith.constant 0 : index
    %47 = vector.load %arg9[%c0_28, %c0_29] : memref<256x128xf32, #tpu.memory_space<vmem>>, vector<256x128xf32>
    %48 = arith.addf %47, %46 : vector<256x128xf32>
    %c0_30 = arith.constant 0 : index
    %c0_31 = arith.constant 0 : index
    %49 = vector.load %arg9[%c0_30, %c0_31] : memref<256x128xf32, #tpu.memory_space<vmem>>, vector<256x128xf32>
    tpu.vector_store %arg9[%c0_30, %c0_31], %48 {strides = array<i32>} : memref<256x128xf32, #tpu.memory_space<vmem>>, vector<256x128xf32>,
    %c0_32 = arith.constant 0 : index
    %c0_33 = arith.constant 0 : index
    %50 = vector.load %arg8[%c0_32, %c0_33] : memref<288x128xf32, #tpu.memory_space<vmem>>, vector<256x128xf32>
    %c255_i32 = arith.constant 255 : i32
    %51 = tpu.dynamic_rotate %50 by %c255_i32 dim 0 : vector<256x128xf32>, i32 -> vector<256x128xf32>
    %cst_34 = arith.constant 0.000000e+00 : f32
    %52 = vector.broadcast %cst_34 : f32 to vector<256x128xf32>
    %53 = vector.shape_cast %34 : vector<256x1xi1> to vector<256x1xi1>
    %54 = vector.broadcast %53 : vector<256x1xi1> to vector<256x128xi1>
    %55 = arith.select %54, %51, %52 : vector<256x128xi1>, vector<256x128xf32>
    %c256 = arith.constant 256 : index
    %c0_35 = arith.constant 0 : index
    %56 = vector.load %arg4[%c256, %c0_35] : memref<1152x128xf32, #tpu.memory_space<vmem>>, vector<128x128xf32>
    %cst_36 = arith.constant dense<0.000000e+00> : vector<256x128xf32>
    %57 = tpu.matmul %55, %56, %cst_36 {dimension_numbers = #tpu.dot_dimension_numbers<[1], [0], [0], [1], [0, 0, 1, 1], [], []>} : vector<256x128xf32>, vector<128x128xf32>, vector<256x128xf32> -> vector<256x128xf32>
    %c0_37 = arith.constant 0 : index
    %c0_38 = arith.constant 0 : index
    %58 = vector.load %arg9[%c0_37, %c0_38] : memref<256x128xf32, #tpu.memory_space<vmem>>, vector<256x128xf32>
    %59 = arith.addf %58, %57 : vector<256x128xf32>
    %c0_39 = arith.constant 0 : index
    %c0_40 = arith.constant 0 : index
    %60 = vector.load %arg9[%c0_39, %c0_40] : memref<256x128xf32, #tpu.memory_space<vmem>>, vector<256x128xf32>
    tpu.vector_store %arg9[%c0_39, %c0_40], %59 {strides = array<i32>} : memref<256x128xf32, #tpu.memory_space<vmem>>, vector<256x128xf32>,
    %c16_41 = arith.constant 16 : index
    %c0_42 = arith.constant 0 : index
    %61 = vector.load %arg8[%c16_41, %c0_42] : memref<288x128xf32, #tpu.memory_space<vmem>>, vector<256x128xf32>
    %c1_i32_43 = arith.constant 1 : i32
    %62 = tpu.dynamic_rotate %61 by %c1_i32_43 dim 0 : vector<256x128xf32>, i32 -> vector<256x128xf32>
    %cst_44 = arith.constant 0.000000e+00 : f32
    %63 = vector.broadcast %cst_44 : f32 to vector<256x128xf32>
    %64 = vector.shape_cast %32 : vector<256x1xi1> to vector<256x1xi1>
    %65 = vector.broadcast %64 : vector<256x1xi1> to vector<256x128xi1>
    %66 = arith.select %65, %62, %63 : vector<256x128xi1>, vector<256x128xf32>
    %c384 = arith.constant 384 : index
    %c0_45 = arith.constant 0 : index
    %67 = vector.load %arg4[%c384, %c0_45] : memref<1152x128xf32, #tpu.memory_space<vmem>>, vector<128x128xf32>
    %cst_46 = arith.constant dense<0.000000e+00> : vector<256x128xf32>
    %68 = tpu.matmul %66, %67, %cst_46 {dimension_numbers = #tpu.dot_dimension_numbers<[1], [0], [0], [1], [0, 0, 1, 1], [], []>} : vector<256x128xf32>, vector<128x128xf32>, vector<256x128xf32> -> vector<256x128xf32>
    %c0_47 = arith.constant 0 : index
    %c0_48 = arith.constant 0 : index
    %69 = vector.load %arg9[%c0_47, %c0_48] : memref<256x128xf32, #tpu.memory_space<vmem>>, vector<256x128xf32>
    %70 = arith.addf %69, %68 : vector<256x128xf32>
    %c0_49 = arith.constant 0 : index
    %c0_50 = arith.constant 0 : index
    %71 = vector.load %arg9[%c0_49, %c0_50] : memref<256x128xf32, #tpu.memory_space<vmem>>, vector<256x128xf32>
    tpu.vector_store %arg9[%c0_49, %c0_50], %70 {strides = array<i32>} : memref<256x128xf32, #tpu.memory_space<vmem>>, vector<256x128xf32>,
    %c16_51 = arith.constant 16 : index
    %c0_52 = arith.constant 0 : index
    %72 = vector.load %arg8[%c16_51, %c0_52] : memref<288x128xf32, #tpu.memory_space<vmem>>, vector<256x128xf32>
    %c512 = arith.constant 512 : index
    %c0_53 = arith.constant 0 : index
    %73 = vector.load %arg4[%c512, %c0_53] : memref<1152x128xf32, #tpu.memory_space<vmem>>, vector<128x128xf32>
    %cst_54 = arith.constant dense<0.000000e+00> : vector<256x128xf32>
    %74 = tpu.matmul %72, %73, %cst_54 {dimension_numbers = #tpu.dot_dimension_numbers<[1], [0], [0], [1], [0, 0, 1, 1], [], []>} : vector<256x128xf32>, vector<128x128xf32>, vector<256x128xf32> -> vector<256x128xf32>
    %c0_55 = arith.constant 0 : index
    %c0_56 = arith.constant 0 : index
    %75 = vector.load %arg9[%c0_55, %c0_56] : memref<256x128xf32, #tpu.memory_space<vmem>>, vector<256x128xf32>
    %76 = arith.addf %75, %74 : vector<256x128xf32>
    %c0_57 = arith.constant 0 : index
    %c0_58 = arith.constant 0 : index
    %77 = vector.load %arg9[%c0_57, %c0_58] : memref<256x128xf32, #tpu.memory_space<vmem>>, vector<256x128xf32>
    tpu.vector_store %arg9[%c0_57, %c0_58], %76 {strides = array<i32>} : memref<256x128xf32, #tpu.memory_space<vmem>>, vector<256x128xf32>,
    %c16_59 = arith.constant 16 : index
    %c0_60 = arith.constant 0 : index
    %78 = vector.load %arg8[%c16_59, %c0_60] : memref<288x128xf32, #tpu.memory_space<vmem>>, vector<256x128xf32>
    %c255_i32_61 = arith.constant 255 : i32
    %79 = tpu.dynamic_rotate %78 by %c255_i32_61 dim 0 : vector<256x128xf32>, i32 -> vector<256x128xf32>
    %cst_62 = arith.constant 0.000000e+00 : f32
    %80 = vector.broadcast %cst_62 : f32 to vector<256x128xf32>
    %81 = vector.shape_cast %34 : vector<256x1xi1> to vector<256x1xi1>
    %82 = vector.broadcast %81 : vector<256x1xi1> to vector<256x128xi1>
    %83 = arith.select %82, %79, %80 : vector<256x128xi1>, vector<256x128xf32>
    %c640 = arith.constant 640 : index
    %c0_63 = arith.constant 0 : index
    %84 = vector.load %arg4[%c640, %c0_63] : memref<1152x128xf32, #tpu.memory_space<vmem>>, vector<128x128xf32>
    %cst_64 = arith.constant dense<0.000000e+00> : vector<256x128xf32>
    %85 = tpu.matmul %83, %84, %cst_64 {dimension_numbers = #tpu.dot_dimension_numbers<[1], [0], [0], [1], [0, 0, 1, 1], [], []>} : vector<256x128xf32>, vector<128x128xf32>, vector<256x128xf32> -> vector<256x128xf32>
    %c0_65 = arith.constant 0 : index
    %c0_66 = arith.constant 0 : index
    %86 = vector.load %arg9[%c0_65, %c0_66] : memref<256x128xf32, #tpu.memory_space<vmem>>, vector<256x128xf32>
    %87 = arith.addf %86, %85 : vector<256x128xf32>
    %c0_67 = arith.constant 0 : index
    %c0_68 = arith.constant 0 : index
    %88 = vector.load %arg9[%c0_67, %c0_68] : memref<256x128xf32, #tpu.memory_space<vmem>>, vector<256x128xf32>
    tpu.vector_store %arg9[%c0_67, %c0_68], %87 {strides = array<i32>} : memref<256x128xf32, #tpu.memory_space<vmem>>, vector<256x128xf32>,
    %c32 = arith.constant 32 : index
    %c0_69 = arith.constant 0 : index
    %89 = vector.load %arg8[%c32, %c0_69] : memref<288x128xf32, #tpu.memory_space<vmem>>, vector<256x128xf32>
    %c1_i32_70 = arith.constant 1 : i32
    %90 = tpu.dynamic_rotate %89 by %c1_i32_70 dim 0 : vector<256x128xf32>, i32 -> vector<256x128xf32>
    %cst_71 = arith.constant 0.000000e+00 : f32
    %91 = vector.broadcast %cst_71 : f32 to vector<256x128xf32>
    %92 = vector.shape_cast %32 : vector<256x1xi1> to vector<256x1xi1>
    %93 = vector.broadcast %92 : vector<256x1xi1> to vector<256x128xi1>
    %94 = arith.select %93, %90, %91 : vector<256x128xi1>, vector<256x128xf32>
    %c768 = arith.constant 768 : index
    %c0_72 = arith.constant 0 : index
    %95 = vector.load %arg4[%c768, %c0_72] : memref<1152x128xf32, #tpu.memory_space<vmem>>, vector<128x128xf32>
    %cst_73 = arith.constant dense<0.000000e+00> : vector<256x128xf32>
    %96 = tpu.matmul %94, %95, %cst_73 {dimension_numbers = #tpu.dot_dimension_numbers<[1], [0], [0], [1], [0, 0, 1, 1], [], []>} : vector<256x128xf32>, vector<128x128xf32>, vector<256x128xf32> -> vector<256x128xf32>
    %c0_74 = arith.constant 0 : index
    %c0_75 = arith.constant 0 : index
    %97 = vector.load %arg9[%c0_74, %c0_75] : memref<256x128xf32, #tpu.memory_space<vmem>>, vector<256x128xf32>
    %98 = arith.addf %97, %96 : vector<256x128xf32>
    %c0_76 = arith.constant 0 : index
    %c0_77 = arith.constant 0 : index
    %99 = vector.load %arg9[%c0_76, %c0_77] : memref<256x128xf32, #tpu.memory_space<vmem>>, vector<256x128xf32>
    tpu.vector_store %arg9[%c0_76, %c0_77], %98 {strides = array<i32>} : memref<256x128xf32, #tpu.memory_space<vmem>>, vector<256x128xf32>,
    %c32_78 = arith.constant 32 : index
    %c0_79 = arith.constant 0 : index
    %100 = vector.load %arg8[%c32_78, %c0_79] : memref<288x128xf32, #tpu.memory_space<vmem>>, vector<256x128xf32>
    %c896 = arith.constant 896 : index
    %c0_80 = arith.constant 0 : index
    %101 = vector.load %arg4[%c896, %c0_80] : memref<1152x128xf32, #tpu.memory_space<vmem>>, vector<128x128xf32>
    %cst_81 = arith.constant dense<0.000000e+00> : vector<256x128xf32>
    %102 = tpu.matmul %100, %101, %cst_81 {dimension_numbers = #tpu.dot_dimension_numbers<[1], [0], [0], [1], [0, 0, 1, 1], [], []>} : vector<256x128xf32>, vector<128x128xf32>, vector<256x128xf32> -> vector<256x128xf32>
    %c0_82 = arith.constant 0 : index
    %c0_83 = arith.constant 0 : index
    %103 = vector.load %arg9[%c0_82, %c0_83] : memref<256x128xf32, #tpu.memory_space<vmem>>, vector<256x128xf32>
    %104 = arith.addf %103, %102 : vector<256x128xf32>
    %c0_84 = arith.constant 0 : index
    %c0_85 = arith.constant 0 : index
    %105 = vector.load %arg9[%c0_84, %c0_85] : memref<256x128xf32, #tpu.memory_space<vmem>>, vector<256x128xf32>
    tpu.vector_store %arg9[%c0_84, %c0_85], %104 {strides = array<i32>} : memref<256x128xf32, #tpu.memory_space<vmem>>, vector<256x128xf32>,
    %c32_86 = arith.constant 32 : index
    %c0_87 = arith.constant 0 : index
    %106 = vector.load %arg8[%c32_86, %c0_87] : memref<288x128xf32, #tpu.memory_space<vmem>>, vector<256x128xf32>
    %c255_i32_88 = arith.constant 255 : i32
    %107 = tpu.dynamic_rotate %106 by %c255_i32_88 dim 0 : vector<256x128xf32>, i32 -> vector<256x128xf32>
    %cst_89 = arith.constant 0.000000e+00 : f32
    %108 = vector.broadcast %cst_89 : f32 to vector<256x128xf32>
    %109 = vector.shape_cast %34 : vector<256x1xi1> to vector<256x1xi1>
    %110 = vector.broadcast %109 : vector<256x1xi1> to vector<256x128xi1>
    %111 = arith.select %110, %107, %108 : vector<256x128xi1>, vector<256x128xf32>
    %c1024 = arith.constant 1024 : index
    %c0_90 = arith.constant 0 : index
    %112 = vector.load %arg4[%c1024, %c0_90] : memref<1152x128xf32, #tpu.memory_space<vmem>>, vector<128x128xf32>
    %cst_91 = arith.constant dense<0.000000e+00> : vector<256x128xf32>
    %113 = tpu.matmul %111, %112, %cst_91 {dimension_numbers = #tpu.dot_dimension_numbers<[1], [0], [0], [1], [0, 0, 1, 1], [], []>} : vector<256x128xf32>, vector<128x128xf32>, vector<256x128xf32> -> vector<256x128xf32>
    %c0_92 = arith.constant 0 : index
    %c0_93 = arith.constant 0 : index
    %114 = vector.load %arg9[%c0_92, %c0_93] : memref<256x128xf32, #tpu.memory_space<vmem>>, vector<256x128xf32>
    %115 = arith.addf %114, %113 : vector<256x128xf32>
    %c0_94 = arith.constant 0 : index
    %c0_95 = arith.constant 0 : index
    %116 = vector.load %arg9[%c0_94, %c0_95] : memref<256x128xf32, #tpu.memory_space<vmem>>, vector<256x128xf32>
    tpu.vector_store %arg9[%c0_94, %c0_95], %115 {strides = array<i32>} : memref<256x128xf32, #tpu.memory_space<vmem>>, vector<256x128xf32>,
    %c0_96 = arith.constant 0 : index
    %c0_97 = arith.constant 0 : index
    %117 = vector.load %arg9[%c0_96, %c0_97] : memref<256x128xf32, #tpu.memory_space<vmem>>, vector<256x128xf32>
    %c0_98 = arith.constant 0 : index
    %c0_99 = arith.constant 0 : index
    %c0_100 = arith.constant 0 : index
    %118 = vector.load %arg5[%c0_98, %c0_99, %c0_100] : memref<1x256x128xf32, #tpu.memory_space<vmem>>, vector<1x256x128xf32>
    %119 = vector.shape_cast %118 : vector<1x256x128xf32> to vector<256x128xf32>
    %120 = vector.shape_cast %117 : vector<256x128xf32> to vector<1x256x128xf32>
    tpu.vector_store %arg5[%c0_98, %c0_99, %c0_100], %120 {strides = array<i32>} : memref<1x256x128xf32, #tpu.memory_space<vmem>>, vector<1x256x128xf32>,
    %cst_101 = arith.constant dense<0.000000e+00> : vector<128xf32>
    %121 = vector.multi_reduction <add>, %117, %cst_101 [0] : vector<256x128xf32> to vector<128xf32>
    %122 = vector.shape_cast %121 : vector<128xf32> to vector<1x128xf32>
    %123 = vector.shape_cast %122 : vector<1x128xf32> to vector<1x128xf32>
    %124 = vector.broadcast %123 : vector<1x128xf32> to vector<8x128xf32>
    %c0_102 = arith.constant 0 : index
    %c0_103 = arith.constant 0 : index
    %c0_104 = arith.constant 0 : index
    %125 = vector.load %arg6[%c0_102, %c0_103, %c0_104] : memref<1x8x128xf32, #tpu.memory_space<vmem>>, vector<1x8x128xf32>
    %126 = vector.shape_cast %125 : vector<1x8x128xf32> to vector<8x128xf32>
    %127 = vector.shape_cast %124 : vector<8x128xf32> to vector<1x8x128xf32>
    tpu.vector_store %arg6[%c0_102, %c0_103, %c0_104], %127 {strides = array<i32>} : memref<1x8x128xf32, #tpu.memory_space<vmem>>, vector<1x8x128xf32>,
    %128 = arith.mulf %117, %117 : vector<256x128xf32>
    %cst_105 = arith.constant dense<0.000000e+00> : vector<128xf32>
    %129 = vector.multi_reduction <add>, %128, %cst_105 [0] : vector<256x128xf32> to vector<128xf32>
    %130 = vector.shape_cast %129 : vector<128xf32> to vector<1x128xf32>
    %131 = vector.shape_cast %130 : vector<1x128xf32> to vector<1x128xf32>
    %132 = vector.broadcast %131 : vector<1x128xf32> to vector<8x128xf32>
    %c0_106 = arith.constant 0 : index
    %c0_107 = arith.constant 0 : index
    %c0_108 = arith.constant 0 : index
    %133 = vector.load %arg7[%c0_106, %c0_107, %c0_108] : memref<1x8x128xf32, #tpu.memory_space<vmem>>, vector<1x8x128xf32>
    %134 = vector.shape_cast %133 : vector<1x8x128xf32> to vector<8x128xf32>
    %135 = vector.shape_cast %132 : vector<8x128xf32> to vector<1x8x128xf32>
    tpu.vector_store %arg7[%c0_106, %c0_107, %c0_108], %135 {strides = array<i32>} : memref<1x8x128xf32, #tpu.memory_space<vmem>>, vector<1x8x128xf32>,
    return
  }
  func.func @transform_0(%arg0: i32) -> (i32, i32, i32) {
    %c0_i32 = arith.constant 0 : i32
    %c0_i32_0 = arith.constant 0 : i32
    %c0_i32_1 = arith.constant 0 : i32
    return %arg0, %c0_i32, %c0_i32_0 : i32, i32, i32
  }
  func.func @transform_1(%arg0: i32) -> (i32, i32) {
    %c0_i32 = arith.constant 0 : i32
    %c0_i32_0 = arith.constant 0 : i32
    %c0_i32_1 = arith.constant 0 : i32
    return %c0_i32, %c0_i32_0 : i32, i32
  }
  func.func @transform_2(%arg0: i32) -> (i32, i32) {
    %c0_i32 = arith.constant 0 : i32
    %c0_i32_0 = arith.constant 0 : i32
    %c0_i32_1 = arith.constant 0 : i32
    return %c0_i32, %c0_i32_0 : i32, i32
  }
  func.func @transform_3(%arg0: i32) -> (i32, i32) {
    %c0_i32 = arith.constant 0 : i32
    %c0_i32_0 = arith.constant 0 : i32
    %c0_i32_1 = arith.constant 0 : i32
    return %c0_i32, %c0_i32_0 : i32, i32
  }
  func.func @transform_4(%arg0: i32) -> (i32, i32, i32) {
    %c0_i32 = arith.constant 0 : i32
    %c0_i32_0 = arith.constant 0 : i32
    %c0_i32_1 = arith.constant 0 : i32
    return %arg0, %c0_i32, %c0_i32_0 : i32, i32, i32
  }
  func.func @transform_5(%arg0: i32) -> (i32, i32, i32) {
    %c0_i32 = arith.constant 0 : i32
    %c0_i32_0 = arith.constant 0 : i32
    %c0_i32_1 = arith.constant 0 : i32
    return %arg0, %c0_i32, %c0_i32_0 : i32, i32, i32
  }
  func.func @transform_6(%arg0: i32) -> (i32, i32, i32) {
    %c0_i32 = arith.constant 0 : i32
    %c0_i32_0 = arith.constant 0 : i32
    %c0_i32_1 = arith.constant 0 : i32
    return %arg0, %c0_i32, %c0_i32_0 : i32, i32, i32
  }
}

module attributes {stable_mosaic.version = 11 : i64} {
  func.func @_bn_add_relu_kernel(%arg0: i32, %arg1: memref<512x128xf32, #tpu.memory_space<vmem>>, %arg2: memref<1x128xf32, #tpu.memory_space<vmem>>, %arg3: memref<1x128xf32, #tpu.memory_space<vmem>>, %arg4: memref<512x128xf32, #tpu.memory_space<vmem>>, %arg5: memref<512x128xf32, #tpu.memory_space<vmem>>) attributes {dimension_semantics = [#tpu.dimension_semantics<parallel>], iteration_bounds = array<i64: 1>, scalar_prefetch = 0 : i64, scratch_operands = 0 : i64, tpu.core_type = #tpu.core_type<tc>, window_params = [{transform_indices = @transform_0, window_bounds = array<i64: 512, 128>}, {pipeline_mode = #tpu.pipeline_mode<synchronous>, transform_indices = @transform_1, window_bounds = array<i64: 1, 128>}, {pipeline_mode = #tpu.pipeline_mode<synchronous>, transform_indices = @transform_2, window_bounds = array<i64: 1, 128>}, {transform_indices = @transform_3, window_bounds = array<i64: 512, 128>}, {transform_indices = @transform_4, window_bounds = array<i64: 512, 128>}]} {
    %c0 = arith.constant 0 : index
    %c0_0 = arith.constant 0 : index
    %0 = vector.load %arg1[%c0, %c0_0] : memref<512x128xf32, #tpu.memory_space<vmem>>, vector<512x128xf32>
    %c0_1 = arith.constant 0 : index
    %c0_2 = arith.constant 0 : index
    %1 = vector.load %arg2[%c0_1, %c0_2] : memref<1x128xf32, #tpu.memory_space<vmem>>, vector<1x128xf32>
    %2 = vector.broadcast %1 : vector<1x128xf32> to vector<512x128xf32>
    %3 = arith.mulf %0, %2 : vector<512x128xf32>
    %c0_3 = arith.constant 0 : index
    %c0_4 = arith.constant 0 : index
    %4 = vector.load %arg3[%c0_3, %c0_4] : memref<1x128xf32, #tpu.memory_space<vmem>>, vector<1x128xf32>
    %5 = vector.broadcast %4 : vector<1x128xf32> to vector<512x128xf32>
    %6 = arith.addf %3, %5 : vector<512x128xf32>
    %c0_5 = arith.constant 0 : index
    %c0_6 = arith.constant 0 : index
    %7 = vector.load %arg4[%c0_5, %c0_6] : memref<512x128xf32, #tpu.memory_space<vmem>>, vector<512x128xf32>
    %8 = arith.addf %6, %7 : vector<512x128xf32>
    %cst = arith.constant 0.000000e+00 : f32
    %9 = vector.broadcast %cst : f32 to vector<512x128xf32>
    %10 = arith.maximumf %8, %9 : vector<512x128xf32>
    %c0_7 = arith.constant 0 : index
    %c0_8 = arith.constant 0 : index
    %11 = vector.load %arg5[%c0_7, %c0_8] : memref<512x128xf32, #tpu.memory_space<vmem>>, vector<512x128xf32>
    tpu.vector_store %arg5[%c0_7, %c0_8], %10 {strides = array<i32>} : memref<512x128xf32, #tpu.memory_space<vmem>>, vector<512x128xf32>,
    return
  }
  func.func @transform_0(%arg0: i32) -> (i32, i32) {
    %c0_i32 = arith.constant 0 : i32
    %c0_i32_0 = arith.constant 0 : i32
    return %arg0, %c0_i32 : i32, i32
  }
  func.func @transform_1(%arg0: i32) -> (i32, i32) {
    %c0_i32 = arith.constant 0 : i32
    %c0_i32_0 = arith.constant 0 : i32
    %c0_i32_1 = arith.constant 0 : i32
    return %c0_i32, %c0_i32_0 : i32, i32
  }
  func.func @transform_2(%arg0: i32) -> (i32, i32) {
    %c0_i32 = arith.constant 0 : i32
    %c0_i32_0 = arith.constant 0 : i32
    %c0_i32_1 = arith.constant 0 : i32
    return %c0_i32, %c0_i32_0 : i32, i32
  }
  func.func @transform_3(%arg0: i32) -> (i32, i32) {
    %c0_i32 = arith.constant 0 : i32
    %c0_i32_0 = arith.constant 0 : i32
    return %arg0, %c0_i32 : i32, i32
  }
  func.func @transform_4(%arg0: i32) -> (i32, i32) {
    %c0_i32 = arith.constant 0 : i32
    %c0_i32_0 = arith.constant 0 : i32
    return %arg0, %c0_i32 : i32, i32
  }
}

</mosaic_0001>

<llo_original>
// kernel: bottleneck_forward.6
$region0: #{bottleneck_forward.6}
  #allocation0 [shape = 'u32[]', space=smem, size = 0x4, offset = 0x4, fixed_abs, tag = 'smem constant byte address 0x4 - core index']
  #allocation1 [shape = 'u32[144,128]{1,0:T(1,128)}', space=vmem, size = 0x12000, scoped, tag = 'internal scratch']
  %s0 = inlined_call_operand.vmem [shape: f32[512,128], index: 0, kind: input, shape index: {}]
  %s1 = inlined_call_operand.vmem [shape: f32[1,128], index: 1, kind: input, shape index: {}]
  %s2 = inlined_call_operand.vmem [shape: f32[1,128], index: 2, kind: input, shape index: {}]
  %s3 = inlined_call_operand.vmem [shape: f32[128,128], index: 3, kind: input, shape index: {}]
  %s4 = inlined_call_operand.vmem [shape: f32[512,128], index: 4, kind: output, shape index: {0}]
  %s5 = inlined_call_operand.vmem [shape: f32[1,8,128], index: 5, kind: output, shape index: {1}]
  %s6 = inlined_call_operand.vmem [shape: f32[1,8,128], index: 6, kind: output, shape index: {2}]
  %7 = xla_tuple %s4, %s5, %s6
  %s8 = sld [smem:[#allocation0]]
  $region42: #{bottleneck_forward.6} parent=0
    _
  %s10 = ssub.s32 1, %s8
  %s11 = scalar_select 0, %s10, %s8
  // Predicated region
  $region2: #{bottleneck_forward.6} parent=0 // pred_check
    _
  $region3: #{bottleneck_forward.6} parent=0 // pred_check_branch
    %13 = sbr.rel (0) target = $region5
  $region4: #{bottleneck_forward.6} parent=0 // pred_region
    _
  $region5: #{bottleneck_forward.6} parent=0 // pred_fallthru
    _
  // Predicated region
  $region6: #{bottleneck_forward.6} parent=0 // pred_check
    _
  $region7: #{bottleneck_forward.6} parent=0 // pred_check_branch
    %15 = sbr.rel (0) target = $region9
  $region8: #{bottleneck_forward.6} parent=0 // pred_region
    _
  $region9: #{bottleneck_forward.6} parent=0 // pred_fallthru
    _
  // Predicated region
  $region10: #{bottleneck_forward.6} parent=0 // pred_check
    _
  $region11: #{bottleneck_forward.6} parent=0 // pred_check_branch
    %17 = sbr.rel (0) target = $region13
  $region12: #{bottleneck_forward.6} parent=0 // pred_region
    _
  $region13: #{bottleneck_forward.6} parent=0 // pred_fallthru
    _
  // Predicated region
  $region14: #{bottleneck_forward.6} parent=0 // pred_check
    _
  $region15: #{bottleneck_forward.6} parent=0 // pred_check_branch
    %19 = sbr.rel (0) target = $region17
  $region16: #{bottleneck_forward.6} parent=0 // pred_region
    _
  $region17: #{bottleneck_forward.6} parent=0 // pred_fallthru
    _
  %v20 = vld [vmem:[%s0] sm:$0xff]
  %v21 = vld [vmem:[%s0 + $0x8] sm:$0xff]
  %v22 = vld [vmem:[%s0 + $0x10] sm:$0xff]
  %v23 = vld [vmem:[%s0 + $0x18] sm:$0xff]
  %v24 = vld [vmem:[%s0 + $0x20] sm:$0xff]
  %v25 = vld [vmem:[%s0 + $0x28] sm:$0xff]
  %v26 = vld [vmem:[%s0 + $0x30] sm:$0xff]
  %v27 = vld [vmem:[%s0 + $0x38] sm:$0xff]
  %v28 = vld [vmem:[%s0 + $0x40] sm:$0xff]
  %v29 = vld [vmem:[%s0 + $0x48] sm:$0xff]
  %v30 = vld [vmem:[%s0 + $0x50] sm:$0xff]
  %v31 = vld [vmem:[%s0 + $0x58] sm:$0xff]
  %v32 = vld [vmem:[%s0 + $0x60] sm:$0xff]
  %v33 = vld [vmem:[%s0 + $0x68] sm:$0xff]
  %v34 = vld [vmem:[%s0 + $0x70] sm:$0xff]
  %v35 = vld [vmem:[%s0 + $0x78] sm:$0xff]
  %v36 = vld [vmem:[%s0 + $0x80] sm:$0xff]
  %v37 = vld [vmem:[%s0 + $0x88] sm:$0xff]
  %v38 = vld [vmem:[%s0 + $0x90] sm:$0xff]
  %v39 = vld [vmem:[%s0 + $0x98] sm:$0xff]
  %v40 = vld [vmem:[%s0 + $0xa0] sm:$0xff]
  %v41 = vld [vmem:[%s0 + $0xa8] sm:$0xff]
  %v42 = vld [vmem:[%s0 + $0xb0] sm:$0xff]
  %v43 = vld [vmem:[%s0 + $0xb8] sm:$0xff]
  %v44 = vld [vmem:[%s0 + $0xc0] sm:$0xff]
  %v45 = vld [vmem:[%s0 + $0xc8] sm:$0xff]
  %v46 = vld [vmem:[%s0 + $0xd0] sm:$0xff]
  %v47 = vld [vmem:[%s0 + $0xd8] sm:$0xff]
  %v48 = vld [vmem:[%s0 + $0xe0] sm:$0xff]
  %v49 = vld [vmem:[%s0 + $0xe8] sm:$0xff]
  %v50 = vld [vmem:[%s0 + $0xf0] sm:$0xff]
  %v51 = vld [vmem:[%s0 + $0xf8] sm:$0xff]
  %v52 = vld [vmem:[%s0 + $0x100] sm:$0xff]
  %v53 = vld [vmem:[%s0 + $0x108] sm:$0xff]
  %v54 = vld [vmem:[%s0 + $0x110] sm:$0xff]
  %v55 = vld [vmem:[%s0 + $0x118] sm:$0xff]
  %v56 = vld [vmem:[%s0 + $0x120] sm:$0xff]
  %v57 = vld [vmem:[%s0 + $0x128] sm:$0xff]
  %v58 = vld [vmem:[%s0 + $0x130] sm:$0xff]
  %v59 = vld [vmem:[%s0 + $0x138] sm:$0xff]
  %v60 = vld [vmem:[%s0 + $0x140] sm:$0xff]
  %v61 = vld [vmem:[%s0 + $0x148] sm:$0xff]
  %v62 = vld [vmem:[%s0 + $0x150] sm:$0xff]
  %v63 = vld [vmem:[%s0 + $0x158] sm:$0xff]
  %v64 = vld [vmem:[%s0 + $0x160] sm:$0xff]
  %v65 = vld [vmem:[%s0 + $0x168] sm:$0xff]
  %v66 = vld [vmem:[%s0 + $0x170] sm:$0xff]
  %v67 = vld [vmem:[%s0 + $0x178] sm:$0xff]
  %v68 = vld [vmem:[%s0 + $0x180] sm:$0xff]
  %v69 = vld [vmem:[%s0 + $0x188] sm:$0xff]
  %v70 = vld [vmem:[%s0 + $0x190] sm:$0xff]
  %v71 = vld [vmem:[%s0 + $0x198] sm:$0xff]
  %v72 = vld [vmem:[%s0 + $0x1a0] sm:$0xff]
  %v73 = vld [vmem:[%s0 + $0x1a8] sm:$0xff]
  %v74 = vld [vmem:[%s0 + $0x1b0] sm:$0xff]
  %v75 = vld [vmem:[%s0 + $0x1b8] sm:$0xff]
  %v76 = vld [vmem:[%s0 + $0x1c0] sm:$0xff]
  %v77 = vld [vmem:[%s0 + $0x1c8] sm:$0xff]
  %v78 = vld [vmem:[%s0 + $0x1d0] sm:$0xff]
  %v79 = vld [vmem:[%s0 + $0x1d8] sm:$0xff]
  %v80 = vld [vmem:[%s0 + $0x1e0] sm:$0xff]
  %v81 = vld [vmem:[%s0 + $0x1e8] sm:$0xff]
  %v82 = vld [vmem:[%s0 + $0x1f0] sm:$0xff]
  %v83 = vld [vmem:[%s0 + $0x1f8] sm:$0xff]
  %v84 = vld [vmem:[%s1] sm:$0x1]
  %v86 = vlaneseq
  %v87 = vshrl.u32 %v86, 7
  %v88 = vsub.s32 0, %v87
  %v89 = vrot.slane %v84, %v88
  %v91 = vmul.f32 %v20, %v89
  %v92 = vmul.f32 %v21, %v89
  %v93 = vmul.f32 %v22, %v89
  %v94 = vmul.f32 %v23, %v89
  %v95 = vmul.f32 %v24, %v89
  %v96 = vmul.f32 %v25, %v89
  %v97 = vmul.f32 %v26, %v89
  %v98 = vmul.f32 %v27, %v89
  %v99 = vmul.f32 %v28, %v89
  %v100 = vmul.f32 %v29, %v89
  %v101 = vmul.f32 %v30, %v89
  %v102 = vmul.f32 %v31, %v89
  %v103 = vmul.f32 %v32, %v89
  %v104 = vmul.f32 %v33, %v89
  %v105 = vmul.f32 %v34, %v89
  %v106 = vmul.f32 %v35, %v89
  %v107 = vmul.f32 %v36, %v89
  %v108 = vmul.f32 %v37, %v89
  %v109 = vmul.f32 %v38, %v89
  %v110 = vmul.f32 %v39, %v89
  %v111 = vmul.f32 %v40, %v89
  %v112 = vmul.f32 %v41, %v89
  %v113 = vmul.f32 %v42, %v89
  %v114 = vmul.f32 %v43, %v89
  %v115 = vmul.f32 %v44, %v89
  %v116 = vmul.f32 %v45, %v89
  %v117 = vmul.f32 %v46, %v89
  %v118 = vmul.f32 %v47, %v89
  %v119 = vmul.f32 %v48, %v89
  %v120 = vmul.f32 %v49, %v89
  %v121 = vmul.f32 %v50, %v89
  %v122 = vmul.f32 %v51, %v89
  %v123 = vmul.f32 %v52, %v89
  %v124 = vmul.f32 %v53, %v89
  %v125 = vmul.f32 %v54, %v89
  %v126 = vmul.f32 %v55, %v89
  %v127 = vmul.f32 %v56, %v89
  %v128 = vmul.f32 %v57, %v89
  %v129 = vmul.f32 %v58, %v89
  %v130 = vmul.f32 %v59, %v89
  %v131 = vmul.f32 %v60, %v89
  %v132 = vmul.f32 %v61, %v89
  %v133 = vmul.f32 %v62, %v89
  %v134 = vmul.f32 %v63, %v89
  %v135 = vmul.f32 %v64, %v89
  %v136 = vmul.f32 %v65, %v89
  %v137 = vmul.f32 %v66, %v89
  %v138 = vmul.f32 %v67, %v89
  %v139 = vmul.f32 %v68, %v89
  %v140 = vmul.f32 %v69, %v89
  %v141 = vmul.f32 %v70, %v89
  %v142 = vmul.f32 %v71, %v89
  %v143 = vmul.f32 %v72, %v89
  %v144 = vmul.f32 %v73, %v89
  %v145 = vmul.f32 %v74, %v89
  %v146 = vmul.f32 %v75, %v89
  %v147 = vmul.f32 %v76, %v89
  %v148 = vmul.f32 %v77, %v89
  %v149 = vmul.f32 %v78, %v89
  %v150 = vmul.f32 %v79, %v89
  %v151 = vmul.f32 %v80, %v89
  %v152 = vmul.f32 %v81, %v89
  %v153 = vmul.f32 %v82, %v89
  %v154 = vmul.f32 %v83, %v89
  %v155 = vld [vmem:[%s2] sm:$0x1]
  %v157 = vlaneseq
  %v158 = vshrl.u32 %v157, 7
  %v159 = vsub.s32 0, %v158
  %v160 = vrot.slane %v155, %v159
  %v162 = vadd.f32 %v91, %v160
  %v163 = vadd.f32 %v92, %v160
  %v164 = vadd.f32 %v93, %v160
  %v165 = vadd.f32 %v94, %v160
  %v166 = vadd.f32 %v95, %v160
  %v167 = vadd.f32 %v96, %v160
  %v168 = vadd.f32 %v97, %v160
  %v169 = vadd.f32 %v98, %v160
  %v170 = vadd.f32 %v99, %v160
  %v171 = vadd.f32 %v100, %v160
  %v172 = vadd.f32 %v101, %v160
  %v173 = vadd.f32 %v102, %v160
  %v174 = vadd.f32 %v103, %v160
  %v175 = vadd.f32 %v104, %v160
  %v176 = vadd.f32 %v105, %v160
  %v177 = vadd.f32 %v106, %v160
  %v178 = vadd.f32 %v107, %v160
  %v179 = vadd.f32 %v108, %v160
  %v180 = vadd.f32 %v109, %v160
  %v181 = vadd.f32 %v110, %v160
  %v182 = vadd.f32 %v111, %v160
  %v183 = vadd.f32 %v112, %v160
  %v184 = vadd.f32 %v113, %v160
  %v185 = vadd.f32 %v114, %v160
  %v186 = vadd.f32 %v115, %v160
  %v187 = vadd.f32 %v116, %v160
  %v188 = vadd.f32 %v117, %v160
  %v189 = vadd.f32 %v118, %v160
  %v190 = vadd.f32 %v119, %v160
  %v191 = vadd.f32 %v120, %v160
  %v192 = vadd.f32 %v121, %v160
  %v193 = vadd.f32 %v122, %v160
  %v194 = vadd.f32 %v123, %v160
  %v195 = vadd.f32 %v124, %v160
  %v196 = vadd.f32 %v125, %v160
  %v197 = vadd.f32 %v126, %v160
  %v198 = vadd.f32 %v127, %v160
  %v199 = vadd.f32 %v128, %v160
  %v200 = vadd.f32 %v129, %v160
  %v201 = vadd.f32 %v130, %v160
  %v202 = vadd.f32 %v131, %v160
  %v203 = vadd.f32 %v132, %v160
  %v204 = vadd.f32 %v133, %v160
  %v205 = vadd.f32 %v134, %v160
  %v206 = vadd.f32 %v135, %v160
  %v207 = vadd.f32 %v136, %v160
  %v208 = vadd.f32 %v137, %v160
  %v209 = vadd.f32 %v138, %v160
  %v210 = vadd.f32 %v139, %v160
  %v211 = vadd.f32 %v140, %v160
  %v212 = vadd.f32 %v141, %v160
  %v213 = vadd.f32 %v142, %v160
  %v214 = vadd.f32 %v143, %v160
  %v215 = vadd.f32 %v144, %v160
  %v216 = vadd.f32 %v145, %v160
  %v217 = vadd.f32 %v146, %v160
  %v218 = vadd.f32 %v147, %v160
  %v219 = vadd.f32 %v148, %v160
  %v220 = vadd.f32 %v149, %v160
  %v221 = vadd.f32 %v150, %v160
  %v222 = vadd.f32 %v151, %v160
  %v223 = vadd.f32 %v152, %v160
  %v224 = vadd.f32 %v153, %v160
  %v225 = vadd.f32 %v154, %v160
  %v226 = vmax.f32 %v162, 0.0
  %v227 = vmax.f32 %v163, 0.0
  %v228 = vmax.f32 %v164, 0.0
  %v229 = vmax.f32 %v165, 0.0
  %v230 = vmax.f32 %v166, 0.0
  %v231 = vmax.f32 %v167, 0.0
  %v232 = vmax.f32 %v168, 0.0
  %v233 = vmax.f32 %v169, 0.0
  %v234 = vmax.f32 %v170, 0.0
  %v235 = vmax.f32 %v171, 0.0
  %v236 = vmax.f32 %v172, 0.0
  %v237 = vmax.f32 %v173, 0.0
  %v238 = vmax.f32 %v174, 0.0
  %v239 = vmax.f32 %v175, 0.0
  %v240 = vmax.f32 %v176, 0.0
  %v241 = vmax.f32 %v177, 0.0
  %v242 = vmax.f32 %v178, 0.0
  %v243 = vmax.f32 %v179, 0.0
  %v244 = vmax.f32 %v180, 0.0
  %v245 = vmax.f32 %v181, 0.0
  %v246 = vmax.f32 %v182, 0.0
  %v247 = vmax.f32 %v183, 0.0
  %v248 = vmax.f32 %v184, 0.0
  %v249 = vmax.f32 %v185, 0.0
  %v250 = vmax.f32 %v186, 0.0
  %v251 = vmax.f32 %v187, 0.0
  %v252 = vmax.f32 %v188, 0.0
  %v253 = vmax.f32 %v189, 0.0
  %v254 = vmax.f32 %v190, 0.0
  %v255 = vmax.f32 %v191, 0.0
  %v256 = vmax.f32 %v192, 0.0
  %v257 = vmax.f32 %v193, 0.0
  %v258 = vmax.f32 %v194, 0.0
  %v259 = vmax.f32 %v195, 0.0
  %v260 = vmax.f32 %v196, 0.0
  %v261 = vmax.f32 %v197, 0.0
  %v262 = vmax.f32 %v198, 0.0
  %v263 = vmax.f32 %v199, 0.0
  %v264 = vmax.f32 %v200, 0.0
  %v265 = vmax.f32 %v201, 0.0
  %v266 = vmax.f32 %v202, 0.0
  %v267 = vmax.f32 %v203, 0.0
  %v268 = vmax.f32 %v204, 0.0
  %v269 = vmax.f32 %v205, 0.0
  %v270 = vmax.f32 %v206, 0.0
  %v271 = vmax.f32 %v207, 0.0
  %v272 = vmax.f32 %v208, 0.0
  %v273 = vmax.f32 %v209, 0.0
  %v274 = vmax.f32 %v210, 0.0
  %v275 = vmax.f32 %v211, 0.0
  %v276 = vmax.f32 %v212, 0.0
  %v277 = vmax.f32 %v213, 0.0
  %v278 = vmax.f32 %v214, 0.0
  %v279 = vmax.f32 %v215, 0.0
  %v280 = vmax.f32 %v216, 0.0
  %v281 = vmax.f32 %v217, 0.0
  %v282 = vmax.f32 %v218, 0.0
  %v283 = vmax.f32 %v219, 0.0
  %v284 = vmax.f32 %v220, 0.0
  %v285 = vmax.f32 %v221, 0.0
  %v286 = vmax.f32 %v222, 0.0
  %v287 = vmax.f32 %v223, 0.0
  %v288 = vmax.f32 %v224, 0.0
  %v289 = vmax.f32 %v225, 0.0
  %v290 = vld [vmem:[%s3] sm:$0xff]
  %v291 = vld [vmem:[%s3 + $0x8] sm:$0xff]
  %v292 = vld [vmem:[%s3 + $0x10] sm:$0xff]
  %v293 = vld [vmem:[%s3 + $0x18] sm:$0xff]
  %v294 = vld [vmem:[%s3 + $0x20] sm:$0xff]
  %v295 = vld [vmem:[%s3 + $0x28] sm:$0xff]
  %v296 = vld [vmem:[%s3 + $0x30] sm:$0xff]
  %v297 = vld [vmem:[%s3 + $0x38] sm:$0xff]
  %v298 = vld [vmem:[%s3 + $0x40] sm:$0xff]
  %v299 = vld [vmem:[%s3 + $0x48] sm:$0xff]
  %v300 = vld [vmem:[%s3 + $0x50] sm:$0xff]
  %v301 = vld [vmem:[%s3 + $0x58] sm:$0xff]
  %v302 = vld [vmem:[%s3 + $0x60] sm:$0xff]
  %v303 = vld [vmem:[%s3 + $0x68] sm:$0xff]
  %v304 = vld [vmem:[%s3 + $0x70] sm:$0xff]
  %v305 = vld [vmem:[%s3 + $0x78] sm:$0xff]
  %306 = vmatprep.subr.mxu0 0.0
  %307 = vmatpush1.msra.mxu0 %v290
  %308 = vmatprep.subr.mxu0 0.0
  %309 = vmatpush1.msra.mxu0 %v291
  %310 = vmatprep.subr.mxu0 0.0
  %311 = vmatpush1.msra.mxu0 %v292
  %312 = vmatprep.subr.mxu0 0.0
  %313 = vmatpush1.msra.mxu0 %v293
  %314 = vmatprep.subr.mxu0 0.0
  %315 = vmatpush1.msra.mxu0 %v294
  %316 = vmatprep.subr.mxu0 0.0
  %317 = vmatpush1.msra.mxu0 %v295
  %318 = vmatprep.subr.mxu0 0.0
  %319 = vmatpush1.msra.mxu0 %v296
  %320 = vmatprep.subr.mxu0 0.0
  %321 = vmatpush1.msra.mxu0 %v297
  %322 = vmatprep.subr.mxu0 0.0
  %323 = vmatpush1.msra.mxu0 %v298
  %324 = vmatprep.subr.mxu0 0.0
  %325 = vmatpush1.msra.mxu0 %v299
  %326 = vmatprep.subr.mxu0 0.0
  %327 = vmatpush1.msra.mxu0 %v300
  %328 = vmatprep.subr.mxu0 0.0
  %329 = vmatpush1.msra.mxu0 %v301
  %330 = vmatprep.subr.mxu0 0.0
  %331 = vmatpush1.msra.mxu0 %v302
  %332 = vmatprep.subr.mxu0 0.0
  %333 = vmatpush1.msra.mxu0 %v303
  %334 = vmatprep.subr.mxu0 0.0
  %335 = vmatpush1.msra.mxu0 %v304
  %336 = vmatprep.subr.mxu0 0.0
  %337 = vmatpush1.msra.mxu0 %v305
  %338 = vmatprep.subr.mxu0 0.0
  %339 = vmatpush1.msra.mxu0 0.0
  %340 = vmatprep.subr.mxu0 0.0
  %341 = vmatpush1.msra.mxu0 0.0
  %342 = vmatprep.subr.mxu0 0.0
  %343 = vmatpush1.msra.mxu0 0.0
  %344 = vmatprep.subr.mxu0 0.0
  %345 = vmatpush1.msra.mxu0 0.0
  %346 = vmatprep.subr.mxu0 0.0
  %347 = vmatpush1.msra.mxu0 0.0
  %348 = vmatprep.subr.mxu0 0.0
  %349 = vmatpush1.msra.mxu0 0.0
  %350 = vmatprep.subr.mxu0 0.0
  %351 = vmatpush1.msra.mxu0 0.0
  %352 = vmatprep.subr.mxu0 0.0
  %353 = vmatpush1.msra.mxu0 0.0
  %354 = vmatprep.subr.mxu0 0.0
  %355 = vmatpush1.msra.mxu0 0.0
  %356 = vmatprep.subr.mxu0 0.0
  %357 = vmatpush1.msra.mxu0 0.0
  %358 = vmatprep.subr.mxu0 0.0
  %359 = vmatpush1.msra.mxu0 0.0
  %360 = vmatprep.subr.mxu0 0.0
  %361 = vmatpush1.msra.mxu0 0.0
  %362 = vmatprep.subr.mxu0 0.0
  %363 = vmatpush1.msra.mxu0 0.0
  %364 = vmatprep.subr.mxu0 0.0
  %365 = vmatpush1.msra.mxu0 0.0
  %366 = vmatprep.subr.mxu0 0.0
  %367 = vmatpush1.msra.mxu0 0.0
  %368 = vmatprep.subr.mxu0 0.0
  %369 = vmatpush1.msra.mxu0 0.0
  %370 = vmatprep.mubr.f32.mxu0 0.0
  %371 = vmatmul.mubr.f32.gmra.mrb[0].mxu0 %v226
  %v372 = vpop.f32.mrb[0].mxu0
  %v373 = vadd.f32 0.0, %v372
  %v374 = vpop.f32.mrb[0].mxu0
  %375 = vmatprep.mubr.f32.mxu0 0.0
  %376 = vmatmul.mubr.f32.gmra.mrb[0].mxu0 %v227
  %v377 = vpop.f32.mrb[0].mxu0
  %v378 = vadd.f32 0.0, %v377
  %v379 = vpop.f32.mrb[0].mxu0
  %380 = vmatprep.mubr.f32.mxu0 0.0
  %381 = vmatmul.mubr.f32.gmra.mrb[0].mxu0 %v228
  %v382 = vpop.f32.mrb[0].mxu0
  %v383 = vadd.f32 0.0, %v382
  %v384 = vpop.f32.mrb[0].mxu0
  %385 = vmatprep.mubr.f32.mxu0 0.0
  %386 = vmatmul.mubr.f32.gmra.mrb[0].mxu0 %v229
  %v387 = vpop.f32.mrb[0].mxu0
  %v388 = vadd.f32 0.0, %v387
  %v389 = vpop.f32.mrb[0].mxu0
  %390 = vmatprep.mubr.f32.mxu0 0.0
  %391 = vmatmul.mubr.f32.gmra.mrb[0].mxu0 %v230
  %v392 = vpop.f32.mrb[0].mxu0
  %v393 = vadd.f32 0.0, %v392
  %v394 = vpop.f32.mrb[0].mxu0
  %395 = vmatprep.mubr.f32.mxu0 0.0
  %396 = vmatmul.mubr.f32.gmra.mrb[0].mxu0 %v231
  %v397 = vpop.f32.mrb[0].mxu0
  %v398 = vadd.f32 0.0, %v397
  %v399 = vpop.f32.mrb[0].mxu0
  %400 = vmatprep.mubr.f32.mxu0 0.0
  %401 = vmatmul.mubr.f32.gmra.mrb[0].mxu0 %v232
  %v402 = vpop.f32.mrb[0].mxu0
  %v403 = vadd.f32 0.0, %v402
  %v404 = vpop.f32.mrb[0].mxu0
  %405 = vmatprep.mubr.f32.mxu0 0.0
  %406 = vmatmul.mubr.f32.gmra.mrb[0].mxu0 %v233
  %v407 = vpop.f32.mrb[0].mxu0
  %v408 = vadd.f32 0.0, %v407
  %v409 = vpop.f32.mrb[0].mxu0
  %410 = vmatprep.mubr.f32.mxu0 0.0
  %411 = vmatmul.mubr.f32.gmra.mrb[0].mxu0 %v234
  %v412 = vpop.f32.mrb[0].mxu0
  %v413 = vadd.f32 0.0, %v412
  %v414 = vpop.f32.mrb[0].mxu0
  %415 = vmatprep.mubr.f32.mxu0 0.0
  %416 = vmatmul.mubr.f32.gmra.mrb[0].mxu0 %v235
  %v417 = vpop.f32.mrb[0].mxu0
  %v418 = vadd.f32 0.0, %v417
  %v419 = vpop.f32.mrb[0].mxu0
  %420 = vmatprep.mubr.f32.mxu0 0.0
  %421 = vmatmul.mubr.f32.gmra.mrb[0].mxu0 %v236
  %v422 = vpop.f32.mrb[0].mxu0
  %v423 = vadd.f32 0.0, %v422
  %v424 = vpop.f32.mrb[0].mxu0
  %425 = vmatprep.mubr.f32.mxu0 0.0
  %426 = vmatmul.mubr.f32.gmra.mrb[0].mxu0 %v237
  %v427 = vpop.f32.mrb[0].mxu0
  %v428 = vadd.f32 0.0, %v427
  %v429 = vpop.f32.mrb[0].mxu0
  %430 = vmatprep.mubr.f32.mxu0 0.0
  %431 = vmatmul.mubr.f32.gmra.mrb[0].mxu0 %v238
  %v432 = vpop.f32.mrb[0].mxu0
  %v433 = vadd.f32 0.0, %v432
  %v434 = vpop.f32.mrb[0].mxu0
  %435 = vmatprep.mubr.f32.mxu0 0.0
  %436 = vmatmul.mubr.f32.gmra.mrb[0].mxu0 %v239
  %v437 = vpop.f32.mrb[0].mxu0
  %v438 = vadd.f32 0.0, %v437
  %v439 = vpop.f32.mrb[0].mxu0
  %440 = vmatprep.mubr.f32.mxu0 0.0
  %441 = vmatmul.mubr.f32.gmra.mrb[0].mxu0 %v240
  %v442 = vpop.f32.mrb[0].mxu0
  %v443 = vadd.f32 0.0, %v442
  %v444 = vpop.f32.mrb[0].mxu0
  %445 = vmatprep.mubr.f32.mxu0 0.0
  %446 = vmatmul.mubr.f32.gmra.mrb[0].mxu0 %v241
  %v447 = vpop.f32.mrb[0].mxu0
  %v448 = vadd.f32 0.0, %v447
  %v449 = vpop.f32.mrb[0].mxu0
  %450 = vmatprep.mubr.f32.mxu0 0.0
  %451 = vmatmul.mubr.f32.gmra.mrb[0].mxu0 %v242
  %v452 = vpop.f32.mrb[0].mxu0
  %v453 = vadd.f32 0.0, %v452
  %v454 = vpop.f32.mrb[0].mxu0
  %455 = vmatprep.mubr.f32.mxu0 0.0
  %456 = vmatmul.mubr.f32.gmra.mrb[0].mxu0 %v243
  %v457 = vpop.f32.mrb[0].mxu0
  %v458 = vadd.f32 0.0, %v457
  %v459 = vpop.f32.mrb[0].mxu0
  %460 = vmatprep.mubr.f32.mxu0 0.0
  %461 = vmatmul.mubr.f32.gmra.mrb[0].mxu0 %v244
  %v462 = vpop.f32.mrb[0].mxu0
  %v463 = vadd.f32 0.0, %v462
  %v464 = vpop.f32.mrb[0].mxu0
  %465 = vmatprep.mubr.f32.mxu0 0.0
  %466 = vmatmul.mubr.f32.gmra.mrb[0].mxu0 %v245
  %v467 = vpop.f32.mrb[0].mxu0
  %v468 = vadd.f32 0.0, %v467
  %v469 = vpop.f32.mrb[0].mxu0
  %470 = vmatprep.mubr.f32.mxu0 0.0
  %471 = vmatmul.mubr.f32.gmra.mrb[0].mxu0 %v246
  %v472 = vpop.f32.mrb[0].mxu0
  %v473 = vadd.f32 0.0, %v472
  %v474 = vpop.f32.mrb[0].mxu0
  %475 = vmatprep.mubr.f32.mxu0 0.0
  %476 = vmatmul.mubr.f32.gmra.mrb[0].mxu0 %v247
  %v477 = vpop.f32.mrb[0].mxu0
  %v478 = vadd.f32 0.0, %v477
  %v479 = vpop.f32.mrb[0].mxu0
  %480 = vmatprep.mubr.f32.mxu0 0.0
  %481 = vmatmul.mubr.f32.gmra.mrb[0].mxu0 %v248
  %v482 = vpop.f32.mrb[0].mxu0
  %v483 = vadd.f32 0.0, %v482
  %v484 = vpop.f32.mrb[0].mxu0
  %485 = vmatprep.mubr.f32.mxu0 0.0
  %486 = vmatmul.mubr.f32.gmra.mrb[0].mxu0 %v249
  %v487 = vpop.f32.mrb[0].mxu0
  %v488 = vadd.f32 0.0, %v487
  %v489 = vpop.f32.mrb[0].mxu0
  %490 = vmatprep.mubr.f32.mxu0 0.0
  %491 = vmatmul.mubr.f32.gmra.mrb[0].mxu0 %v250
  %v492 = vpop.f32.mrb[0].mxu0
  %v493 = vadd.f32 0.0, %v492
  %v494 = vpop.f32.mrb[0].mxu0
  %495 = vmatprep.mubr.f32.mxu0 0.0
  %496 = vmatmul.mubr.f32.gmra.mrb[0].mxu0 %v251
  %v497 = vpop.f32.mrb[0].mxu0
  %v498 = vadd.f32 0.0, %v497
  %v499 = vpop.f32.mrb[0].mxu0
  %500 = vmatprep.mubr.f32.mxu0 0.0
  %501 = vmatmul.mubr.f32.gmra.mrb[0].mxu0 %v252
  %v502 = vpop.f32.mrb[0].mxu0
  %v503 = vadd.f32 0.0, %v502
  %v504 = vpop.f32.mrb[0].mxu0
  %505 = vmatprep.mubr.f32.mxu0 0.0
  %506 = vmatmul.mubr.f32.gmra.mrb[0].mxu0 %v253
  %v507 = vpop.f32.mrb[0].mxu0
  %v508 = vadd.f32 0.0, %v507
  %v509 = vpop.f32.mrb[0].mxu0
  %510 = vmatprep.mubr.f32.mxu0 0.0
  %511 = vmatmul.mubr.f32.gmra.mrb[0].mxu0 %v254
  %v512 = vpop.f32.mrb[0].mxu0
  %v513 = vadd.f32 0.0, %v512
  %v514 = vpop.f32.mrb[0].mxu0
  %515 = vmatprep.mubr.f32.mxu0 0.0
  %516 = vmatmul.mubr.f32.gmra.mrb[0].mxu0 %v255
  %v517 = vpop.f32.mrb[0].mxu0
  %v518 = vadd.f32 0.0, %v517
  %v519 = vpop.f32.mrb[0].mxu0
  %520 = vmatprep.mubr.f32.mxu0 0.0
  %521 = vmatmul.mubr.f32.gmra.mrb[0].mxu0 %v256
  %v522 = vpop.f32.mrb[0].mxu0
  %v523 = vadd.f32 0.0, %v522
  %v524 = vpop.f32.mrb[0].mxu0
  %525 = vmatprep.mubr.f32.mxu0 0.0
  %526 = vmatmul.mubr.f32.gmra.mrb[0].mxu0 %v257
  %v527 = vpop.f32.mrb[0].mxu0
  %v528 = vadd.f32 0.0, %v527
  %v529 = vpop.f32.mrb[0].mxu0
  %530 = vmatprep.mubr.f32.mxu0 0.0
  %531 = vmatmul.mubr.f32.gmra.mrb[0].mxu0 %v258
  %v532 = vpop.f32.mrb[0].mxu0
  %v533 = vadd.f32 0.0, %v532
  %v534 = vpop.f32.mrb[0].mxu0
  %535 = vmatprep.mubr.f32.mxu0 0.0
  %536 = vmatmul.mubr.f32.gmra.mrb[0].mxu0 %v259
  %v537 = vpop.f32.mrb[0].mxu0
  %v538 = vadd.f32 0.0, %v537
  %v539 = vpop.f32.mrb[0].mxu0
  %540 = vmatprep.mubr.f32.mxu0 0.0
  %541 = vmatmul.mubr.f32.gmra.mrb[0].mxu0 %v260
  %v542 = vpop.f32.mrb[0].mxu0
  %v543 = vadd.f32 0.0, %v542
  %v544 = vpop.f32.mrb[0].mxu0
  %545 = vmatprep.mubr.f32.mxu0 0.0
  %546 = vmatmul.mubr.f32.gmra.mrb[0].mxu0 %v261
  %v547 = vpop.f32.mrb[0].mxu0
  %v548 = vadd.f32 0.0, %v547
  %v549 = vpop.f32.mrb[0].mxu0
  %550 = vmatprep.mubr.f32.mxu0 0.0
  %551 = vmatmul.mubr.f32.gmra.mrb[0].mxu0 %v262
  %v552 = vpop.f32.mrb[0].mxu0
  %v553 = vadd.f32 0.0, %v552
  %v554 = vpop.f32.mrb[0].mxu0
  %555 = vmatprep.mubr.f32.mxu0 0.0
  %556 = vmatmul.mubr.f32.gmra.mrb[0].mxu0 %v263
  %v557 = vpop.f32.mrb[0].mxu0
  %v558 = vadd.f32 0.0, %v557
  %v559 = vpop.f32.mrb[0].mxu0
  %560 = vmatprep.mubr.f32.mxu0 0.0
  %561 = vmatmul.mubr.f32.gmra.mrb[0].mxu0 %v264
  %v562 = vpop.f32.mrb[0].mxu0
  %v563 = vadd.f32 0.0, %v562
  %v564 = vpop.f32.mrb[0].mxu0
  %565 = vmatprep.mubr.f32.mxu0 0.0
  %566 = vmatmul.mubr.f32.gmra.mrb[0].mxu0 %v265
  %v567 = vpop.f32.mrb[0].mxu0
  %v568 = vadd.f32 0.0, %v567
  %v569 = vpop.f32.mrb[0].mxu0
  %570 = vmatprep.mubr.f32.mxu0 0.0
  %571 = vmatmul.mubr.f32.gmra.mrb[0].mxu0 %v266
  %v572 = vpop.f32.mrb[0].mxu0
  %v573 = vadd.f32 0.0, %v572
  %v574 = vpop.f32.mrb[0].mxu0
  %575 = vmatprep.mubr.f32.mxu0 0.0
  %576 = vmatmul.mubr.f32.gmra.mrb[0].mxu0 %v267
  %v577 = vpop.f32.mrb[0].mxu0
  %v578 = vadd.f32 0.0, %v577
  %v579 = vpop.f32.mrb[0].mxu0
  %580 = vmatprep.mubr.f32.mxu0 0.0
  %581 = vmatmul.mubr.f32.gmra.mrb[0].mxu0 %v268
  %v582 = vpop.f32.mrb[0].mxu0
  %v583 = vadd.f32 0.0, %v582
  %v584 = vpop.f32.mrb[0].mxu0
  %585 = vmatprep.mubr.f32.mxu0 0.0
  %586 = vmatmul.mubr.f32.gmra.mrb[0].mxu0 %v269
  %v587 = vpop.f32.mrb[0].mxu0
  %v588 = vadd.f32 0.0, %v587
  %v589 = vpop.f32.mrb[0].mxu0
  %590 = vmatprep.mubr.f32.mxu0 0.0
  %591 = vmatmul.mubr.f32.gmra.mrb[0].mxu0 %v270
  %v592 = vpop.f32.mrb[0].mxu0
  %v593 = vadd.f32 0.0, %v592
  %v594 = vpop.f32.mrb[0].mxu0
  %595 = vmatprep.mubr.f32.mxu0 0.0
  %596 = vmatmul.mubr.f32.gmra.mrb[0].mxu0 %v271
  %v597 = vpop.f32.mrb[0].mxu0
  %v598 = vadd.f32 0.0, %v597
  %v599 = vpop.f32.mrb[0].mxu0
  %600 = vmatprep.mubr.f32.mxu0 0.0
  %601 = vmatmul.mubr.f32.gmra.mrb[0].mxu0 %v272
  %v602 = vpop.f32.mrb[0].mxu0
  %v603 = vadd.f32 0.0, %v602
  %v604 = vpop.f32.mrb[0].mxu0
  %605 = vmatprep.mubr.f32.mxu0 0.0
  %606 = vmatmul.mubr.f32.gmra.mrb[0].mxu0 %v273
  %v607 = vpop.f32.mrb[0].mxu0
  %v608 = vadd.f32 0.0, %v607
  %v609 = vpop.f32.mrb[0].mxu0
  %610 = vmatprep.mubr.f32.mxu0 0.0
  %611 = vmatmul.mubr.f32.gmra.mrb[0].mxu0 %v274
  %v612 = vpop.f32.mrb[0].mxu0
  %v613 = vadd.f32 0.0, %v612
  %v614 = vpop.f32.mrb[0].mxu0
  %615 = vmatprep.mubr.f32.mxu0 0.0
  %616 = vmatmul.mubr.f32.gmra.mrb[0].mxu0 %v275
  %v617 = vpop.f32.mrb[0].mxu0
  %v618 = vadd.f32 0.0, %v617
  %v619 = vpop.f32.mrb[0].mxu0
  %620 = vmatprep.mubr.f32.mxu0 0.0
  %621 = vmatmul.mubr.f32.gmra.mrb[0].mxu0 %v276
  %v622 = vpop.f32.mrb[0].mxu0
  %v623 = vadd.f32 0.0, %v622
  %v624 = vpop.f32.mrb[0].mxu0
  %625 = vmatprep.mubr.f32.mxu0 0.0
  %626 = vmatmul.mubr.f32.gmra.mrb[0].mxu0 %v277
  %v627 = vpop.f32.mrb[0].mxu0
  %v628 = vadd.f32 0.0, %v627
  %v629 = vpop.f32.mrb[0].mxu0
  %630 = vmatprep.mubr.f32.mxu0 0.0
  %631 = vmatmul.mubr.f32.gmra.mrb[0].mxu0 %v278
  %v632 = vpop.f32.mrb[0].mxu0
  %v633 = vadd.f32 0.0, %v632
  %v634 = vpop.f32.mrb[0].mxu0
  %635 = vmatprep.mubr.f32.mxu0 0.0
  %636 = vmatmul.mubr.f32.gmra.mrb[0].mxu0 %v279
  %v637 = vpop.f32.mrb[0].mxu0
  %v638 = vadd.f32 0.0, %v637
  %v639 = vpop.f32.mrb[0].mxu0
  %640 = vmatprep.mubr.f32.mxu0 0.0
  %641 = vmatmul.mubr.f32.gmra.mrb[0].mxu0 %v280
  %v642 = vpop.f32.mrb[0].mxu0
  %v643 = vadd.f32 0.0, %v642
  %v644 = vpop.f32.mrb[0].mxu0
  %645 = vmatprep.mubr.f32.mxu0 0.0
  %646 = vmatmul.mubr.f32.gmra.mrb[0].mxu0 %v281
  %v647 = vpop.f32.mrb[0].mxu0
  %v648 = vadd.f32 0.0, %v647
  %v649 = vpop.f32.mrb[0].mxu0
  %650 = vmatprep.mubr.f32.mxu0 0.0
  %651 = vmatmul.mubr.f32.gmra.mrb[0].mxu0 %v282
  %v652 = vpop.f32.mrb[0].mxu0
  %v653 = vadd.f32 0.0, %v652
  %v654 = vpop.f32.mrb[0].mxu0
  %655 = vmatprep.mubr.f32.mxu0 0.0
  %656 = vmatmul.mubr.f32.gmra.mrb[0].mxu0 %v283
  %v657 = vpop.f32.mrb[0].mxu0
  %v658 = vadd.f32 0.0, %v657
  %v659 = vpop.f32.mrb[0].mxu0
  %660 = vmatprep.mubr.f32.mxu0 0.0
  %661 = vmatmul.mubr.f32.gmra.mrb[0].mxu0 %v284
  %v662 = vpop.f32.mrb[0].mxu0
  %v663 = vadd.f32 0.0, %v662
  %v664 = vpop.f32.mrb[0].mxu0
  %665 = vmatprep.mubr.f32.mxu0 0.0
  %666 = vmatmul.mubr.f32.gmra.mrb[0].mxu0 %v285
  %v667 = vpop.f32.mrb[0].mxu0
  %v668 = vadd.f32 0.0, %v667
  %v669 = vpop.f32.mrb[0].mxu0
  %670 = vmatprep.mubr.f32.mxu0 0.0
  %671 = vmatmul.mubr.f32.gmra.mrb[0].mxu0 %v286
  %v672 = vpop.f32.mrb[0].mxu0
  %v673 = vadd.f32 0.0, %v672
  %v674 = vpop.f32.mrb[0].mxu0
  %675 = vmatprep.mubr.f32.mxu0 0.0
  %676 = vmatmul.mubr.f32.gmra.mrb[0].mxu0 %v287
  %v677 = vpop.f32.mrb[0].mxu0
  %v678 = vadd.f32 0.0, %v677
  %v679 = vpop.f32.mrb[0].mxu0
  %680 = vmatprep.mubr.f32.mxu0 0.0
  %681 = vmatmul.mubr.f32.gmra.mrb[0].mxu0 %v288
  %v682 = vpop.f32.mrb[0].mxu0
  %v683 = vadd.f32 0.0, %v682
  %v684 = vpop.f32.mrb[0].mxu0
  %685 = vmatprep.mubr.f32.mxu0 0.0
  %686 = vmatmul.mubr.f32.gmra.mrb[0].mxu0 %v289
  %v687 = vpop.f32.mrb[0].mxu0
  %v688 = vadd.f32 0.0, %v687
  %v689 = vpop.f32.mrb[0].mxu0
  %690 = vdwg.mxu0
  %691 = vst [vmem:[%s4] sm:$0xff] %v373
  %692 = vst [vmem:[%s4 + $0x8] sm:$0xff] %v378
  %693 = vst [vmem:[%s4 + $0x10] sm:$0xff] %v383
  %694 = vst [vmem:[%s4 + $0x18] sm:$0xff] %v388
  %695 = vst [vmem:[%s4 + $0x20] sm:$0xff] %v393
  %696 = vst [vmem:[%s4 + $0x28] sm:$0xff] %v398
  %697 = vst [vmem:[%s4 + $0x30] sm:$0xff] %v403
  %698 = vst [vmem:[%s4 + $0x38] sm:$0xff] %v408
  %699 = vst [vmem:[%s4 + $0x40] sm:$0xff] %v413
  %700 = vst [vmem:[%s4 + $0x48] sm:$0xff] %v418
  %701 = vst [vmem:[%s4 + $0x50] sm:$0xff] %v423
  %702 = vst [vmem:[%s4 + $0x58] sm:$0xff] %v428
  %703 = vst [vmem:[%s4 + $0x60] sm:$0xff] %v433
  %704 = vst [vmem:[%s4 + $0x68] sm:$0xff] %v438
  %705 = vst [vmem:[%s4 + $0x70] sm:$0xff] %v443
  %706 = vst [vmem:[%s4 + $0x78] sm:$0xff] %v448
  %707 = vst [vmem:[%s4 + $0x80] sm:$0xff] %v453
  %708 = vst [vmem:[%s4 + $0x88] sm:$0xff] %v458
  %709 = vst [vmem:[%s4 + $0x90] sm:$0xff] %v463
  %710 = vst [vmem:[%s4 + $0x98] sm:$0xff] %v468
  %711 = vst [vmem:[%s4 + $0xa0] sm:$0xff] %v473
  %712 = vst [vmem:[%s4 + $0xa8] sm:$0xff] %v478
  %713 = vst [vmem:[%s4 + $0xb0] sm:$0xff] %v483
  %714 = vst [vmem:[%s4 + $0xb8] sm:$0xff] %v488
  %715 = vst [vmem:[%s4 + $0xc0] sm:$0xff] %v493
  %716 = vst [vmem:[%s4 + $0xc8] sm:$0xff] %v498
  %717 = vst [vmem:[%s4 + $0xd0] sm:$0xff] %v503
  %718 = vst [vmem:[%s4 + $0xd8] sm:$0xff] %v508
  %719 = vst [vmem:[%s4 + $0xe0] sm:$0xff] %v513
  %720 = vst [vmem:[%s4 + $0xe8] sm:$0xff] %v518
  %721 = vst [vmem:[%s4 + $0xf0] sm:$0xff] %v523
  %722 = vst [vmem:[%s4 + $0xf8] sm:$0xff] %v528
  %723 = vst [vmem:[%s4 + $0x100] sm:$0xff] %v533
  %724 = vst [vmem:[%s4 + $0x108] sm:$0xff] %v538
  %725 = vst [vmem:[%s4 + $0x110] sm:$0xff] %v543
  %726 = vst [vmem:[%s4 + $0x118] sm:$0xff] %v548
  %727 = vst [vmem:[%s4 + $0x120] sm:$0xff] %v553
  %728 = vst [vmem:[%s4 + $0x128] sm:$0xff] %v558
  %729 = vst [vmem:[%s4 + $0x130] sm:$0xff] %v563
  %730 = vst [vmem:[%s4 + $0x138] sm:$0xff] %v568
  %731 = vst [vmem:[%s4 + $0x140] sm:$0xff] %v573
  %732 = vst [vmem:[%s4 + $0x148] sm:$0xff] %v578
  %733 = vst [vmem:[%s4 + $0x150] sm:$0xff] %v583
  %734 = vst [vmem:[%s4 + $0x158] sm:$0xff] %v588
  %735 = vst [vmem:[%s4 + $0x160] sm:$0xff] %v593
  %736 = vst [vmem:[%s4 + $0x168] sm:$0xff] %v598
  %737 = vst [vmem:[%s4 + $0x170] sm:$0xff] %v603
  %738 = vst [vmem:[%s4 + $0x178] sm:$0xff] %v608
  %739 = vst [vmem:[%s4 + $0x180] sm:$0xff] %v613
  %740 = vst [vmem:[%s4 + $0x188] sm:$0xff] %v618
  %741 = vst [vmem:[%s4 + $0x190] sm:$0xff] %v623
  %742 = vst [vmem:[%s4 + $0x198] sm:$0xff] %v628
  %743 = vst [vmem:[%s4 + $0x1a0] sm:$0xff] %v633
  %744 = vst [vmem:[%s4 + $0x1a8] sm:$0xff] %v638
  %745 = vst [vmem:[%s4 + $0x1b0] sm:$0xff] %v643
  %746 = vst [vmem:[%s4 + $0x1b8] sm:$0xff] %v648
  %747 = vst [vmem:[%s4 + $0x1c0] sm:$0xff] %v653
  %748 = vst [vmem:[%s4 + $0x1c8] sm:$0xff] %v658
  %749 = vst [vmem:[%s4 + $0x1d0] sm:$0xff] %v663
  %750 = vst [vmem:[%s4 + $0x1d8] sm:$0xff] %v668
  %751 = vst [vmem:[%s4 + $0x1e0] sm:$0xff] %v673
  %752 = vst [vmem:[%s4 + $0x1e8] sm:$0xff] %v678
  %753 = vst [vmem:[%s4 + $0x1f0] sm:$0xff] %v683
  %754 = vst [vmem:[%s4 + $0x1f8] sm:$0xff] %v688
  %v755 = vadd.f32 %v373, %v378
  %v756 = vadd.f32 %v755, %v383
  %v757 = vadd.f32 %v756, %v388
  %v758 = vadd.f32 %v757, %v393
  %v759 = vadd.f32 %v758, %v398
  %v760 = vadd.f32 %v759, %v403
  %v761 = vadd.f32 %v760, %v408
  %v762 = vadd.f32 %v761, %v413
  %v763 = vadd.f32 %v762, %v418
  %v764 = vadd.f32 %v763, %v423
  %v765 = vadd.f32 %v764, %v428
  %v766 = vadd.f32 %v765, %v433
  %v767 = vadd.f32 %v766, %v438
  %v768 = vadd.f32 %v767, %v443
  %v769 = vadd.f32 %v768, %v448
  %v770 = vadd.f32 %v769, %v453
  %v771 = vadd.f32 %v770, %v458
  %v772 = vadd.f32 %v771, %v463
  %v773 = vadd.f32 %v772, %v468
  %v774 = vadd.f32 %v773, %v473
  %v775 = vadd.f32 %v774, %v478
  %v776 = vadd.f32 %v775, %v483
  %v777 = vadd.f32 %v776, %v488
  %v778 = vadd.f32 %v777, %v493
  %v779 = vadd.f32 %v778, %v498
  %v780 = vadd.f32 %v779, %v503
  %v781 = vadd.f32 %v780, %v508
  %v782 = vadd.f32 %v781, %v513
  %v783 = vadd.f32 %v782, %v518
  %v784 = vadd.f32 %v783, %v523
  %v785 = vadd.f32 %v784, %v528
  %v786 = vadd.f32 %v785, %v533
  %v787 = vadd.f32 %v786, %v538
  %v788 = vadd.f32 %v787, %v543
  %v789 = vadd.f32 %v788, %v548
  %v790 = vadd.f32 %v789, %v553
  %v791 = vadd.f32 %v790, %v558
  %v792 = vadd.f32 %v791, %v563
  %v793 = vadd.f32 %v792, %v568
  %v794 = vadd.f32 %v793, %v573
  %v795 = vadd.f32 %v794, %v578
  %v796 = vadd.f32 %v795, %v583
  %v797 = vadd.f32 %v796, %v588
  %v798 = vadd.f32 %v797, %v593
  %v799 = vadd.f32 %v798, %v598
  %v800 = vadd.f32 %v799, %v603
  %v801 = vadd.f32 %v800, %v608
  %v802 = vadd.f32 %v801, %v613
  %v803 = vadd.f32 %v802, %v618
  %v804 = vadd.f32 %v803, %v623
  %v805 = vadd.f32 %v804, %v628
  %v806 = vadd.f32 %v805, %v633
  %v807 = vadd.f32 %v806, %v638
  %v808 = vadd.f32 %v807, %v643
  %v809 = vadd.f32 %v808, %v648
  %v810 = vadd.f32 %v809, %v653
  %v811 = vadd.f32 %v810, %v658
  %v812 = vadd.f32 %v811, %v663
  %v813 = vadd.f32 %v812, %v668
  %v814 = vadd.f32 %v813, %v673
  %v815 = vadd.f32 %v814, %v678
  %v816 = vadd.f32 %v815, %v683
  %v817 = vadd.f32 %v816, %v688
  %v818 = vrot.slane %v817, 4
  %v819 = vadd.f32 %v817, %v818
  %v820 = vrot.slane %v819, 2
  %v821 = vadd.f32 %v819, %v820
  %v822 = vrot.slane %v821, 1
  %v823 = vadd.f32 %v821, %v822
  %824 = vst [vmem:[%s5] sm:$0xff] %v823
  %v825 = vmul.f32 %v373, %v373
  %v826 = vmul.f32 %v378, %v378
  %v827 = vmul.f32 %v383, %v383
  %v828 = vmul.f32 %v388, %v388
  %v829 = vmul.f32 %v393, %v393
  %v830 = vmul.f32 %v398, %v398
  %v831 = vmul.f32 %v403, %v403
  %v832 = vmul.f32 %v408, %v408
  %v833 = vmul.f32 %v413, %v413
  %v834 = vmul.f32 %v418, %v418
  %v835 = vmul.f32 %v423, %v423
  %v836 = vmul.f32 %v428, %v428
  %v837 = vmul.f32 %v433, %v433
  %v838 = vmul.f32 %v438, %v438
  %v839 = vmul.f32 %v443, %v443
  %v840 = vmul.f32 %v448, %v448
  %v841 = vmul.f32 %v453, %v453
  %v842 = vmul.f32 %v458, %v458
  %v843 = vmul.f32 %v463, %v463
  %v844 = vmul.f32 %v468, %v468
  %v845 = vmul.f32 %v473, %v473
  %v846 = vmul.f32 %v478, %v478
  %v847 = vmul.f32 %v483, %v483
  %v848 = vmul.f32 %v488, %v488
  %v849 = vmul.f32 %v493, %v493
  %v850 = vmul.f32 %v498, %v498
  %v851 = vmul.f32 %v503, %v503
  %v852 = vmul.f32 %v508, %v508
  %v853 = vmul.f32 %v513, %v513
  %v854 = vmul.f32 %v518, %v518
  %v855 = vmul.f32 %v523, %v523
  %v856 = vmul.f32 %v528, %v528
  %v857 = vmul.f32 %v533, %v533
  %v858 = vmul.f32 %v538, %v538
  %v859 = vmul.f32 %v543, %v543
  %v860 = vmul.f32 %v548, %v548
  %v861 = vmul.f32 %v553, %v553
  %v862 = vmul.f32 %v558, %v558
  %v863 = vmul.f32 %v563, %v563
  %v864 = vmul.f32 %v568, %v568
  %v865 = vmul.f32 %v573, %v573
  %v866 = vmul.f32 %v578, %v578
  %v867 = vmul.f32 %v583, %v583
  %v868 = vmul.f32 %v588, %v588
  %v869 = vmul.f32 %v593, %v593
  %v870 = vmul.f32 %v598, %v598
  %v871 = vmul.f32 %v603, %v603
  %v872 = vmul.f32 %v608, %v608
  %v873 = vmul.f32 %v613, %v613
  %v874 = vmul.f32 %v618, %v618
  %v875 = vmul.f32 %v623, %v623
  %v876 = vmul.f32 %v628, %v628
  %v877 = vmul.f32 %v633, %v633
  %v878 = vmul.f32 %v638, %v638
  %v879 = vmul.f32 %v643, %v643
  %v880 = vmul.f32 %v648, %v648
  %v881 = vmul.f32 %v653, %v653
  %v882 = vmul.f32 %v658, %v658
  %v883 = vmul.f32 %v663, %v663
  %v884 = vmul.f32 %v668, %v668
  %v885 = vmul.f32 %v673, %v673
  %v886 = vmul.f32 %v678, %v678
  %v887 = vmul.f32 %v683, %v683
  %v888 = vmul.f32 %v688, %v688
  %v889 = vadd.f32 %v825, %v826
  %v890 = vadd.f32 %v889, %v827
  %v891 = vadd.f32 %v890, %v828
  %v892 = vadd.f32 %v891, %v829
  %v893 = vadd.f32 %v892, %v830
  %v894 = vadd.f32 %v893, %v831
  %v895 = vadd.f32 %v894, %v832
  %v896 = vadd.f32 %v895, %v833
  %v897 = vadd.f32 %v896, %v834
  %v898 = vadd.f32 %v897, %v835
  %v899 = vadd.f32 %v898, %v836
  %v900 = vadd.f32 %v899, %v837
  %v901 = vadd.f32 %v900, %v838
  %v902 = vadd.f32 %v901, %v839
  %v903 = vadd.f32 %v902, %v840
  %v904 = vadd.f32 %v903, %v841
  %v905 = vadd.f32 %v904, %v842
  %v906 = vadd.f32 %v905, %v843
  %v907 = vadd.f32 %v906, %v844
  %v908 = vadd.f32 %v907, %v845
  %v909 = vadd.f32 %v908, %v846
  %v910 = vadd.f32 %v909, %v847
  %v911 = vadd.f32 %v910, %v848
  %v912 = vadd.f32 %v911, %v849
  %v913 = vadd.f32 %v912, %v850
  %v914 = vadd.f32 %v913, %v851
  %v915 = vadd.f32 %v914, %v852
  %v916 = vadd.f32 %v915, %v853
  %v917 = vadd.f32 %v916, %v854
  %v918 = vadd.f32 %v917, %v855
  %v919 = vadd.f32 %v918, %v856
  %v920 = vadd.f32 %v919, %v857
  %v921 = vadd.f32 %v920, %v858
  %v922 = vadd.f32 %v921, %v859
  %v923 = vadd.f32 %v922, %v860
  %v924 = vadd.f32 %v923, %v861
  %v925 = vadd.f32 %v924, %v862
  %v926 = vadd.f32 %v925, %v863
  %v927 = vadd.f32 %v926, %v864
  %v928 = vadd.f32 %v927, %v865
  %v929 = vadd.f32 %v928, %v866
  %v930 = vadd.f32 %v929, %v867
  %v931 = vadd.f32 %v930, %v868
  %v932 = vadd.f32 %v931, %v869
  %v933 = vadd.f32 %v932, %v870
  %v934 = vadd.f32 %v933, %v871
  %v935 = vadd.f32 %v934, %v872
  %v936 = vadd.f32 %v935, %v873
  %v937 = vadd.f32 %v936, %v874
  %v938 = vadd.f32 %v937, %v875
  %v939 = vadd.f32 %v938, %v876
  %v940 = vadd.f32 %v939, %v877
  %v941 = vadd.f32 %v940, %v878
  %v942 = vadd.f32 %v941, %v879
  %v943 = vadd.f32 %v942, %v880
  %v944 = vadd.f32 %v943, %v881
  %v945 = vadd.f32 %v944, %v882
  %v946 = vadd.f32 %v945, %v883
  %v947 = vadd.f32 %v946, %v884
  %v948 = vadd.f32 %v947, %v885
  %v949 = vadd.f32 %v948, %v886
  %v950 = vadd.f32 %v949, %v887
  %v951 = vadd.f32 %v950, %v888
  %v952 = vrot.slane %v951, 4
  %v953 = vadd.f32 %v951, %v952
  %v954 = vrot.slane %v953, 2
  %v955 = vadd.f32 %v953, %v954
  %v956 = vrot.slane %v955, 1
  %v957 = vadd.f32 %v955, %v956
  %958 = vst [vmem:[%s6] sm:$0xff] %v957
  // Predicated region
  $region18: #{bottleneck_forward.6} parent=0 // pred_check
    _
  $region19: #{bottleneck_forward.6} parent=0 // pred_check_branch
    %960 = sbr.rel (0) target = $region21
  $region20: #{bottleneck_forward.6} parent=0 // pred_region
    _
  $region21: #{bottleneck_forward.6} parent=0 // pred_fallthru
    _
  // Predicated region
  $region22: #{bottleneck_forward.6} parent=0 // pred_check
    _
  $region23: #{bottleneck_forward.6} parent=0 // pred_check_branch
    %962 = sbr.rel (0) target = $region25
  $region24: #{bottleneck_forward.6} parent=0 // pred_region
    _
  $region25: #{bottleneck_forward.6} parent=0 // pred_fallthru
    _
  // Predicated region
  $region26: #{bottleneck_forward.6} parent=0 // pred_check
    _
  $region27: #{bottleneck_forward.6} parent=0 // pred_check_branch
    %964 = sbr.rel (0) target = $region29
  $region28: #{bottleneck_forward.6} parent=0 // pred_region
    _
  $region29: #{bottleneck_forward.6} parent=0 // pred_fallthru
    _
  // Predicated region
  $region30: #{bottleneck_forward.6} parent=0 // pred_check
    _
  $region31: #{bottleneck_forward.6} parent=0 // pred_check_branch
    %966 = sbr.rel (0) target = $region33
  $region32: #{bottleneck_forward.6} parent=0 // pred_region
    _
  $region33: #{bottleneck_forward.6} parent=0 // pred_fallthru
    _
  // Predicated region
  $region34: #{bottleneck_forward.6} parent=0 // pred_check
    _
  $region35: #{bottleneck_forward.6} parent=0 // pred_check_branch
    %968 = sbr.rel (0) target = $region37
  $region36: #{bottleneck_forward.6} parent=0 // pred_region
    _
  $region37: #{bottleneck_forward.6} parent=0 // pred_fallthru
    _
  // Predicated region
  $region38: #{bottleneck_forward.6} parent=0 // pred_check
    _
  $region39: #{bottleneck_forward.6} parent=0 // pred_check_branch
    %970 = sbr.rel (0) target = $region41
  $region40: #{bottleneck_forward.6} parent=0 // pred_region
    _
  $region41: #{bottleneck_forward.6} parent=0 // pred_fallthru
    _

// kernel: bottleneck_forward.4
$region0: #{bottleneck_forward.4}
  #allocation0 [shape = 'u32[]', space=smem, size = 0x4, offset = 0x4, fixed_abs, tag = 'smem constant byte address 0x4 - core index']
  #allocation1 [shape = 'u32[144,128]{1,0:T(1,128)}', space=vmem, size = 0x12000, scoped, tag = 'internal scratch']
  %s0 = inlined_call_operand.vmem [shape: f32[512,128], index: 0, kind: input, shape index: {}]
  %s1 = inlined_call_operand.vmem [shape: f32[128,128], index: 1, kind: input, shape index: {}]
  %s2 = inlined_call_operand.vmem [shape: f32[512,128], index: 2, kind: output, shape index: {0}]
  %s3 = inlined_call_operand.vmem [shape: f32[1,8,128], index: 3, kind: output, shape index: {1}]
  %s4 = inlined_call_operand.vmem [shape: f32[1,8,128], index: 4, kind: output, shape index: {2}]
  %5 = xla_tuple %s2, %s3, %s4
  %s6 = sld [smem:[#allocation0]]
  $region34: #{bottleneck_forward.4} parent=0
    _
  %s8 = ssub.s32 1, %s6
  %s9 = scalar_select 0, %s8, %s6
  // Predicated region
  $region2: #{bottleneck_forward.4} parent=0 // pred_check
    _
  $region3: #{bottleneck_forward.4} parent=0 // pred_check_branch
    %11 = sbr.rel (0) target = $region5
  $region4: #{bottleneck_forward.4} parent=0 // pred_region
    _
  $region5: #{bottleneck_forward.4} parent=0 // pred_fallthru
    _
  // Predicated region
  $region6: #{bottleneck_forward.4} parent=0 // pred_check
    _
  $region7: #{bottleneck_forward.4} parent=0 // pred_check_branch
    %13 = sbr.rel (0) target = $region9
  $region8: #{bottleneck_forward.4} parent=0 // pred_region
    _
  $region9: #{bottleneck_forward.4} parent=0 // pred_fallthru
    _
  %v14 = vld [vmem:[%s0] sm:$0xff]
  %v15 = vld [vmem:[%s0 + $0x8] sm:$0xff]
  %v16 = vld [vmem:[%s0 + $0x10] sm:$0xff]
  %v17 = vld [vmem:[%s0 + $0x18] sm:$0xff]
  %v18 = vld [vmem:[%s0 + $0x20] sm:$0xff]
  %v19 = vld [vmem:[%s0 + $0x28] sm:$0xff]
  %v20 = vld [vmem:[%s0 + $0x30] sm:$0xff]
  %v21 = vld [vmem:[%s0 + $0x38] sm:$0xff]
  %v22 = vld [vmem:[%s0 + $0x40] sm:$0xff]
  %v23 = vld [vmem:[%s0 + $0x48] sm:$0xff]
  %v24 = vld [vmem:[%s0 + $0x50] sm:$0xff]
  %v25 = vld [vmem:[%s0 + $0x58] sm:$0xff]
  %v26 = vld [vmem:[%s0 + $0x60] sm:$0xff]
  %v27 = vld [vmem:[%s0 + $0x68] sm:$0xff]
  %v28 = vld [vmem:[%s0 + $0x70] sm:$0xff]
  %v29 = vld [vmem:[%s0 + $0x78] sm:$0xff]
  %v30 = vld [vmem:[%s0 + $0x80] sm:$0xff]
  %v31 = vld [vmem:[%s0 + $0x88] sm:$0xff]
  %v32 = vld [vmem:[%s0 + $0x90] sm:$0xff]
  %v33 = vld [vmem:[%s0 + $0x98] sm:$0xff]
  %v34 = vld [vmem:[%s0 + $0xa0] sm:$0xff]
  %v35 = vld [vmem:[%s0 + $0xa8] sm:$0xff]
  %v36 = vld [vmem:[%s0 + $0xb0] sm:$0xff]
  %v37 = vld [vmem:[%s0 + $0xb8] sm:$0xff]
  %v38 = vld [vmem:[%s0 + $0xc0] sm:$0xff]
  %v39 = vld [vmem:[%s0 + $0xc8] sm:$0xff]
  %v40 = vld [vmem:[%s0 + $0xd0] sm:$0xff]
  %v41 = vld [vmem:[%s0 + $0xd8] sm:$0xff]
  %v42 = vld [vmem:[%s0 + $0xe0] sm:$0xff]
  %v43 = vld [vmem:[%s0 + $0xe8] sm:$0xff]
  %v44 = vld [vmem:[%s0 + $0xf0] sm:$0xff]
  %v45 = vld [vmem:[%s0 + $0xf8] sm:$0xff]
  %v46 = vld [vmem:[%s0 + $0x100] sm:$0xff]
  %v47 = vld [vmem:[%s0 + $0x108] sm:$0xff]
  %v48 = vld [vmem:[%s0 + $0x110] sm:$0xff]
  %v49 = vld [vmem:[%s0 + $0x118] sm:$0xff]
  %v50 = vld [vmem:[%s0 + $0x120] sm:$0xff]
  %v51 = vld [vmem:[%s0 + $0x128] sm:$0xff]
  %v52 = vld [vmem:[%s0 + $0x130] sm:$0xff]
  %v53 = vld [vmem:[%s0 + $0x138] sm:$0xff]
  %v54 = vld [vmem:[%s0 + $0x140] sm:$0xff]
  %v55 = vld [vmem:[%s0 + $0x148] sm:$0xff]
  %v56 = vld [vmem:[%s0 + $0x150] sm:$0xff]
  %v57 = vld [vmem:[%s0 + $0x158] sm:$0xff]
  %v58 = vld [vmem:[%s0 + $0x160] sm:$0xff]
  %v59 = vld [vmem:[%s0 + $0x168] sm:$0xff]
  %v60 = vld [vmem:[%s0 + $0x170] sm:$0xff]
  %v61 = vld [vmem:[%s0 + $0x178] sm:$0xff]
  %v62 = vld [vmem:[%s0 + $0x180] sm:$0xff]
  %v63 = vld [vmem:[%s0 + $0x188] sm:$0xff]
  %v64 = vld [vmem:[%s0 + $0x190] sm:$0xff]
  %v65 = vld [vmem:[%s0 + $0x198] sm:$0xff]
  %v66 = vld [vmem:[%s0 + $0x1a0] sm:$0xff]
  %v67 = vld [vmem:[%s0 + $0x1a8] sm:$0xff]
  %v68 = vld [vmem:[%s0 + $0x1b0] sm:$0xff]
  %v69 = vld [vmem:[%s0 + $0x1b8] sm:$0xff]
  %v70 = vld [vmem:[%s0 + $0x1c0] sm:$0xff]
  %v71 = vld [vmem:[%s0 + $0x1c8] sm:$0xff]
  %v72 = vld [vmem:[%s0 + $0x1d0] sm:$0xff]
  %v73 = vld [vmem:[%s0 + $0x1d8] sm:$0xff]
  %v74 = vld [vmem:[%s0 + $0x1e0] sm:$0xff]
  %v75 = vld [vmem:[%s0 + $0x1e8] sm:$0xff]
  %v76 = vld [vmem:[%s0 + $0x1f0] sm:$0xff]
  %v77 = vld [vmem:[%s0 + $0x1f8] sm:$0xff]
  %v78 = vld [vmem:[%s1] sm:$0xff]
  %v79 = vld [vmem:[%s1 + $0x8] sm:$0xff]
  %v80 = vld [vmem:[%s1 + $0x10] sm:$0xff]
  %v81 = vld [vmem:[%s1 + $0x18] sm:$0xff]
  %v82 = vld [vmem:[%s1 + $0x20] sm:$0xff]
  %v83 = vld [vmem:[%s1 + $0x28] sm:$0xff]
  %v84 = vld [vmem:[%s1 + $0x30] sm:$0xff]
  %v85 = vld [vmem:[%s1 + $0x38] sm:$0xff]
  %v86 = vld [vmem:[%s1 + $0x40] sm:$0xff]
  %v87 = vld [vmem:[%s1 + $0x48] sm:$0xff]
  %v88 = vld [vmem:[%s1 + $0x50] sm:$0xff]
  %v89 = vld [vmem:[%s1 + $0x58] sm:$0xff]
  %v90 = vld [vmem:[%s1 + $0x60] sm:$0xff]
  %v91 = vld [vmem:[%s1 + $0x68] sm:$0xff]
  %v92 = vld [vmem:[%s1 + $0x70] sm:$0xff]
  %v93 = vld [vmem:[%s1 + $0x78] sm:$0xff]
  %94 = vmatprep.subr.mxu0 0.0
  %95 = vmatpush1.msra.mxu0 %v78
  %96 = vmatprep.subr.mxu0 0.0
  %97 = vmatpush1.msra.mxu0 %v79
  %98 = vmatprep.subr.mxu0 0.0
  %99 = vmatpush1.msra.mxu0 %v80
  %100 = vmatprep.subr.mxu0 0.0
  %101 = vmatpush1.msra.mxu0 %v81
  %102 = vmatprep.subr.mxu0 0.0
  %103 = vmatpush1.msra.mxu0 %v82
  %104 = vmatprep.subr.mxu0 0.0
  %105 = vmatpush1.msra.mxu0 %v83
  %106 = vmatprep.subr.mxu0 0.0
  %107 = vmatpush1.msra.mxu0 %v84
  %108 = vmatprep.subr.mxu0 0.0
  %109 = vmatpush1.msra.mxu0 %v85
  %110 = vmatprep.subr.mxu0 0.0
  %111 = vmatpush1.msra.mxu0 %v86
  %112 = vmatprep.subr.mxu0 0.0
  %113 = vmatpush1.msra.mxu0 %v87
  %114 = vmatprep.subr.mxu0 0.0
  %115 = vmatpush1.msra.mxu0 %v88
  %116 = vmatprep.subr.mxu0 0.0
  %117 = vmatpush1.msra.mxu0 %v89
  %118 = vmatprep.subr.mxu0 0.0
  %119 = vmatpush1.msra.mxu0 %v90
  %120 = vmatprep.subr.mxu0 0.0
  %121 = vmatpush1.msra.mxu0 %v91
  %122 = vmatprep.subr.mxu0 0.0
  %123 = vmatpush1.msra.mxu0 %v92
  %124 = vmatprep.subr.mxu0 0.0
  %125 = vmatpush1.msra.mxu0 %v93
  %126 = vmatprep.subr.mxu0 0.0
  %127 = vmatpush1.msra.mxu0 0.0
  %128 = vmatprep.subr.mxu0 0.0
  %129 = vmatpush1.msra.mxu0 0.0
  %130 = vmatprep.subr.mxu0 0.0
  %131 = vmatpush1.msra.mxu0 0.0
  %132 = vmatprep.subr.mxu0 0.0
  %133 = vmatpush1.msra.mxu0 0.0
  %134 = vmatprep.subr.mxu0 0.0
  %135 = vmatpush1.msra.mxu0 0.0
  %136 = vmatprep.subr.mxu0 0.0
  %137 = vmatpush1.msra.mxu0 0.0
  %138 = vmatprep.subr.mxu0 0.0
  %139 = vmatpush1.msra.mxu0 0.0
  %140 = vmatprep.subr.mxu0 0.0
  %141 = vmatpush1.msra.mxu0 0.0
  %142 = vmatprep.subr.mxu0 0.0
  %143 = vmatpush1.msra.mxu0 0.0
  %144 = vmatprep.subr.mxu0 0.0
  %145 = vmatpush1.msra.mxu0 0.0
  %146 = vmatprep.subr.mxu0 0.0
  %147 = vmatpush1.msra.mxu0 0.0
  %148 = vmatprep.subr.mxu0 0.0
  %149 = vmatpush1.msra.mxu0 0.0
  %150 = vmatprep.subr.mxu0 0.0
  %151 = vmatpush1.msra.mxu0 0.0
  %152 = vmatprep.subr.mxu0 0.0
  %153 = vmatpush1.msra.mxu0 0.0
  %154 = vmatprep.subr.mxu0 0.0
  %155 = vmatpush1.msra.mxu0 0.0
  %156 = vmatprep.subr.mxu0 0.0
  %157 = vmatpush1.msra.mxu0 0.0
  %158 = vmatprep.mubr.f32.mxu0 0.0
  %159 = vmatmul.mubr.f32.gmra.mrb[0].mxu0 %v14
  %v160 = vpop.f32.mrb[0].mxu0
  %v161 = vadd.f32 0.0, %v160
  %v162 = vpop.f32.mrb[0].mxu0
  %163 = vmatprep.mubr.f32.mxu0 0.0
  %164 = vmatmul.mubr.f32.gmra.mrb[0].mxu0 %v15
  %v165 = vpop.f32.mrb[0].mxu0
  %v166 = vadd.f32 0.0, %v165
  %v167 = vpop.f32.mrb[0].mxu0
  %168 = vmatprep.mubr.f32.mxu0 0.0
  %169 = vmatmul.mubr.f32.gmra.mrb[0].mxu0 %v16
  %v170 = vpop.f32.mrb[0].mxu0
  %v171 = vadd.f32 0.0, %v170
  %v172 = vpop.f32.mrb[0].mxu0
  %173 = vmatprep.mubr.f32.mxu0 0.0
  %174 = vmatmul.mubr.f32.gmra.mrb[0].mxu0 %v17
  %v175 = vpop.f32.mrb[0].mxu0
  %v176 = vadd.f32 0.0, %v175
  %v177 = vpop.f32.mrb[0].mxu0
  %178 = vmatprep.mubr.f32.mxu0 0.0
  %179 = vmatmul.mubr.f32.gmra.mrb[0].mxu0 %v18
  %v180 = vpop.f32.mrb[0].mxu0
  %v181 = vadd.f32 0.0, %v180
  %v182 = vpop.f32.mrb[0].mxu0
  %183 = vmatprep.mubr.f32.mxu0 0.0
  %184 = vmatmul.mubr.f32.gmra.mrb[0].mxu0 %v19
  %v185 = vpop.f32.mrb[0].mxu0
  %v186 = vadd.f32 0.0, %v185
  %v187 = vpop.f32.mrb[0].mxu0
  %188 = vmatprep.mubr.f32.mxu0 0.0
  %189 = vmatmul.mubr.f32.gmra.mrb[0].mxu0 %v20
  %v190 = vpop.f32.mrb[0].mxu0
  %v191 = vadd.f32 0.0, %v190
  %v192 = vpop.f32.mrb[0].mxu0
  %193 = vmatprep.mubr.f32.mxu0 0.0
  %194 = vmatmul.mubr.f32.gmra.mrb[0].mxu0 %v21
  %v195 = vpop.f32.mrb[0].mxu0
  %v196 = vadd.f32 0.0, %v195
  %v197 = vpop.f32.mrb[0].mxu0
  %198 = vmatprep.mubr.f32.mxu0 0.0
  %199 = vmatmul.mubr.f32.gmra.mrb[0].mxu0 %v22
  %v200 = vpop.f32.mrb[0].mxu0
  %v201 = vadd.f32 0.0, %v200
  %v202 = vpop.f32.mrb[0].mxu0
  %203 = vmatprep.mubr.f32.mxu0 0.0
  %204 = vmatmul.mubr.f32.gmra.mrb[0].mxu0 %v23
  %v205 = vpop.f32.mrb[0].mxu0
  %v206 = vadd.f32 0.0, %v205
  %v207 = vpop.f32.mrb[0].mxu0
  %208 = vmatprep.mubr.f32.mxu0 0.0
  %209 = vmatmul.mubr.f32.gmra.mrb[0].mxu0 %v24
  %v210 = vpop.f32.mrb[0].mxu0
  %v211 = vadd.f32 0.0, %v210
  %v212 = vpop.f32.mrb[0].mxu0
  %213 = vmatprep.mubr.f32.mxu0 0.0
  %214 = vmatmul.mubr.f32.gmra.mrb[0].mxu0 %v25
  %v215 = vpop.f32.mrb[0].mxu0
  %v216 = vadd.f32 0.0, %v215
  %v217 = vpop.f32.mrb[0].mxu0
  %218 = vmatprep.mubr.f32.mxu0 0.0
  %219 = vmatmul.mubr.f32.gmra.mrb[0].mxu0 %v26
  %v220 = vpop.f32.mrb[0].mxu0
  %v221 = vadd.f32 0.0, %v220
  %v222 = vpop.f32.mrb[0].mxu0
  %223 = vmatprep.mubr.f32.mxu0 0.0
  %224 = vmatmul.mubr.f32.gmra.mrb[0].mxu0 %v27
  %v225 = vpop.f32.mrb[0].mxu0
  %v226 = vadd.f32 0.0, %v225
  %v227 = vpop.f32.mrb[0].mxu0
  %228 = vmatprep.mubr.f32.mxu0 0.0
  %229 = vmatmul.mubr.f32.gmra.mrb[0].mxu0 %v28
  %v230 = vpop.f32.mrb[0].mxu0
  %v231 = vadd.f32 0.0, %v230
  %v232 = vpop.f32.mrb[0].mxu0
  %233 = vmatprep.mubr.f32.mxu0 0.0
  %234 = vmatmul.mubr.f32.gmra.mrb[0].mxu0 %v29
  %v235 = vpop.f32.mrb[0].mxu0
  %v236 = vadd.f32 0.0, %v235
  %v237 = vpop.f32.mrb[0].mxu0
  %238 = vmatprep.mubr.f32.mxu0 0.0
  %239 = vmatmul.mubr.f32.gmra.mrb[0].mxu0 %v30
  %v240 = vpop.f32.mrb[0].mxu0
  %v241 = vadd.f32 0.0, %v240
  %v242 = vpop.f32.mrb[0].mxu0
  %243 = vmatprep.mubr.f32.mxu0 0.0
  %244 = vmatmul.mubr.f32.gmra.mrb[0].mxu0 %v31
  %v245 = vpop.f32.mrb[0].mxu0
  %v246 = vadd.f32 0.0, %v245
  %v247 = vpop.f32.mrb[0].mxu0
  %248 = vmatprep.mubr.f32.mxu0 0.0
  %249 = vmatmul.mubr.f32.gmra.mrb[0].mxu0 %v32
  %v250 = vpop.f32.mrb[0].mxu0
  %v251 = vadd.f32 0.0, %v250
  %v252 = vpop.f32.mrb[0].mxu0
  %253 = vmatprep.mubr.f32.mxu0 0.0
  %254 = vmatmul.mubr.f32.gmra.mrb[0].mxu0 %v33
  %v255 = vpop.f32.mrb[0].mxu0
  %v256 = vadd.f32 0.0, %v255
  %v257 = vpop.f32.mrb[0].mxu0
  %258 = vmatprep.mubr.f32.mxu0 0.0
  %259 = vmatmul.mubr.f32.gmra.mrb[0].mxu0 %v34
  %v260 = vpop.f32.mrb[0].mxu0
  %v261 = vadd.f32 0.0, %v260
  %v262 = vpop.f32.mrb[0].mxu0
  %263 = vmatprep.mubr.f32.mxu0 0.0
  %264 = vmatmul.mubr.f32.gmra.mrb[0].mxu0 %v35
  %v265 = vpop.f32.mrb[0].mxu0
  %v266 = vadd.f32 0.0, %v265
  %v267 = vpop.f32.mrb[0].mxu0
  %268 = vmatprep.mubr.f32.mxu0 0.0
  %269 = vmatmul.mubr.f32.gmra.mrb[0].mxu0 %v36
  %v270 = vpop.f32.mrb[0].mxu0
  %v271 = vadd.f32 0.0, %v270
  %v272 = vpop.f32.mrb[0].mxu0
  %273 = vmatprep.mubr.f32.mxu0 0.0
  %274 = vmatmul.mubr.f32.gmra.mrb[0].mxu0 %v37
  %v275 = vpop.f32.mrb[0].mxu0
  %v276 = vadd.f32 0.0, %v275
  %v277 = vpop.f32.mrb[0].mxu0
  %278 = vmatprep.mubr.f32.mxu0 0.0
  %279 = vmatmul.mubr.f32.gmra.mrb[0].mxu0 %v38
  %v280 = vpop.f32.mrb[0].mxu0
  %v281 = vadd.f32 0.0, %v280
  %v282 = vpop.f32.mrb[0].mxu0
  %283 = vmatprep.mubr.f32.mxu0 0.0
  %284 = vmatmul.mubr.f32.gmra.mrb[0].mxu0 %v39
  %v285 = vpop.f32.mrb[0].mxu0
  %v286 = vadd.f32 0.0, %v285
  %v287 = vpop.f32.mrb[0].mxu0
  %288 = vmatprep.mubr.f32.mxu0 0.0
  %289 = vmatmul.mubr.f32.gmra.mrb[0].mxu0 %v40
  %v290 = vpop.f32.mrb[0].mxu0
  %v291 = vadd.f32 0.0, %v290
  %v292 = vpop.f32.mrb[0].mxu0
  %293 = vmatprep.mubr.f32.mxu0 0.0
  %294 = vmatmul.mubr.f32.gmra.mrb[0].mxu0 %v41
  %v295 = vpop.f32.mrb[0].mxu0
  %v296 = vadd.f32 0.0, %v295
  %v297 = vpop.f32.mrb[0].mxu0
  %298 = vmatprep.mubr.f32.mxu0 0.0
  %299 = vmatmul.mubr.f32.gmra.mrb[0].mxu0 %v42
  %v300 = vpop.f32.mrb[0].mxu0
  %v301 = vadd.f32 0.0, %v300
  %v302 = vpop.f32.mrb[0].mxu0
  %303 = vmatprep.mubr.f32.mxu0 0.0
  %304 = vmatmul.mubr.f32.gmra.mrb[0].mxu0 %v43
  %v305 = vpop.f32.mrb[0].mxu0
  %v306 = vadd.f32 0.0, %v305
  %v307 = vpop.f32.mrb[0].mxu0
  %308 = vmatprep.mubr.f32.mxu0 0.0
  %309 = vmatmul.mubr.f32.gmra.mrb[0].mxu0 %v44
  %v310 = vpop.f32.mrb[0].mxu0
  %v311 = vadd.f32 0.0, %v310
  %v312 = vpop.f32.mrb[0].mxu0
  %313 = vmatprep.mubr.f32.mxu0 0.0
  %314 = vmatmul.mubr.f32.gmra.mrb[0].mxu0 %v45
  %v315 = vpop.f32.mrb[0].mxu0
  %v316 = vadd.f32 0.0, %v315
  %v317 = vpop.f32.mrb[0].mxu0
  %318 = vmatprep.mubr.f32.mxu0 0.0
  %319 = vmatmul.mubr.f32.gmra.mrb[0].mxu0 %v46
  %v320 = vpop.f32.mrb[0].mxu0
  %v321 = vadd.f32 0.0, %v320
  %v322 = vpop.f32.mrb[0].mxu0
  %323 = vmatprep.mubr.f32.mxu0 0.0
  %324 = vmatmul.mubr.f32.gmra.mrb[0].mxu0 %v47
  %v325 = vpop.f32.mrb[0].mxu0
  %v326 = vadd.f32 0.0, %v325
  %v327 = vpop.f32.mrb[0].mxu0
  %328 = vmatprep.mubr.f32.mxu0 0.0
  %329 = vmatmul.mubr.f32.gmra.mrb[0].mxu0 %v48
  %v330 = vpop.f32.mrb[0].mxu0
  %v331 = vadd.f32 0.0, %v330
  %v332 = vpop.f32.mrb[0].mxu0
  %333 = vmatprep.mubr.f32.mxu0 0.0
  %334 = vmatmul.mubr.f32.gmra.mrb[0].mxu0 %v49
  %v335 = vpop.f32.mrb[0].mxu0
  %v336 = vadd.f32 0.0, %v335
  %v337 = vpop.f32.mrb[0].mxu0
  %338 = vmatprep.mubr.f32.mxu0 0.0
  %339 = vmatmul.mubr.f32.gmra.mrb[0].mxu0 %v50
  %v340 = vpop.f32.mrb[0].mxu0
  %v341 = vadd.f32 0.0, %v340
  %v342 = vpop.f32.mrb[0].mxu0
  %343 = vmatprep.mubr.f32.mxu0 0.0
  %344 = vmatmul.mubr.f32.gmra.mrb[0].mxu0 %v51
  %v345 = vpop.f32.mrb[0].mxu0
  %v346 = vadd.f32 0.0, %v345
  %v347 = vpop.f32.mrb[0].mxu0
  %348 = vmatprep.mubr.f32.mxu0 0.0
  %349 = vmatmul.mubr.f32.gmra.mrb[0].mxu0 %v52
  %v350 = vpop.f32.mrb[0].mxu0
  %v351 = vadd.f32 0.0, %v350
  %v352 = vpop.f32.mrb[0].mxu0
  %353 = vmatprep.mubr.f32.mxu0 0.0
  %354 = vmatmul.mubr.f32.gmra.mrb[0].mxu0 %v53
  %v355 = vpop.f32.mrb[0].mxu0
  %v356 = vadd.f32 0.0, %v355
  %v357 = vpop.f32.mrb[0].mxu0
  %358 = vmatprep.mubr.f32.mxu0 0.0
  %359 = vmatmul.mubr.f32.gmra.mrb[0].mxu0 %v54
  %v360 = vpop.f32.mrb[0].mxu0
  %v361 = vadd.f32 0.0, %v360
  %v362 = vpop.f32.mrb[0].mxu0
  %363 = vmatprep.mubr.f32.mxu0 0.0
  %364 = vmatmul.mubr.f32.gmra.mrb[0].mxu0 %v55
  %v365 = vpop.f32.mrb[0].mxu0
  %v366 = vadd.f32 0.0, %v365
  %v367 = vpop.f32.mrb[0].mxu0
  %368 = vmatprep.mubr.f32.mxu0 0.0
  %369 = vmatmul.mubr.f32.gmra.mrb[0].mxu0 %v56
  %v370 = vpop.f32.mrb[0].mxu0
  %v371 = vadd.f32 0.0, %v370
  %v372 = vpop.f32.mrb[0].mxu0
  %373 = vmatprep.mubr.f32.mxu0 0.0
  %374 = vmatmul.mubr.f32.gmra.mrb[0].mxu0 %v57
  %v375 = vpop.f32.mrb[0].mxu0
  %v376 = vadd.f32 0.0, %v375
  %v377 = vpop.f32.mrb[0].mxu0
  %378 = vmatprep.mubr.f32.mxu0 0.0
  %379 = vmatmul.mubr.f32.gmra.mrb[0].mxu0 %v58
  %v380 = vpop.f32.mrb[0].mxu0
  %v381 = vadd.f32 0.0, %v380
  %v382 = vpop.f32.mrb[0].mxu0
  %383 = vmatprep.mubr.f32.mxu0 0.0
  %384 = vmatmul.mubr.f32.gmra.mrb[0].mxu0 %v59
  %v385 = vpop.f32.mrb[0].mxu0
  %v386 = vadd.f32 0.0, %v385
  %v387 = vpop.f32.mrb[0].mxu0
  %388 = vmatprep.mubr.f32.mxu0 0.0
  %389 = vmatmul.mubr.f32.gmra.mrb[0].mxu0 %v60
  %v390 = vpop.f32.mrb[0].mxu0
  %v391 = vadd.f32 0.0, %v390
  %v392 = vpop.f32.mrb[0].mxu0
  %393 = vmatprep.mubr.f32.mxu0 0.0
  %394 = vmatmul.mubr.f32.gmra.mrb[0].mxu0 %v61
  %v395 = vpop.f32.mrb[0].mxu0
  %v396 = vadd.f32 0.0, %v395
  %v397 = vpop.f32.mrb[0].mxu0
  %398 = vmatprep.mubr.f32.mxu0 0.0
  %399 = vmatmul.mubr.f32.gmra.mrb[0].mxu0 %v62
  %v400 = vpop.f32.mrb[0].mxu0
  %v401 = vadd.f32 0.0, %v400
  %v402 = vpop.f32.mrb[0].mxu0
  %403 = vmatprep.mubr.f32.mxu0 0.0
  %404 = vmatmul.mubr.f32.gmra.mrb[0].mxu0 %v63
  %v405 = vpop.f32.mrb[0].mxu0
  %v406 = vadd.f32 0.0, %v405
  %v407 = vpop.f32.mrb[0].mxu0
  %408 = vmatprep.mubr.f32.mxu0 0.0
  %409 = vmatmul.mubr.f32.gmra.mrb[0].mxu0 %v64
  %v410 = vpop.f32.mrb[0].mxu0
  %v411 = vadd.f32 0.0, %v410
  %v412 = vpop.f32.mrb[0].mxu0
  %413 = vmatprep.mubr.f32.mxu0 0.0
  %414 = vmatmul.mubr.f32.gmra.mrb[0].mxu0 %v65
  %v415 = vpop.f32.mrb[0].mxu0
  %v416 = vadd.f32 0.0, %v415
  %v417 = vpop.f32.mrb[0].mxu0
  %418 = vmatprep.mubr.f32.mxu0 0.0
  %419 = vmatmul.mubr.f32.gmra.mrb[0].mxu0 %v66
  %v420 = vpop.f32.mrb[0].mxu0
  %v421 = vadd.f32 0.0, %v420
  %v422 = vpop.f32.mrb[0].mxu0
  %423 = vmatprep.mubr.f32.mxu0 0.0
  %424 = vmatmul.mubr.f32.gmra.mrb[0].mxu0 %v67
  %v425 = vpop.f32.mrb[0].mxu0
  %v426 = vadd.f32 0.0, %v425
  %v427 = vpop.f32.mrb[0].mxu0
  %428 = vmatprep.mubr.f32.mxu0 0.0
  %429 = vmatmul.mubr.f32.gmra.mrb[0].mxu0 %v68
  %v430 = vpop.f32.mrb[0].mxu0
  %v431 = vadd.f32 0.0, %v430
  %v432 = vpop.f32.mrb[0].mxu0
  %433 = vmatprep.mubr.f32.mxu0 0.0
  %434 = vmatmul.mubr.f32.gmra.mrb[0].mxu0 %v69
  %v435 = vpop.f32.mrb[0].mxu0
  %v436 = vadd.f32 0.0, %v435
  %v437 = vpop.f32.mrb[0].mxu0
  %438 = vmatprep.mubr.f32.mxu0 0.0
  %439 = vmatmul.mubr.f32.gmra.mrb[0].mxu0 %v70
  %v440 = vpop.f32.mrb[0].mxu0
  %v441 = vadd.f32 0.0, %v440
  %v442 = vpop.f32.mrb[0].mxu0
  %443 = vmatprep.mubr.f32.mxu0 0.0
  %444 = vmatmul.mubr.f32.gmra.mrb[0].mxu0 %v71
  %v445 = vpop.f32.mrb[0].mxu0
  %v446 = vadd.f32 0.0, %v445
  %v447 = vpop.f32.mrb[0].mxu0
  %448 = vmatprep.mubr.f32.mxu0 0.0
  %449 = vmatmul.mubr.f32.gmra.mrb[0].mxu0 %v72
  %v450 = vpop.f32.mrb[0].mxu0
  %v451 = vadd.f32 0.0, %v450
  %v452 = vpop.f32.mrb[0].mxu0
  %453 = vmatprep.mubr.f32.mxu0 0.0
  %454 = vmatmul.mubr.f32.gmra.mrb[0].mxu0 %v73
  %v455 = vpop.f32.mrb[0].mxu0
  %v456 = vadd.f32 0.0, %v455
  %v457 = vpop.f32.mrb[0].mxu0
  %458 = vmatprep.mubr.f32.mxu0 0.0
  %459 = vmatmul.mubr.f32.gmra.mrb[0].mxu0 %v74
  %v460 = vpop.f32.mrb[0].mxu0
  %v461 = vadd.f32 0.0, %v460
  %v462 = vpop.f32.mrb[0].mxu0
  %463 = vmatprep.mubr.f32.mxu0 0.0
  %464 = vmatmul.mubr.f32.gmra.mrb[0].mxu0 %v75
  %v465 = vpop.f32.mrb[0].mxu0
  %v466 = vadd.f32 0.0, %v465
  %v467 = vpop.f32.mrb[0].mxu0
  %468 = vmatprep.mubr.f32.mxu0 0.0
  %469 = vmatmul.mubr.f32.gmra.mrb[0].mxu0 %v76
  %v470 = vpop.f32.mrb[0].mxu0
  %v471 = vadd.f32 0.0, %v470
  %v472 = vpop.f32.mrb[0].mxu0
  %473 = vmatprep.mubr.f32.mxu0 0.0
  %474 = vmatmul.mubr.f32.gmra.mrb[0].mxu0 %v77
  %v475 = vpop.f32.mrb[0].mxu0
  %v476 = vadd.f32 0.0, %v475
  %v477 = vpop.f32.mrb[0].mxu0
  %478 = vdwg.mxu0
  %479 = vst [vmem:[%s2] sm:$0xff] %v161
  %480 = vst [vmem:[%s2 + $0x8] sm:$0xff] %v166
  %481 = vst [vmem:[%s2 + $0x10] sm:$0xff] %v171
  %482 = vst [vmem:[%s2 + $0x18] sm:$0xff] %v176
  %483 = vst [vmem:[%s2 + $0x20] sm:$0xff] %v181
  %484 = vst [vmem:[%s2 + $0x28] sm:$0xff] %v186
  %485 = vst [vmem:[%s2 + $0x30] sm:$0xff] %v191
  %486 = vst [vmem:[%s2 + $0x38] sm:$0xff] %v196
  %487 = vst [vmem:[%s2 + $0x40] sm:$0xff] %v201
  %488 = vst [vmem:[%s2 + $0x48] sm:$0xff] %v206
  %489 = vst [vmem:[%s2 + $0x50] sm:$0xff] %v211
  %490 = vst [vmem:[%s2 + $0x58] sm:$0xff] %v216
  %491 = vst [vmem:[%s2 + $0x60] sm:$0xff] %v221
  %492 = vst [vmem:[%s2 + $0x68] sm:$0xff] %v226
  %493 = vst [vmem:[%s2 + $0x70] sm:$0xff] %v231
  %494 = vst [vmem:[%s2 + $0x78] sm:$0xff] %v236
  %495 = vst [vmem:[%s2 + $0x80] sm:$0xff] %v241
  %496 = vst [vmem:[%s2 + $0x88] sm:$0xff] %v246
  %497 = vst [vmem:[%s2 + $0x90] sm:$0xff] %v251
  %498 = vst [vmem:[%s2 + $0x98] sm:$0xff] %v256
  %499 = vst [vmem:[%s2 + $0xa0] sm:$0xff] %v261
  %500 = vst [vmem:[%s2 + $0xa8] sm:$0xff] %v266
  %501 = vst [vmem:[%s2 + $0xb0] sm:$0xff] %v271
  %502 = vst [vmem:[%s2 + $0xb8] sm:$0xff] %v276
  %503 = vst [vmem:[%s2 + $0xc0] sm:$0xff] %v281
  %504 = vst [vmem:[%s2 + $0xc8] sm:$0xff] %v286
  %505 = vst [vmem:[%s2 + $0xd0] sm:$0xff] %v291
  %506 = vst [vmem:[%s2 + $0xd8] sm:$0xff] %v296
  %507 = vst [vmem:[%s2 + $0xe0] sm:$0xff] %v301
  %508 = vst [vmem:[%s2 + $0xe8] sm:$0xff] %v306
  %509 = vst [vmem:[%s2 + $0xf0] sm:$0xff] %v311
  %510 = vst [vmem:[%s2 + $0xf8] sm:$0xff] %v316
  %511 = vst [vmem:[%s2 + $0x100] sm:$0xff] %v321
  %512 = vst [vmem:[%s2 + $0x108] sm:$0xff] %v326
  %513 = vst [vmem:[%s2 + $0x110] sm:$0xff] %v331
  %514 = vst [vmem:[%s2 + $0x118] sm:$0xff] %v336
  %515 = vst [vmem:[%s2 + $0x120] sm:$0xff] %v341
  %516 = vst [vmem:[%s2 + $0x128] sm:$0xff] %v346
  %517 = vst [vmem:[%s2 + $0x130] sm:$0xff] %v351
  %518 = vst [vmem:[%s2 + $0x138] sm:$0xff] %v356
  %519 = vst [vmem:[%s2 + $0x140] sm:$0xff] %v361
  %520 = vst [vmem:[%s2 + $0x148] sm:$0xff] %v366
  %521 = vst [vmem:[%s2 + $0x150] sm:$0xff] %v371
  %522 = vst [vmem:[%s2 + $0x158] sm:$0xff] %v376
  %523 = vst [vmem:[%s2 + $0x160] sm:$0xff] %v381
  %524 = vst [vmem:[%s2 + $0x168] sm:$0xff] %v386
  %525 = vst [vmem:[%s2 + $0x170] sm:$0xff] %v391
  %526 = vst [vmem:[%s2 + $0x178] sm:$0xff] %v396
  %527 = vst [vmem:[%s2 + $0x180] sm:$0xff] %v401
  %528 = vst [vmem:[%s2 + $0x188] sm:$0xff] %v406
  %529 = vst [vmem:[%s2 + $0x190] sm:$0xff] %v411
  %530 = vst [vmem:[%s2 + $0x198] sm:$0xff] %v416
  %531 = vst [vmem:[%s2 + $0x1a0] sm:$0xff] %v421
  %532 = vst [vmem:[%s2 + $0x1a8] sm:$0xff] %v426
  %533 = vst [vmem:[%s2 + $0x1b0] sm:$0xff] %v431
  %534 = vst [vmem:[%s2 + $0x1b8] sm:$0xff] %v436
  %535 = vst [vmem:[%s2 + $0x1c0] sm:$0xff] %v441
  %536 = vst [vmem:[%s2 + $0x1c8] sm:$0xff] %v446
  %537 = vst [vmem:[%s2 + $0x1d0] sm:$0xff] %v451
  %538 = vst [vmem:[%s2 + $0x1d8] sm:$0xff] %v456
  %539 = vst [vmem:[%s2 + $0x1e0] sm:$0xff] %v461
  %540 = vst [vmem:[%s2 + $0x1e8] sm:$0xff] %v466
  %541 = vst [vmem:[%s2 + $0x1f0] sm:$0xff] %v471
  %542 = vst [vmem:[%s2 + $0x1f8] sm:$0xff] %v476
  %v543 = vadd.f32 %v161, %v166
  %v544 = vadd.f32 %v543, %v171
  %v545 = vadd.f32 %v544, %v176
  %v546 = vadd.f32 %v545, %v181
  %v547 = vadd.f32 %v546, %v186
  %v548 = vadd.f32 %v547, %v191
  %v549 = vadd.f32 %v548, %v196
  %v550 = vadd.f32 %v549, %v201
  %v551 = vadd.f32 %v550, %v206
  %v552 = vadd.f32 %v551, %v211
  %v553 = vadd.f32 %v552, %v216
  %v554 = vadd.f32 %v553, %v221
  %v555 = vadd.f32 %v554, %v226
  %v556 = vadd.f32 %v555, %v231
  %v557 = vadd.f32 %v556, %v236
  %v558 = vadd.f32 %v557, %v241
  %v559 = vadd.f32 %v558, %v246
  %v560 = vadd.f32 %v559, %v251
  %v561 = vadd.f32 %v560, %v256
  %v562 = vadd.f32 %v561, %v261
  %v563 = vadd.f32 %v562, %v266
  %v564 = vadd.f32 %v563, %v271
  %v565 = vadd.f32 %v564, %v276
  %v566 = vadd.f32 %v565, %v281
  %v567 = vadd.f32 %v566, %v286
  %v568 = vadd.f32 %v567, %v291
  %v569 = vadd.f32 %v568, %v296
  %v570 = vadd.f32 %v569, %v301
  %v571 = vadd.f32 %v570, %v306
  %v572 = vadd.f32 %v571, %v311
  %v573 = vadd.f32 %v572, %v316
  %v574 = vadd.f32 %v573, %v321
  %v575 = vadd.f32 %v574, %v326
  %v576 = vadd.f32 %v575, %v331
  %v577 = vadd.f32 %v576, %v336
  %v578 = vadd.f32 %v577, %v341
  %v579 = vadd.f32 %v578, %v346
  %v580 = vadd.f32 %v579, %v351
  %v581 = vadd.f32 %v580, %v356
  %v582 = vadd.f32 %v581, %v361
  %v583 = vadd.f32 %v582, %v366
  %v584 = vadd.f32 %v583, %v371
  %v585 = vadd.f32 %v584, %v376
  %v586 = vadd.f32 %v585, %v381
  %v587 = vadd.f32 %v586, %v386
  %v588 = vadd.f32 %v587, %v391
  %v589 = vadd.f32 %v588, %v396
  %v590 = vadd.f32 %v589, %v401
  %v591 = vadd.f32 %v590, %v406
  %v592 = vadd.f32 %v591, %v411
  %v593 = vadd.f32 %v592, %v416
  %v594 = vadd.f32 %v593, %v421
  %v595 = vadd.f32 %v594, %v426
  %v596 = vadd.f32 %v595, %v431
  %v597 = vadd.f32 %v596, %v436
  %v598 = vadd.f32 %v597, %v441
  %v599 = vadd.f32 %v598, %v446
  %v600 = vadd.f32 %v599, %v451
  %v601 = vadd.f32 %v600, %v456
  %v602 = vadd.f32 %v601, %v461
  %v603 = vadd.f32 %v602, %v466
  %v604 = vadd.f32 %v603, %v471
  %v605 = vadd.f32 %v604, %v476
  %v606 = vrot.slane %v605, 4
  %v607 = vadd.f32 %v605, %v606
  %v608 = vrot.slane %v607, 2
  %v609 = vadd.f32 %v607, %v608
  %v610 = vrot.slane %v609, 1
  %v611 = vadd.f32 %v609, %v610
  %612 = vst [vmem:[%s3] sm:$0xff] %v611
  %v613 = vmul.f32 %v161, %v161
  %v614 = vmul.f32 %v166, %v166
  %v615 = vmul.f32 %v171, %v171
  %v616 = vmul.f32 %v176, %v176
  %v617 = vmul.f32 %v181, %v181
  %v618 = vmul.f32 %v186, %v186
  %v619 = vmul.f32 %v191, %v191
  %v620 = vmul.f32 %v196, %v196
  %v621 = vmul.f32 %v201, %v201
  %v622 = vmul.f32 %v206, %v206
  %v623 = vmul.f32 %v211, %v211
  %v624 = vmul.f32 %v216, %v216
  %v625 = vmul.f32 %v221, %v221
  %v626 = vmul.f32 %v226, %v226
  %v627 = vmul.f32 %v231, %v231
  %v628 = vmul.f32 %v236, %v236
  %v629 = vmul.f32 %v241, %v241
  %v630 = vmul.f32 %v246, %v246
  %v631 = vmul.f32 %v251, %v251
  %v632 = vmul.f32 %v256, %v256
  %v633 = vmul.f32 %v261, %v261
  %v634 = vmul.f32 %v266, %v266
  %v635 = vmul.f32 %v271, %v271
  %v636 = vmul.f32 %v276, %v276
  %v637 = vmul.f32 %v281, %v281
  %v638 = vmul.f32 %v286, %v286
  %v639 = vmul.f32 %v291, %v291
  %v640 = vmul.f32 %v296, %v296
  %v641 = vmul.f32 %v301, %v301
  %v642 = vmul.f32 %v306, %v306
  %v643 = vmul.f32 %v311, %v311
  %v644 = vmul.f32 %v316, %v316
  %v645 = vmul.f32 %v321, %v321
  %v646 = vmul.f32 %v326, %v326
  %v647 = vmul.f32 %v331, %v331
  %v648 = vmul.f32 %v336, %v336
  %v649 = vmul.f32 %v341, %v341
  %v650 = vmul.f32 %v346, %v346
  %v651 = vmul.f32 %v351, %v351
  %v652 = vmul.f32 %v356, %v356
  %v653 = vmul.f32 %v361, %v361
  %v654 = vmul.f32 %v366, %v366
  %v655 = vmul.f32 %v371, %v371
  %v656 = vmul.f32 %v376, %v376
  %v657 = vmul.f32 %v381, %v381
  %v658 = vmul.f32 %v386, %v386
  %v659 = vmul.f32 %v391, %v391
  %v660 = vmul.f32 %v396, %v396
  %v661 = vmul.f32 %v401, %v401
  %v662 = vmul.f32 %v406, %v406
  %v663 = vmul.f32 %v411, %v411
  %v664 = vmul.f32 %v416, %v416
  %v665 = vmul.f32 %v421, %v421
  %v666 = vmul.f32 %v426, %v426
  %v667 = vmul.f32 %v431, %v431
  %v668 = vmul.f32 %v436, %v436
  %v669 = vmul.f32 %v441, %v441
  %v670 = vmul.f32 %v446, %v446
  %v671 = vmul.f32 %v451, %v451
  %v672 = vmul.f32 %v456, %v456
  %v673 = vmul.f32 %v461, %v461
  %v674 = vmul.f32 %v466, %v466
  %v675 = vmul.f32 %v471, %v471
  %v676 = vmul.f32 %v476, %v476
  %v677 = vadd.f32 %v613, %v614
  %v678 = vadd.f32 %v677, %v615
  %v679 = vadd.f32 %v678, %v616
  %v680 = vadd.f32 %v679, %v617
  %v681 = vadd.f32 %v680, %v618
  %v682 = vadd.f32 %v681, %v619
  %v683 = vadd.f32 %v682, %v620
  %v684 = vadd.f32 %v683, %v621
  %v685 = vadd.f32 %v684, %v622
  %v686 = vadd.f32 %v685, %v623
  %v687 = vadd.f32 %v686, %v624
  %v688 = vadd.f32 %v687, %v625
  %v689 = vadd.f32 %v688, %v626
  %v690 = vadd.f32 %v689, %v627
  %v691 = vadd.f32 %v690, %v628
  %v692 = vadd.f32 %v691, %v629
  %v693 = vadd.f32 %v692, %v630
  %v694 = vadd.f32 %v693, %v631
  %v695 = vadd.f32 %v694, %v632
  %v696 = vadd.f32 %v695, %v633
  %v697 = vadd.f32 %v696, %v634
  %v698 = vadd.f32 %v697, %v635
  %v699 = vadd.f32 %v698, %v636
  %v700 = vadd.f32 %v699, %v637
  %v701 = vadd.f32 %v700, %v638
  %v702 = vadd.f32 %v701, %v639
  %v703 = vadd.f32 %v702, %v640
  %v704 = vadd.f32 %v703, %v641
  %v705 = vadd.f32 %v704, %v642
  %v706 = vadd.f32 %v705, %v643
  %v707 = vadd.f32 %v706, %v644
  %v708 = vadd.f32 %v707, %v645
  %v709 = vadd.f32 %v708, %v646
  %v710 = vadd.f32 %v709, %v647
  %v711 = vadd.f32 %v710, %v648
  %v712 = vadd.f32 %v711, %v649
  %v713 = vadd.f32 %v712, %v650
  %v714 = vadd.f32 %v713, %v651
  %v715 = vadd.f32 %v714, %v652
  %v716 = vadd.f32 %v715, %v653
  %v717 = vadd.f32 %v716, %v654
  %v718 = vadd.f32 %v717, %v655
  %v719 = vadd.f32 %v718, %v656
  %v720 = vadd.f32 %v719, %v657
  %v721 = vadd.f32 %v720, %v658
  %v722 = vadd.f32 %v721, %v659
  %v723 = vadd.f32 %v722, %v660
  %v724 = vadd.f32 %v723, %v661
  %v725 = vadd.f32 %v724, %v662
  %v726 = vadd.f32 %v725, %v663
  %v727 = vadd.f32 %v726, %v664
  %v728 = vadd.f32 %v727, %v665
  %v729 = vadd.f32 %v728, %v666
  %v730 = vadd.f32 %v729, %v667
  %v731 = vadd.f32 %v730, %v668
  %v732 = vadd.f32 %v731, %v669
  %v733 = vadd.f32 %v732, %v670
  %v734 = vadd.f32 %v733, %v671
  %v735 = vadd.f32 %v734, %v672
  %v736 = vadd.f32 %v735, %v673
  %v737 = vadd.f32 %v736, %v674
  %v738 = vadd.f32 %v737, %v675
  %v739 = vadd.f32 %v738, %v676
  %v740 = vrot.slane %v739, 4
  %v741 = vadd.f32 %v739, %v740
  %v742 = vrot.slane %v741, 2
  %v743 = vadd.f32 %v741, %v742
  %v744 = vrot.slane %v743, 1
  %v745 = vadd.f32 %v743, %v744
  %746 = vst [vmem:[%s4] sm:$0xff] %v745
  // Predicated region
  $region10: #{bottleneck_forward.4} parent=0 // pred_check
    _
  $region11: #{bottleneck_forward.4} parent=0 // pred_check_branch
    %748 = sbr.rel (0) target = $region13
  $region12: #{bottleneck_forward.4} parent=0 // pred_region
    _
  $region13: #{bottleneck_forward.4} parent=0 // pred_fallthru
    _
  // Predicated region
  $region14: #{bottleneck_forward.4} parent=0 // pred_check
    _
  $region15: #{bottleneck_forward.4} parent=0 // pred_check_branch
    %750 = sbr.rel (0) target = $region17
  $region16: #{bottleneck_forward.4} parent=0 // pred_region
    _
  $region17: #{bottleneck_forward.4} parent=0 // pred_fallthru
    _
  // Predicated region
  $region18: #{bottleneck_forward.4} parent=0 // pred_check
    _
  $region19: #{bottleneck_forward.4} parent=0 // pred_check_branch
    %752 = sbr.rel (0) target = $region21
  $region20: #{bottleneck_forward.4} parent=0 // pred_region
    _
  $region21: #{bottleneck_forward.4} parent=0 // pred_fallthru
    _
  // Predicated region
  $region22: #{bottleneck_forward.4} parent=0 // pred_check
    _
  $region23: #{bottleneck_forward.4} parent=0 // pred_check_branch
    %754 = sbr.rel (0) target = $region25
  $region24: #{bottleneck_forward.4} parent=0 // pred_region
    _
  $region25: #{bottleneck_forward.4} parent=0 // pred_fallthru
    _
  // Predicated region
  $region26: #{bottleneck_forward.4} parent=0 // pred_check
    _
  $region27: #{bottleneck_forward.4} parent=0 // pred_check_branch
    %756 = sbr.rel (0) target = $region29
  $region28: #{bottleneck_forward.4} parent=0 // pred_region
    _
  $region29: #{bottleneck_forward.4} parent=0 // pred_fallthru
    _
  // Predicated region
  $region30: #{bottleneck_forward.4} parent=0 // pred_check
    _
  $region31: #{bottleneck_forward.4} parent=0 // pred_check_branch
    %758 = sbr.rel (0) target = $region33
  $region32: #{bottleneck_forward.4} parent=0 // pred_region
    _
  $region33: #{bottleneck_forward.4} parent=0 // pred_fallthru
    _

// kernel: bottleneck_forward.7
$region0: #{bottleneck_forward.7}
  #allocation0 [shape = 'u32[]', space=smem, size = 0x4, offset = 0x4, fixed_abs, tag = 'smem constant byte address 0x4 - core index']
  #allocation1 [shape = 'u32[144,128]{1,0:T(1,128)}', space=vmem, size = 0x12000, scoped, tag = 'internal scratch']
  %s0 = inlined_call_operand.vmem [shape: f32[512,128], index: 0, kind: input, shape index: {}]
  %s1 = inlined_call_operand.vmem [shape: f32[1,128], index: 1, kind: input, shape index: {}]
  %s2 = inlined_call_operand.vmem [shape: f32[1,128], index: 2, kind: input, shape index: {}]
  %s3 = inlined_call_operand.vmem [shape: f32[512,128], index: 3, kind: input, shape index: {}]
  %s4 = inlined_call_operand.hbm [shape: f32[512,128], index: 4, kind: output, shape index: {}]
  %s5 = sld [smem:[#allocation0]]
  $region26: #{bottleneck_forward.7} parent=0
    _
  %s7 = ssub.s32 1, %s5
  %s8 = scalar_select 0, %s7, %s5
  $region1: #{bottleneck_forward.7} parent=0
    #allocation2 [shape = 'u8[262144]{0}', space=vmem, size = 0x40000, scoped, tag = 'output window, operand 0, single buffered']
    #allocation3 [shape = 's32[1]{0}', space=sflag, size = 0x4, scoped, tag = 'scoped memory for bottleneck_forward.7']
    %9 = vsyncpa [#allocation3], 0
    // Predicated region
    $region2: #{bottleneck_forward.7} parent=1 // pred_check
      _
    $region3: #{bottleneck_forward.7} parent=1 // pred_check_branch
      %11 = sbr.rel (0) target = $region5
    $region4: #{bottleneck_forward.7} parent=1 // pred_region
      _
    $region5: #{bottleneck_forward.7} parent=1 // pred_fallthru
      _
    // Predicated region
    $region6: #{bottleneck_forward.7} parent=1 // pred_check
      _
    $region7: #{bottleneck_forward.7} parent=1 // pred_check_branch
      %13 = sbr.rel (0) target = $region9
    $region8: #{bottleneck_forward.7} parent=1 // pred_region
      _
    $region9: #{bottleneck_forward.7} parent=1 // pred_fallthru
      _
    // Predicated region
    $region10: #{bottleneck_forward.7} parent=1 // pred_check
      _
    $region11: #{bottleneck_forward.7} parent=1 // pred_check_branch
      %15 = sbr.rel (0) target = $region13
    $region12: #{bottleneck_forward.7} parent=1 // pred_region
      _
    $region13: #{bottleneck_forward.7} parent=1 // pred_fallthru
      _
    // Predicated region
    $region14: #{bottleneck_forward.7} parent=1 // pred_check
      _
    $region15: #{bottleneck_forward.7} parent=1 // pred_check_branch
      %17 = sbr.rel (0) target = $region17
    $region16: #{bottleneck_forward.7} parent=1 // pred_region
      _
    $region17: #{bottleneck_forward.7} parent=1 // pred_fallthru
      _
    %v18 = vld [vmem:[%s0] sm:$0xff]
    %v19 = vld [vmem:[%s0 + $0x8] sm:$0xff]
    %v20 = vld [vmem:[%s0 + $0x10] sm:$0xff]
    %v21 = vld [vmem:[%s0 + $0x18] sm:$0xff]
    %v22 = vld [vmem:[%s0 + $0x20] sm:$0xff]
    %v23 = vld [vmem:[%s0 + $0x28] sm:$0xff]
    %v24 = vld [vmem:[%s0 + $0x30] sm:$0xff]
    %v25 = vld [vmem:[%s0 + $0x38] sm:$0xff]
    %v26 = vld [vmem:[%s0 + $0x40] sm:$0xff]
    %v27 = vld [vmem:[%s0 + $0x48] sm:$0xff]
    %v28 = vld [vmem:[%s0 + $0x50] sm:$0xff]
    %v29 = vld [vmem:[%s0 + $0x58] sm:$0xff]
    %v30 = vld [vmem:[%s0 + $0x60] sm:$0xff]
    %v31 = vld [vmem:[%s0 + $0x68] sm:$0xff]
    %v32 = vld [vmem:[%s0 + $0x70] sm:$0xff]
    %v33 = vld [vmem:[%s0 + $0x78] sm:$0xff]
    %v34 = vld [vmem:[%s0 + $0x80] sm:$0xff]
    %v35 = vld [vmem:[%s0 + $0x88] sm:$0xff]
    %v36 = vld [vmem:[%s0 + $0x90] sm:$0xff]
    %v37 = vld [vmem:[%s0 + $0x98] sm:$0xff]
    %v38 = vld [vmem:[%s0 + $0xa0] sm:$0xff]
    %v39 = vld [vmem:[%s0 + $0xa8] sm:$0xff]
    %v40 = vld [vmem:[%s0 + $0xb0] sm:$0xff]
    %v41 = vld [vmem:[%s0 + $0xb8] sm:$0xff]
    %v42 = vld [vmem:[%s0 + $0xc0] sm:$0xff]
    %v43 = vld [vmem:[%s0 + $0xc8] sm:$0xff]
    %v44 = vld [vmem:[%s0 + $0xd0] sm:$0xff]
    %v45 = vld [vmem:[%s0 + $0xd8] sm:$0xff]
    %v46 = vld [vmem:[%s0 + $0xe0] sm:$0xff]
    %v47 = vld [vmem:[%s0 + $0xe8] sm:$0xff]
    %v48 = vld [vmem:[%s0 + $0xf0] sm:$0xff]
    %v49 = vld [vmem:[%s0 + $0xf8] sm:$0xff]
    %v50 = vld [vmem:[%s0 + $0x100] sm:$0xff]
    %v51 = vld [vmem:[%s0 + $0x108] sm:$0xff]
    %v52 = vld [vmem:[%s0 + $0x110] sm:$0xff]
    %v53 = vld [vmem:[%s0 + $0x118] sm:$0xff]
    %v54 = vld [vmem:[%s0 + $0x120] sm:$0xff]
    %v55 = vld [vmem:[%s0 + $0x128] sm:$0xff]
    %v56 = vld [vmem:[%s0 + $0x130] sm:$0xff]
    %v57 = vld [vmem:[%s0 + $0x138] sm:$0xff]
    %v58 = vld [vmem:[%s0 + $0x140] sm:$0xff]
    %v59 = vld [vmem:[%s0 + $0x148] sm:$0xff]
    %v60 = vld [vmem:[%s0 + $0x150] sm:$0xff]
    %v61 = vld [vmem:[%s0 + $0x158] sm:$0xff]
    %v62 = vld [vmem:[%s0 + $0x160] sm:$0xff]
    %v63 = vld [vmem:[%s0 + $0x168] sm:$0xff]
    %v64 = vld [vmem:[%s0 + $0x170] sm:$0xff]
    %v65 = vld [vmem:[%s0 + $0x178] sm:$0xff]
    %v66 = vld [vmem:[%s0 + $0x180] sm:$0xff]
    %v67 = vld [vmem:[%s0 + $0x188] sm:$0xff]
    %v68 = vld [vmem:[%s0 + $0x190] sm:$0xff]
    %v69 = vld [vmem:[%s0 + $0x198] sm:$0xff]
    %v70 = vld [vmem:[%s0 + $0x1a0] sm:$0xff]
    %v71 = vld [vmem:[%s0 + $0x1a8] sm:$0xff]
    %v72 = vld [vmem:[%s0 + $0x1b0] sm:$0xff]
    %v73 = vld [vmem:[%s0 + $0x1b8] sm:$0xff]
    %v74 = vld [vmem:[%s0 + $0x1c0] sm:$0xff]
    %v75 = vld [vmem:[%s0 + $0x1c8] sm:$0xff]
    %v76 = vld [vmem:[%s0 + $0x1d0] sm:$0xff]
    %v77 = vld [vmem:[%s0 + $0x1d8] sm:$0xff]
    %v78 = vld [vmem:[%s0 + $0x1e0] sm:$0xff]
    %v79 = vld [vmem:[%s0 + $0x1e8] sm:$0xff]
    %v80 = vld [vmem:[%s0 + $0x1f0] sm:$0xff]
    %v81 = vld [vmem:[%s0 + $0x1f8] sm:$0xff]
    %v82 = vld [vmem:[%s1] sm:$0x1]
    %v84 = vlaneseq
    %v85 = vshrl.u32 %v84, 7
    %v86 = vsub.s32 0, %v85
    %v87 = vrot.slane %v82, %v86
    %v89 = vmul.f32 %v18, %v87
    %v90 = vmul.f32 %v19, %v87
    %v91 = vmul.f32 %v20, %v87
    %v92 = vmul.f32 %v21, %v87
    %v93 = vmul.f32 %v22, %v87
    %v94 = vmul.f32 %v23, %v87
    %v95 = vmul.f32 %v24, %v87
    %v96 = vmul.f32 %v25, %v87
    %v97 = vmul.f32 %v26, %v87
    %v98 = vmul.f32 %v27, %v87
    %v99 = vmul.f32 %v28, %v87
    %v100 = vmul.f32 %v29, %v87
    %v101 = vmul.f32 %v30, %v87
    %v102 = vmul.f32 %v31, %v87
    %v103 = vmul.f32 %v32, %v87
    %v104 = vmul.f32 %v33, %v87
    %v105 = vmul.f32 %v34, %v87
    %v106 = vmul.f32 %v35, %v87
    %v107 = vmul.f32 %v36, %v87
    %v108 = vmul.f32 %v37, %v87
    %v109 = vmul.f32 %v38, %v87
    %v110 = vmul.f32 %v39, %v87
    %v111 = vmul.f32 %v40, %v87
    %v112 = vmul.f32 %v41, %v87
    %v113 = vmul.f32 %v42, %v87
    %v114 = vmul.f32 %v43, %v87
    %v115 = vmul.f32 %v44, %v87
    %v116 = vmul.f32 %v45, %v87
    %v117 = vmul.f32 %v46, %v87
    %v118 = vmul.f32 %v47, %v87
    %v119 = vmul.f32 %v48, %v87
    %v120 = vmul.f32 %v49, %v87
    %v121 = vmul.f32 %v50, %v87
    %v122 = vmul.f32 %v51, %v87
    %v123 = vmul.f32 %v52, %v87
    %v124 = vmul.f32 %v53, %v87
    %v125 = vmul.f32 %v54, %v87
    %v126 = vmul.f32 %v55, %v87
    %v127 = vmul.f32 %v56, %v87
    %v128 = vmul.f32 %v57, %v87
    %v129 = vmul.f32 %v58, %v87
    %v130 = vmul.f32 %v59, %v87
    %v131 = vmul.f32 %v60, %v87
    %v132 = vmul.f32 %v61, %v87
    %v133 = vmul.f32 %v62, %v87
    %v134 = vmul.f32 %v63, %v87
    %v135 = vmul.f32 %v64, %v87
    %v136 = vmul.f32 %v65, %v87
    %v137 = vmul.f32 %v66, %v87
    %v138 = vmul.f32 %v67, %v87
    %v139 = vmul.f32 %v68, %v87
    %v140 = vmul.f32 %v69, %v87
    %v141 = vmul.f32 %v70, %v87
    %v142 = vmul.f32 %v71, %v87
    %v143 = vmul.f32 %v72, %v87
    %v144 = vmul.f32 %v73, %v87
    %v145 = vmul.f32 %v74, %v87
    %v146 = vmul.f32 %v75, %v87
    %v147 = vmul.f32 %v76, %v87
    %v148 = vmul.f32 %v77, %v87
    %v149 = vmul.f32 %v78, %v87
    %v150 = vmul.f32 %v79, %v87
    %v151 = vmul.f32 %v80, %v87
    %v152 = vmul.f32 %v81, %v87
    %v153 = vld [vmem:[%s2] sm:$0x1]
    %v155 = vlaneseq
    %v156 = vshrl.u32 %v155, 7
    %v157 = vsub.s32 0, %v156
    %v158 = vrot.slane %v153, %v157
    %v160 = vadd.f32 %v89, %v158
    %v161 = vadd.f32 %v90, %v158
    %v162 = vadd.f32 %v91, %v158
    %v163 = vadd.f32 %v92, %v158
    %v164 = vadd.f32 %v93, %v158
    %v165 = vadd.f32 %v94, %v158
    %v166 = vadd.f32 %v95, %v158
    %v167 = vadd.f32 %v96, %v158
    %v168 = vadd.f32 %v97, %v158
    %v169 = vadd.f32 %v98, %v158
    %v170 = vadd.f32 %v99, %v158
    %v171 = vadd.f32 %v100, %v158
    %v172 = vadd.f32 %v101, %v158
    %v173 = vadd.f32 %v102, %v158
    %v174 = vadd.f32 %v103, %v158
    %v175 = vadd.f32 %v104, %v158
    %v176 = vadd.f32 %v105, %v158
    %v177 = vadd.f32 %v106, %v158
    %v178 = vadd.f32 %v107, %v158
    %v179 = vadd.f32 %v108, %v158
    %v180 = vadd.f32 %v109, %v158
    %v181 = vadd.f32 %v110, %v158
    %v182 = vadd.f32 %v111, %v158
    %v183 = vadd.f32 %v112, %v158
    %v184 = vadd.f32 %v113, %v158
    %v185 = vadd.f32 %v114, %v158
    %v186 = vadd.f32 %v115, %v158
    %v187 = vadd.f32 %v116, %v158
    %v188 = vadd.f32 %v117, %v158
    %v189 = vadd.f32 %v118, %v158
    %v190 = vadd.f32 %v119, %v158
    %v191 = vadd.f32 %v120, %v158
    %v192 = vadd.f32 %v121, %v158
    %v193 = vadd.f32 %v122, %v158
    %v194 = vadd.f32 %v123, %v158
    %v195 = vadd.f32 %v124, %v158
    %v196 = vadd.f32 %v125, %v158
    %v197 = vadd.f32 %v126, %v158
    %v198 = vadd.f32 %v127, %v158
    %v199 = vadd.f32 %v128, %v158
    %v200 = vadd.f32 %v129, %v158
    %v201 = vadd.f32 %v130, %v158
    %v202 = vadd.f32 %v131, %v158
    %v203 = vadd.f32 %v132, %v158
    %v204 = vadd.f32 %v133, %v158
    %v205 = vadd.f32 %v134, %v158
    %v206 = vadd.f32 %v135, %v158
    %v207 = vadd.f32 %v136, %v158
    %v208 = vadd.f32 %v137, %v158
    %v209 = vadd.f32 %v138, %v158
    %v210 = vadd.f32 %v139, %v158
    %v211 = vadd.f32 %v140, %v158
    %v212 = vadd.f32 %v141, %v158
    %v213 = vadd.f32 %v142, %v158
    %v214 = vadd.f32 %v143, %v158
    %v215 = vadd.f32 %v144, %v158
    %v216 = vadd.f32 %v145, %v158
    %v217 = vadd.f32 %v146, %v158
    %v218 = vadd.f32 %v147, %v158
    %v219 = vadd.f32 %v148, %v158
    %v220 = vadd.f32 %v149, %v158
    %v221 = vadd.f32 %v150, %v158
    %v222 = vadd.f32 %v151, %v158
    %v223 = vadd.f32 %v152, %v158
    %v224 = vld [vmem:[%s3] sm:$0xff]
    %v225 = vld [vmem:[%s3 + $0x8] sm:$0xff]
    %v226 = vld [vmem:[%s3 + $0x10] sm:$0xff]
    %v227 = vld [vmem:[%s3 + $0x18] sm:$0xff]
    %v228 = vld [vmem:[%s3 + $0x20] sm:$0xff]
    %v229 = vld [vmem:[%s3 + $0x28] sm:$0xff]
    %v230 = vld [vmem:[%s3 + $0x30] sm:$0xff]
    %v231 = vld [vmem:[%s3 + $0x38] sm:$0xff]
    %v232 = vld [vmem:[%s3 + $0x40] sm:$0xff]
    %v233 = vld [vmem:[%s3 + $0x48] sm:$0xff]
    %v234 = vld [vmem:[%s3 + $0x50] sm:$0xff]
    %v235 = vld [vmem:[%s3 + $0x58] sm:$0xff]
    %v236 = vld [vmem:[%s3 + $0x60] sm:$0xff]
    %v237 = vld [vmem:[%s3 + $0x68] sm:$0xff]
    %v238 = vld [vmem:[%s3 + $0x70] sm:$0xff]
    %v239 = vld [vmem:[%s3 + $0x78] sm:$0xff]
    %v240 = vld [vmem:[%s3 + $0x80] sm:$0xff]
    %v241 = vld [vmem:[%s3 + $0x88] sm:$0xff]
    %v242 = vld [vmem:[%s3 + $0x90] sm:$0xff]
    %v243 = vld [vmem:[%s3 + $0x98] sm:$0xff]
    %v244 = vld [vmem:[%s3 + $0xa0] sm:$0xff]
    %v245 = vld [vmem:[%s3 + $0xa8] sm:$0xff]
    %v246 = vld [vmem:[%s3 + $0xb0] sm:$0xff]
    %v247 = vld [vmem:[%s3 + $0xb8] sm:$0xff]
    %v248 = vld [vmem:[%s3 + $0xc0] sm:$0xff]
    %v249 = vld [vmem:[%s3 + $0xc8] sm:$0xff]
    %v250 = vld [vmem:[%s3 + $0xd0] sm:$0xff]
    %v251 = vld [vmem:[%s3 + $0xd8] sm:$0xff]
    %v252 = vld [vmem:[%s3 + $0xe0] sm:$0xff]
    %v253 = vld [vmem:[%s3 + $0xe8] sm:$0xff]
    %v254 = vld [vmem:[%s3 + $0xf0] sm:$0xff]
    %v255 = vld [vmem:[%s3 + $0xf8] sm:$0xff]
    %v256 = vld [vmem:[%s3 + $0x100] sm:$0xff]
    %v257 = vld [vmem:[%s3 + $0x108] sm:$0xff]
    %v258 = vld [vmem:[%s3 + $0x110] sm:$0xff]
    %v259 = vld [vmem:[%s3 + $0x118] sm:$0xff]
    %v260 = vld [vmem:[%s3 + $0x120] sm:$0xff]
    %v261 = vld [vmem:[%s3 + $0x128] sm:$0xff]
    %v262 = vld [vmem:[%s3 + $0x130] sm:$0xff]
    %v263 = vld [vmem:[%s3 + $0x138] sm:$0xff]
    %v264 = vld [vmem:[%s3 + $0x140] sm:$0xff]
    %v265 = vld [vmem:[%s3 + $0x148] sm:$0xff]
    %v266 = vld [vmem:[%s3 + $0x150] sm:$0xff]
    %v267 = vld [vmem:[%s3 + $0x158] sm:$0xff]
    %v268 = vld [vmem:[%s3 + $0x160] sm:$0xff]
    %v269 = vld [vmem:[%s3 + $0x168] sm:$0xff]
    %v270 = vld [vmem:[%s3 + $0x170] sm:$0xff]
    %v271 = vld [vmem:[%s3 + $0x178] sm:$0xff]
    %v272 = vld [vmem:[%s3 + $0x180] sm:$0xff]
    %v273 = vld [vmem:[%s3 + $0x188] sm:$0xff]
    %v274 = vld [vmem:[%s3 + $0x190] sm:$0xff]
    %v275 = vld [vmem:[%s3 + $0x198] sm:$0xff]
    %v276 = vld [vmem:[%s3 + $0x1a0] sm:$0xff]
    %v277 = vld [vmem:[%s3 + $0x1a8] sm:$0xff]
    %v278 = vld [vmem:[%s3 + $0x1b0] sm:$0xff]
    %v279 = vld [vmem:[%s3 + $0x1b8] sm:$0xff]
    %v280 = vld [vmem:[%s3 + $0x1c0] sm:$0xff]
    %v281 = vld [vmem:[%s3 + $0x1c8] sm:$0xff]
    %v282 = vld [vmem:[%s3 + $0x1d0] sm:$0xff]
    %v283 = vld [vmem:[%s3 + $0x1d8] sm:$0xff]
    %v284 = vld [vmem:[%s3 + $0x1e0] sm:$0xff]
    %v285 = vld [vmem:[%s3 + $0x1e8] sm:$0xff]
    %v286 = vld [vmem:[%s3 + $0x1f0] sm:$0xff]
    %v287 = vld [vmem:[%s3 + $0x1f8] sm:$0xff]
    %v288 = vadd.f32 %v160, %v224
    %v289 = vadd.f32 %v161, %v225
    %v290 = vadd.f32 %v162, %v226
    %v291 = vadd.f32 %v163, %v227
    %v292 = vadd.f32 %v164, %v228
    %v293 = vadd.f32 %v165, %v229
    %v294 = vadd.f32 %v166, %v230
    %v295 = vadd.f32 %v167, %v231
    %v296 = vadd.f32 %v168, %v232
    %v297 = vadd.f32 %v169, %v233
    %v298 = vadd.f32 %v170, %v234
    %v299 = vadd.f32 %v171, %v235
    %v300 = vadd.f32 %v172, %v236
    %v301 = vadd.f32 %v173, %v237
    %v302 = vadd.f32 %v174, %v238
    %v303 = vadd.f32 %v175, %v239
    %v304 = vadd.f32 %v176, %v240
    %v305 = vadd.f32 %v177, %v241
    %v306 = vadd.f32 %v178, %v242
    %v307 = vadd.f32 %v179, %v243
    %v308 = vadd.f32 %v180, %v244
    %v309 = vadd.f32 %v181, %v245
    %v310 = vadd.f32 %v182, %v246
    %v311 = vadd.f32 %v183, %v247
    %v312 = vadd.f32 %v184, %v248
    %v313 = vadd.f32 %v185, %v249
    %v314 = vadd.f32 %v186, %v250
    %v315 = vadd.f32 %v187, %v251
    %v316 = vadd.f32 %v188, %v252
    %v317 = vadd.f32 %v189, %v253
    %v318 = vadd.f32 %v190, %v254
    %v319 = vadd.f32 %v191, %v255
    %v320 = vadd.f32 %v192, %v256
    %v321 = vadd.f32 %v193, %v257
    %v322 = vadd.f32 %v194, %v258
    %v323 = vadd.f32 %v195, %v259
    %v324 = vadd.f32 %v196, %v260
    %v325 = vadd.f32 %v197, %v261
    %v326 = vadd.f32 %v198, %v262
    %v327 = vadd.f32 %v199, %v263
    %v328 = vadd.f32 %v200, %v264
    %v329 = vadd.f32 %v201, %v265
    %v330 = vadd.f32 %v202, %v266
    %v331 = vadd.f32 %v203, %v267
    %v332 = vadd.f32 %v204, %v268
    %v333 = vadd.f32 %v205, %v269
    %v334 = vadd.f32 %v206, %v270
    %v335 = vadd.f32 %v207, %v271
    %v336 = vadd.f32 %v208, %v272
    %v337 = vadd.f32 %v209, %v273
    %v338 = vadd.f32 %v210, %v274
    %v339 = vadd.f32 %v211, %v275
    %v340 = vadd.f32 %v212, %v276
    %v341 = vadd.f32 %v213, %v277
    %v342 = vadd.f32 %v214, %v278
    %v343 = vadd.f32 %v215, %v279
    %v344 = vadd.f32 %v216, %v280
    %v345 = vadd.f32 %v217, %v281
    %v346 = vadd.f32 %v218, %v282
    %v347 = vadd.f32 %v219, %v283
    %v348 = vadd.f32 %v220, %v284
    %v349 = vadd.f32 %v221, %v285
    %v350 = vadd.f32 %v222, %v286
    %v351 = vadd.f32 %v223, %v287
    %v352 = vmax.f32 %v288, 0.0
    %v353 = vmax.f32 %v289, 0.0
    %v354 = vmax.f32 %v290, 0.0
    %v355 = vmax.f32 %v291, 0.0
    %v356 = vmax.f32 %v292, 0.0
    %v357 = vmax.f32 %v293, 0.0
    %v358 = vmax.f32 %v294, 0.0
    %v359 = vmax.f32 %v295, 0.0
    %v360 = vmax.f32 %v296, 0.0
    %v361 = vmax.f32 %v297, 0.0
    %v362 = vmax.f32 %v298, 0.0
    %v363 = vmax.f32 %v299, 0.0
    %v364 = vmax.f32 %v300, 0.0
    %v365 = vmax.f32 %v301, 0.0
    %v366 = vmax.f32 %v302, 0.0
    %v367 = vmax.f32 %v303, 0.0
    %v368 = vmax.f32 %v304, 0.0
    %v369 = vmax.f32 %v305, 0.0
    %v370 = vmax.f32 %v306, 0.0
    %v371 = vmax.f32 %v307, 0.0
    %v372 = vmax.f32 %v308, 0.0
    %v373 = vmax.f32 %v309, 0.0
    %v374 = vmax.f32 %v310, 0.0
    %v375 = vmax.f32 %v311, 0.0
    %v376 = vmax.f32 %v312, 0.0
    %v377 = vmax.f32 %v313, 0.0
    %v378 = vmax.f32 %v314, 0.0
    %v379 = vmax.f32 %v315, 0.0
    %v380 = vmax.f32 %v316, 0.0
    %v381 = vmax.f32 %v317, 0.0
    %v382 = vmax.f32 %v318, 0.0
    %v383 = vmax.f32 %v319, 0.0
    %v384 = vmax.f32 %v320, 0.0
    %v385 = vmax.f32 %v321, 0.0
    %v386 = vmax.f32 %v322, 0.0
    %v387 = vmax.f32 %v323, 0.0
    %v388 = vmax.f32 %v324, 0.0
    %v389 = vmax.f32 %v325, 0.0
    %v390 = vmax.f32 %v326, 0.0
    %v391 = vmax.f32 %v327, 0.0
    %v392 = vmax.f32 %v328, 0.0
    %v393 = vmax.f32 %v329, 0.0
    %v394 = vmax.f32 %v330, 0.0
    %v395 = vmax.f32 %v331, 0.0
    %v396 = vmax.f32 %v332, 0.0
    %v397 = vmax.f32 %v333, 0.0
    %v398 = vmax.f32 %v334, 0.0
    %v399 = vmax.f32 %v335, 0.0
    %v400 = vmax.f32 %v336, 0.0
    %v401 = vmax.f32 %v337, 0.0
    %v402 = vmax.f32 %v338, 0.0
    %v403 = vmax.f32 %v339, 0.0
    %v404 = vmax.f32 %v340, 0.0
    %v405 = vmax.f32 %v341, 0.0
    %v406 = vmax.f32 %v342, 0.0
    %v407 = vmax.f32 %v343, 0.0
    %v408 = vmax.f32 %v344, 0.0
    %v409 = vmax.f32 %v345, 0.0
    %v410 = vmax.f32 %v346, 0.0
    %v411 = vmax.f32 %v347, 0.0
    %v412 = vmax.f32 %v348, 0.0
    %v413 = vmax.f32 %v349, 0.0
    %v414 = vmax.f32 %v350, 0.0
    %v415 = vmax.f32 %v351, 0.0
    %416 = vst [vmem:[#allocation2] sm:$0xff] %v352
    %417 = vst [vmem:[#allocation2 + $0x8] sm:$0xff] %v353
    %418 = vst [vmem:[#allocation2 + $0x10] sm:$0xff] %v354
    %419 = vst [vmem:[#allocation2 + $0x18] sm:$0xff] %v355
    %420 = vst [vmem:[#allocation2 + $0x20] sm:$0xff] %v356
    %421 = vst [vmem:[#allocation2 + $0x28] sm:$0xff] %v357
    %422 = vst [vmem:[#allocation2 + $0x30] sm:$0xff] %v358
    %423 = vst [vmem:[#allocation2 + $0x38] sm:$0xff] %v359
    %424 = vst [vmem:[#allocation2 + $0x40] sm:$0xff] %v360
    %425 = vst [vmem:[#allocation2 + $0x48] sm:$0xff] %v361
    %426 = vst [vmem:[#allocation2 + $0x50] sm:$0xff] %v362
    %427 = vst [vmem:[#allocation2 + $0x58] sm:$0xff] %v363
    %428 = vst [vmem:[#allocation2 + $0x60] sm:$0xff] %v364
    %429 = vst [vmem:[#allocation2 + $0x68] sm:$0xff] %v365
    %430 = vst [vmem:[#allocation2 + $0x70] sm:$0xff] %v366
    %431 = vst [vmem:[#allocation2 + $0x78] sm:$0xff] %v367
    %432 = vst [vmem:[#allocation2 + $0x80] sm:$0xff] %v368
    %433 = vst [vmem:[#allocation2 + $0x88] sm:$0xff] %v369
    %434 = vst [vmem:[#allocation2 + $0x90] sm:$0xff] %v370
    %435 = vst [vmem:[#allocation2 + $0x98] sm:$0xff] %v371
    %436 = vst [vmem:[#allocation2 + $0xa0] sm:$0xff] %v372
    %437 = vst [vmem:[#allocation2 + $0xa8] sm:$0xff] %v373
    %438 = vst [vmem:[#allocation2 + $0xb0] sm:$0xff] %v374
    %439 = vst [vmem:[#allocation2 + $0xb8] sm:$0xff] %v375
    %440 = vst [vmem:[#allocation2 + $0xc0] sm:$0xff] %v376
    %441 = vst [vmem:[#allocation2 + $0xc8] sm:$0xff] %v377
    %442 = vst [vmem:[#allocation2 + $0xd0] sm:$0xff] %v378
    %443 = vst [vmem:[#allocation2 + $0xd8] sm:$0xff] %v379
    %444 = vst [vmem:[#allocation2 + $0xe0] sm:$0xff] %v380
    %445 = vst [vmem:[#allocation2 + $0xe8] sm:$0xff] %v381
    %446 = vst [vmem:[#allocation2 + $0xf0] sm:$0xff] %v382
    %447 = vst [vmem:[#allocation2 + $0xf8] sm:$0xff] %v383
    %448 = vst [vmem:[#allocation2 + $0x100] sm:$0xff] %v384
    %449 = vst [vmem:[#allocation2 + $0x108] sm:$0xff] %v385
    %450 = vst [vmem:[#allocation2 + $0x110] sm:$0xff] %v386
    %451 = vst [vmem:[#allocation2 + $0x118] sm:$0xff] %v387
    %452 = vst [vmem:[#allocation2 + $0x120] sm:$0xff] %v388
    %453 = vst [vmem:[#allocation2 + $0x128] sm:$0xff] %v389
    %454 = vst [vmem:[#allocation2 + $0x130] sm:$0xff] %v390
    %455 = vst [vmem:[#allocation2 + $0x138] sm:$0xff] %v391
    %456 = vst [vmem:[#allocation2 + $0x140] sm:$0xff] %v392
    %457 = vst [vmem:[#allocation2 + $0x148] sm:$0xff] %v393
    %458 = vst [vmem:[#allocation2 + $0x150] sm:$0xff] %v394
    %459 = vst [vmem:[#allocation2 + $0x158] sm:$0xff] %v395
    %460 = vst [vmem:[#allocation2 + $0x160] sm:$0xff] %v396
    %461 = vst [vmem:[#allocation2 + $0x168] sm:$0xff] %v397
    %462 = vst [vmem:[#allocation2 + $0x170] sm:$0xff] %v398
    %463 = vst [vmem:[#allocation2 + $0x178] sm:$0xff] %v399
    %464 = vst [vmem:[#allocation2 + $0x180] sm:$0xff] %v400
    %465 = vst [vmem:[#allocation2 + $0x188] sm:$0xff] %v401
    %466 = vst [vmem:[#allocation2 + $0x190] sm:$0xff] %v402
    %467 = vst [vmem:[#allocation2 + $0x198] sm:$0xff] %v403
    %468 = vst [vmem:[#allocation2 + $0x1a0] sm:$0xff] %v404
    %469 = vst [vmem:[#allocation2 + $0x1a8] sm:$0xff] %v405
    %470 = vst [vmem:[#allocation2 + $0x1b0] sm:$0xff] %v406
    %471 = vst [vmem:[#allocation2 + $0x1b8] sm:$0xff] %v407
    %472 = vst [vmem:[#allocation2 + $0x1c0] sm:$0xff] %v408
    %473 = vst [vmem:[#allocation2 + $0x1c8] sm:$0xff] %v409
    %474 = vst [vmem:[#allocation2 + $0x1d0] sm:$0xff] %v410
    %475 = vst [vmem:[#allocation2 + $0x1d8] sm:$0xff] %v411
    %476 = vst [vmem:[#allocation2 + $0x1e0] sm:$0xff] %v412
    %477 = vst [vmem:[#allocation2 + $0x1e8] sm:$0xff] %v413
    %478 = vst [vmem:[#allocation2 + $0x1f0] sm:$0xff] %v414
    %479 = vst [vmem:[#allocation2 + $0x1f8] sm:$0xff] %v415
    // Predicated region
    $region18: #{bottleneck_forward.7} parent=1 // pred_check
      _
    $region19: #{bottleneck_forward.7} parent=1 // pred_check_branch
      %481 = sbr.rel (0) target = $region21
    $region20: #{bottleneck_forward.7} parent=1 // pred_region
      %s483 = ssub.s32 8192, 8192
      %484 = vsyncadd [#allocation3], %s483
      %s485 = sshll.u32 [#allocation2], 4
      %s486 = int_to_ptr.vmem [resolvable:$true] %s485
      %491 = dma.vmem_to_hbm [thread:$0]  %s486, 8192, %s4, [#allocation3], 128, 128, 8
    $region21: #{bottleneck_forward.7} parent=1 // pred_fallthru
      _
    // Predicated region
    $region22: #{bottleneck_forward.7} parent=1 // pred_check
      _
    $region23: #{bottleneck_forward.7} parent=1 // pred_check_branch
      %493 = sbr.rel (0) target = $region25
    $region24: #{bottleneck_forward.7} parent=1 // pred_region
      %494 = dma.done [#allocation3], 8192
    $region25: #{bottleneck_forward.7} parent=1 // pred_fallthru
      _
    %495 = vsyncpa [#allocation3], 1

// kernel: bottleneck_forward.5
$region0: #{bottleneck_forward.5}
  #allocation0 [shape = 'u32[]', space=smem, size = 0x4, offset = 0x4, fixed_abs, tag = 'smem constant byte address 0x4 - core index']
  #allocation1 [shape = 'u32[144,128]{1,0:T(1,128)}', space=vmem, size = 0x12000, scoped, tag = 'internal scratch']
  #allocation2 [shape = 'f32[288,128]{1,0:T(8,128)}', space=vmem, size = 0x24000, scoped, tag = 'scratch operand']
  #allocation3 [shape = 'f32[256,128]{1,0:T(8,128)}', space=vmem, size = 0x20000, scoped, tag = 'scratch operand']
  %s0 = inlined_call_operand.vmem [shape: f32[2,256,128], index: 0, kind: input, shape index: {}]
  %s1 = inlined_call_operand.vmem [shape: f32[1,128], index: 1, kind: input, shape index: {}]
  %s2 = inlined_call_operand.vmem [shape: f32[1,128], index: 2, kind: input, shape index: {}]
  %s3 = inlined_call_operand.vmem [shape: f32[1152,128], index: 3, kind: input, shape index: {}]
  %s4 = inlined_call_operand.vmem [shape: f32[2,256,128], index: 4, kind: output, shape index: {0}]
  %s5 = inlined_call_operand.vmem [shape: f32[2,8,128], index: 5, kind: output, shape index: {1}]
  %s6 = inlined_call_operand.vmem [shape: f32[2,8,128], index: 6, kind: output, shape index: {2}]
  %7 = xla_tuple %s4, %s5, %s6
  %s8 = sld [smem:[#allocation0]]
  $region65: #{bottleneck_forward.5} parent=0
    _
  %s10 = ssub.s32 1, %s8
  %s11 = scalar_select 0, %s10, %s8
  loop: start=0, step=1, limit=4
  $region2: #{bottleneck_forward.5} parent=0 // loop_pre_header
    _
  $region3: #{bottleneck_forward.5} parent=0 // loop_header
    %s13 = sphi 0, %s17
    %p14 = scmp.ge.s32.totalorder %s13, 4
    %s23 = sphi 0, %s25
    %s26 = sphi 0, %s23
    %s27 = sphi 0, %s26
    %s43 = sphi 0, %s27
    %s47 = sphi 0, %s47
    %s49 = sphi 0, %s47
    %s50 = sphi 0, %s49
    %s64 = sphi 0, %s50
    %s68 = sphi 0, %s68
    %s70 = sphi 0, %s68
    %s71 = sphi 0, %s70
    %s85 = sphi 0, %s71
    %s89 = sphi 0, %s89
    %s91 = sphi 0, %s89
    %s92 = sphi 0, %s91
    %s106 = sphi 0, %s92
    %s112 = sphi 0, %s114
    %s115 = sphi 0, %s112
    %s116 = sphi 0, %s115
    %s132 = sphi 0, %s116
    %s138 = sphi 0, %s140
    %s141 = sphi 0, %s138
    %s142 = sphi 0, %s141
    %s158 = sphi 0, %s142
    %s164 = sphi 0, %s166
    %s167 = sphi 0, %s164
    %s168 = sphi 0, %s167
    %s184 = sphi 0, %s168
  $region4: #{bottleneck_forward.5} parent=0 // loop_header_branch
    %16 = sbr.rel (%p14) target = $region8
  $region5: #{bottleneck_forward.5} parent=0 // loop_body
    %s18 = ssub.s32 %s13, 1
    %s19 = ssub.s32 %s13, 2
    %s20 = sadd.s32 %s13, 1
    %s21 = ssub.s32 %s13, %s20
    %p22 = scmp.eq.s32.totalorder %s21, 0
    %s24 = sadd.s32 %s23, 1
    %s25 = scalar_select %p22, %s23, %s24
    %p28 = pneg %p22
    %p29 = scmp.eq.s32.totalorder %s13, 1
    %p30 = por %p28, %p29
    %p31 = scmp.ne.s32.totalorder %s23, %s26
    %p32 = scmp.eq.s32.totalorder %s13, 0
    %p33 = por %p31, %p32
    %p34 = scmp.ne.s32.totalorder %s23, %s26
    %p35 = scmp.eq.s32.totalorder %s18, 1
    %p36 = por %p34, %p35
    %p37 = scmp.ne.s32.totalorder %s26, %s27
    %p38 = scmp.eq.s32.totalorder %s18, 0
    %p39 = por %p37, %p38
    %p40 = scmp.ne.s32.totalorder %s26, %s27
    %p41 = scmp.eq.s32.totalorder %s19, 1
    %p42 = por %p40, %p41
    %p44 = scmp.ne.s32.totalorder %s27, %s43
    %p45 = scmp.eq.s32.totalorder %s19, 0
    %p46 = por %p44, %p45
    %s48 = sadd.s32 %s47, 1
    %p51 = scmp.eq.s32.totalorder %s13, 1
    %p52 = scmp.ne.s32.totalorder %s47, %s49
    %p53 = scmp.eq.s32.totalorder %s13, 0
    %p54 = por %p52, %p53
    %p55 = scmp.ne.s32.totalorder %s47, %s49
    %p56 = scmp.eq.s32.totalorder %s18, 1
    %p57 = por %p55, %p56
    %p58 = scmp.ne.s32.totalorder %s49, %s50
    %p59 = scmp.eq.s32.totalorder %s18, 0
    %p60 = por %p58, %p59
    %p61 = scmp.ne.s32.totalorder %s49, %s50
    %p62 = scmp.eq.s32.totalorder %s19, 1
    %p63 = por %p61, %p62
    %p65 = scmp.ne.s32.totalorder %s50, %s64
    %p66 = scmp.eq.s32.totalorder %s19, 0
    %p67 = por %p65, %p66
    %s69 = sadd.s32 %s68, 1
    %p72 = scmp.eq.s32.totalorder %s13, 1
    %p73 = scmp.ne.s32.totalorder %s68, %s70
    %p74 = scmp.eq.s32.totalorder %s13, 0
    %p75 = por %p73, %p74
    %p76 = scmp.ne.s32.totalorder %s68, %s70
    %p77 = scmp.eq.s32.totalorder %s18, 1
    %p78 = por %p76, %p77
    %p79 = scmp.ne.s32.totalorder %s70, %s71
    %p80 = scmp.eq.s32.totalorder %s18, 0
    %p81 = por %p79, %p80
    %p82 = scmp.ne.s32.totalorder %s70, %s71
    %p83 = scmp.eq.s32.totalorder %s19, 1
    %p84 = por %p82, %p83
    %p86 = scmp.ne.s32.totalorder %s71, %s85
    %p87 = scmp.eq.s32.totalorder %s19, 0
    %p88 = por %p86, %p87
    %s90 = sadd.s32 %s89, 1
    %p93 = scmp.eq.s32.totalorder %s13, 1
    %p94 = scmp.ne.s32.totalorder %s89, %s91
    %p95 = scmp.eq.s32.totalorder %s13, 0
    %p96 = por %p94, %p95
    %p97 = scmp.ne.s32.totalorder %s89, %s91
    %p98 = scmp.eq.s32.totalorder %s18, 1
    %p99 = por %p97, %p98
    %p100 = scmp.ne.s32.totalorder %s91, %s92
    %p101 = scmp.eq.s32.totalorder %s18, 0
    %p102 = por %p100, %p101
    %p103 = scmp.ne.s32.totalorder %s91, %s92
    %p104 = scmp.eq.s32.totalorder %s19, 1
    %p105 = por %p103, %p104
    %p107 = scmp.ne.s32.totalorder %s92, %s106
    %p108 = scmp.eq.s32.totalorder %s19, 0
    %p109 = por %p107, %p108
    %s110 = ssub.s32 %s13, %s20
    %p111 = scmp.eq.s32.totalorder %s110, 0
    %s113 = sadd.s32 %s112, 1
    %s114 = scalar_select %p111, %s112, %s113
    %p117 = pneg %p111
    %p118 = scmp.eq.s32.totalorder %s13, 1
    %p119 = por %p117, %p118
    %p120 = scmp.ne.s32.totalorder %s112, %s115
    %p121 = scmp.eq.s32.totalorder %s13, 0
    %p122 = por %p120, %p121
    %p123 = scmp.ne.s32.totalorder %s112, %s115
    %p124 = scmp.eq.s32.totalorder %s18, 1
    %p125 = por %p123, %p124
    %p126 = scmp.ne.s32.totalorder %s115, %s116
    %p127 = scmp.eq.s32.totalorder %s18, 0
    %p128 = por %p126, %p127
    %p129 = scmp.ne.s32.totalorder %s115, %s116
    %p130 = scmp.eq.s32.totalorder %s19, 1
    %p131 = por %p129, %p130
    %p133 = scmp.ne.s32.totalorder %s116, %s132
    %p134 = scmp.eq.s32.totalorder %s19, 0
    %p135 = por %p133, %p134
    %s136 = ssub.s32 %s13, %s20
    %p137 = scmp.eq.s32.totalorder %s136, 0
    %s139 = sadd.s32 %s138, 1
    %s140 = scalar_select %p137, %s138, %s139
    %p143 = pneg %p137
    %p144 = scmp.eq.s32.totalorder %s13, 1
    %p145 = por %p143, %p144
    %p146 = scmp.ne.s32.totalorder %s138, %s141
    %p147 = scmp.eq.s32.totalorder %s13, 0
    %p148 = por %p146, %p147
    %p149 = scmp.ne.s32.totalorder %s138, %s141
    %p150 = scmp.eq.s32.totalorder %s18, 1
    %p151 = por %p149, %p150
    %p152 = scmp.ne.s32.totalorder %s141, %s142
    %p153 = scmp.eq.s32.totalorder %s18, 0
    %p154 = por %p152, %p153
    %p155 = scmp.ne.s32.totalorder %s141, %s142
    %p156 = scmp.eq.s32.totalorder %s19, 1
    %p157 = por %p155, %p156
    %p159 = scmp.ne.s32.totalorder %s142, %s158
    %p160 = scmp.eq.s32.totalorder %s19, 0
    %p161 = por %p159, %p160
    %s162 = ssub.s32 %s13, %s20
    %p163 = scmp.eq.s32.totalorder %s162, 0
    %s165 = sadd.s32 %s164, 1
    %s166 = scalar_select %p163, %s164, %s165
    %p169 = pneg %p163
    %p170 = scmp.eq.s32.totalorder %s13, 1
    %p171 = por %p169, %p170
    %p172 = scmp.ne.s32.totalorder %s164, %s167
    %p173 = scmp.eq.s32.totalorder %s13, 0
    %p174 = por %p172, %p173
    %p175 = scmp.ne.s32.totalorder %s164, %s167
    %p176 = scmp.eq.s32.totalorder %s18, 1
    %p177 = por %p175, %p176
    %p178 = scmp.ne.s32.totalorder %s167, %s168
    %p179 = scmp.eq.s32.totalorder %s18, 0
    %p180 = por %p178, %p179
    %p181 = scmp.ne.s32.totalorder %s167, %s168
    %p182 = scmp.eq.s32.totalorder %s19, 1
    %p183 = por %p181, %p182
    %p185 = scmp.ne.s32.totalorder %s168, %s184
    %p186 = scmp.eq.s32.totalorder %s19, 0
    %p187 = por %p185, %p186
    %p188 = scmp.le.s32.totalorder 1, %s13
    %p189 = scmp.lt.s32.totalorder %s13, 3
    %p190 = pnand %p188, %p189
    %p191 = pneg %p190
    // Predicated region
    $region9: #{bottleneck_forward.5} parent=5 // pred_check
      _
    $region10: #{bottleneck_forward.5} parent=5 // pred_check_branch
      %193 = sbr.rel (%p190) target = $region12
    $region11: #{bottleneck_forward.5} parent=5 // pred_region
      %s194 = ssub.s32 %s13, 1
      // Predicated region
      $region13: #{bottleneck_forward.5} parent=11 // pred_check
        %p195 = pneg %p60
      $region14: #{bottleneck_forward.5} parent=11 // pred_check_branch
        %197 = sbr.rel (%p195) target = $region16
      $region15: #{bottleneck_forward.5} parent=11 // pred_region
        _
      $region16: #{bottleneck_forward.5} parent=11 // pred_fallthru
        _
      // Predicated region
      $region17: #{bottleneck_forward.5} parent=11 // pred_check
        %p198 = pneg %p81
      $region18: #{bottleneck_forward.5} parent=11 // pred_check_branch
        %200 = sbr.rel (%p198) target = $region20
      $region19: #{bottleneck_forward.5} parent=11 // pred_region
        _
      $region20: #{bottleneck_forward.5} parent=11 // pred_fallthru
        _
      // Predicated region
      $region21: #{bottleneck_forward.5} parent=11 // pred_check
        %p201 = pneg %p102
      $region22: #{bottleneck_forward.5} parent=11 // pred_check_branch
        %203 = sbr.rel (%p201) target = $region24
      $region23: #{bottleneck_forward.5} parent=11 // pred_region
        _
      $region24: #{bottleneck_forward.5} parent=11 // pred_fallthru
        _
    $region12: #{bottleneck_forward.5} parent=5 // pred_fallthru
      _
    %p204 = scmp.lt.s32.totalorder %s13, 2
    // Predicated region
    $region25: #{bottleneck_forward.5} parent=5 // pred_check
      %p205 = pneg %p204
    $region26: #{bottleneck_forward.5} parent=5 // pred_check_branch
      %207 = sbr.rel (%p205) target = $region28
    $region27: #{bottleneck_forward.5} parent=5 // pred_region
      // Predicated region
      $region29: #{bottleneck_forward.5} parent=27 // pred_check
        %p208 = pneg %p33
      $region30: #{bottleneck_forward.5} parent=27 // pred_check_branch
        %210 = sbr.rel (%p208) target = $region32
      $region31: #{bottleneck_forward.5} parent=27 // pred_region
        %p211 = scmp.lt.s32.totalorder %s13, 1
        %s212 = scalar_select %p211, %s13, 1
        %s213 = smul.addr %s212, 32
        %s214 = smul.addr %s213, 8
        %s215 = scalar_lea.vmem %s0, %s214
      $region32: #{bottleneck_forward.5} parent=27 // pred_fallthru
        _
    $region28: #{bottleneck_forward.5} parent=5 // pred_fallthru
      _
    %p216 = scmp.le.s32.totalorder 1, %s13
    %p217 = scmp.lt.s32.totalorder %s13, 3
    %p218 = pnand %p216, %p217
    %p219 = pneg %p218
    // Predicated region
    $region33: #{bottleneck_forward.5} parent=5 // pred_check
      _
    $region34: #{bottleneck_forward.5} parent=5 // pred_check_branch
      %221 = sbr.rel (%p218) target = $region36
    $region35: #{bottleneck_forward.5} parent=5 // pred_region
      %s222 = ssub.s32 %s13, 1
      %p223 = scmp.lt.s32.totalorder %s18, 1
      %s224 = scalar_select %p223, %s18, 1
      %s225 = smul.addr %s224, 32
      %s226 = smul.addr %s225, 8
      %s227 = scalar_lea.vmem %s0, %s226
      %p228 = pneg %p39
      %p229 = pneg %p36
      %p230 = pneg %p60
      %p231 = pneg %p57
      %p232 = pneg %p81
      %p233 = pneg %p78
      %p234 = pneg %p102
      %p235 = pneg %p99
      %p236 = pneg %p128
      %p237 = pneg %p125
      %p238 = scmp.lt.s32.totalorder %s18, 1
      %s239 = scalar_select %p238, %s18, 1
      %s240 = smul.addr %s239, 32
      %s241 = smul.addr %s240, 8
      %s242 = scalar_lea.vmem %s4, %s241
      %p243 = pneg %p154
      %p244 = pneg %p151
      %p245 = scmp.lt.s32.totalorder %s18, 1
      %s246 = scalar_select %p245, %s18, 1
      %s247 = smul.addr %s246, 8
      %s248 = scalar_lea.vmem %s5, %s247
      %p249 = pneg %p180
      %p250 = pneg %p177
      %p251 = scmp.lt.s32.totalorder %s18, 1
      %s252 = scalar_select %p251, %s18, 1
      %s253 = smul.addr %s252, 8
      %s254 = scalar_lea.vmem %s6, %s253
      %p255 = scmp.lt.s32.totalorder %s18, 1
      %s256 = scalar_select %p255, %s18, 1
      %s257 = smul.addr %s256, 32
      %s258 = smul.addr %s257, 8
      %s259 = scalar_lea.vmem %s0, %s258
      %p260 = scmp.lt.s32.totalorder %s18, 1
      %s261 = scalar_select %p260, %s18, 1
      %s262 = smul.addr %s261, 32
      %s263 = smul.addr %s262, 8
      %s264 = scalar_lea.vmem %s4, %s263
      %p265 = scmp.lt.s32.totalorder %s18, 1
      %s266 = scalar_select %p265, %s18, 1
      %s267 = smul.addr %s266, 8
      %s268 = scalar_lea.vmem %s5, %s267
      %p269 = scmp.lt.s32.totalorder %s18, 1
      %s270 = scalar_select %p269, %s18, 1
      %s271 = smul.addr %s270, 8
      %s272 = scalar_lea.vmem %s6, %s271
      %273 = vst [vmem:[#allocation2] sm:$0xff] 0.0
      %274 = vst [vmem:[#allocation2 + $0x8] sm:$0xff] 0.0
      %275 = vst [vmem:[#allocation2 + $0x110] sm:$0xff] 0.0
      %276 = vst [vmem:[#allocation2 + $0x118] sm:$0xff] 0.0
      %v277 = vld [vmem:[%s259] sm:$0xff]
      %v278 = vld [vmem:[%s259 + $0x8] sm:$0xff]
      %v279 = vld [vmem:[%s259 + $0x10] sm:$0xff]
      %v280 = vld [vmem:[%s259 + $0x18] sm:$0xff]
      %v281 = vld [vmem:[%s259 + $0x20] sm:$0xff]
      %v282 = vld [vmem:[%s259 + $0x28] sm:$0xff]
      %v283 = vld [vmem:[%s259 + $0x30] sm:$0xff]
      %v284 = vld [vmem:[%s259 + $0x38] sm:$0xff]
      %v285 = vld [vmem:[%s259 + $0x40] sm:$0xff]
      %v286 = vld [vmem:[%s259 + $0x48] sm:$0xff]
      %v287 = vld [vmem:[%s259 + $0x50] sm:$0xff]
      %v288 = vld [vmem:[%s259 + $0x58] sm:$0xff]
      %v289 = vld [vmem:[%s259 + $0x60] sm:$0xff]
      %v290 = vld [vmem:[%s259 + $0x68] sm:$0xff]
      %v291 = vld [vmem:[%s259 + $0x70] sm:$0xff]
      %v292 = vld [vmem:[%s259 + $0x78] sm:$0xff]
      %v293 = vld [vmem:[%s259 + $0x80] sm:$0xff]
      %v294 = vld [vmem:[%s259 + $0x88] sm:$0xff]
      %v295 = vld [vmem:[%s259 + $0x90] sm:$0xff]
      %v296 = vld [vmem:[%s259 + $0x98] sm:$0xff]
      %v297 = vld [vmem:[%s259 + $0xa0] sm:$0xff]
      %v298 = vld [vmem:[%s259 + $0xa8] sm:$0xff]
      %v299 = vld [vmem:[%s259 + $0xb0] sm:$0xff]
      %v300 = vld [vmem:[%s259 + $0xb8] sm:$0xff]
      %v301 = vld [vmem:[%s259 + $0xc0] sm:$0xff]
      %v302 = vld [vmem:[%s259 + $0xc8] sm:$0xff]
      %v303 = vld [vmem:[%s259 + $0xd0] sm:$0xff]
      %v304 = vld [vmem:[%s259 + $0xd8] sm:$0xff]
      %v305 = vld [vmem:[%s259 + $0xe0] sm:$0xff]
      %v306 = vld [vmem:[%s259 + $0xe8] sm:$0xff]
      %v307 = vld [vmem:[%s259 + $0xf0] sm:$0xff]
      %v308 = vld [vmem:[%s259 + $0xf8] sm:$0xff]
      %v309 = vld [vmem:[%s1] sm:$0x1]
      %v311 = vlaneseq
      %v312 = vshrl.u32 %v311, 7
      %v313 = vsub.s32 0, %v312
      %v314 = vrot.slane %v309, %v313
      %v316 = vmul.f32 %v277, %v314
      %v317 = vmul.f32 %v278, %v314
      %v318 = vmul.f32 %v279, %v314
      %v319 = vmul.f32 %v280, %v314
      %v320 = vmul.f32 %v281, %v314
      %v321 = vmul.f32 %v282, %v314
      %v322 = vmul.f32 %v283, %v314
      %v323 = vmul.f32 %v284, %v314
      %v324 = vmul.f32 %v285, %v314
      %v325 = vmul.f32 %v286, %v314
      %v326 = vmul.f32 %v287, %v314
      %v327 = vmul.f32 %v288, %v314
      %v328 = vmul.f32 %v289, %v314
      %v329 = vmul.f32 %v290, %v314
      %v330 = vmul.f32 %v291, %v314
      %v331 = vmul.f32 %v292, %v314
      %v332 = vmul.f32 %v293, %v314
      %v333 = vmul.f32 %v294, %v314
      %v334 = vmul.f32 %v295, %v314
      %v335 = vmul.f32 %v296, %v314
      %v336 = vmul.f32 %v297, %v314
      %v337 = vmul.f32 %v298, %v314
      %v338 = vmul.f32 %v299, %v314
      %v339 = vmul.f32 %v300, %v314
      %v340 = vmul.f32 %v301, %v314
      %v341 = vmul.f32 %v302, %v314
      %v342 = vmul.f32 %v303, %v314
      %v343 = vmul.f32 %v304, %v314
      %v344 = vmul.f32 %v305, %v314
      %v345 = vmul.f32 %v306, %v314
      %v346 = vmul.f32 %v307, %v314
      %v347 = vmul.f32 %v308, %v314
      %v348 = vld [vmem:[%s2] sm:$0x1]
      %v350 = vlaneseq
      %v351 = vshrl.u32 %v350, 7
      %v352 = vsub.s32 0, %v351
      %v353 = vrot.slane %v348, %v352
      %v355 = vadd.f32 %v316, %v353
      %v356 = vadd.f32 %v317, %v353
      %v357 = vadd.f32 %v318, %v353
      %v358 = vadd.f32 %v319, %v353
      %v359 = vadd.f32 %v320, %v353
      %v360 = vadd.f32 %v321, %v353
      %v361 = vadd.f32 %v322, %v353
      %v362 = vadd.f32 %v323, %v353
      %v363 = vadd.f32 %v324, %v353
      %v364 = vadd.f32 %v325, %v353
      %v365 = vadd.f32 %v326, %v353
      %v366 = vadd.f32 %v327, %v353
      %v367 = vadd.f32 %v328, %v353
      %v368 = vadd.f32 %v329, %v353
      %v369 = vadd.f32 %v330, %v353
      %v370 = vadd.f32 %v331, %v353
      %v371 = vadd.f32 %v332, %v353
      %v372 = vadd.f32 %v333, %v353
      %v373 = vadd.f32 %v334, %v353
      %v374 = vadd.f32 %v335, %v353
      %v375 = vadd.f32 %v336, %v353
      %v376 = vadd.f32 %v337, %v353
      %v377 = vadd.f32 %v338, %v353
      %v378 = vadd.f32 %v339, %v353
      %v379 = vadd.f32 %v340, %v353
      %v380 = vadd.f32 %v341, %v353
      %v381 = vadd.f32 %v342, %v353
      %v382 = vadd.f32 %v343, %v353
      %v383 = vadd.f32 %v344, %v353
      %v384 = vadd.f32 %v345, %v353
      %v385 = vadd.f32 %v346, %v353
      %v386 = vadd.f32 %v347, %v353
      %v387 = vmax.f32 %v355, 0.0
      %v388 = vmax.f32 %v356, 0.0
      %v389 = vmax.f32 %v357, 0.0
      %v390 = vmax.f32 %v358, 0.0
      %v391 = vmax.f32 %v359, 0.0
      %v392 = vmax.f32 %v360, 0.0
      %v393 = vmax.f32 %v361, 0.0
      %v394 = vmax.f32 %v362, 0.0
      %v395 = vmax.f32 %v363, 0.0
      %v396 = vmax.f32 %v364, 0.0
      %v397 = vmax.f32 %v365, 0.0
      %v398 = vmax.f32 %v366, 0.0
      %v399 = vmax.f32 %v367, 0.0
      %v400 = vmax.f32 %v368, 0.0
      %v401 = vmax.f32 %v369, 0.0
      %v402 = vmax.f32 %v370, 0.0
      %v403 = vmax.f32 %v371, 0.0
      %v404 = vmax.f32 %v372, 0.0
      %v405 = vmax.f32 %v373, 0.0
      %v406 = vmax.f32 %v374, 0.0
      %v407 = vmax.f32 %v375, 0.0
      %v408 = vmax.f32 %v376, 0.0
      %v409 = vmax.f32 %v377, 0.0
      %v410 = vmax.f32 %v378, 0.0
      %v411 = vmax.f32 %v379, 0.0
      %v412 = vmax.f32 %v380, 0.0
      %v413 = vmax.f32 %v381, 0.0
      %v414 = vmax.f32 %v382, 0.0
      %v415 = vmax.f32 %v383, 0.0
      %v416 = vmax.f32 %v384, 0.0
      %v417 = vmax.f32 %v385, 0.0
      %v418 = vmax.f32 %v386, 0.0
      %419 = vst [vmem:[#allocation2 + $0x10] sm:$0xff] %v387
      %420 = vst [vmem:[#allocation2 + $0x18] sm:$0xff] %v388
      %421 = vst [vmem:[#allocation2 + $0x20] sm:$0xff] %v389
      %422 = vst [vmem:[#allocation2 + $0x28] sm:$0xff] %v390
      %423 = vst [vmem:[#allocation2 + $0x30] sm:$0xff] %v391
      %424 = vst [vmem:[#allocation2 + $0x38] sm:$0xff] %v392
      %425 = vst [vmem:[#allocation2 + $0x40] sm:$0xff] %v393
      %426 = vst [vmem:[#allocation2 + $0x48] sm:$0xff] %v394
      %427 = vst [vmem:[#allocation2 + $0x50] sm:$0xff] %v395
      %428 = vst [vmem:[#allocation2 + $0x58] sm:$0xff] %v396
      %429 = vst [vmem:[#allocation2 + $0x60] sm:$0xff] %v397
      %430 = vst [vmem:[#allocation2 + $0x68] sm:$0xff] %v398
      %431 = vst [vmem:[#allocation2 + $0x70] sm:$0xff] %v399
      %432 = vst [vmem:[#allocation2 + $0x78] sm:$0xff] %v400
      %433 = vst [vmem:[#allocation2 + $0x80] sm:$0xff] %v401
      %434 = vst [vmem:[#allocation2 + $0x88] sm:$0xff] %v402
      %435 = vst [vmem:[#allocation2 + $0x90] sm:$0xff] %v403
      %436 = vst [vmem:[#allocation2 + $0x98] sm:$0xff] %v404
      %437 = vst [vmem:[#allocation2 + $0xa0] sm:$0xff] %v405
      %438 = vst [vmem:[#allocation2 + $0xa8] sm:$0xff] %v406
      %439 = vst [vmem:[#allocation2 + $0xb0] sm:$0xff] %v407
      %440 = vst [vmem:[#allocation2 + $0xb8] sm:$0xff] %v408
      %441 = vst [vmem:[#allocation2 + $0xc0] sm:$0xff] %v409
      %442 = vst [vmem:[#allocation2 + $0xc8] sm:$0xff] %v410
      %443 = vst [vmem:[#allocation2 + $0xd0] sm:$0xff] %v411
      %444 = vst [vmem:[#allocation2 + $0xd8] sm:$0xff] %v412
      %445 = vst [vmem:[#allocation2 + $0xe0] sm:$0xff] %v413
      %446 = vst [vmem:[#allocation2 + $0xe8] sm:$0xff] %v414
      %447 = vst [vmem:[#allocation2 + $0xf0] sm:$0xff] %v415
      %448 = vst [vmem:[#allocation2 + $0xf8] sm:$0xff] %v416
      %449 = vst [vmem:[#allocation2 + $0x100] sm:$0xff] %v417
      %450 = vst [vmem:[#allocation2 + $0x108] sm:$0xff] %v418
      %v451 = vlaneseq
      %v452 = vshrl.u32 %v451, 7
      %v453 = vadd.s32 %v452, 8
      %v454 = vadd.s32 %v452, 16
      %v455 = vadd.s32 %v452, 24
      %v456 = vadd.s32 %v452, 32
      %v457 = vadd.s32 %v452, 40
      %v458 = vadd.s32 %v452, 48
      %v459 = vadd.s32 %v452, 56
      %v460 = vadd.s32 %v452, 64
      %v461 = vadd.s32 %v452, 72
      %v462 = vadd.s32 %v452, 80
      %v463 = vadd.s32 %v452, 88
      %v464 = vadd.s32 %v452, 96
      %v465 = vadd.s32 %v452, 104
      %v466 = vadd.s32 %v452, 112
      %v467 = vadd.s32 %v452, 120
      %v468 = vadd.s32 %v452, 128
      %v469 = vadd.s32 %v452, 136
      %v470 = vadd.s32 %v452, 144
      %v471 = vadd.s32 %v452, 152
      %v472 = vadd.s32 %v452, 160
      %v473 = vadd.s32 %v452, 168
      %v474 = vadd.s32 %v452, 176
      %v475 = vadd.s32 %v452, 184
      %v476 = vadd.s32 %v452, 192
      %v477 = vadd.s32 %v452, 200
      %v478 = vadd.s32 %v452, 208
      %v479 = vadd.s32 %v452, 216
      %v480 = vadd.s32 %v452, 224
      %v481 = vadd.s32 %v452, 232
      %v482 = vadd.s32 %v452, 240
      %v483 = vadd.s32 %v452, 248
      %vm484 = vcmp.lt.s32.totalorder %v452, 0
      %v485 = vsub.s32 0, %v452
      %v486 = vsel %vm484, %v485, %v452
      %v487 = vshrl.u32 %v486, 4
      %v488 = vand.u32 %v486, 15
      %v489 = vsub.s32 0, %v488
      %v490 = vsel %vm484, %v489, %v488
      %vm491 = vcmp.lt.s32.totalorder %v453, 0
      %v492 = vsub.s32 0, %v453
      %v493 = vsel %vm491, %v492, %v453
      %v494 = vshrl.u32 %v493, 4
      %v495 = vand.u32 %v493, 15
      %v496 = vsub.s32 0, %v495
      %v497 = vsel %vm491, %v496, %v495
      %vm498 = vcmp.lt.s32.totalorder %v454, 0
      %v499 = vsub.s32 0, %v454
      %v500 = vsel %vm498, %v499, %v454
      %v501 = vshrl.u32 %v500, 4
      %v502 = vand.u32 %v500, 15
      %v503 = vsub.s32 0, %v502
      %v504 = vsel %vm498, %v503, %v502
      %vm505 = vcmp.lt.s32.totalorder %v455, 0
      %v506 = vsub.s32 0, %v455
      %v507 = vsel %vm505, %v506, %v455
      %v508 = vshrl.u32 %v507, 4
      %v509 = vand.u32 %v507, 15
      %v510 = vsub.s32 0, %v509
      %v511 = vsel %vm505, %v510, %v509
      %vm512 = vcmp.lt.s32.totalorder %v456, 0
      %v513 = vsub.s32 0, %v456
      %v514 = vsel %vm512, %v513, %v456
      %v515 = vshrl.u32 %v514, 4
      %v516 = vand.u32 %v514, 15
      %v517 = vsub.s32 0, %v516
      %v518 = vsel %vm512, %v517, %v516
      %vm519 = vcmp.lt.s32.totalorder %v457, 0
      %v520 = vsub.s32 0, %v457
      %v521 = vsel %vm519, %v520, %v457
      %v522 = vshrl.u32 %v521, 4
      %v523 = vand.u32 %v521, 15
      %v524 = vsub.s32 0, %v523
      %v525 = vsel %vm519, %v524, %v523
      %vm526 = vcmp.lt.s32.totalorder %v458, 0
      %v527 = vsub.s32 0, %v458
      %v528 = vsel %vm526, %v527, %v458
      %v529 = vshrl.u32 %v528, 4
      %v530 = vand.u32 %v528, 15
      %v531 = vsub.s32 0, %v530
      %v532 = vsel %vm526, %v531, %v530
      %vm533 = vcmp.lt.s32.totalorder %v459, 0
      %v534 = vsub.s32 0, %v459
      %v535 = vsel %vm533, %v534, %v459
      %v536 = vshrl.u32 %v535, 4
      %v537 = vand.u32 %v535, 15
      %v538 = vsub.s32 0, %v537
      %v539 = vsel %vm533, %v538, %v537
      %vm540 = vcmp.lt.s32.totalorder %v460, 0
      %v541 = vsub.s32 0, %v460
      %v542 = vsel %vm540, %v541, %v460
      %v543 = vshrl.u32 %v542, 4
      %v544 = vand.u32 %v542, 15
      %v545 = vsub.s32 0, %v544
      %v546 = vsel %vm540, %v545, %v544
      %vm547 = vcmp.lt.s32.totalorder %v461, 0
      %v548 = vsub.s32 0, %v461
      %v549 = vsel %vm547, %v548, %v461
      %v550 = vshrl.u32 %v549, 4
      %v551 = vand.u32 %v549, 15
      %v552 = vsub.s32 0, %v551
      %v553 = vsel %vm547, %v552, %v551
      %vm554 = vcmp.lt.s32.totalorder %v462, 0
      %v555 = vsub.s32 0, %v462
      %v556 = vsel %vm554, %v555, %v462
      %v557 = vshrl.u32 %v556, 4
      %v558 = vand.u32 %v556, 15
      %v559 = vsub.s32 0, %v558
      %v560 = vsel %vm554, %v559, %v558
      %vm561 = vcmp.lt.s32.totalorder %v463, 0
      %v562 = vsub.s32 0, %v463
      %v563 = vsel %vm561, %v562, %v463
      %v564 = vshrl.u32 %v563, 4
      %v565 = vand.u32 %v563, 15
      %v566 = vsub.s32 0, %v565
      %v567 = vsel %vm561, %v566, %v565
      %vm568 = vcmp.lt.s32.totalorder %v464, 0
      %v569 = vsub.s32 0, %v464
      %v570 = vsel %vm568, %v569, %v464
      %v571 = vshrl.u32 %v570, 4
      %v572 = vand.u32 %v570, 15
      %v573 = vsub.s32 0, %v572
      %v574 = vsel %vm568, %v573, %v572
      %vm575 = vcmp.lt.s32.totalorder %v465, 0
      %v576 = vsub.s32 0, %v465
      %v577 = vsel %vm575, %v576, %v465
      %v578 = vshrl.u32 %v577, 4
      %v579 = vand.u32 %v577, 15
      %v580 = vsub.s32 0, %v579
      %v581 = vsel %vm575, %v580, %v579
      %vm582 = vcmp.lt.s32.totalorder %v466, 0
      %v583 = vsub.s32 0, %v466
      %v584 = vsel %vm582, %v583, %v466
      %v585 = vshrl.u32 %v584, 4
      %v586 = vand.u32 %v584, 15
      %v587 = vsub.s32 0, %v586
      %v588 = vsel %vm582, %v587, %v586
      %vm589 = vcmp.lt.s32.totalorder %v467, 0
      %v590 = vsub.s32 0, %v467
      %v591 = vsel %vm589, %v590, %v467
      %v592 = vshrl.u32 %v591, 4
      %v593 = vand.u32 %v591, 15
      %v594 = vsub.s32 0, %v593
      %v595 = vsel %vm589, %v594, %v593
      %vm596 = vcmp.lt.s32.totalorder %v468, 0
      %v597 = vsub.s32 0, %v468
      %v598 = vsel %vm596, %v597, %v468
      %v599 = vshrl.u32 %v598, 4
      %v600 = vand.u32 %v598, 15
      %v601 = vsub.s32 0, %v600
      %v602 = vsel %vm596, %v601, %v600
      %vm603 = vcmp.lt.s32.totalorder %v469, 0
      %v604 = vsub.s32 0, %v469
      %v605 = vsel %vm603, %v604, %v469
      %v606 = vshrl.u32 %v605, 4
      %v607 = vand.u32 %v605, 15
      %v608 = vsub.s32 0, %v607
      %v609 = vsel %vm603, %v608, %v607
      %vm610 = vcmp.lt.s32.totalorder %v470, 0
      %v611 = vsub.s32 0, %v470
      %v612 = vsel %vm610, %v611, %v470
      %v613 = vshrl.u32 %v612, 4
      %v614 = vand.u32 %v612, 15
      %v615 = vsub.s32 0, %v614
      %v616 = vsel %vm610, %v615, %v614
      %vm617 = vcmp.lt.s32.totalorder %v471, 0
      %v618 = vsub.s32 0, %v471
      %v619 = vsel %vm617, %v618, %v471
      %v620 = vshrl.u32 %v619, 4
      %v621 = vand.u32 %v619, 15
      %v622 = vsub.s32 0, %v621
      %v623 = vsel %vm617, %v622, %v621
      %vm624 = vcmp.lt.s32.totalorder %v472, 0
      %v625 = vsub.s32 0, %v472
      %v626 = vsel %vm624, %v625, %v472
      %v627 = vshrl.u32 %v626, 4
      %v628 = vand.u32 %v626, 15
      %v629 = vsub.s32 0, %v628
      %v630 = vsel %vm624, %v629, %v628
      %vm631 = vcmp.lt.s32.totalorder %v473, 0
      %v632 = vsub.s32 0, %v473
      %v633 = vsel %vm631, %v632, %v473
      %v634 = vshrl.u32 %v633, 4
      %v635 = vand.u32 %v633, 15
      %v636 = vsub.s32 0, %v635
      %v637 = vsel %vm631, %v636, %v635
      %vm638 = vcmp.lt.s32.totalorder %v474, 0
      %v639 = vsub.s32 0, %v474
      %v640 = vsel %vm638, %v639, %v474
      %v641 = vshrl.u32 %v640, 4
      %v642 = vand.u32 %v640, 15
      %v643 = vsub.s32 0, %v642
      %v644 = vsel %vm638, %v643, %v642
      %vm645 = vcmp.lt.s32.totalorder %v475, 0
      %v646 = vsub.s32 0, %v475
      %v647 = vsel %vm645, %v646, %v475
      %v648 = vshrl.u32 %v647, 4
      %v649 = vand.u32 %v647, 15
      %v650 = vsub.s32 0, %v649
      %v651 = vsel %vm645, %v650, %v649
      %vm652 = vcmp.lt.s32.totalorder %v476, 0
      %v653 = vsub.s32 0, %v476
      %v654 = vsel %vm652, %v653, %v476
      %v655 = vshrl.u32 %v654, 4
      %v656 = vand.u32 %v654, 15
      %v657 = vsub.s32 0, %v656
      %v658 = vsel %vm652, %v657, %v656
      %vm659 = vcmp.lt.s32.totalorder %v477, 0
      %v660 = vsub.s32 0, %v477
      %v661 = vsel %vm659, %v660, %v477
      %v662 = vshrl.u32 %v661, 4
      %v663 = vand.u32 %v661, 15
      %v664 = vsub.s32 0, %v663
      %v665 = vsel %vm659, %v664, %v663
      %vm666 = vcmp.lt.s32.totalorder %v478, 0
      %v667 = vsub.s32 0, %v478
      %v668 = vsel %vm666, %v667, %v478
      %v669 = vshrl.u32 %v668, 4
      %v670 = vand.u32 %v668, 15
      %v671 = vsub.s32 0, %v670
      %v672 = vsel %vm666, %v671, %v670
      %vm673 = vcmp.lt.s32.totalorder %v479, 0
      %v674 = vsub.s32 0, %v479
      %v675 = vsel %vm673, %v674, %v479
      %v676 = vshrl.u32 %v675, 4
      %v677 = vand.u32 %v675, 15
      %v678 = vsub.s32 0, %v677
      %v679 = vsel %vm673, %v678, %v677
      %vm680 = vcmp.lt.s32.totalorder %v480, 0
      %v681 = vsub.s32 0, %v480
      %v682 = vsel %vm680, %v681, %v480
      %v683 = vshrl.u32 %v682, 4
      %v684 = vand.u32 %v682, 15
      %v685 = vsub.s32 0, %v684
      %v686 = vsel %vm680, %v685, %v684
      %vm687 = vcmp.lt.s32.totalorder %v481, 0
      %v688 = vsub.s32 0, %v481
      %v689 = vsel %vm687, %v688, %v481
      %v690 = vshrl.u32 %v689, 4
      %v691 = vand.u32 %v689, 15
      %v692 = vsub.s32 0, %v691
      %v693 = vsel %vm687, %v692, %v691
      %vm694 = vcmp.lt.s32.totalorder %v482, 0
      %v695 = vsub.s32 0, %v482
      %v696 = vsel %vm694, %v695, %v482
      %v697 = vshrl.u32 %v696, 4
      %v698 = vand.u32 %v696, 15
      %v699 = vsub.s32 0, %v698
      %v700 = vsel %vm694, %v699, %v698
      %vm701 = vcmp.lt.s32.totalorder %v483, 0
      %v702 = vsub.s32 0, %v483
      %v703 = vsel %vm701, %v702, %v483
      %v704 = vshrl.u32 %v703, 4
      %v705 = vand.u32 %v703, 15
      %v706 = vsub.s32 0, %v705
      %v707 = vsel %vm701, %v706, %v705
      %vm708 = vcmp.ne.s32.totalorder %v490, 0
      %vm709 = vcmp.ne.s32.totalorder %v497, 0
      %vm710 = vcmp.ne.s32.totalorder %v504, 0
      %vm711 = vcmp.ne.s32.totalorder %v511, 0
      %vm712 = vcmp.ne.s32.totalorder %v518, 0
      %vm713 = vcmp.ne.s32.totalorder %v525, 0
      %vm714 = vcmp.ne.s32.totalorder %v532, 0
      %vm715 = vcmp.ne.s32.totalorder %v539, 0
      %vm716 = vcmp.ne.s32.totalorder %v546, 0
      %vm717 = vcmp.ne.s32.totalorder %v553, 0
      %vm718 = vcmp.ne.s32.totalorder %v560, 0
      %vm719 = vcmp.ne.s32.totalorder %v567, 0
      %vm720 = vcmp.ne.s32.totalorder %v574, 0
      %vm721 = vcmp.ne.s32.totalorder %v581, 0
      %vm722 = vcmp.ne.s32.totalorder %v588, 0
      %vm723 = vcmp.ne.s32.totalorder %v595, 0
      %vm724 = vcmp.ne.s32.totalorder %v602, 0
      %vm725 = vcmp.ne.s32.totalorder %v609, 0
      %vm726 = vcmp.ne.s32.totalorder %v616, 0
      %vm727 = vcmp.ne.s32.totalorder %v623, 0
      %vm728 = vcmp.ne.s32.totalorder %v630, 0
      %vm729 = vcmp.ne.s32.totalorder %v637, 0
      %vm730 = vcmp.ne.s32.totalorder %v644, 0
      %vm731 = vcmp.ne.s32.totalorder %v651, 0
      %vm732 = vcmp.ne.s32.totalorder %v658, 0
      %vm733 = vcmp.ne.s32.totalorder %v665, 0
      %vm734 = vcmp.ne.s32.totalorder %v672, 0
      %vm735 = vcmp.ne.s32.totalorder %v679, 0
      %vm736 = vcmp.ne.s32.totalorder %v686, 0
      %vm737 = vcmp.ne.s32.totalorder %v693, 0
      %vm738 = vcmp.ne.s32.totalorder %v700, 0
      %vm739 = vcmp.ne.s32.totalorder %v707, 0
      %vm740 = vcmp.lt.s32.totalorder %v490, 0
      %vm741 = vcmp.lt.s32.totalorder %v497, 0
      %vm742 = vcmp.lt.s32.totalorder %v504, 0
      %vm743 = vcmp.lt.s32.totalorder %v511, 0
      %vm744 = vcmp.lt.s32.totalorder %v518, 0
      %vm745 = vcmp.lt.s32.totalorder %v525, 0
      %vm746 = vcmp.lt.s32.totalorder %v532, 0
      %vm747 = vcmp.lt.s32.totalorder %v539, 0
      %vm748 = vcmp.lt.s32.totalorder %v546, 0
      %vm749 = vcmp.lt.s32.totalorder %v553, 0
      %vm750 = vcmp.lt.s32.totalorder %v560, 0
      %vm751 = vcmp.lt.s32.totalorder %v567, 0
      %vm752 = vcmp.lt.s32.totalorder %v574, 0
      %vm753 = vcmp.lt.s32.totalorder %v581, 0
      %vm754 = vcmp.lt.s32.totalorder %v588, 0
      %vm755 = vcmp.lt.s32.totalorder %v595, 0
      %vm756 = vcmp.lt.s32.totalorder %v602, 0
      %vm757 = vcmp.lt.s32.totalorder %v609, 0
      %vm758 = vcmp.lt.s32.totalorder %v616, 0
      %vm759 = vcmp.lt.s32.totalorder %v623, 0
      %vm760 = vcmp.lt.s32.totalorder %v630, 0
      %vm761 = vcmp.lt.s32.totalorder %v637, 0
      %vm762 = vcmp.lt.s32.totalorder %v644, 0
      %vm763 = vcmp.lt.s32.totalorder %v651, 0
      %vm764 = vcmp.lt.s32.totalorder %v658, 0
      %vm765 = vcmp.lt.s32.totalorder %v665, 0
      %vm766 = vcmp.lt.s32.totalorder %v672, 0
      %vm767 = vcmp.lt.s32.totalorder %v679, 0
      %vm768 = vcmp.lt.s32.totalorder %v686, 0
      %vm769 = vcmp.lt.s32.totalorder %v693, 0
      %vm770 = vcmp.lt.s32.totalorder %v700, 0
      %vm771 = vcmp.lt.s32.totalorder %v707, 0
      %vm772 = vmand %vm740, %vm708
      %vm773 = vmand %vm741, %vm709
      %vm774 = vmand %vm742, %vm710
      %vm775 = vmand %vm743, %vm711
      %vm776 = vmand %vm744, %vm712
      %vm777 = vmand %vm745, %vm713
      %vm778 = vmand %vm746, %vm714
      %vm779 = vmand %vm747, %vm715
      %vm780 = vmand %vm748, %vm716
      %vm781 = vmand %vm749, %vm717
      %vm782 = vmand %vm750, %vm718
      %vm783 = vmand %vm751, %vm719
      %vm784 = vmand %vm752, %vm720
      %vm785 = vmand %vm753, %vm721
      %vm786 = vmand %vm754, %vm722
      %vm787 = vmand %vm755, %vm723
      %vm788 = vmand %vm756, %vm724
      %vm789 = vmand %vm757, %vm725
      %vm790 = vmand %vm758, %vm726
      %vm791 = vmand %vm759, %vm727
      %vm792 = vmand %vm760, %vm728
      %vm793 = vmand %vm761, %vm729
      %vm794 = vmand %vm762, %vm730
      %vm795 = vmand %vm763, %vm731
      %vm796 = vmand %vm764, %vm732
      %vm797 = vmand %vm765, %vm733
      %vm798 = vmand %vm766, %vm734
      %vm799 = vmand %vm767, %vm735
      %vm800 = vmand %vm768, %vm736
      %vm801 = vmand %vm769, %vm737
      %vm802 = vmand %vm770, %vm738
      %vm803 = vmand %vm771, %vm739
      %v804 = vadd.s32 %v490, 16
      %v805 = vadd.s32 %v497, 16
      %v806 = vadd.s32 %v504, 16
      %v807 = vadd.s32 %v511, 16
      %v808 = vadd.s32 %v518, 16
      %v809 = vadd.s32 %v525, 16
      %v810 = vadd.s32 %v532, 16
      %v811 = vadd.s32 %v539, 16
      %v812 = vadd.s32 %v546, 16
      %v813 = vadd.s32 %v553, 16
      %v814 = vadd.s32 %v560, 16
      %v815 = vadd.s32 %v567, 16
      %v816 = vadd.s32 %v574, 16
      %v817 = vadd.s32 %v581, 16
      %v818 = vadd.s32 %v588, 16
      %v819 = vadd.s32 %v595, 16
      %v820 = vadd.s32 %v602, 16
      %v821 = vadd.s32 %v609, 16
      %v822 = vadd.s32 %v616, 16
      %v823 = vadd.s32 %v623, 16
      %v824 = vadd.s32 %v630, 16
      %v825 = vadd.s32 %v637, 16
      %v826 = vadd.s32 %v644, 16
      %v827 = vadd.s32 %v651, 16
      %v828 = vadd.s32 %v658, 16
      %v829 = vadd.s32 %v665, 16
      %v830 = vadd.s32 %v672, 16
      %v831 = vadd.s32 %v679, 16
      %v832 = vadd.s32 %v686, 16
      %v833 = vadd.s32 %v693, 16
      %v834 = vadd.s32 %v700, 16
      %v835 = vadd.s32 %v707, 16
      %v836 = vsel %vm772, %v804, %v490
      %v837 = vsel %vm773, %v805, %v497
      %v838 = vsel %vm774, %v806, %v504
      %v839 = vsel %vm775, %v807, %v511
      %v840 = vsel %vm776, %v808, %v518
      %v841 = vsel %vm777, %v809, %v525
      %v842 = vsel %vm778, %v810, %v532
      %v843 = vsel %vm779, %v811, %v539
      %v844 = vsel %vm780, %v812, %v546
      %v845 = vsel %vm781, %v813, %v553
      %v846 = vsel %vm782, %v814, %v560
      %v847 = vsel %vm783, %v815, %v567
      %v848 = vsel %vm784, %v816, %v574
      %v849 = vsel %vm785, %v817, %v581
      %v850 = vsel %vm786, %v818, %v588
      %v851 = vsel %vm787, %v819, %v595
      %v852 = vsel %vm788, %v820, %v602
      %v853 = vsel %vm789, %v821, %v609
      %v854 = vsel %vm790, %v822, %v616
      %v855 = vsel %vm791, %v823, %v623
      %v856 = vsel %vm792, %v824, %v630
      %v857 = vsel %vm793, %v825, %v637
      %v858 = vsel %vm794, %v826, %v644
      %v859 = vsel %vm795, %v827, %v651
      %v860 = vsel %vm796, %v828, %v658
      %v861 = vsel %vm797, %v829, %v665
      %v862 = vsel %vm798, %v830, %v672
      %v863 = vsel %vm799, %v831, %v679
      %v864 = vsel %vm800, %v832, %v686
      %v865 = vsel %vm801, %v833, %v693
      %v866 = vsel %vm802, %v834, %v700
      %v867 = vsel %vm803, %v835, %v707
      %vm868 = vcmp.ne.s32.totalorder %v836, 0
      %vm869 = vcmp.ne.s32.totalorder %v837, 0
      %vm870 = vcmp.ne.s32.totalorder %v838, 0
      %vm871 = vcmp.ne.s32.totalorder %v839, 0
      %vm872 = vcmp.ne.s32.totalorder %v840, 0
      %vm873 = vcmp.ne.s32.totalorder %v841, 0
      %vm874 = vcmp.ne.s32.totalorder %v842, 0
      %vm875 = vcmp.ne.s32.totalorder %v843, 0
      %vm876 = vcmp.ne.s32.totalorder %v844, 0
      %vm877 = vcmp.ne.s32.totalorder %v845, 0
      %vm878 = vcmp.ne.s32.totalorder %v846, 0
      %vm879 = vcmp.ne.s32.totalorder %v847, 0
      %vm880 = vcmp.ne.s32.totalorder %v848, 0
      %vm881 = vcmp.ne.s32.totalorder %v849, 0
      %vm882 = vcmp.ne.s32.totalorder %v850, 0
      %vm883 = vcmp.ne.s32.totalorder %v851, 0
      %vm884 = vcmp.ne.s32.totalorder %v852, 0
      %vm885 = vcmp.ne.s32.totalorder %v853, 0
      %vm886 = vcmp.ne.s32.totalorder %v854, 0
      %vm887 = vcmp.ne.s32.totalorder %v855, 0
      %vm888 = vcmp.ne.s32.totalorder %v856, 0
      %vm889 = vcmp.ne.s32.totalorder %v857, 0
      %vm890 = vcmp.ne.s32.totalorder %v858, 0
      %vm891 = vcmp.ne.s32.totalorder %v859, 0
      %vm892 = vcmp.ne.s32.totalorder %v860, 0
      %vm893 = vcmp.ne.s32.totalorder %v861, 0
      %vm894 = vcmp.ne.s32.totalorder %v862, 0
      %vm895 = vcmp.ne.s32.totalorder %v863, 0
      %vm896 = vcmp.ne.s32.totalorder %v864, 0
      %vm897 = vcmp.ne.s32.totalorder %v865, 0
      %vm898 = vcmp.ne.s32.totalorder %v866, 0
      %vm899 = vcmp.ne.s32.totalorder %v867, 0
      %vm900 = vcmp.ne.s32.totalorder %v836, 15
      %vm901 = vcmp.ne.s32.totalorder %v837, 15
      %vm902 = vcmp.ne.s32.totalorder %v838, 15
      %vm903 = vcmp.ne.s32.totalorder %v839, 15
      %vm904 = vcmp.ne.s32.totalorder %v840, 15
      %vm905 = vcmp.ne.s32.totalorder %v841, 15
      %vm906 = vcmp.ne.s32.totalorder %v842, 15
      %vm907 = vcmp.ne.s32.totalorder %v843, 15
      %vm908 = vcmp.ne.s32.totalorder %v844, 15
      %vm909 = vcmp.ne.s32.totalorder %v845, 15
      %vm910 = vcmp.ne.s32.totalorder %v846, 15
      %vm911 = vcmp.ne.s32.totalorder %v847, 15
      %vm912 = vcmp.ne.s32.totalorder %v848, 15
      %vm913 = vcmp.ne.s32.totalorder %v849, 15
      %vm914 = vcmp.ne.s32.totalorder %v850, 15
      %vm915 = vcmp.ne.s32.totalorder %v851, 15
      %vm916 = vcmp.ne.s32.totalorder %v852, 15
      %vm917 = vcmp.ne.s32.totalorder %v853, 15
      %vm918 = vcmp.ne.s32.totalorder %v854, 15
      %vm919 = vcmp.ne.s32.totalorder %v855, 15
      %vm920 = vcmp.ne.s32.totalorder %v856, 15
      %vm921 = vcmp.ne.s32.totalorder %v857, 15
      %vm922 = vcmp.ne.s32.totalorder %v858, 15
      %vm923 = vcmp.ne.s32.totalorder %v859, 15
      %vm924 = vcmp.ne.s32.totalorder %v860, 15
      %vm925 = vcmp.ne.s32.totalorder %v861, 15
      %vm926 = vcmp.ne.s32.totalorder %v862, 15
      %vm927 = vcmp.ne.s32.totalorder %v863, 15
      %vm928 = vcmp.ne.s32.totalorder %v864, 15
      %vm929 = vcmp.ne.s32.totalorder %v865, 15
      %vm930 = vcmp.ne.s32.totalorder %v866, 15
      %vm931 = vcmp.ne.s32.totalorder %v867, 15
      %v932 = vld [vmem:[#allocation2] sm:$0xff]
      %v933 = vld [vmem:[#allocation2 + $0x8] sm:$0xff]
      %v934 = vld [vmem:[#allocation2 + $0x10] sm:$0xff]
      %v935 = vld [vmem:[#allocation2 + $0x18] sm:$0xff]
      %v936 = vld [vmem:[#allocation2 + $0x20] sm:$0xff]
      %v937 = vld [vmem:[#allocation2 + $0x28] sm:$0xff]
      %v938 = vld [vmem:[#allocation2 + $0x30] sm:$0xff]
      %v939 = vld [vmem:[#allocation2 + $0x38] sm:$0xff]
      %v940 = vld [vmem:[#allocation2 + $0x40] sm:$0xff]
      %v941 = vld [vmem:[#allocation2 + $0x48] sm:$0xff]
      %v942 = vld [vmem:[#allocation2 + $0x50] sm:$0xff]
      %v943 = vld [vmem:[#allocation2 + $0x58] sm:$0xff]
      %v944 = vld [vmem:[#allocation2 + $0x60] sm:$0xff]
      %v945 = vld [vmem:[#allocation2 + $0x68] sm:$0xff]
      %v946 = vld [vmem:[#allocation2 + $0x70] sm:$0xff]
      %v947 = vld [vmem:[#allocation2 + $0x78] sm:$0xff]
      %v948 = vld [vmem:[#allocation2 + $0x80] sm:$0xff]
      %v949 = vld [vmem:[#allocation2 + $0x88] sm:$0xff]
      %v950 = vld [vmem:[#allocation2 + $0x90] sm:$0xff]
      %v951 = vld [vmem:[#allocation2 + $0x98] sm:$0xff]
      %v952 = vld [vmem:[#allocation2 + $0xa0] sm:$0xff]
      %v953 = vld [vmem:[#allocation2 + $0xa8] sm:$0xff]
      %v954 = vld [vmem:[#allocation2 + $0xb0] sm:$0xff]
      %v955 = vld [vmem:[#allocation2 + $0xb8] sm:$0xff]
      %v956 = vld [vmem:[#allocation2 + $0xc0] sm:$0xff]
      %v957 = vld [vmem:[#allocation2 + $0xc8] sm:$0xff]
      %v958 = vld [vmem:[#allocation2 + $0xd0] sm:$0xff]
      %v959 = vld [vmem:[#allocation2 + $0xd8] sm:$0xff]
      %v960 = vld [vmem:[#allocation2 + $0xe0] sm:$0xff]
      %v961 = vld [vmem:[#allocation2 + $0xe8] sm:$0xff]
      %v962 = vld [vmem:[#allocation2 + $0xf0] sm:$0xff]
      %v963 = vld [vmem:[#allocation2 + $0xf8] sm:$0xff]
      %v964 = vrot.slane %v932, 7
      %v965 = vrot.slane %v933, 7
      %v966 = vrot.slane %v934, 7
      %v967 = vrot.slane %v935, 7
      %v968 = vrot.slane %v936, 7
      %v969 = vrot.slane %v937, 7
      %v970 = vrot.slane %v938, 7
      %v971 = vrot.slane %v939, 7
      %v972 = vrot.slane %v940, 7
      %v973 = vrot.slane %v941, 7
      %v974 = vrot.slane %v942, 7
      %v975 = vrot.slane %v943, 7
      %v976 = vrot.slane %v944, 7
      %v977 = vrot.slane %v945, 7
      %v978 = vrot.slane %v946, 7
      %v979 = vrot.slane %v947, 7
      %v980 = vrot.slane %v948, 7
      %v981 = vrot.slane %v949, 7
      %v982 = vrot.slane %v950, 7
      %v983 = vrot.slane %v951, 7
      %v984 = vrot.slane %v952, 7
      %v985 = vrot.slane %v953, 7
      %v986 = vrot.slane %v954, 7
      %v987 = vrot.slane %v955, 7
      %v988 = vrot.slane %v956, 7
      %v989 = vrot.slane %v957, 7
      %v990 = vrot.slane %v958, 7
      %v991 = vrot.slane %v959, 7
      %v992 = vrot.slane %v960, 7
      %v993 = vrot.slane %v961, 7
      %v994 = vrot.slane %v962, 7
      %v995 = vrot.slane %v963, 7
      %vm996 = vcmp.lt.s32.totalorder %v452, 1
      %v997 = vsel %vm996, %v994, %v995
      %v998 = vsel %vm996, %v993, %v994
      %v999 = vsel %vm996, %v992, %v993
      %v1000 = vsel %vm996, %v991, %v992
      %v1001 = vsel %vm996, %v990, %v991
      %v1002 = vsel %vm996, %v989, %v990
      %v1003 = vsel %vm996, %v988, %v989
      %v1004 = vsel %vm996, %v987, %v988
      %v1005 = vsel %vm996, %v986, %v987
      %v1006 = vsel %vm996, %v985, %v986
      %v1007 = vsel %vm996, %v984, %v985
      %v1008 = vsel %vm996, %v983, %v984
      %v1009 = vsel %vm996, %v982, %v983
      %v1010 = vsel %vm996, %v981, %v982
      %v1011 = vsel %vm996, %v980, %v981
      %v1012 = vsel %vm996, %v979, %v980
      %v1013 = vsel %vm996, %v978, %v979
      %v1014 = vsel %vm996, %v977, %v978
      %v1015 = vsel %vm996, %v976, %v977
      %v1016 = vsel %vm996, %v975, %v976
      %v1017 = vsel %vm996, %v974, %v975
      %v1018 = vsel %vm996, %v973, %v974
      %v1019 = vsel %vm996, %v972, %v973
      %v1020 = vsel %vm996, %v971, %v972
      %v1021 = vsel %vm996, %v970, %v971
      %v1022 = vsel %vm996, %v969, %v970
      %v1023 = vsel %vm996, %v968, %v969
      %v1024 = vsel %vm996, %v967, %v968
      %v1025 = vsel %vm996, %v966, %v967
      %v1026 = vsel %vm996, %v965, %v966
      %v1027 = vsel %vm996, %v964, %v965
      %v1028 = vsel %vm996, %v995, %v964
      %v1029 = vsel %vm868, 1, 0
      %v1030 = vsel %vm869, 1, 0
      %v1031 = vsel %vm870, 1, 0
      %v1032 = vsel %vm871, 1, 0
      %v1033 = vsel %vm872, 1, 0
      %v1034 = vsel %vm873, 1, 0
      %v1035 = vsel %vm874, 1, 0
      %v1036 = vsel %vm875, 1, 0
      %v1037 = vsel %vm876, 1, 0
      %v1038 = vsel %vm877, 1, 0
      %v1039 = vsel %vm878, 1, 0
      %v1040 = vsel %vm879, 1, 0
      %v1041 = vsel %vm880, 1, 0
      %v1042 = vsel %vm881, 1, 0
      %v1043 = vsel %vm882, 1, 0
      %v1044 = vsel %vm883, 1, 0
      %v1045 = vsel %vm884, 1, 0
      %v1046 = vsel %vm885, 1, 0
      %v1047 = vsel %vm886, 1, 0
      %v1048 = vsel %vm887, 1, 0
      %v1049 = vsel %vm888, 1, 0
      %v1050 = vsel %vm889, 1, 0
      %v1051 = vsel %vm890, 1, 0
      %v1052 = vsel %vm891, 1, 0
      %v1053 = vsel %vm892, 1, 0
      %v1054 = vsel %vm893, 1, 0
      %v1055 = vsel %vm894, 1, 0
      %v1056 = vsel %vm895, 1, 0
      %v1057 = vsel %vm896, 1, 0
      %v1058 = vsel %vm897, 1, 0
      %v1059 = vsel %vm898, 1, 0
      %v1060 = vsel %vm899, 1, 0
      %vm1061 = vcmp.eq.s32.totalorder %v1029, 1
      %vm1062 = vcmp.eq.s32.totalorder %v1030, 1
      %vm1063 = vcmp.eq.s32.totalorder %v1031, 1
      %vm1064 = vcmp.eq.s32.totalorder %v1032, 1
      %vm1065 = vcmp.eq.s32.totalorder %v1033, 1
      %vm1066 = vcmp.eq.s32.totalorder %v1034, 1
      %vm1067 = vcmp.eq.s32.totalorder %v1035, 1
      %vm1068 = vcmp.eq.s32.totalorder %v1036, 1
      %vm1069 = vcmp.eq.s32.totalorder %v1037, 1
      %vm1070 = vcmp.eq.s32.totalorder %v1038, 1
      %vm1071 = vcmp.eq.s32.totalorder %v1039, 1
      %vm1072 = vcmp.eq.s32.totalorder %v1040, 1
      %vm1073 = vcmp.eq.s32.totalorder %v1041, 1
      %vm1074 = vcmp.eq.s32.totalorder %v1042, 1
      %vm1075 = vcmp.eq.s32.totalorder %v1043, 1
      %vm1076 = vcmp.eq.s32.totalorder %v1044, 1
      %vm1077 = vcmp.eq.s32.totalorder %v1045, 1
      %vm1078 = vcmp.eq.s32.totalorder %v1046, 1
      %vm1079 = vcmp.eq.s32.totalorder %v1047, 1
      %vm1080 = vcmp.eq.s32.totalorder %v1048, 1
      %vm1081 = vcmp.eq.s32.totalorder %v1049, 1
      %vm1082 = vcmp.eq.s32.totalorder %v1050, 1
      %vm1083 = vcmp.eq.s32.totalorder %v1051, 1
      %vm1084 = vcmp.eq.s32.totalorder %v1052, 1
      %vm1085 = vcmp.eq.s32.totalorder %v1053, 1
      %vm1086 = vcmp.eq.s32.totalorder %v1054, 1
      %vm1087 = vcmp.eq.s32.totalorder %v1055, 1
      %vm1088 = vcmp.eq.s32.totalorder %v1056, 1
      %vm1089 = vcmp.eq.s32.totalorder %v1057, 1
      %vm1090 = vcmp.eq.s32.totalorder %v1058, 1
      %vm1091 = vcmp.eq.s32.totalorder %v1059, 1
      %vm1092 = vcmp.eq.s32.totalorder %v1060, 1
      %v1093 = vsel %vm1061, %v1028, 0.0
      %v1094 = vsel %vm1062, %v1027, 0.0
      %v1095 = vsel %vm1063, %v1026, 0.0
      %v1096 = vsel %vm1064, %v1025, 0.0
      %v1097 = vsel %vm1065, %v1024, 0.0
      %v1098 = vsel %vm1066, %v1023, 0.0
      %v1099 = vsel %vm1067, %v1022, 0.0
      %v1100 = vsel %vm1068, %v1021, 0.0
      %v1101 = vsel %vm1069, %v1020, 0.0
      %v1102 = vsel %vm1070, %v1019, 0.0
      %v1103 = vsel %vm1071, %v1018, 0.0
      %v1104 = vsel %vm1072, %v1017, 0.0
      %v1105 = vsel %vm1073, %v1016, 0.0
      %v1106 = vsel %vm1074, %v1015, 0.0
      %v1107 = vsel %vm1075, %v1014, 0.0
      %v1108 = vsel %vm1076, %v1013, 0.0
      %v1109 = vsel %vm1077, %v1012, 0.0
      %v1110 = vsel %vm1078, %v1011, 0.0
      %v1111 = vsel %vm1079, %v1010, 0.0
      %v1112 = vsel %vm1080, %v1009, 0.0
      %v1113 = vsel %vm1081, %v1008, 0.0
      %v1114 = vsel %vm1082, %v1007, 0.0
      %v1115 = vsel %vm1083, %v1006, 0.0
      %v1116 = vsel %vm1084, %v1005, 0.0
      %v1117 = vsel %vm1085, %v1004, 0.0
      %v1118 = vsel %vm1086, %v1003, 0.0
      %v1119 = vsel %vm1087, %v1002, 0.0
      %v1120 = vsel %vm1088, %v1001, 0.0
      %v1121 = vsel %vm1089, %v1000, 0.0
      %v1122 = vsel %vm1090, %v999, 0.0
      %v1123 = vsel %vm1091, %v998, 0.0
      %v1124 = vsel %vm1092, %v997, 0.0
      %v1125 = vld [vmem:[%s3] sm:$0xff]
      %v1126 = vld [vmem:[%s3 + $0x8] sm:$0xff]
      %v1127 = vld [vmem:[%s3 + $0x10] sm:$0xff]
      %v1128 = vld [vmem:[%s3 + $0x18] sm:$0xff]
      %v1129 = vld [vmem:[%s3 + $0x20] sm:$0xff]
      %v1130 = vld [vmem:[%s3 + $0x28] sm:$0xff]
      %v1131 = vld [vmem:[%s3 + $0x30] sm:$0xff]
      %v1132 = vld [vmem:[%s3 + $0x38] sm:$0xff]
      %v1133 = vld [vmem:[%s3 + $0x40] sm:$0xff]
      %v1134 = vld [vmem:[%s3 + $0x48] sm:$0xff]
      %v1135 = vld [vmem:[%s3 + $0x50] sm:$0xff]
      %v1136 = vld [vmem:[%s3 + $0x58] sm:$0xff]
      %v1137 = vld [vmem:[%s3 + $0x60] sm:$0xff]
      %v1138 = vld [vmem:[%s3 + $0x68] sm:$0xff]
      %v1139 = vld [vmem:[%s3 + $0x70] sm:$0xff]
      %v1140 = vld [vmem:[%s3 + $0x78] sm:$0xff]
      %1141 = vmatprep.subr.mxu0 0.0
      %1142 = vmatpush1.msra.mxu0 %v1125
      %1143 = vmatprep.subr.mxu0 0.0
      %1144 = vmatpush1.msra.mxu0 %v1126
      %1145 = vmatprep.subr.mxu0 0.0
      %1146 = vmatpush1.msra.mxu0 %v1127
      %1147 = vmatprep.subr.mxu0 0.0
      %1148 = vmatpush1.msra.mxu0 %v1128
      %1149 = vmatprep.subr.mxu0 0.0
      %1150 = vmatpush1.msra.mxu0 %v1129
      %1151 = vmatprep.subr.mxu0 0.0
      %1152 = vmatpush1.msra.mxu0 %v1130
      %1153 = vmatprep.subr.mxu0 0.0
      %1154 = vmatpush1.msra.mxu0 %v1131
      %1155 = vmatprep.subr.mxu0 0.0
      %1156 = vmatpush1.msra.mxu0 %v1132
      %1157 = vmatprep.subr.mxu0 0.0
      %1158 = vmatpush1.msra.mxu0 %v1133
      %1159 = vmatprep.subr.mxu0 0.0
      %1160 = vmatpush1.msra.mxu0 %v1134
      %1161 = vmatprep.subr.mxu0 0.0
      %1162 = vmatpush1.msra.mxu0 %v1135
      %1163 = vmatprep.subr.mxu0 0.0
      %1164 = vmatpush1.msra.mxu0 %v1136
      %1165 = vmatprep.subr.mxu0 0.0
      %1166 = vmatpush1.msra.mxu0 %v1137
      %1167 = vmatprep.subr.mxu0 0.0
      %1168 = vmatpush1.msra.mxu0 %v1138
      %1169 = vmatprep.subr.mxu0 0.0
      %1170 = vmatpush1.msra.mxu0 %v1139
      %1171 = vmatprep.subr.mxu0 0.0
      %1172 = vmatpush1.msra.mxu0 %v1140
      %1173 = vmatprep.subr.mxu0 0.0
      %1174 = vmatpush1.msra.mxu0 0.0
      %1175 = vmatprep.subr.mxu0 0.0
      %1176 = vmatpush1.msra.mxu0 0.0
      %1177 = vmatprep.subr.mxu0 0.0
      %1178 = vmatpush1.msra.mxu0 0.0
      %1179 = vmatprep.subr.mxu0 0.0
      %1180 = vmatpush1.msra.mxu0 0.0
      %1181 = vmatprep.subr.mxu0 0.0
      %1182 = vmatpush1.msra.mxu0 0.0
      %1183 = vmatprep.subr.mxu0 0.0
      %1184 = vmatpush1.msra.mxu0 0.0
      %1185 = vmatprep.subr.mxu0 0.0
      %1186 = vmatpush1.msra.mxu0 0.0
      %1187 = vmatprep.subr.mxu0 0.0
      %1188 = vmatpush1.msra.mxu0 0.0
      %1189 = vmatprep.subr.mxu0 0.0
      %1190 = vmatpush1.msra.mxu0 0.0
      %1191 = vmatprep.subr.mxu0 0.0
      %1192 = vmatpush1.msra.mxu0 0.0
      %1193 = vmatprep.subr.mxu0 0.0
      %1194 = vmatpush1.msra.mxu0 0.0
      %1195 = vmatprep.subr.mxu0 0.0
      %1196 = vmatpush1.msra.mxu0 0.0
      %1197 = vmatprep.subr.mxu0 0.0
      %1198 = vmatpush1.msra.mxu0 0.0
      %1199 = vmatprep.subr.mxu0 0.0
      %1200 = vmatpush1.msra.mxu0 0.0
      %1201 = vmatprep.subr.mxu0 0.0
      %1202 = vmatpush1.msra.mxu0 0.0
      %1203 = vmatprep.subr.mxu0 0.0
      %1204 = vmatpush1.msra.mxu0 0.0
      %1205 = vmatprep.mubr.f32.mxu0 0.0
      %1206 = vmatmul.mubr.f32.gmra.mrb[0].mxu0 %v1093
      %v1207 = vpop.f32.mrb[0].mxu0
      %v1208 = vadd.f32 0.0, %v1207
      %v1209 = vpop.f32.mrb[0].mxu0
      %1210 = vmatprep.mubr.f32.mxu0 0.0
      %1211 = vmatmul.mubr.f32.gmra.mrb[0].mxu0 %v1094
      %v1212 = vpop.f32.mrb[0].mxu0
      %v1213 = vadd.f32 0.0, %v1212
      %v1214 = vpop.f32.mrb[0].mxu0
      %1215 = vmatprep.mubr.f32.mxu0 0.0
      %1216 = vmatmul.mubr.f32.gmra.mrb[0].mxu0 %v1095
      %v1217 = vpop.f32.mrb[0].mxu0
      %v1218 = vadd.f32 0.0, %v1217
      %v1219 = vpop.f32.mrb[0].mxu0
      %1220 = vmatprep.mubr.f32.mxu0 0.0
      %1221 = vmatmul.mubr.f32.gmra.mrb[0].mxu0 %v1096
      %v1222 = vpop.f32.mrb[0].mxu0
      %v1223 = vadd.f32 0.0, %v1222
      %v1224 = vpop.f32.mrb[0].mxu0
      %1225 = vmatprep.mubr.f32.mxu0 0.0
      %1226 = vmatmul.mubr.f32.gmra.mrb[0].mxu0 %v1097
      %v1227 = vpop.f32.mrb[0].mxu0
      %v1228 = vadd.f32 0.0, %v1227
      %v1229 = vpop.f32.mrb[0].mxu0
      %1230 = vmatprep.mubr.f32.mxu0 0.0
      %1231 = vmatmul.mubr.f32.gmra.mrb[0].mxu0 %v1098
      %v1232 = vpop.f32.mrb[0].mxu0
      %v1233 = vadd.f32 0.0, %v1232
      %v1234 = vpop.f32.mrb[0].mxu0
      %1235 = vmatprep.mubr.f32.mxu0 0.0
      %1236 = vmatmul.mubr.f32.gmra.mrb[0].mxu0 %v1099
      %v1237 = vpop.f32.mrb[0].mxu0
      %v1238 = vadd.f32 0.0, %v1237
      %v1239 = vpop.f32.mrb[0].mxu0
      %1240 = vmatprep.mubr.f32.mxu0 0.0
      %1241 = vmatmul.mubr.f32.gmra.mrb[0].mxu0 %v1100
      %v1242 = vpop.f32.mrb[0].mxu0
      %v1243 = vadd.f32 0.0, %v1242
      %v1244 = vpop.f32.mrb[0].mxu0
      %1245 = vmatprep.mubr.f32.mxu0 0.0
      %1246 = vmatmul.mubr.f32.gmra.mrb[0].mxu0 %v1101
      %v1247 = vpop.f32.mrb[0].mxu0
      %v1248 = vadd.f32 0.0, %v1247
      %v1249 = vpop.f32.mrb[0].mxu0
      %1250 = vmatprep.mubr.f32.mxu0 0.0
      %1251 = vmatmul.mubr.f32.gmra.mrb[0].mxu0 %v1102
      %v1252 = vpop.f32.mrb[0].mxu0
      %v1253 = vadd.f32 0.0, %v1252
      %v1254 = vpop.f32.mrb[0].mxu0
      %1255 = vmatprep.mubr.f32.mxu0 0.0
      %1256 = vmatmul.mubr.f32.gmra.mrb[0].mxu0 %v1103
      %v1257 = vpop.f32.mrb[0].mxu0
      %v1258 = vadd.f32 0.0, %v1257
      %v1259 = vpop.f32.mrb[0].mxu0
      %1260 = vmatprep.mubr.f32.mxu0 0.0
      %1261 = vmatmul.mubr.f32.gmra.mrb[0].mxu0 %v1104
      %v1262 = vpop.f32.mrb[0].mxu0
      %v1263 = vadd.f32 0.0, %v1262
      %v1264 = vpop.f32.mrb[0].mxu0
      %1265 = vmatprep.mubr.f32.mxu0 0.0
      %1266 = vmatmul.mubr.f32.gmra.mrb[0].mxu0 %v1105
      %v1267 = vpop.f32.mrb[0].mxu0
      %v1268 = vadd.f32 0.0, %v1267
      %v1269 = vpop.f32.mrb[0].mxu0
      %1270 = vmatprep.mubr.f32.mxu0 0.0
      %1271 = vmatmul.mubr.f32.gmra.mrb[0].mxu0 %v1106
      %v1272 = vpop.f32.mrb[0].mxu0
      %v1273 = vadd.f32 0.0, %v1272
      %v1274 = vpop.f32.mrb[0].mxu0
      %1275 = vmatprep.mubr.f32.mxu0 0.0
      %1276 = vmatmul.mubr.f32.gmra.mrb[0].mxu0 %v1107
      %v1277 = vpop.f32.mrb[0].mxu0
      %v1278 = vadd.f32 0.0, %v1277
      %v1279 = vpop.f32.mrb[0].mxu0
      %1280 = vmatprep.mubr.f32.mxu0 0.0
      %1281 = vmatmul.mubr.f32.gmra.mrb[0].mxu0 %v1108
      %v1282 = vpop.f32.mrb[0].mxu0
      %v1283 = vadd.f32 0.0, %v1282
      %v1284 = vpop.f32.mrb[0].mxu0
      %1285 = vmatprep.mubr.f32.mxu0 0.0
      %1286 = vmatmul.mubr.f32.gmra.mrb[0].mxu0 %v1109
      %v1287 = vpop.f32.mrb[0].mxu0
      %v1288 = vadd.f32 0.0, %v1287
      %v1289 = vpop.f32.mrb[0].mxu0
      %1290 = vmatprep.mubr.f32.mxu0 0.0
      %1291 = vmatmul.mubr.f32.gmra.mrb[0].mxu0 %v1110
      %v1292 = vpop.f32.mrb[0].mxu0
      %v1293 = vadd.f32 0.0, %v1292
      %v1294 = vpop.f32.mrb[0].mxu0
      %1295 = vmatprep.mubr.f32.mxu0 0.0
      %1296 = vmatmul.mubr.f32.gmra.mrb[0].mxu0 %v1111
      %v1297 = vpop.f32.mrb[0].mxu0
      %v1298 = vadd.f32 0.0, %v1297
      %v1299 = vpop.f32.mrb[0].mxu0
      %1300 = vmatprep.mubr.f32.mxu0 0.0
      %1301 = vmatmul.mubr.f32.gmra.mrb[0].mxu0 %v1112
      %v1302 = vpop.f32.mrb[0].mxu0
      %v1303 = vadd.f32 0.0, %v1302
      %v1304 = vpop.f32.mrb[0].mxu0
      %1305 = vmatprep.mubr.f32.mxu0 0.0
      %1306 = vmatmul.mubr.f32.gmra.mrb[0].mxu0 %v1113
      %v1307 = vpop.f32.mrb[0].mxu0
      %v1308 = vadd.f32 0.0, %v1307
      %v1309 = vpop.f32.mrb[0].mxu0
      %1310 = vmatprep.mubr.f32.mxu0 0.0
      %1311 = vmatmul.mubr.f32.gmra.mrb[0].mxu0 %v1114
      %v1312 = vpop.f32.mrb[0].mxu0
      %v1313 = vadd.f32 0.0, %v1312
      %v1314 = vpop.f32.mrb[0].mxu0
      %1315 = vmatprep.mubr.f32.mxu0 0.0
      %1316 = vmatmul.mubr.f32.gmra.mrb[0].mxu0 %v1115
      %v1317 = vpop.f32.mrb[0].mxu0
      %v1318 = vadd.f32 0.0, %v1317
      %v1319 = vpop.f32.mrb[0].mxu0
      %1320 = vmatprep.mubr.f32.mxu0 0.0
      %1321 = vmatmul.mubr.f32.gmra.mrb[0].mxu0 %v1116
      %v1322 = vpop.f32.mrb[0].mxu0
      %v1323 = vadd.f32 0.0, %v1322
      %v1324 = vpop.f32.mrb[0].mxu0
      %1325 = vmatprep.mubr.f32.mxu0 0.0
      %1326 = vmatmul.mubr.f32.gmra.mrb[0].mxu0 %v1117
      %v1327 = vpop.f32.mrb[0].mxu0
      %v1328 = vadd.f32 0.0, %v1327
      %v1329 = vpop.f32.mrb[0].mxu0
      %1330 = vmatprep.mubr.f32.mxu0 0.0
      %1331 = vmatmul.mubr.f32.gmra.mrb[0].mxu0 %v1118
      %v1332 = vpop.f32.mrb[0].mxu0
      %v1333 = vadd.f32 0.0, %v1332
      %v1334 = vpop.f32.mrb[0].mxu0
      %1335 = vmatprep.mubr.f32.mxu0 0.0
      %1336 = vmatmul.mubr.f32.gmra.mrb[0].mxu0 %v1119
      %v1337 = vpop.f32.mrb[0].mxu0
      %v1338 = vadd.f32 0.0, %v1337
      %v1339 = vpop.f32.mrb[0].mxu0
      %1340 = vmatprep.mubr.f32.mxu0 0.0
      %1341 = vmatmul.mubr.f32.gmra.mrb[0].mxu0 %v1120
      %v1342 = vpop.f32.mrb[0].mxu0
      %v1343 = vadd.f32 0.0, %v1342
      %v1344 = vpop.f32.mrb[0].mxu0
      %1345 = vmatprep.mubr.f32.mxu0 0.0
      %1346 = vmatmul.mubr.f32.gmra.mrb[0].mxu0 %v1121
      %v1347 = vpop.f32.mrb[0].mxu0
      %v1348 = vadd.f32 0.0, %v1347
      %v1349 = vpop.f32.mrb[0].mxu0
      %1350 = vmatprep.mubr.f32.mxu0 0.0
      %1351 = vmatmul.mubr.f32.gmra.mrb[0].mxu0 %v1122
      %v1352 = vpop.f32.mrb[0].mxu0
      %v1353 = vadd.f32 0.0, %v1352
      %v1354 = vpop.f32.mrb[0].mxu0
      %1355 = vmatprep.mubr.f32.mxu0 0.0
      %1356 = vmatmul.mubr.f32.gmra.mrb[0].mxu0 %v1123
      %v1357 = vpop.f32.mrb[0].mxu0
      %v1358 = vadd.f32 0.0, %v1357
      %v1359 = vpop.f32.mrb[0].mxu0
      %1360 = vmatprep.mubr.f32.mxu0 0.0
      %1361 = vmatmul.mubr.f32.gmra.mrb[0].mxu0 %v1124
      %v1362 = vpop.f32.mrb[0].mxu0
      %v1363 = vadd.f32 0.0, %v1362
      %v1364 = vpop.f32.mrb[0].mxu0
      %1365 = vdwg.mxu0
      %1366 = vst [vmem:[#allocation3] sm:$0xff] %v1208
      %1367 = vst [vmem:[#allocation3 + $0x8] sm:$0xff] %v1213
      %1368 = vst [vmem:[#allocation3 + $0x10] sm:$0xff] %v1218
      %1369 = vst [vmem:[#allocation3 + $0x18] sm:$0xff] %v1223
      %1370 = vst [vmem:[#allocation3 + $0x20] sm:$0xff] %v1228
      %1371 = vst [vmem:[#allocation3 + $0x28] sm:$0xff] %v1233
      %1372 = vst [vmem:[#allocation3 + $0x30] sm:$0xff] %v1238
      %1373 = vst [vmem:[#allocation3 + $0x38] sm:$0xff] %v1243
      %1374 = vst [vmem:[#allocation3 + $0x40] sm:$0xff] %v1248
      %1375 = vst [vmem:[#allocation3 + $0x48] sm:$0xff] %v1253
      %1376 = vst [vmem:[#allocation3 + $0x50] sm:$0xff] %v1258
      %1377 = vst [vmem:[#allocation3 + $0x58] sm:$0xff] %v1263
      %1378 = vst [vmem:[#allocation3 + $0x60] sm:$0xff] %v1268
      %1379 = vst [vmem:[#allocation3 + $0x68] sm:$0xff] %v1273
      %1380 = vst [vmem:[#allocation3 + $0x70] sm:$0xff] %v1278
      %1381 = vst [vmem:[#allocation3 + $0x78] sm:$0xff] %v1283
      %1382 = vst [vmem:[#allocation3 + $0x80] sm:$0xff] %v1288
      %1383 = vst [vmem:[#allocation3 + $0x88] sm:$0xff] %v1293
      %1384 = vst [vmem:[#allocation3 + $0x90] sm:$0xff] %v1298
      %1385 = vst [vmem:[#allocation3 + $0x98] sm:$0xff] %v1303
      %1386 = vst [vmem:[#allocation3 + $0xa0] sm:$0xff] %v1308
      %1387 = vst [vmem:[#allocation3 + $0xa8] sm:$0xff] %v1313
      %1388 = vst [vmem:[#allocation3 + $0xb0] sm:$0xff] %v1318
      %1389 = vst [vmem:[#allocation3 + $0xb8] sm:$0xff] %v1323
      %1390 = vst [vmem:[#allocation3 + $0xc0] sm:$0xff] %v1328
      %1391 = vst [vmem:[#allocation3 + $0xc8] sm:$0xff] %v1333
      %1392 = vst [vmem:[#allocation3 + $0xd0] sm:$0xff] %v1338
      %1393 = vst [vmem:[#allocation3 + $0xd8] sm:$0xff] %v1343
      %1394 = vst [vmem:[#allocation3 + $0xe0] sm:$0xff] %v1348
      %1395 = vst [vmem:[#allocation3 + $0xe8] sm:$0xff] %v1353
      %1396 = vst [vmem:[#allocation3 + $0xf0] sm:$0xff] %v1358
      %1397 = vst [vmem:[#allocation3 + $0xf8] sm:$0xff] %v1363
      %v1398 = vld [vmem:[#allocation2] sm:$0xff]
      %v1399 = vld [vmem:[#allocation2 + $0x8] sm:$0xff]
      %v1400 = vld [vmem:[#allocation2 + $0x10] sm:$0xff]
      %v1401 = vld [vmem:[#allocation2 + $0x18] sm:$0xff]
      %v1402 = vld [vmem:[#allocation2 + $0x20] sm:$0xff]
      %v1403 = vld [vmem:[#allocation2 + $0x28] sm:$0xff]
      %v1404 = vld [vmem:[#allocation2 + $0x30] sm:$0xff]
      %v1405 = vld [vmem:[#allocation2 + $0x38] sm:$0xff]
      %v1406 = vld [vmem:[#allocation2 + $0x40] sm:$0xff]
      %v1407 = vld [vmem:[#allocation2 + $0x48] sm:$0xff]
      %v1408 = vld [vmem:[#allocation2 + $0x50] sm:$0xff]
      %v1409 = vld [vmem:[#allocation2 + $0x58] sm:$0xff]
      %v1410 = vld [vmem:[#allocation2 + $0x60] sm:$0xff]
      %v1411 = vld [vmem:[#allocation2 + $0x68] sm:$0xff]
      %v1412 = vld [vmem:[#allocation2 + $0x70] sm:$0xff]
      %v1413 = vld [vmem:[#allocation2 + $0x78] sm:$0xff]
      %v1414 = vld [vmem:[#allocation2 + $0x80] sm:$0xff]
      %v1415 = vld [vmem:[#allocation2 + $0x88] sm:$0xff]
      %v1416 = vld [vmem:[#allocation2 + $0x90] sm:$0xff]
      %v1417 = vld [vmem:[#allocation2 + $0x98] sm:$0xff]
      %v1418 = vld [vmem:[#allocation2 + $0xa0] sm:$0xff]
      %v1419 = vld [vmem:[#allocation2 + $0xa8] sm:$0xff]
      %v1420 = vld [vmem:[#allocation2 + $0xb0] sm:$0xff]
      %v1421 = vld [vmem:[#allocation2 + $0xb8] sm:$0xff]
      %v1422 = vld [vmem:[#allocation2 + $0xc0] sm:$0xff]
      %v1423 = vld [vmem:[#allocation2 + $0xc8] sm:$0xff]
      %v1424 = vld [vmem:[#allocation2 + $0xd0] sm:$0xff]
      %v1425 = vld [vmem:[#allocation2 + $0xd8] sm:$0xff]
      %v1426 = vld [vmem:[#allocation2 + $0xe0] sm:$0xff]
      %v1427 = vld [vmem:[#allocation2 + $0xe8] sm:$0xff]
      %v1428 = vld [vmem:[#allocation2 + $0xf0] sm:$0xff]
      %v1429 = vld [vmem:[#allocation2 + $0xf8] sm:$0xff]
      %v1430 = vld [vmem:[%s3 + $0x80] sm:$0xff]
      %v1431 = vld [vmem:[%s3 + $0x88] sm:$0xff]
      %v1432 = vld [vmem:[%s3 + $0x90] sm:$0xff]
      %v1433 = vld [vmem:[%s3 + $0x98] sm:$0xff]
      %v1434 = vld [vmem:[%s3 + $0xa0] sm:$0xff]
      %v1435 = vld [vmem:[%s3 + $0xa8] sm:$0xff]
      %v1436 = vld [vmem:[%s3 + $0xb0] sm:$0xff]
      %v1437 = vld [vmem:[%s3 + $0xb8] sm:$0xff]
      %v1438 = vld [vmem:[%s3 + $0xc0] sm:$0xff]
      %v1439 = vld [vmem:[%s3 + $0xc8] sm:$0xff]
      %v1440 = vld [vmem:[%s3 + $0xd0] sm:$0xff]
      %v1441 = vld [vmem:[%s3 + $0xd8] sm:$0xff]
      %v1442 = vld [vmem:[%s3 + $0xe0] sm:$0xff]
      %v1443 = vld [vmem:[%s3 + $0xe8] sm:$0xff]
      %v1444 = vld [vmem:[%s3 + $0xf0] sm:$0xff]
      %v1445 = vld [vmem:[%s3 + $0xf8] sm:$0xff]
      %1446 = vmatprep.subr.mxu0 0.0
      %1447 = vmatpush1.msra.mxu0 %v1430
      %1448 = vmatprep.subr.mxu0 0.0
      %1449 = vmatpush1.msra.mxu0 %v1431
      %1450 = vmatprep.subr.mxu0 0.0
      %1451 = vmatpush1.msra.mxu0 %v1432
      %1452 = vmatprep.subr.mxu0 0.0
      %1453 = vmatpush1.msra.mxu0 %v1433
      %1454 = vmatprep.subr.mxu0 0.0
      %1455 = vmatpush1.msra.mxu0 %v1434
      %1456 = vmatprep.subr.mxu0 0.0
      %1457 = vmatpush1.msra.mxu0 %v1435
      %1458 = vmatprep.subr.mxu0 0.0
      %1459 = vmatpush1.msra.mxu0 %v1436
      %1460 = vmatprep.subr.mxu0 0.0
      %1461 = vmatpush1.msra.mxu0 %v1437
      %1462 = vmatprep.subr.mxu0 0.0
      %1463 = vmatpush1.msra.mxu0 %v1438
      %1464 = vmatprep.subr.mxu0 0.0
      %1465 = vmatpush1.msra.mxu0 %v1439
      %1466 = vmatprep.subr.mxu0 0.0
      %1467 = vmatpush1.msra.mxu0 %v1440
      %1468 = vmatprep.subr.mxu0 0.0
      %1469 = vmatpush1.msra.mxu0 %v1441
      %1470 = vmatprep.subr.mxu0 0.0
      %1471 = vmatpush1.msra.mxu0 %v1442
      %1472 = vmatprep.subr.mxu0 0.0
      %1473 = vmatpush1.msra.mxu0 %v1443
      %1474 = vmatprep.subr.mxu0 0.0
      %1475 = vmatpush1.msra.mxu0 %v1444
      %1476 = vmatprep.subr.mxu0 0.0
      %1477 = vmatpush1.msra.mxu0 %v1445
      %1478 = vmatprep.subr.mxu0 0.0
      %1479 = vmatpush1.msra.mxu0 0.0
      %1480 = vmatprep.subr.mxu0 0.0
      %1481 = vmatpush1.msra.mxu0 0.0
      %1482 = vmatprep.subr.mxu0 0.0
      %1483 = vmatpush1.msra.mxu0 0.0
      %1484 = vmatprep.subr.mxu0 0.0
      %1485 = vmatpush1.msra.mxu0 0.0
      %1486 = vmatprep.subr.mxu0 0.0
      %1487 = vmatpush1.msra.mxu0 0.0
      %1488 = vmatprep.subr.mxu0 0.0
      %1489 = vmatpush1.msra.mxu0 0.0
      %1490 = vmatprep.subr.mxu0 0.0
      %1491 = vmatpush1.msra.mxu0 0.0
      %1492 = vmatprep.subr.mxu0 0.0
      %1493 = vmatpush1.msra.mxu0 0.0
      %1494 = vmatprep.subr.mxu0 0.0
      %1495 = vmatpush1.msra.mxu0 0.0
      %1496 = vmatprep.subr.mxu0 0.0
      %1497 = vmatpush1.msra.mxu0 0.0
      %1498 = vmatprep.subr.mxu0 0.0
      %1499 = vmatpush1.msra.mxu0 0.0
      %1500 = vmatprep.subr.mxu0 0.0
      %1501 = vmatpush1.msra.mxu0 0.0
      %1502 = vmatprep.subr.mxu0 0.0
      %1503 = vmatpush1.msra.mxu0 0.0
      %1504 = vmatprep.subr.mxu0 0.0
      %1505 = vmatpush1.msra.mxu0 0.0
      %1506 = vmatprep.subr.mxu0 0.0
      %1507 = vmatpush1.msra.mxu0 0.0
      %1508 = vmatprep.subr.mxu0 0.0
      %1509 = vmatpush1.msra.mxu0 0.0
      %1510 = vmatprep.mubr.f32.mxu0 0.0
      %1511 = vmatmul.mubr.f32.gmra.mrb[0].mxu0 %v1398
      %v1512 = vpop.f32.mrb[0].mxu0
      %v1513 = vadd.f32 0.0, %v1512
      %v1514 = vpop.f32.mrb[0].mxu0
      %1515 = vmatprep.mubr.f32.mxu0 0.0
      %1516 = vmatmul.mubr.f32.gmra.mrb[0].mxu0 %v1399
      %v1517 = vpop.f32.mrb[0].mxu0
      %v1518 = vadd.f32 0.0, %v1517
      %v1519 = vpop.f32.mrb[0].mxu0
      %1520 = vmatprep.mubr.f32.mxu0 0.0
      %1521 = vmatmul.mubr.f32.gmra.mrb[0].mxu0 %v1400
      %v1522 = vpop.f32.mrb[0].mxu0
      %v1523 = vadd.f32 0.0, %v1522
      %v1524 = vpop.f32.mrb[0].mxu0
      %1525 = vmatprep.mubr.f32.mxu0 0.0
      %1526 = vmatmul.mubr.f32.gmra.mrb[0].mxu0 %v1401
      %v1527 = vpop.f32.mrb[0].mxu0
      %v1528 = vadd.f32 0.0, %v1527
      %v1529 = vpop.f32.mrb[0].mxu0
      %1530 = vmatprep.mubr.f32.mxu0 0.0
      %1531 = vmatmul.mubr.f32.gmra.mrb[0].mxu0 %v1402
      %v1532 = vpop.f32.mrb[0].mxu0
      %v1533 = vadd.f32 0.0, %v1532
      %v1534 = vpop.f32.mrb[0].mxu0
      %1535 = vmatprep.mubr.f32.mxu0 0.0
      %1536 = vmatmul.mubr.f32.gmra.mrb[0].mxu0 %v1403
      %v1537 = vpop.f32.mrb[0].mxu0
      %v1538 = vadd.f32 0.0, %v1537
      %v1539 = vpop.f32.mrb[0].mxu0
      %1540 = vmatprep.mubr.f32.mxu0 0.0
      %1541 = vmatmul.mubr.f32.gmra.mrb[0].mxu0 %v1404
      %v1542 = vpop.f32.mrb[0].mxu0
      %v1543 = vadd.f32 0.0, %v1542
      %v1544 = vpop.f32.mrb[0].mxu0
      %1545 = vmatprep.mubr.f32.mxu0 0.0
      %1546 = vmatmul.mubr.f32.gmra.mrb[0].mxu0 %v1405
      %v1547 = vpop.f32.mrb[0].mxu0
      %v1548 = vadd.f32 0.0, %v1547
      %v1549 = vpop.f32.mrb[0].mxu0
      %1550 = vmatprep.mubr.f32.mxu0 0.0
      %1551 = vmatmul.mubr.f32.gmra.mrb[0].mxu0 %v1406
      %v1552 = vpop.f32.mrb[0].mxu0
      %v1553 = vadd.f32 0.0, %v1552
      %v1554 = vpop.f32.mrb[0].mxu0
      %1555 = vmatprep.mubr.f32.mxu0 0.0
      %1556 = vmatmul.mubr.f32.gmra.mrb[0].mxu0 %v1407
      %v1557 = vpop.f32.mrb[0].mxu0
      %v1558 = vadd.f32 0.0, %v1557
      %v1559 = vpop.f32.mrb[0].mxu0
      %1560 = vmatprep.mubr.f32.mxu0 0.0
      %1561 = vmatmul.mubr.f32.gmra.mrb[0].mxu0 %v1408
      %v1562 = vpop.f32.mrb[0].mxu0
      %v1563 = vadd.f32 0.0, %v1562
      %v1564 = vpop.f32.mrb[0].mxu0
      %1565 = vmatprep.mubr.f32.mxu0 0.0
      %1566 = vmatmul.mubr.f32.gmra.mrb[0].mxu0 %v1409
      %v1567 = vpop.f32.mrb[0].mxu0
      %v1568 = vadd.f32 0.0, %v1567
      %v1569 = vpop.f32.mrb[0].mxu0
      %1570 = vmatprep.mubr.f32.mxu0 0.0
      %1571 = vmatmul.mubr.f32.gmra.mrb[0].mxu0 %v1410
      %v1572 = vpop.f32.mrb[0].mxu0
      %v1573 = vadd.f32 0.0, %v1572
      %v1574 = vpop.f32.mrb[0].mxu0
      %1575 = vmatprep.mubr.f32.mxu0 0.0
      %1576 = vmatmul.mubr.f32.gmra.mrb[0].mxu0 %v1411
      %v1577 = vpop.f32.mrb[0].mxu0
      %v1578 = vadd.f32 0.0, %v1577
      %v1579 = vpop.f32.mrb[0].mxu0
      %1580 = vmatprep.mubr.f32.mxu0 0.0
      %1581 = vmatmul.mubr.f32.gmra.mrb[0].mxu0 %v1412
      %v1582 = vpop.f32.mrb[0].mxu0
      %v1583 = vadd.f32 0.0, %v1582
      %v1584 = vpop.f32.mrb[0].mxu0
      %1585 = vmatprep.mubr.f32.mxu0 0.0
      %1586 = vmatmul.mubr.f32.gmra.mrb[0].mxu0 %v1413
      %v1587 = vpop.f32.mrb[0].mxu0
      %v1588 = vadd.f32 0.0, %v1587
      %v1589 = vpop.f32.mrb[0].mxu0
      %1590 = vmatprep.mubr.f32.mxu0 0.0
      %1591 = vmatmul.mubr.f32.gmra.mrb[0].mxu0 %v1414
      %v1592 = vpop.f32.mrb[0].mxu0
      %v1593 = vadd.f32 0.0, %v1592
      %v1594 = vpop.f32.mrb[0].mxu0
      %1595 = vmatprep.mubr.f32.mxu0 0.0
      %1596 = vmatmul.mubr.f32.gmra.mrb[0].mxu0 %v1415
      %v1597 = vpop.f32.mrb[0].mxu0
      %v1598 = vadd.f32 0.0, %v1597
      %v1599 = vpop.f32.mrb[0].mxu0
      %1600 = vmatprep.mubr.f32.mxu0 0.0
      %1601 = vmatmul.mubr.f32.gmra.mrb[0].mxu0 %v1416
      %v1602 = vpop.f32.mrb[0].mxu0
      %v1603 = vadd.f32 0.0, %v1602
      %v1604 = vpop.f32.mrb[0].mxu0
      %1605 = vmatprep.mubr.f32.mxu0 0.0
      %1606 = vmatmul.mubr.f32.gmra.mrb[0].mxu0 %v1417
      %v1607 = vpop.f32.mrb[0].mxu0
      %v1608 = vadd.f32 0.0, %v1607
      %v1609 = vpop.f32.mrb[0].mxu0
      %1610 = vmatprep.mubr.f32.mxu0 0.0
      %1611 = vmatmul.mubr.f32.gmra.mrb[0].mxu0 %v1418
      %v1612 = vpop.f32.mrb[0].mxu0
      %v1613 = vadd.f32 0.0, %v1612
      %v1614 = vpop.f32.mrb[0].mxu0
      %1615 = vmatprep.mubr.f32.mxu0 0.0
      %1616 = vmatmul.mubr.f32.gmra.mrb[0].mxu0 %v1419
      %v1617 = vpop.f32.mrb[0].mxu0
      %v1618 = vadd.f32 0.0, %v1617
      %v1619 = vpop.f32.mrb[0].mxu0
      %1620 = vmatprep.mubr.f32.mxu0 0.0
      %1621 = vmatmul.mubr.f32.gmra.mrb[0].mxu0 %v1420
      %v1622 = vpop.f32.mrb[0].mxu0
      %v1623 = vadd.f32 0.0, %v1622
      %v1624 = vpop.f32.mrb[0].mxu0
      %1625 = vmatprep.mubr.f32.mxu0 0.0
      %1626 = vmatmul.mubr.f32.gmra.mrb[0].mxu0 %v1421
      %v1627 = vpop.f32.mrb[0].mxu0
      %v1628 = vadd.f32 0.0, %v1627
      %v1629 = vpop.f32.mrb[0].mxu0
      %1630 = vmatprep.mubr.f32.mxu0 0.0
      %1631 = vmatmul.mubr.f32.gmra.mrb[0].mxu0 %v1422
      %v1632 = vpop.f32.mrb[0].mxu0
      %v1633 = vadd.f32 0.0, %v1632
      %v1634 = vpop.f32.mrb[0].mxu0
      %1635 = vmatprep.mubr.f32.mxu0 0.0
      %1636 = vmatmul.mubr.f32.gmra.mrb[0].mxu0 %v1423
      %v1637 = vpop.f32.mrb[0].mxu0
      %v1638 = vadd.f32 0.0, %v1637
      %v1639 = vpop.f32.mrb[0].mxu0
      %1640 = vmatprep.mubr.f32.mxu0 0.0
      %1641 = vmatmul.mubr.f32.gmra.mrb[0].mxu0 %v1424
      %v1642 = vpop.f32.mrb[0].mxu0
      %v1643 = vadd.f32 0.0, %v1642
      %v1644 = vpop.f32.mrb[0].mxu0
      %1645 = vmatprep.mubr.f32.mxu0 0.0
      %1646 = vmatmul.mubr.f32.gmra.mrb[0].mxu0 %v1425
      %v1647 = vpop.f32.mrb[0].mxu0
      %v1648 = vadd.f32 0.0, %v1647
      %v1649 = vpop.f32.mrb[0].mxu0
      %1650 = vmatprep.mubr.f32.mxu0 0.0
      %1651 = vmatmul.mubr.f32.gmra.mrb[0].mxu0 %v1426
      %v1652 = vpop.f32.mrb[0].mxu0
      %v1653 = vadd.f32 0.0, %v1652
      %v1654 = vpop.f32.mrb[0].mxu0
      %1655 = vmatprep.mubr.f32.mxu0 0.0
      %1656 = vmatmul.mubr.f32.gmra.mrb[0].mxu0 %v1427
      %v1657 = vpop.f32.mrb[0].mxu0
      %v1658 = vadd.f32 0.0, %v1657
      %v1659 = vpop.f32.mrb[0].mxu0
      %1660 = vmatprep.mubr.f32.mxu0 0.0
      %1661 = vmatmul.mubr.f32.gmra.mrb[0].mxu0 %v1428
      %v1662 = vpop.f32.mrb[0].mxu0
      %v1663 = vadd.f32 0.0, %v1662
      %v1664 = vpop.f32.mrb[0].mxu0
      %1665 = vmatprep.mubr.f32.mxu0 0.0
      %1666 = vmatmul.mubr.f32.gmra.mrb[0].mxu0 %v1429
      %v1667 = vpop.f32.mrb[0].mxu0
      %v1668 = vadd.f32 0.0, %v1667
      %v1669 = vpop.f32.mrb[0].mxu0
      %1670 = vdwg.mxu0
      %v1671 = vld [vmem:[#allocation3] sm:$0xff]
      %v1672 = vld [vmem:[#allocation3 + $0x8] sm:$0xff]
      %v1673 = vld [vmem:[#allocation3 + $0x10] sm:$0xff]
      %v1674 = vld [vmem:[#allocation3 + $0x18] sm:$0xff]
      %v1675 = vld [vmem:[#allocation3 + $0x20] sm:$0xff]
      %v1676 = vld [vmem:[#allocation3 + $0x28] sm:$0xff]
      %v1677 = vld [vmem:[#allocation3 + $0x30] sm:$0xff]
      %v1678 = vld [vmem:[#allocation3 + $0x38] sm:$0xff]
      %v1679 = vld [vmem:[#allocation3 + $0x40] sm:$0xff]
      %v1680 = vld [vmem:[#allocation3 + $0x48] sm:$0xff]
      %v1681 = vld [vmem:[#allocation3 + $0x50] sm:$0xff]
      %v1682 = vld [vmem:[#allocation3 + $0x58] sm:$0xff]
      %v1683 = vld [vmem:[#allocation3 + $0x60] sm:$0xff]
      %v1684 = vld [vmem:[#allocation3 + $0x68] sm:$0xff]
      %v1685 = vld [vmem:[#allocation3 + $0x70] sm:$0xff]
      %v1686 = vld [vmem:[#allocation3 + $0x78] sm:$0xff]
      %v1687 = vld [vmem:[#allocation3 + $0x80] sm:$0xff]
      %v1688 = vld [vmem:[#allocation3 + $0x88] sm:$0xff]
      %v1689 = vld [vmem:[#allocation3 + $0x90] sm:$0xff]
      %v1690 = vld [vmem:[#allocation3 + $0x98] sm:$0xff]
      %v1691 = vld [vmem:[#allocation3 + $0xa0] sm:$0xff]
      %v1692 = vld [vmem:[#allocation3 + $0xa8] sm:$0xff]
      %v1693 = vld [vmem:[#allocation3 + $0xb0] sm:$0xff]
      %v1694 = vld [vmem:[#allocation3 + $0xb8] sm:$0xff]
      %v1695 = vld [vmem:[#allocation3 + $0xc0] sm:$0xff]
      %v1696 = vld [vmem:[#allocation3 + $0xc8] sm:$0xff]
      %v1697 = vld [vmem:[#allocation3 + $0xd0] sm:$0xff]
      %v1698 = vld [vmem:[#allocation3 + $0xd8] sm:$0xff]
      %v1699 = vld [vmem:[#allocation3 + $0xe0] sm:$0xff]
      %v1700 = vld [vmem:[#allocation3 + $0xe8] sm:$0xff]
      %v1701 = vld [vmem:[#allocation3 + $0xf0] sm:$0xff]
      %v1702 = vld [vmem:[#allocation3 + $0xf8] sm:$0xff]
      %v1703 = vadd.f32 %v1671, %v1513
      %v1704 = vadd.f32 %v1672, %v1518
      %v1705 = vadd.f32 %v1673, %v1523
      %v1706 = vadd.f32 %v1674, %v1528
      %v1707 = vadd.f32 %v1675, %v1533
      %v1708 = vadd.f32 %v1676, %v1538
      %v1709 = vadd.f32 %v1677, %v1543
      %v1710 = vadd.f32 %v1678, %v1548
      %v1711 = vadd.f32 %v1679, %v1553
      %v1712 = vadd.f32 %v1680, %v1558
      %v1713 = vadd.f32 %v1681, %v1563
      %v1714 = vadd.f32 %v1682, %v1568
      %v1715 = vadd.f32 %v1683, %v1573
      %v1716 = vadd.f32 %v1684, %v1578
      %v1717 = vadd.f32 %v1685, %v1583
      %v1718 = vadd.f32 %v1686, %v1588
      %v1719 = vadd.f32 %v1687, %v1593
      %v1720 = vadd.f32 %v1688, %v1598
      %v1721 = vadd.f32 %v1689, %v1603
      %v1722 = vadd.f32 %v1690, %v1608
      %v1723 = vadd.f32 %v1691, %v1613
      %v1724 = vadd.f32 %v1692, %v1618
      %v1725 = vadd.f32 %v1693, %v1623
      %v1726 = vadd.f32 %v1694, %v1628
      %v1727 = vadd.f32 %v1695, %v1633
      %v1728 = vadd.f32 %v1696, %v1638
      %v1729 = vadd.f32 %v1697, %v1643
      %v1730 = vadd.f32 %v1698, %v1648
      %v1731 = vadd.f32 %v1699, %v1653
      %v1732 = vadd.f32 %v1700, %v1658
      %v1733 = vadd.f32 %v1701, %v1663
      %v1734 = vadd.f32 %v1702, %v1668
      %1735 = vst [vmem:[#allocation3] sm:$0xff] %v1703
      %1736 = vst [vmem:[#allocation3 + $0x8] sm:$0xff] %v1704
      %1737 = vst [vmem:[#allocation3 + $0x10] sm:$0xff] %v1705
      %1738 = vst [vmem:[#allocation3 + $0x18] sm:$0xff] %v1706
      %1739 = vst [vmem:[#allocation3 + $0x20] sm:$0xff] %v1707
      %1740 = vst [vmem:[#allocation3 + $0x28] sm:$0xff] %v1708
      %1741 = vst [vmem:[#allocation3 + $0x30] sm:$0xff] %v1709
      %1742 = vst [vmem:[#allocation3 + $0x38] sm:$0xff] %v1710
      %1743 = vst [vmem:[#allocation3 + $0x40] sm:$0xff] %v1711
      %1744 = vst [vmem:[#allocation3 + $0x48] sm:$0xff] %v1712
      %1745 = vst [vmem:[#allocation3 + $0x50] sm:$0xff] %v1713
      %1746 = vst [vmem:[#allocation3 + $0x58] sm:$0xff] %v1714
      %1747 = vst [vmem:[#allocation3 + $0x60] sm:$0xff] %v1715
      %1748 = vst [vmem:[#allocation3 + $0x68] sm:$0xff] %v1716
      %1749 = vst [vmem:[#allocation3 + $0x70] sm:$0xff] %v1717
      %1750 = vst [vmem:[#allocation3 + $0x78] sm:$0xff] %v1718
      %1751 = vst [vmem:[#allocation3 + $0x80] sm:$0xff] %v1719
      %1752 = vst [vmem:[#allocation3 + $0x88] sm:$0xff] %v1720
      %1753 = vst [vmem:[#allocation3 + $0x90] sm:$0xff] %v1721
      %1754 = vst [vmem:[#allocation3 + $0x98] sm:$0xff] %v1722
      %1755 = vst [vmem:[#allocation3 + $0xa0] sm:$0xff] %v1723
      %1756 = vst [vmem:[#allocation3 + $0xa8] sm:$0xff] %v1724
      %1757 = vst [vmem:[#allocation3 + $0xb0] sm:$0xff] %v1725
      %1758 = vst [vmem:[#allocation3 + $0xb8] sm:$0xff] %v1726
      %1759 = vst [vmem:[#allocation3 + $0xc0] sm:$0xff] %v1727
      %1760 = vst [vmem:[#allocation3 + $0xc8] sm:$0xff] %v1728
      %1761 = vst [vmem:[#allocation3 + $0xd0] sm:$0xff] %v1729
      %1762 = vst [vmem:[#allocation3 + $0xd8] sm:$0xff] %v1730
      %1763 = vst [vmem:[#allocation3 + $0xe0] sm:$0xff] %v1731
      %1764 = vst [vmem:[#allocation3 + $0xe8] sm:$0xff] %v1732
      %1765 = vst [vmem:[#allocation3 + $0xf0] sm:$0xff] %v1733
      %1766 = vst [vmem:[#allocation3 + $0xf8] sm:$0xff] %v1734
      %v1767 = vld [vmem:[#allocation2] sm:$0xff]
      %v1768 = vld [vmem:[#allocation2 + $0x8] sm:$0xff]
      %v1769 = vld [vmem:[#allocation2 + $0x10] sm:$0xff]
      %v1770 = vld [vmem:[#allocation2 + $0x18] sm:$0xff]
      %v1771 = vld [vmem:[#allocation2 + $0x20] sm:$0xff]
      %v1772 = vld [vmem:[#allocation2 + $0x28] sm:$0xff]
      %v1773 = vld [vmem:[#allocation2 + $0x30] sm:$0xff]
      %v1774 = vld [vmem:[#allocation2 + $0x38] sm:$0xff]
      %v1775 = vld [vmem:[#allocation2 + $0x40] sm:$0xff]
      %v1776 = vld [vmem:[#allocation2 + $0x48] sm:$0xff]
      %v1777 = vld [vmem:[#allocation2 + $0x50] sm:$0xff]
      %v1778 = vld [vmem:[#allocation2 + $0x58] sm:$0xff]
      %v1779 = vld [vmem:[#allocation2 + $0x60] sm:$0xff]
      %v1780 = vld [vmem:[#allocation2 + $0x68] sm:$0xff]
      %v1781 = vld [vmem:[#allocation2 + $0x70] sm:$0xff]
      %v1782 = vld [vmem:[#allocation2 + $0x78] sm:$0xff]
      %v1783 = vld [vmem:[#allocation2 + $0x80] sm:$0xff]
      %v1784 = vld [vmem:[#allocation2 + $0x88] sm:$0xff]
      %v1785 = vld [vmem:[#allocation2 + $0x90] sm:$0xff]
      %v1786 = vld [vmem:[#allocation2 + $0x98] sm:$0xff]
      %v1787 = vld [vmem:[#allocation2 + $0xa0] sm:$0xff]
      %v1788 = vld [vmem:[#allocation2 + $0xa8] sm:$0xff]
      %v1789 = vld [vmem:[#allocation2 + $0xb0] sm:$0xff]
      %v1790 = vld [vmem:[#allocation2 + $0xb8] sm:$0xff]
      %v1791 = vld [vmem:[#allocation2 + $0xc0] sm:$0xff]
      %v1792 = vld [vmem:[#allocation2 + $0xc8] sm:$0xff]
      %v1793 = vld [vmem:[#allocation2 + $0xd0] sm:$0xff]
      %v1794 = vld [vmem:[#allocation2 + $0xd8] sm:$0xff]
      %v1795 = vld [vmem:[#allocation2 + $0xe0] sm:$0xff]
      %v1796 = vld [vmem:[#allocation2 + $0xe8] sm:$0xff]
      %v1797 = vld [vmem:[#allocation2 + $0xf0] sm:$0xff]
      %v1798 = vld [vmem:[#allocation2 + $0xf8] sm:$0xff]
      %v1799 = vrot.slane %v1767, 1
      %v1800 = vrot.slane %v1768, 1
      %v1801 = vrot.slane %v1769, 1
      %v1802 = vrot.slane %v1770, 1
      %v1803 = vrot.slane %v1771, 1
      %v1804 = vrot.slane %v1772, 1
      %v1805 = vrot.slane %v1773, 1
      %v1806 = vrot.slane %v1774, 1
      %v1807 = vrot.slane %v1775, 1
      %v1808 = vrot.slane %v1776, 1
      %v1809 = vrot.slane %v1777, 1
      %v1810 = vrot.slane %v1778, 1
      %v1811 = vrot.slane %v1779, 1
      %v1812 = vrot.slane %v1780, 1
      %v1813 = vrot.slane %v1781, 1
      %v1814 = vrot.slane %v1782, 1
      %v1815 = vrot.slane %v1783, 1
      %v1816 = vrot.slane %v1784, 1
      %v1817 = vrot.slane %v1785, 1
      %v1818 = vrot.slane %v1786, 1
      %v1819 = vrot.slane %v1787, 1
      %v1820 = vrot.slane %v1788, 1
      %v1821 = vrot.slane %v1789, 1
      %v1822 = vrot.slane %v1790, 1
      %v1823 = vrot.slane %v1791, 1
      %v1824 = vrot.slane %v1792, 1
      %v1825 = vrot.slane %v1793, 1
      %v1826 = vrot.slane %v1794, 1
      %v1827 = vrot.slane %v1795, 1
      %v1828 = vrot.slane %v1796, 1
      %v1829 = vrot.slane %v1797, 1
      %v1830 = vrot.slane %v1798, 1
      %vm1831 = vcmp.lt.s32.totalorder %v452, 7
      %v1832 = vsel %vm1831, %v1829, %v1830
      %v1833 = vsel %vm1831, %v1828, %v1829
      %v1834 = vsel %vm1831, %v1827, %v1828
      %v1835 = vsel %vm1831, %v1826, %v1827
      %v1836 = vsel %vm1831, %v1825, %v1826
      %v1837 = vsel %vm1831, %v1824, %v1825
      %v1838 = vsel %vm1831, %v1823, %v1824
      %v1839 = vsel %vm1831, %v1822, %v1823
      %v1840 = vsel %vm1831, %v1821, %v1822
      %v1841 = vsel %vm1831, %v1820, %v1821
      %v1842 = vsel %vm1831, %v1819, %v1820
      %v1843 = vsel %vm1831, %v1818, %v1819
      %v1844 = vsel %vm1831, %v1817, %v1818
      %v1845 = vsel %vm1831, %v1816, %v1817
      %v1846 = vsel %vm1831, %v1815, %v1816
      %v1847 = vsel %vm1831, %v1814, %v1815
      %v1848 = vsel %vm1831, %v1813, %v1814
      %v1849 = vsel %vm1831, %v1812, %v1813
      %v1850 = vsel %vm1831, %v1811, %v1812
      %v1851 = vsel %vm1831, %v1810, %v1811
      %v1852 = vsel %vm1831, %v1809, %v1810
      %v1853 = vsel %vm1831, %v1808, %v1809
      %v1854 = vsel %vm1831, %v1807, %v1808
      %v1855 = vsel %vm1831, %v1806, %v1807
      %v1856 = vsel %vm1831, %v1805, %v1806
      %v1857 = vsel %vm1831, %v1804, %v1805
      %v1858 = vsel %vm1831, %v1803, %v1804
      %v1859 = vsel %vm1831, %v1802, %v1803
      %v1860 = vsel %vm1831, %v1801, %v1802
      %v1861 = vsel %vm1831, %v1800, %v1801
      %v1862 = vsel %vm1831, %v1799, %v1800
      %v1863 = vsel %vm1831, %v1830, %v1799
      %v1864 = vsel %vm900, 1, 0
      %v1865 = vsel %vm901, 1, 0
      %v1866 = vsel %vm902, 1, 0
      %v1867 = vsel %vm903, 1, 0
      %v1868 = vsel %vm904, 1, 0
      %v1869 = vsel %vm905, 1, 0
      %v1870 = vsel %vm906, 1, 0
      %v1871 = vsel %vm907, 1, 0
      %v1872 = vsel %vm908, 1, 0
      %v1873 = vsel %vm909, 1, 0
      %v1874 = vsel %vm910, 1, 0
      %v1875 = vsel %vm911, 1, 0
      %v1876 = vsel %vm912, 1, 0
      %v1877 = vsel %vm913, 1, 0
      %v1878 = vsel %vm914, 1, 0
      %v1879 = vsel %vm915, 1, 0
      %v1880 = vsel %vm916, 1, 0
      %v1881 = vsel %vm917, 1, 0
      %v1882 = vsel %vm918, 1, 0
      %v1883 = vsel %vm919, 1, 0
      %v1884 = vsel %vm920, 1, 0
      %v1885 = vsel %vm921, 1, 0
      %v1886 = vsel %vm922, 1, 0
      %v1887 = vsel %vm923, 1, 0
      %v1888 = vsel %vm924, 1, 0
      %v1889 = vsel %vm925, 1, 0
      %v1890 = vsel %vm926, 1, 0
      %v1891 = vsel %vm927, 1, 0
      %v1892 = vsel %vm928, 1, 0
      %v1893 = vsel %vm929, 1, 0
      %v1894 = vsel %vm930, 1, 0
      %v1895 = vsel %vm931, 1, 0
      %vm1896 = vcmp.eq.s32.totalorder %v1864, 1
      %vm1897 = vcmp.eq.s32.totalorder %v1865, 1
      %vm1898 = vcmp.eq.s32.totalorder %v1866, 1
      %vm1899 = vcmp.eq.s32.totalorder %v1867, 1
      %vm1900 = vcmp.eq.s32.totalorder %v1868, 1
      %vm1901 = vcmp.eq.s32.totalorder %v1869, 1
      %vm1902 = vcmp.eq.s32.totalorder %v1870, 1
      %vm1903 = vcmp.eq.s32.totalorder %v1871, 1
      %vm1904 = vcmp.eq.s32.totalorder %v1872, 1
      %vm1905 = vcmp.eq.s32.totalorder %v1873, 1
      %vm1906 = vcmp.eq.s32.totalorder %v1874, 1
      %vm1907 = vcmp.eq.s32.totalorder %v1875, 1
      %vm1908 = vcmp.eq.s32.totalorder %v1876, 1
      %vm1909 = vcmp.eq.s32.totalorder %v1877, 1
      %vm1910 = vcmp.eq.s32.totalorder %v1878, 1
      %vm1911 = vcmp.eq.s32.totalorder %v1879, 1
      %vm1912 = vcmp.eq.s32.totalorder %v1880, 1
      %vm1913 = vcmp.eq.s32.totalorder %v1881, 1
      %vm1914 = vcmp.eq.s32.totalorder %v1882, 1
      %vm1915 = vcmp.eq.s32.totalorder %v1883, 1
      %vm1916 = vcmp.eq.s32.totalorder %v1884, 1
      %vm1917 = vcmp.eq.s32.totalorder %v1885, 1
      %vm1918 = vcmp.eq.s32.totalorder %v1886, 1
      %vm1919 = vcmp.eq.s32.totalorder %v1887, 1
      %vm1920 = vcmp.eq.s32.totalorder %v1888, 1
      %vm1921 = vcmp.eq.s32.totalorder %v1889, 1
      %vm1922 = vcmp.eq.s32.totalorder %v1890, 1
      %vm1923 = vcmp.eq.s32.totalorder %v1891, 1
      %vm1924 = vcmp.eq.s32.totalorder %v1892, 1
      %vm1925 = vcmp.eq.s32.totalorder %v1893, 1
      %vm1926 = vcmp.eq.s32.totalorder %v1894, 1
      %vm1927 = vcmp.eq.s32.totalorder %v1895, 1
      %v1928 = vsel %vm1896, %v1862, 0.0
      %v1929 = vsel %vm1897, %v1861, 0.0
      %v1930 = vsel %vm1898, %v1860, 0.0
      %v1931 = vsel %vm1899, %v1859, 0.0
      %v1932 = vsel %vm1900, %v1858, 0.0
      %v1933 = vsel %vm1901, %v1857, 0.0
      %v1934 = vsel %vm1902, %v1856, 0.0
      %v1935 = vsel %vm1903, %v1855, 0.0
      %v1936 = vsel %vm1904, %v1854, 0.0
      %v1937 = vsel %vm1905, %v1853, 0.0
      %v1938 = vsel %vm1906, %v1852, 0.0
      %v1939 = vsel %vm1907, %v1851, 0.0
      %v1940 = vsel %vm1908, %v1850, 0.0
      %v1941 = vsel %vm1909, %v1849, 0.0
      %v1942 = vsel %vm1910, %v1848, 0.0
      %v1943 = vsel %vm1911, %v1847, 0.0
      %v1944 = vsel %vm1912, %v1846, 0.0
      %v1945 = vsel %vm1913, %v1845, 0.0
      %v1946 = vsel %vm1914, %v1844, 0.0
      %v1947 = vsel %vm1915, %v1843, 0.0
      %v1948 = vsel %vm1916, %v1842, 0.0
      %v1949 = vsel %vm1917, %v1841, 0.0
      %v1950 = vsel %vm1918, %v1840, 0.0
      %v1951 = vsel %vm1919, %v1839, 0.0
      %v1952 = vsel %vm1920, %v1838, 0.0
      %v1953 = vsel %vm1921, %v1837, 0.0
      %v1954 = vsel %vm1922, %v1836, 0.0
      %v1955 = vsel %vm1923, %v1835, 0.0
      %v1956 = vsel %vm1924, %v1834, 0.0
      %v1957 = vsel %vm1925, %v1833, 0.0
      %v1958 = vsel %vm1926, %v1832, 0.0
      %v1959 = vsel %vm1927, %v1863, 0.0
      %v1960 = vld [vmem:[%s3 + $0x100] sm:$0xff]
      %v1961 = vld [vmem:[%s3 + $0x108] sm:$0xff]
      %v1962 = vld [vmem:[%s3 + $0x110] sm:$0xff]
      %v1963 = vld [vmem:[%s3 + $0x118] sm:$0xff]
      %v1964 = vld [vmem:[%s3 + $0x120] sm:$0xff]
      %v1965 = vld [vmem:[%s3 + $0x128] sm:$0xff]
      %v1966 = vld [vmem:[%s3 + $0x130] sm:$0xff]
      %v1967 = vld [vmem:[%s3 + $0x138] sm:$0xff]
      %v1968 = vld [vmem:[%s3 + $0x140] sm:$0xff]
      %v1969 = vld [vmem:[%s3 + $0x148] sm:$0xff]
      %v1970 = vld [vmem:[%s3 + $0x150] sm:$0xff]
      %v1971 = vld [vmem:[%s3 + $0x158] sm:$0xff]
      %v1972 = vld [vmem:[%s3 + $0x160] sm:$0xff]
      %v1973 = vld [vmem:[%s3 + $0x168] sm:$0xff]
      %v1974 = vld [vmem:[%s3 + $0x170] sm:$0xff]
      %v1975 = vld [vmem:[%s3 + $0x178] sm:$0xff]
      %1976 = vmatprep.subr.mxu0 0.0
      %1977 = vmatpush1.msra.mxu0 %v1960
      %1978 = vmatprep.subr.mxu0 0.0
      %1979 = vmatpush1.msra.mxu0 %v1961
      %1980 = vmatprep.subr.mxu0 0.0
      %1981 = vmatpush1.msra.mxu0 %v1962
      %1982 = vmatprep.subr.mxu0 0.0
      %1983 = vmatpush1.msra.mxu0 %v1963
      %1984 = vmatprep.subr.mxu0 0.0
      %1985 = vmatpush1.msra.mxu0 %v1964
      %1986 = vmatprep.subr.mxu0 0.0
      %1987 = vmatpush1.msra.mxu0 %v1965
      %1988 = vmatprep.subr.mxu0 0.0
      %1989 = vmatpush1.msra.mxu0 %v1966
      %1990 = vmatprep.subr.mxu0 0.0
      %1991 = vmatpush1.msra.mxu0 %v1967
      %1992 = vmatprep.subr.mxu0 0.0
      %1993 = vmatpush1.msra.mxu0 %v1968
      %1994 = vmatprep.subr.mxu0 0.0
      %1995 = vmatpush1.msra.mxu0 %v1969
      %1996 = vmatprep.subr.mxu0 0.0
      %1997 = vmatpush1.msra.mxu0 %v1970
      %1998 = vmatprep.subr.mxu0 0.0
      %1999 = vmatpush1.msra.mxu0 %v1971
      %2000 = vmatprep.subr.mxu0 0.0
      %2001 = vmatpush1.msra.mxu0 %v1972
      %2002 = vmatprep.subr.mxu0 0.0
      %2003 = vmatpush1.msra.mxu0 %v1973
      %2004 = vmatprep.subr.mxu0 0.0
      %2005 = vmatpush1.msra.mxu0 %v1974
      %2006 = vmatprep.subr.mxu0 0.0
      %2007 = vmatpush1.msra.mxu0 %v1975
      %2008 = vmatprep.subr.mxu0 0.0
      %2009 = vmatpush1.msra.mxu0 0.0
      %2010 = vmatprep.subr.mxu0 0.0
      %2011 = vmatpush1.msra.mxu0 0.0
      %2012 = vmatprep.subr.mxu0 0.0
      %2013 = vmatpush1.msra.mxu0 0.0
      %2014 = vmatprep.subr.mxu0 0.0
      %2015 = vmatpush1.msra.mxu0 0.0
      %2016 = vmatprep.subr.mxu0 0.0
      %2017 = vmatpush1.msra.mxu0 0.0
      %2018 = vmatprep.subr.mxu0 0.0
      %2019 = vmatpush1.msra.mxu0 0.0
      %2020 = vmatprep.subr.mxu0 0.0
      %2021 = vmatpush1.msra.mxu0 0.0
      %2022 = vmatprep.subr.mxu0 0.0
      %2023 = vmatpush1.msra.mxu0 0.0
      %2024 = vmatprep.subr.mxu0 0.0
      %2025 = vmatpush1.msra.mxu0 0.0
      %2026 = vmatprep.subr.mxu0 0.0
      %2027 = vmatpush1.msra.mxu0 0.0
      %2028 = vmatprep.subr.mxu0 0.0
      %2029 = vmatpush1.msra.mxu0 0.0
      %2030 = vmatprep.subr.mxu0 0.0
      %2031 = vmatpush1.msra.mxu0 0.0
      %2032 = vmatprep.subr.mxu0 0.0
      %2033 = vmatpush1.msra.mxu0 0.0
      %2034 = vmatprep.subr.mxu0 0.0
      %2035 = vmatpush1.msra.mxu0 0.0
      %2036 = vmatprep.subr.mxu0 0.0
      %2037 = vmatpush1.msra.mxu0 0.0
      %2038 = vmatprep.subr.mxu0 0.0
      %2039 = vmatpush1.msra.mxu0 0.0
      %2040 = vmatprep.mubr.f32.mxu0 0.0
      %2041 = vmatmul.mubr.f32.gmra.mrb[0].mxu0 %v1928
      %v2042 = vpop.f32.mrb[0].mxu0
      %v2043 = vadd.f32 0.0, %v2042
      %v2044 = vpop.f32.mrb[0].mxu0
      %2045 = vmatprep.mubr.f32.mxu0 0.0
      %2046 = vmatmul.mubr.f32.gmra.mrb[0].mxu0 %v1929
      %v2047 = vpop.f32.mrb[0].mxu0
      %v2048 = vadd.f32 0.0, %v2047
      %v2049 = vpop.f32.mrb[0].mxu0
      %2050 = vmatprep.mubr.f32.mxu0 0.0
      %2051 = vmatmul.mubr.f32.gmra.mrb[0].mxu0 %v1930
      %v2052 = vpop.f32.mrb[0].mxu0
      %v2053 = vadd.f32 0.0, %v2052
      %v2054 = vpop.f32.mrb[0].mxu0
      %2055 = vmatprep.mubr.f32.mxu0 0.0
      %2056 = vmatmul.mubr.f32.gmra.mrb[0].mxu0 %v1931
      %v2057 = vpop.f32.mrb[0].mxu0
      %v2058 = vadd.f32 0.0, %v2057
      %v2059 = vpop.f32.mrb[0].mxu0
      %2060 = vmatprep.mubr.f32.mxu0 0.0
      %2061 = vmatmul.mubr.f32.gmra.mrb[0].mxu0 %v1932
      %v2062 = vpop.f32.mrb[0].mxu0
      %v2063 = vadd.f32 0.0, %v2062
      %v2064 = vpop.f32.mrb[0].mxu0
      %2065 = vmatprep.mubr.f32.mxu0 0.0
      %2066 = vmatmul.mubr.f32.gmra.mrb[0].mxu0 %v1933
      %v2067 = vpop.f32.mrb[0].mxu0
      %v2068 = vadd.f32 0.0, %v2067
      %v2069 = vpop.f32.mrb[0].mxu0
      %2070 = vmatprep.mubr.f32.mxu0 0.0
      %2071 = vmatmul.mubr.f32.gmra.mrb[0].mxu0 %v1934
      %v2072 = vpop.f32.mrb[0].mxu0
      %v2073 = vadd.f32 0.0, %v2072
      %v2074 = vpop.f32.mrb[0].mxu0
      %2075 = vmatprep.mubr.f32.mxu0 0.0
      %2076 = vmatmul.mubr.f32.gmra.mrb[0].mxu0 %v1935
      %v2077 = vpop.f32.mrb[0].mxu0
      %v2078 = vadd.f32 0.0, %v2077
      %v2079 = vpop.f32.mrb[0].mxu0
      %2080 = vmatprep.mubr.f32.mxu0 0.0
      %2081 = vmatmul.mubr.f32.gmra.mrb[0].mxu0 %v1936
      %v2082 = vpop.f32.mrb[0].mxu0
      %v2083 = vadd.f32 0.0, %v2082
      %v2084 = vpop.f32.mrb[0].mxu0
      %2085 = vmatprep.mubr.f32.mxu0 0.0
      %2086 = vmatmul.mubr.f32.gmra.mrb[0].mxu0 %v1937
      %v2087 = vpop.f32.mrb[0].mxu0
      %v2088 = vadd.f32 0.0, %v2087
      %v2089 = vpop.f32.mrb[0].mxu0
      %2090 = vmatprep.mubr.f32.mxu0 0.0
      %2091 = vmatmul.mubr.f32.gmra.mrb[0].mxu0 %v1938
      %v2092 = vpop.f32.mrb[0].mxu0
      %v2093 = vadd.f32 0.0, %v2092
      %v2094 = vpop.f32.mrb[0].mxu0
      %2095 = vmatprep.mubr.f32.mxu0 0.0
      %2096 = vmatmul.mubr.f32.gmra.mrb[0].mxu0 %v1939
      %v2097 = vpop.f32.mrb[0].mxu0
      %v2098 = vadd.f32 0.0, %v2097
      %v2099 = vpop.f32.mrb[0].mxu0
      %2100 = vmatprep.mubr.f32.mxu0 0.0
      %2101 = vmatmul.mubr.f32.gmra.mrb[0].mxu0 %v1940
      %v2102 = vpop.f32.mrb[0].mxu0
      %v2103 = vadd.f32 0.0, %v2102
      %v2104 = vpop.f32.mrb[0].mxu0
      %2105 = vmatprep.mubr.f32.mxu0 0.0
      %2106 = vmatmul.mubr.f32.gmra.mrb[0].mxu0 %v1941
      %v2107 = vpop.f32.mrb[0].mxu0
      %v2108 = vadd.f32 0.0, %v2107
      %v2109 = vpop.f32.mrb[0].mxu0
      %2110 = vmatprep.mubr.f32.mxu0 0.0
      %2111 = vmatmul.mubr.f32.gmra.mrb[0].mxu0 %v1942
      %v2112 = vpop.f32.mrb[0].mxu0
      %v2113 = vadd.f32 0.0, %v2112
      %v2114 = vpop.f32.mrb[0].mxu0
      %2115 = vmatprep.mubr.f32.mxu0 0.0
      %2116 = vmatmul.mubr.f32.gmra.mrb[0].mxu0 %v1943
      %v2117 = vpop.f32.mrb[0].mxu0
      %v2118 = vadd.f32 0.0, %v2117
      %v2119 = vpop.f32.mrb[0].mxu0
      %2120 = vmatprep.mubr.f32.mxu0 0.0
      %2121 = vmatmul.mubr.f32.gmra.mrb[0].mxu0 %v1944
      %v2122 = vpop.f32.mrb[0].mxu0
      %v2123 = vadd.f32 0.0, %v2122
      %v2124 = vpop.f32.mrb[0].mxu0
      %2125 = vmatprep.mubr.f32.mxu0 0.0
      %2126 = vmatmul.mubr.f32.gmra.mrb[0].mxu0 %v1945
      %v2127 = vpop.f32.mrb[0].mxu0
      %v2128 = vadd.f32 0.0, %v2127
      %v2129 = vpop.f32.mrb[0].mxu0
      %2130 = vmatprep.mubr.f32.mxu0 0.0
      %2131 = vmatmul.mubr.f32.gmra.mrb[0].mxu0 %v1946
      %v2132 = vpop.f32.mrb[0].mxu0
      %v2133 = vadd.f32 0.0, %v2132
      %v2134 = vpop.f32.mrb[0].mxu0
      %2135 = vmatprep.mubr.f32.mxu0 0.0
      %2136 = vmatmul.mubr.f32.gmra.mrb[0].mxu0 %v1947
      %v2137 = vpop.f32.mrb[0].mxu0
      %v2138 = vadd.f32 0.0, %v2137
      %v2139 = vpop.f32.mrb[0].mxu0
      %2140 = vmatprep.mubr.f32.mxu0 0.0
      %2141 = vmatmul.mubr.f32.gmra.mrb[0].mxu0 %v1948
      %v2142 = vpop.f32.mrb[0].mxu0
      %v2143 = vadd.f32 0.0, %v2142
      %v2144 = vpop.f32.mrb[0].mxu0
      %2145 = vmatprep.mubr.f32.mxu0 0.0
      %2146 = vmatmul.mubr.f32.gmra.mrb[0].mxu0 %v1949
      %v2147 = vpop.f32.mrb[0].mxu0
      %v2148 = vadd.f32 0.0, %v2147
      %v2149 = vpop.f32.mrb[0].mxu0
      %2150 = vmatprep.mubr.f32.mxu0 0.0
      %2151 = vmatmul.mubr.f32.gmra.mrb[0].mxu0 %v1950
      %v2152 = vpop.f32.mrb[0].mxu0
      %v2153 = vadd.f32 0.0, %v2152
      %v2154 = vpop.f32.mrb[0].mxu0
      %2155 = vmatprep.mubr.f32.mxu0 0.0
      %2156 = vmatmul.mubr.f32.gmra.mrb[0].mxu0 %v1951
      %v2157 = vpop.f32.mrb[0].mxu0
      %v2158 = vadd.f32 0.0, %v2157
      %v2159 = vpop.f32.mrb[0].mxu0
      %2160 = vmatprep.mubr.f32.mxu0 0.0
      %2161 = vmatmul.mubr.f32.gmra.mrb[0].mxu0 %v1952
      %v2162 = vpop.f32.mrb[0].mxu0
      %v2163 = vadd.f32 0.0, %v2162
      %v2164 = vpop.f32.mrb[0].mxu0
      %2165 = vmatprep.mubr.f32.mxu0 0.0
      %2166 = vmatmul.mubr.f32.gmra.mrb[0].mxu0 %v1953
      %v2167 = vpop.f32.mrb[0].mxu0
      %v2168 = vadd.f32 0.0, %v2167
      %v2169 = vpop.f32.mrb[0].mxu0
      %2170 = vmatprep.mubr.f32.mxu0 0.0
      %2171 = vmatmul.mubr.f32.gmra.mrb[0].mxu0 %v1954
      %v2172 = vpop.f32.mrb[0].mxu0
      %v2173 = vadd.f32 0.0, %v2172
      %v2174 = vpop.f32.mrb[0].mxu0
      %2175 = vmatprep.mubr.f32.mxu0 0.0
      %2176 = vmatmul.mubr.f32.gmra.mrb[0].mxu0 %v1955
      %v2177 = vpop.f32.mrb[0].mxu0
      %v2178 = vadd.f32 0.0, %v2177
      %v2179 = vpop.f32.mrb[0].mxu0
      %2180 = vmatprep.mubr.f32.mxu0 0.0
      %2181 = vmatmul.mubr.f32.gmra.mrb[0].mxu0 %v1956
      %v2182 = vpop.f32.mrb[0].mxu0
      %v2183 = vadd.f32 0.0, %v2182
      %v2184 = vpop.f32.mrb[0].mxu0
      %2185 = vmatprep.mubr.f32.mxu0 0.0
      %2186 = vmatmul.mubr.f32.gmra.mrb[0].mxu0 %v1957
      %v2187 = vpop.f32.mrb[0].mxu0
      %v2188 = vadd.f32 0.0, %v2187
      %v2189 = vpop.f32.mrb[0].mxu0
      %2190 = vmatprep.mubr.f32.mxu0 0.0
      %2191 = vmatmul.mubr.f32.gmra.mrb[0].mxu0 %v1958
      %v2192 = vpop.f32.mrb[0].mxu0
      %v2193 = vadd.f32 0.0, %v2192
      %v2194 = vpop.f32.mrb[0].mxu0
      %2195 = vmatprep.mubr.f32.mxu0 0.0
      %2196 = vmatmul.mubr.f32.gmra.mrb[0].mxu0 %v1959
      %v2197 = vpop.f32.mrb[0].mxu0
      %v2198 = vadd.f32 0.0, %v2197
      %v2199 = vpop.f32.mrb[0].mxu0
      %2200 = vdwg.mxu0
      %v2201 = vld [vmem:[#allocation3] sm:$0xff]
      %v2202 = vld [vmem:[#allocation3 + $0x8] sm:$0xff]
      %v2203 = vld [vmem:[#allocation3 + $0x10] sm:$0xff]
      %v2204 = vld [vmem:[#allocation3 + $0x18] sm:$0xff]
      %v2205 = vld [vmem:[#allocation3 + $0x20] sm:$0xff]
      %v2206 = vld [vmem:[#allocation3 + $0x28] sm:$0xff]
      %v2207 = vld [vmem:[#allocation3 + $0x30] sm:$0xff]
      %v2208 = vld [vmem:[#allocation3 + $0x38] sm:$0xff]
      %v2209 = vld [vmem:[#allocation3 + $0x40] sm:$0xff]
      %v2210 = vld [vmem:[#allocation3 + $0x48] sm:$0xff]
      %v2211 = vld [vmem:[#allocation3 + $0x50] sm:$0xff]
      %v2212 = vld [vmem:[#allocation3 + $0x58] sm:$0xff]
      %v2213 = vld [vmem:[#allocation3 + $0x60] sm:$0xff]
      %v2214 = vld [vmem:[#allocation3 + $0x68] sm:$0xff]
      %v2215 = vld [vmem:[#allocation3 + $0x70] sm:$0xff]
      %v2216 = vld [vmem:[#allocation3 + $0x78] sm:$0xff]
      %v2217 = vld [vmem:[#allocation3 + $0x80] sm:$0xff]
      %v2218 = vld [vmem:[#allocation3 + $0x88] sm:$0xff]
      %v2219 = vld [vmem:[#allocation3 + $0x90] sm:$0xff]
      %v2220 = vld [vmem:[#allocation3 + $0x98] sm:$0xff]
      %v2221 = vld [vmem:[#allocation3 + $0xa0] sm:$0xff]
      %v2222 = vld [vmem:[#allocation3 + $0xa8] sm:$0xff]
      %v2223 = vld [vmem:[#allocation3 + $0xb0] sm:$0xff]
      %v2224 = vld [vmem:[#allocation3 + $0xb8] sm:$0xff]
      %v2225 = vld [vmem:[#allocation3 + $0xc0] sm:$0xff]
      %v2226 = vld [vmem:[#allocation3 + $0xc8] sm:$0xff]
      %v2227 = vld [vmem:[#allocation3 + $0xd0] sm:$0xff]
      %v2228 = vld [vmem:[#allocation3 + $0xd8] sm:$0xff]
      %v2229 = vld [vmem:[#allocation3 + $0xe0] sm:$0xff]
      %v2230 = vld [vmem:[#allocation3 + $0xe8] sm:$0xff]
      %v2231 = vld [vmem:[#allocation3 + $0xf0] sm:$0xff]
      %v2232 = vld [vmem:[#allocation3 + $0xf8] sm:$0xff]
      %v2233 = vadd.f32 %v2201, %v2043
      %v2234 = vadd.f32 %v2202, %v2048
      %v2235 = vadd.f32 %v2203, %v2053
      %v2236 = vadd.f32 %v2204, %v2058
      %v2237 = vadd.f32 %v2205, %v2063
      %v2238 = vadd.f32 %v2206, %v2068
      %v2239 = vadd.f32 %v2207, %v2073
      %v2240 = vadd.f32 %v2208, %v2078
      %v2241 = vadd.f32 %v2209, %v2083
      %v2242 = vadd.f32 %v2210, %v2088
      %v2243 = vadd.f32 %v2211, %v2093
      %v2244 = vadd.f32 %v2212, %v2098
      %v2245 = vadd.f32 %v2213, %v2103
      %v2246 = vadd.f32 %v2214, %v2108
      %v2247 = vadd.f32 %v2215, %v2113
      %v2248 = vadd.f32 %v2216, %v2118
      %v2249 = vadd.f32 %v2217, %v2123
      %v2250 = vadd.f32 %v2218, %v2128
      %v2251 = vadd.f32 %v2219, %v2133
      %v2252 = vadd.f32 %v2220, %v2138
      %v2253 = vadd.f32 %v2221, %v2143
      %v2254 = vadd.f32 %v2222, %v2148
      %v2255 = vadd.f32 %v2223, %v2153
      %v2256 = vadd.f32 %v2224, %v2158
      %v2257 = vadd.f32 %v2225, %v2163
      %v2258 = vadd.f32 %v2226, %v2168
      %v2259 = vadd.f32 %v2227, %v2173
      %v2260 = vadd.f32 %v2228, %v2178
      %v2261 = vadd.f32 %v2229, %v2183
      %v2262 = vadd.f32 %v2230, %v2188
      %v2263 = vadd.f32 %v2231, %v2193
      %v2264 = vadd.f32 %v2232, %v2198
      %2265 = vst [vmem:[#allocation3] sm:$0xff] %v2233
      %2266 = vst [vmem:[#allocation3 + $0x8] sm:$0xff] %v2234
      %2267 = vst [vmem:[#allocation3 + $0x10] sm:$0xff] %v2235
      %2268 = vst [vmem:[#allocation3 + $0x18] sm:$0xff] %v2236
      %2269 = vst [vmem:[#allocation3 + $0x20] sm:$0xff] %v2237
      %2270 = vst [vmem:[#allocation3 + $0x28] sm:$0xff] %v2238
      %2271 = vst [vmem:[#allocation3 + $0x30] sm:$0xff] %v2239
      %2272 = vst [vmem:[#allocation3 + $0x38] sm:$0xff] %v2240
      %2273 = vst [vmem:[#allocation3 + $0x40] sm:$0xff] %v2241
      %2274 = vst [vmem:[#allocation3 + $0x48] sm:$0xff] %v2242
      %2275 = vst [vmem:[#allocation3 + $0x50] sm:$0xff] %v2243
      %2276 = vst [vmem:[#allocation3 + $0x58] sm:$0xff] %v2244
      %2277 = vst [vmem:[#allocation3 + $0x60] sm:$0xff] %v2245
      %2278 = vst [vmem:[#allocation3 + $0x68] sm:$0xff] %v2246
      %2279 = vst [vmem:[#allocation3 + $0x70] sm:$0xff] %v2247
      %2280 = vst [vmem:[#allocation3 + $0x78] sm:$0xff] %v2248
      %2281 = vst [vmem:[#allocation3 + $0x80] sm:$0xff] %v2249
      %2282 = vst [vmem:[#allocation3 + $0x88] sm:$0xff] %v2250
      %2283 = vst [vmem:[#allocation3 + $0x90] sm:$0xff] %v2251
      %2284 = vst [vmem:[#allocation3 + $0x98] sm:$0xff] %v2252
      %2285 = vst [vmem:[#allocation3 + $0xa0] sm:$0xff] %v2253
      %2286 = vst [vmem:[#allocation3 + $0xa8] sm:$0xff] %v2254
      %2287 = vst [vmem:[#allocation3 + $0xb0] sm:$0xff] %v2255
      %2288 = vst [vmem:[#allocation3 + $0xb8] sm:$0xff] %v2256
      %2289 = vst [vmem:[#allocation3 + $0xc0] sm:$0xff] %v2257
      %2290 = vst [vmem:[#allocation3 + $0xc8] sm:$0xff] %v2258
      %2291 = vst [vmem:[#allocation3 + $0xd0] sm:$0xff] %v2259
      %2292 = vst [vmem:[#allocation3 + $0xd8] sm:$0xff] %v2260
      %2293 = vst [vmem:[#allocation3 + $0xe0] sm:$0xff] %v2261
      %2294 = vst [vmem:[#allocation3 + $0xe8] sm:$0xff] %v2262
      %2295 = vst [vmem:[#allocation3 + $0xf0] sm:$0xff] %v2263
      %2296 = vst [vmem:[#allocation3 + $0xf8] sm:$0xff] %v2264
      %v2297 = vld [vmem:[#allocation2 + $0x10] sm:$0xff]
      %v2298 = vld [vmem:[#allocation2 + $0x18] sm:$0xff]
      %v2299 = vld [vmem:[#allocation2 + $0x20] sm:$0xff]
      %v2300 = vld [vmem:[#allocation2 + $0x28] sm:$0xff]
      %v2301 = vld [vmem:[#allocation2 + $0x30] sm:$0xff]
      %v2302 = vld [vmem:[#allocation2 + $0x38] sm:$0xff]
      %v2303 = vld [vmem:[#allocation2 + $0x40] sm:$0xff]
      %v2304 = vld [vmem:[#allocation2 + $0x48] sm:$0xff]
      %v2305 = vld [vmem:[#allocation2 + $0x50] sm:$0xff]
      %v2306 = vld [vmem:[#allocation2 + $0x58] sm:$0xff]
      %v2307 = vld [vmem:[#allocation2 + $0x60] sm:$0xff]
      %v2308 = vld [vmem:[#allocation2 + $0x68] sm:$0xff]
      %v2309 = vld [vmem:[#allocation2 + $0x70] sm:$0xff]
      %v2310 = vld [vmem:[#allocation2 + $0x78] sm:$0xff]
      %v2311 = vld [vmem:[#allocation2 + $0x80] sm:$0xff]
      %v2312 = vld [vmem:[#allocation2 + $0x88] sm:$0xff]
      %v2313 = vld [vmem:[#allocation2 + $0x90] sm:$0xff]
      %v2314 = vld [vmem:[#allocation2 + $0x98] sm:$0xff]
      %v2315 = vld [vmem:[#allocation2 + $0xa0] sm:$0xff]
      %v2316 = vld [vmem:[#allocation2 + $0xa8] sm:$0xff]
      %v2317 = vld [vmem:[#allocation2 + $0xb0] sm:$0xff]
      %v2318 = vld [vmem:[#allocation2 + $0xb8] sm:$0xff]
      %v2319 = vld [vmem:[#allocation2 + $0xc0] sm:$0xff]
      %v2320 = vld [vmem:[#allocation2 + $0xc8] sm:$0xff]
      %v2321 = vld [vmem:[#allocation2 + $0xd0] sm:$0xff]
      %v2322 = vld [vmem:[#allocation2 + $0xd8] sm:$0xff]
      %v2323 = vld [vmem:[#allocation2 + $0xe0] sm:$0xff]
      %v2324 = vld [vmem:[#allocation2 + $0xe8] sm:$0xff]
      %v2325 = vld [vmem:[#allocation2 + $0xf0] sm:$0xff]
      %v2326 = vld [vmem:[#allocation2 + $0xf8] sm:$0xff]
      %v2327 = vld [vmem:[#allocation2 + $0x100] sm:$0xff]
      %v2328 = vld [vmem:[#allocation2 + $0x108] sm:$0xff]
      %v2329 = vrot.slane %v2297, 7
      %v2330 = vrot.slane %v2298, 7
      %v2331 = vrot.slane %v2299, 7
      %v2332 = vrot.slane %v2300, 7
      %v2333 = vrot.slane %v2301, 7
      %v2334 = vrot.slane %v2302, 7
      %v2335 = vrot.slane %v2303, 7
      %v2336 = vrot.slane %v2304, 7
      %v2337 = vrot.slane %v2305, 7
      %v2338 = vrot.slane %v2306, 7
      %v2339 = vrot.slane %v2307, 7
      %v2340 = vrot.slane %v2308, 7
      %v2341 = vrot.slane %v2309, 7
      %v2342 = vrot.slane %v2310, 7
      %v2343 = vrot.slane %v2311, 7
      %v2344 = vrot.slane %v2312, 7
      %v2345 = vrot.slane %v2313, 7
      %v2346 = vrot.slane %v2314, 7
      %v2347 = vrot.slane %v2315, 7
      %v2348 = vrot.slane %v2316, 7
      %v2349 = vrot.slane %v2317, 7
      %v2350 = vrot.slane %v2318, 7
      %v2351 = vrot.slane %v2319, 7
      %v2352 = vrot.slane %v2320, 7
      %v2353 = vrot.slane %v2321, 7
      %v2354 = vrot.slane %v2322, 7
      %v2355 = vrot.slane %v2323, 7
      %v2356 = vrot.slane %v2324, 7
      %v2357 = vrot.slane %v2325, 7
      %v2358 = vrot.slane %v2326, 7
      %v2359 = vrot.slane %v2327, 7
      %v2360 = vrot.slane %v2328, 7
      %v2361 = vsel %vm996, %v2359, %v2360
      %v2362 = vsel %vm996, %v2358, %v2359
      %v2363 = vsel %vm996, %v2357, %v2358
      %v2364 = vsel %vm996, %v2356, %v2357
      %v2365 = vsel %vm996, %v2355, %v2356
      %v2366 = vsel %vm996, %v2354, %v2355
      %v2367 = vsel %vm996, %v2353, %v2354
      %v2368 = vsel %vm996, %v2352, %v2353
      %v2369 = vsel %vm996, %v2351, %v2352
      %v2370 = vsel %vm996, %v2350, %v2351
      %v2371 = vsel %vm996, %v2349, %v2350
      %v2372 = vsel %vm996, %v2348, %v2349
      %v2373 = vsel %vm996, %v2347, %v2348
      %v2374 = vsel %vm996, %v2346, %v2347
      %v2375 = vsel %vm996, %v2345, %v2346
      %v2376 = vsel %vm996, %v2344, %v2345
      %v2377 = vsel %vm996, %v2343, %v2344
      %v2378 = vsel %vm996, %v2342, %v2343
      %v2379 = vsel %vm996, %v2341, %v2342
      %v2380 = vsel %vm996, %v2340, %v2341
      %v2381 = vsel %vm996, %v2339, %v2340
      %v2382 = vsel %vm996, %v2338, %v2339
      %v2383 = vsel %vm996, %v2337, %v2338
      %v2384 = vsel %vm996, %v2336, %v2337
      %v2385 = vsel %vm996, %v2335, %v2336
      %v2386 = vsel %vm996, %v2334, %v2335
      %v2387 = vsel %vm996, %v2333, %v2334
      %v2388 = vsel %vm996, %v2332, %v2333
      %v2389 = vsel %vm996, %v2331, %v2332
      %v2390 = vsel %vm996, %v2330, %v2331
      %v2391 = vsel %vm996, %v2329, %v2330
      %v2392 = vsel %vm996, %v2360, %v2329
      %v2393 = vsel %vm1061, %v2392, 0.0
      %v2394 = vsel %vm1062, %v2391, 0.0
      %v2395 = vsel %vm1063, %v2390, 0.0
      %v2396 = vsel %vm1064, %v2389, 0.0
      %v2397 = vsel %vm1065, %v2388, 0.0
      %v2398 = vsel %vm1066, %v2387, 0.0
      %v2399 = vsel %vm1067, %v2386, 0.0
      %v2400 = vsel %vm1068, %v2385, 0.0
      %v2401 = vsel %vm1069, %v2384, 0.0
      %v2402 = vsel %vm1070, %v2383, 0.0
      %v2403 = vsel %vm1071, %v2382, 0.0
      %v2404 = vsel %vm1072, %v2381, 0.0
      %v2405 = vsel %vm1073, %v2380, 0.0
      %v2406 = vsel %vm1074, %v2379, 0.0
      %v2407 = vsel %vm1075, %v2378, 0.0
      %v2408 = vsel %vm1076, %v2377, 0.0
      %v2409 = vsel %vm1077, %v2376, 0.0
      %v2410 = vsel %vm1078, %v2375, 0.0
      %v2411 = vsel %vm1079, %v2374, 0.0
      %v2412 = vsel %vm1080, %v2373, 0.0
      %v2413 = vsel %vm1081, %v2372, 0.0
      %v2414 = vsel %vm1082, %v2371, 0.0
      %v2415 = vsel %vm1083, %v2370, 0.0
      %v2416 = vsel %vm1084, %v2369, 0.0
      %v2417 = vsel %vm1085, %v2368, 0.0
      %v2418 = vsel %vm1086, %v2367, 0.0
      %v2419 = vsel %vm1087, %v2366, 0.0
      %v2420 = vsel %vm1088, %v2365, 0.0
      %v2421 = vsel %vm1089, %v2364, 0.0
      %v2422 = vsel %vm1090, %v2363, 0.0
      %v2423 = vsel %vm1091, %v2362, 0.0
      %v2424 = vsel %vm1092, %v2361, 0.0
      %v2425 = vld [vmem:[%s3 + $0x180] sm:$0xff]
      %v2426 = vld [vmem:[%s3 + $0x188] sm:$0xff]
      %v2427 = vld [vmem:[%s3 + $0x190] sm:$0xff]
      %v2428 = vld [vmem:[%s3 + $0x198] sm:$0xff]
      %v2429 = vld [vmem:[%s3 + $0x1a0] sm:$0xff]
      %v2430 = vld [vmem:[%s3 + $0x1a8] sm:$0xff]
      %v2431 = vld [vmem:[%s3 + $0x1b0] sm:$0xff]
      %v2432 = vld [vmem:[%s3 + $0x1b8] sm:$0xff]
      %v2433 = vld [vmem:[%s3 + $0x1c0] sm:$0xff]
      %v2434 = vld [vmem:[%s3 + $0x1c8] sm:$0xff]
      %v2435 = vld [vmem:[%s3 + $0x1d0] sm:$0xff]
      %v2436 = vld [vmem:[%s3 + $0x1d8] sm:$0xff]
      %v2437 = vld [vmem:[%s3 + $0x1e0] sm:$0xff]
      %v2438 = vld [vmem:[%s3 + $0x1e8] sm:$0xff]
      %v2439 = vld [vmem:[%s3 + $0x1f0] sm:$0xff]
      %v2440 = vld [vmem:[%s3 + $0x1f8] sm:$0xff]
      %2441 = vmatprep.subr.mxu0 0.0
      %2442 = vmatpush1.msra.mxu0 %v2425
      %2443 = vmatprep.subr.mxu0 0.0
      %2444 = vmatpush1.msra.mxu0 %v2426
      %2445 = vmatprep.subr.mxu0 0.0
      %2446 = vmatpush1.msra.mxu0 %v2427
      %2447 = vmatprep.subr.mxu0 0.0
      %2448 = vmatpush1.msra.mxu0 %v2428
      %2449 = vmatprep.subr.mxu0 0.0
      %2450 = vmatpush1.msra.mxu0 %v2429
      %2451 = vmatprep.subr.mxu0 0.0
      %2452 = vmatpush1.msra.mxu0 %v2430
      %2453 = vmatprep.subr.mxu0 0.0
      %2454 = vmatpush1.msra.mxu0 %v2431
      %2455 = vmatprep.subr.mxu0 0.0
      %2456 = vmatpush1.msra.mxu0 %v2432
      %2457 = vmatprep.subr.mxu0 0.0
      %2458 = vmatpush1.msra.mxu0 %v2433
      %2459 = vmatprep.subr.mxu0 0.0
      %2460 = vmatpush1.msra.mxu0 %v2434
      %2461 = vmatprep.subr.mxu0 0.0
      %2462 = vmatpush1.msra.mxu0 %v2435
      %2463 = vmatprep.subr.mxu0 0.0
      %2464 = vmatpush1.msra.mxu0 %v2436
      %2465 = vmatprep.subr.mxu0 0.0
      %2466 = vmatpush1.msra.mxu0 %v2437
      %2467 = vmatprep.subr.mxu0 0.0
      %2468 = vmatpush1.msra.mxu0 %v2438
      %2469 = vmatprep.subr.mxu0 0.0
      %2470 = vmatpush1.msra.mxu0 %v2439
      %2471 = vmatprep.subr.mxu0 0.0
      %2472 = vmatpush1.msra.mxu0 %v2440
      %2473 = vmatprep.subr.mxu0 0.0
      %2474 = vmatpush1.msra.mxu0 0.0
      %2475 = vmatprep.subr.mxu0 0.0
      %2476 = vmatpush1.msra.mxu0 0.0
      %2477 = vmatprep.subr.mxu0 0.0
      %2478 = vmatpush1.msra.mxu0 0.0
      %2479 = vmatprep.subr.mxu0 0.0
      %2480 = vmatpush1.msra.mxu0 0.0
      %2481 = vmatprep.subr.mxu0 0.0
      %2482 = vmatpush1.msra.mxu0 0.0
      %2483 = vmatprep.subr.mxu0 0.0
      %2484 = vmatpush1.msra.mxu0 0.0
      %2485 = vmatprep.subr.mxu0 0.0
      %2486 = vmatpush1.msra.mxu0 0.0
      %2487 = vmatprep.subr.mxu0 0.0
      %2488 = vmatpush1.msra.mxu0 0.0
      %2489 = vmatprep.subr.mxu0 0.0
      %2490 = vmatpush1.msra.mxu0 0.0
      %2491 = vmatprep.subr.mxu0 0.0
      %2492 = vmatpush1.msra.mxu0 0.0
      %2493 = vmatprep.subr.mxu0 0.0
      %2494 = vmatpush1.msra.mxu0 0.0
      %2495 = vmatprep.subr.mxu0 0.0
      %2496 = vmatpush1.msra.mxu0 0.0
      %2497 = vmatprep.subr.mxu0 0.0
      %2498 = vmatpush1.msra.mxu0 0.0
      %2499 = vmatprep.subr.mxu0 0.0
      %2500 = vmatpush1.msra.mxu0 0.0
      %2501 = vmatprep.subr.mxu0 0.0
      %2502 = vmatpush1.msra.mxu0 0.0
      %2503 = vmatprep.subr.mxu0 0.0
      %2504 = vmatpush1.msra.mxu0 0.0
      %2505 = vmatprep.mubr.f32.mxu0 0.0
      %2506 = vmatmul.mubr.f32.gmra.mrb[0].mxu0 %v2393
      %v2507 = vpop.f32.mrb[0].mxu0
      %v2508 = vadd.f32 0.0, %v2507
      %v2509 = vpop.f32.mrb[0].mxu0
      %2510 = vmatprep.mubr.f32.mxu0 0.0
      %2511 = vmatmul.mubr.f32.gmra.mrb[0].mxu0 %v2394
      %v2512 = vpop.f32.mrb[0].mxu0
      %v2513 = vadd.f32 0.0, %v2512
      %v2514 = vpop.f32.mrb[0].mxu0
      %2515 = vmatprep.mubr.f32.mxu0 0.0
      %2516 = vmatmul.mubr.f32.gmra.mrb[0].mxu0 %v2395
      %v2517 = vpop.f32.mrb[0].mxu0
      %v2518 = vadd.f32 0.0, %v2517
      %v2519 = vpop.f32.mrb[0].mxu0
      %2520 = vmatprep.mubr.f32.mxu0 0.0
      %2521 = vmatmul.mubr.f32.gmra.mrb[0].mxu0 %v2396
      %v2522 = vpop.f32.mrb[0].mxu0
      %v2523 = vadd.f32 0.0, %v2522
      %v2524 = vpop.f32.mrb[0].mxu0
      %2525 = vmatprep.mubr.f32.mxu0 0.0
      %2526 = vmatmul.mubr.f32.gmra.mrb[0].mxu0 %v2397
      %v2527 = vpop.f32.mrb[0].mxu0
      %v2528 = vadd.f32 0.0, %v2527
      %v2529 = vpop.f32.mrb[0].mxu0
      %2530 = vmatprep.mubr.f32.mxu0 0.0
      %2531 = vmatmul.mubr.f32.gmra.mrb[0].mxu0 %v2398
      %v2532 = vpop.f32.mrb[0].mxu0
      %v2533 = vadd.f32 0.0, %v2532
      %v2534 = vpop.f32.mrb[0].mxu0
      %2535 = vmatprep.mubr.f32.mxu0 0.0
      %2536 = vmatmul.mubr.f32.gmra.mrb[0].mxu0 %v2399
      %v2537 = vpop.f32.mrb[0].mxu0
      %v2538 = vadd.f32 0.0, %v2537
      %v2539 = vpop.f32.mrb[0].mxu0
      %2540 = vmatprep.mubr.f32.mxu0 0.0
      %2541 = vmatmul.mubr.f32.gmra.mrb[0].mxu0 %v2400
      %v2542 = vpop.f32.mrb[0].mxu0
      %v2543 = vadd.f32 0.0, %v2542
      %v2544 = vpop.f32.mrb[0].mxu0
      %2545 = vmatprep.mubr.f32.mxu0 0.0
      %2546 = vmatmul.mubr.f32.gmra.mrb[0].mxu0 %v2401
      %v2547 = vpop.f32.mrb[0].mxu0
      %v2548 = vadd.f32 0.0, %v2547
      %v2549 = vpop.f32.mrb[0].mxu0
      %2550 = vmatprep.mubr.f32.mxu0 0.0
      %2551 = vmatmul.mubr.f32.gmra.mrb[0].mxu0 %v2402
      %v2552 = vpop.f32.mrb[0].mxu0
      %v2553 = vadd.f32 0.0, %v2552
      %v2554 = vpop.f32.mrb[0].mxu0
      %2555 = vmatprep.mubr.f32.mxu0 0.0
      %2556 = vmatmul.mubr.f32.gmra.mrb[0].mxu0 %v2403
      %v2557 = vpop.f32.mrb[0].mxu0
      %v2558 = vadd.f32 0.0, %v2557
      %v2559 = vpop.f32.mrb[0].mxu0
      %2560 = vmatprep.mubr.f32.mxu0 0.0
      %2561 = vmatmul.mubr.f32.gmra.mrb[0].mxu0 %v2404
      %v2562 = vpop.f32.mrb[0].mxu0
      %v2563 = vadd.f32 0.0, %v2562
      %v2564 = vpop.f32.mrb[0].mxu0
      %2565 = vmatprep.mubr.f32.mxu0 0.0
      %2566 = vmatmul.mubr.f32.gmra.mrb[0].mxu0 %v2405
      %v2567 = vpop.f32.mrb[0].mxu0
      %v2568 = vadd.f32 0.0, %v2567
      %v2569 = vpop.f32.mrb[0].mxu0
      %2570 = vmatprep.mubr.f32.mxu0 0.0
      %2571 = vmatmul.mubr.f32.gmra.mrb[0].mxu0 %v2406
      %v2572 = vpop.f32.mrb[0].mxu0
      %v2573 = vadd.f32 0.0, %v2572
      %v2574 = vpop.f32.mrb[0].mxu0
      %2575 = vmatprep.mubr.f32.mxu0 0.0
      %2576 = vmatmul.mubr.f32.gmra.mrb[0].mxu0 %v2407
      %v2577 = vpop.f32.mrb[0].mxu0
      %v2578 = vadd.f32 0.0, %v2577
      %v2579 = vpop.f32.mrb[0].mxu0
      %2580 = vmatprep.mubr.f32.mxu0 0.0
      %2581 = vmatmul.mubr.f32.gmra.mrb[0].mxu0 %v2408
      %v2582 = vpop.f32.mrb[0].mxu0
      %v2583 = vadd.f32 0.0, %v2582
      %v2584 = vpop.f32.mrb[0].mxu0
      %2585 = vmatprep.mubr.f32.mxu0 0.0
      %2586 = vmatmul.mubr.f32.gmra.mrb[0].mxu0 %v2409
      %v2587 = vpop.f32.mrb[0].mxu0
      %v2588 = vadd.f32 0.0, %v2587
      %v2589 = vpop.f32.mrb[0].mxu0
      %2590 = vmatprep.mubr.f32.mxu0 0.0
      %2591 = vmatmul.mubr.f32.gmra.mrb[0].mxu0 %v2410
      %v2592 = vpop.f32.mrb[0].mxu0
      %v2593 = vadd.f32 0.0, %v2592
      %v2594 = vpop.f32.mrb[0].mxu0
      %2595 = vmatprep.mubr.f32.mxu0 0.0
      %2596 = vmatmul.mubr.f32.gmra.mrb[0].mxu0 %v2411
      %v2597 = vpop.f32.mrb[0].mxu0
      %v2598 = vadd.f32 0.0, %v2597
      %v2599 = vpop.f32.mrb[0].mxu0
      %2600 = vmatprep.mubr.f32.mxu0 0.0
      %2601 = vmatmul.mubr.f32.gmra.mrb[0].mxu0 %v2412
      %v2602 = vpop.f32.mrb[0].mxu0
      %v2603 = vadd.f32 0.0, %v2602
      %v2604 = vpop.f32.mrb[0].mxu0
      %2605 = vmatprep.mubr.f32.mxu0 0.0
      %2606 = vmatmul.mubr.f32.gmra.mrb[0].mxu0 %v2413
      %v2607 = vpop.f32.mrb[0].mxu0
      %v2608 = vadd.f32 0.0, %v2607
      %v2609 = vpop.f32.mrb[0].mxu0
      %2610 = vmatprep.mubr.f32.mxu0 0.0
      %2611 = vmatmul.mubr.f32.gmra.mrb[0].mxu0 %v2414
      %v2612 = vpop.f32.mrb[0].mxu0
      %v2613 = vadd.f32 0.0, %v2612
      %v2614 = vpop.f32.mrb[0].mxu0
      %2615 = vmatprep.mubr.f32.mxu0 0.0
      %2616 = vmatmul.mubr.f32.gmra.mrb[0].mxu0 %v2415
      %v2617 = vpop.f32.mrb[0].mxu0
      %v2618 = vadd.f32 0.0, %v2617
      %v2619 = vpop.f32.mrb[0].mxu0
      %2620 = vmatprep.mubr.f32.mxu0 0.0
      %2621 = vmatmul.mubr.f32.gmra.mrb[0].mxu0 %v2416
      %v2622 = vpop.f32.mrb[0].mxu0
      %v2623 = vadd.f32 0.0, %v2622
      %v2624 = vpop.f32.mrb[0].mxu0
      %2625 = vmatprep.mubr.f32.mxu0 0.0
      %2626 = vmatmul.mubr.f32.gmra.mrb[0].mxu0 %v2417
      %v2627 = vpop.f32.mrb[0].mxu0
      %v2628 = vadd.f32 0.0, %v2627
      %v2629 = vpop.f32.mrb[0].mxu0
      %2630 = vmatprep.mubr.f32.mxu0 0.0
      %2631 = vmatmul.mubr.f32.gmra.mrb[0].mxu0 %v2418
      %v2632 = vpop.f32.mrb[0].mxu0
      %v2633 = vadd.f32 0.0, %v2632
      %v2634 = vpop.f32.mrb[0].mxu0
      %2635 = vmatprep.mubr.f32.mxu0 0.0
      %2636 = vmatmul.mubr.f32.gmra.mrb[0].mxu0 %v2419
      %v2637 = vpop.f32.mrb[0].mxu0
      %v2638 = vadd.f32 0.0, %v2637
      %v2639 = vpop.f32.mrb[0].mxu0
      %2640 = vmatprep.mubr.f32.mxu0 0.0
      %2641 = vmatmul.mubr.f32.gmra.mrb[0].mxu0 %v2420
      %v2642 = vpop.f32.mrb[0].mxu0
      %v2643 = vadd.f32 0.0, %v2642
      %v2644 = vpop.f32.mrb[0].mxu0
      %2645 = vmatprep.mubr.f32.mxu0 0.0
      %2646 = vmatmul.mubr.f32.gmra.mrb[0].mxu0 %v2421
      %v2647 = vpop.f32.mrb[0].mxu0
      %v2648 = vadd.f32 0.0, %v2647
      %v2649 = vpop.f32.mrb[0].mxu0
      %2650 = vmatprep.mubr.f32.mxu0 0.0
      %2651 = vmatmul.mubr.f32.gmra.mrb[0].mxu0 %v2422
      %v2652 = vpop.f32.mrb[0].mxu0
      %v2653 = vadd.f32 0.0, %v2652
      %v2654 = vpop.f32.mrb[0].mxu0
      %2655 = vmatprep.mubr.f32.mxu0 0.0
      %2656 = vmatmul.mubr.f32.gmra.mrb[0].mxu0 %v2423
      %v2657 = vpop.f32.mrb[0].mxu0
      %v2658 = vadd.f32 0.0, %v2657
      %v2659 = vpop.f32.mrb[0].mxu0
      %2660 = vmatprep.mubr.f32.mxu0 0.0
      %2661 = vmatmul.mubr.f32.gmra.mrb[0].mxu0 %v2424
      %v2662 = vpop.f32.mrb[0].mxu0
      %v2663 = vadd.f32 0.0, %v2662
      %v2664 = vpop.f32.mrb[0].mxu0
      %2665 = vdwg.mxu0
      %v2666 = vld [vmem:[#allocation3] sm:$0xff]
      %v2667 = vld [vmem:[#allocation3 + $0x8] sm:$0xff]
      %v2668 = vld [vmem:[#allocation3 + $0x10] sm:$0xff]
      %v2669 = vld [vmem:[#allocation3 + $0x18] sm:$0xff]
      %v2670 = vld [vmem:[#allocation3 + $0x20] sm:$0xff]
      %v2671 = vld [vmem:[#allocation3 + $0x28] sm:$0xff]
      %v2672 = vld [vmem:[#allocation3 + $0x30] sm:$0xff]
      %v2673 = vld [vmem:[#allocation3 + $0x38] sm:$0xff]
      %v2674 = vld [vmem:[#allocation3 + $0x40] sm:$0xff]
      %v2675 = vld [vmem:[#allocation3 + $0x48] sm:$0xff]
      %v2676 = vld [vmem:[#allocation3 + $0x50] sm:$0xff]
      %v2677 = vld [vmem:[#allocation3 + $0x58] sm:$0xff]
      %v2678 = vld [vmem:[#allocation3 + $0x60] sm:$0xff]
      %v2679 = vld [vmem:[#allocation3 + $0x68] sm:$0xff]
      %v2680 = vld [vmem:[#allocation3 + $0x70] sm:$0xff]
      %v2681 = vld [vmem:[#allocation3 + $0x78] sm:$0xff]
      %v2682 = vld [vmem:[#allocation3 + $0x80] sm:$0xff]
      %v2683 = vld [vmem:[#allocation3 + $0x88] sm:$0xff]
      %v2684 = vld [vmem:[#allocation3 + $0x90] sm:$0xff]
      %v2685 = vld [vmem:[#allocation3 + $0x98] sm:$0xff]
      %v2686 = vld [vmem:[#allocation3 + $0xa0] sm:$0xff]
      %v2687 = vld [vmem:[#allocation3 + $0xa8] sm:$0xff]
      %v2688 = vld [vmem:[#allocation3 + $0xb0] sm:$0xff]
      %v2689 = vld [vmem:[#allocation3 + $0xb8] sm:$0xff]
      %v2690 = vld [vmem:[#allocation3 + $0xc0] sm:$0xff]
      %v2691 = vld [vmem:[#allocation3 + $0xc8] sm:$0xff]
      %v2692 = vld [vmem:[#allocation3 + $0xd0] sm:$0xff]
      %v2693 = vld [vmem:[#allocation3 + $0xd8] sm:$0xff]
      %v2694 = vld [vmem:[#allocation3 + $0xe0] sm:$0xff]
      %v2695 = vld [vmem:[#allocation3 + $0xe8] sm:$0xff]
      %v2696 = vld [vmem:[#allocation3 + $0xf0] sm:$0xff]
      %v2697 = vld [vmem:[#allocation3 + $0xf8] sm:$0xff]
      %v2698 = vadd.f32 %v2666, %v2508
      %v2699 = vadd.f32 %v2667, %v2513
      %v2700 = vadd.f32 %v2668, %v2518
      %v2701 = vadd.f32 %v2669, %v2523
      %v2702 = vadd.f32 %v2670, %v2528
      %v2703 = vadd.f32 %v2671, %v2533
      %v2704 = vadd.f32 %v2672, %v2538
      %v2705 = vadd.f32 %v2673, %v2543
      %v2706 = vadd.f32 %v2674, %v2548
      %v2707 = vadd.f32 %v2675, %v2553
      %v2708 = vadd.f32 %v2676, %v2558
      %v2709 = vadd.f32 %v2677, %v2563
      %v2710 = vadd.f32 %v2678, %v2568
      %v2711 = vadd.f32 %v2679, %v2573
      %v2712 = vadd.f32 %v2680, %v2578
      %v2713 = vadd.f32 %v2681, %v2583
      %v2714 = vadd.f32 %v2682, %v2588
      %v2715 = vadd.f32 %v2683, %v2593
      %v2716 = vadd.f32 %v2684, %v2598
      %v2717 = vadd.f32 %v2685, %v2603
      %v2718 = vadd.f32 %v2686, %v2608
      %v2719 = vadd.f32 %v2687, %v2613
      %v2720 = vadd.f32 %v2688, %v2618
      %v2721 = vadd.f32 %v2689, %v2623
      %v2722 = vadd.f32 %v2690, %v2628
      %v2723 = vadd.f32 %v2691, %v2633
      %v2724 = vadd.f32 %v2692, %v2638
      %v2725 = vadd.f32 %v2693, %v2643
      %v2726 = vadd.f32 %v2694, %v2648
      %v2727 = vadd.f32 %v2695, %v2653
      %v2728 = vadd.f32 %v2696, %v2658
      %v2729 = vadd.f32 %v2697, %v2663
      %2730 = vst [vmem:[#allocation3] sm:$0xff] %v2698
      %2731 = vst [vmem:[#allocation3 + $0x8] sm:$0xff] %v2699
      %2732 = vst [vmem:[#allocation3 + $0x10] sm:$0xff] %v2700
      %2733 = vst [vmem:[#allocation3 + $0x18] sm:$0xff] %v2701
      %2734 = vst [vmem:[#allocation3 + $0x20] sm:$0xff] %v2702
      %2735 = vst [vmem:[#allocation3 + $0x28] sm:$0xff] %v2703
      %2736 = vst [vmem:[#allocation3 + $0x30] sm:$0xff] %v2704
      %2737 = vst [vmem:[#allocation3 + $0x38] sm:$0xff] %v2705
      %2738 = vst [vmem:[#allocation3 + $0x40] sm:$0xff] %v2706
      %2739 = vst [vmem:[#allocation3 + $0x48] sm:$0xff] %v2707
      %2740 = vst [vmem:[#allocation3 + $0x50] sm:$0xff] %v2708
      %2741 = vst [vmem:[#allocation3 + $0x58] sm:$0xff] %v2709
      %2742 = vst [vmem:[#allocation3 + $0x60] sm:$0xff] %v2710
      %2743 = vst [vmem:[#allocation3 + $0x68] sm:$0xff] %v2711
      %2744 = vst [vmem:[#allocation3 + $0x70] sm:$0xff] %v2712
      %2745 = vst [vmem:[#allocation3 + $0x78] sm:$0xff] %v2713
      %2746 = vst [vmem:[#allocation3 + $0x80] sm:$0xff] %v2714
      %2747 = vst [vmem:[#allocation3 + $0x88] sm:$0xff] %v2715
      %2748 = vst [vmem:[#allocation3 + $0x90] sm:$0xff] %v2716
      %2749 = vst [vmem:[#allocation3 + $0x98] sm:$0xff] %v2717
      %2750 = vst [vmem:[#allocation3 + $0xa0] sm:$0xff] %v2718
      %2751 = vst [vmem:[#allocation3 + $0xa8] sm:$0xff] %v2719
      %2752 = vst [vmem:[#allocation3 + $0xb0] sm:$0xff] %v2720
      %2753 = vst [vmem:[#allocation3 + $0xb8] sm:$0xff] %v2721
      %2754 = vst [vmem:[#allocation3 + $0xc0] sm:$0xff] %v2722
      %2755 = vst [vmem:[#allocation3 + $0xc8] sm:$0xff] %v2723
      %2756 = vst [vmem:[#allocation3 + $0xd0] sm:$0xff] %v2724
      %2757 = vst [vmem:[#allocation3 + $0xd8] sm:$0xff] %v2725
      %2758 = vst [vmem:[#allocation3 + $0xe0] sm:$0xff] %v2726
      %2759 = vst [vmem:[#allocation3 + $0xe8] sm:$0xff] %v2727
      %2760 = vst [vmem:[#allocation3 + $0xf0] sm:$0xff] %v2728
      %2761 = vst [vmem:[#allocation3 + $0xf8] sm:$0xff] %v2729
      %v2762 = vld [vmem:[#allocation2 + $0x10] sm:$0xff]
      %v2763 = vld [vmem:[#allocation2 + $0x18] sm:$0xff]
      %v2764 = vld [vmem:[#allocation2 + $0x20] sm:$0xff]
      %v2765 = vld [vmem:[#allocation2 + $0x28] sm:$0xff]
      %v2766 = vld [vmem:[#allocation2 + $0x30] sm:$0xff]
      %v2767 = vld [vmem:[#allocation2 + $0x38] sm:$0xff]
      %v2768 = vld [vmem:[#allocation2 + $0x40] sm:$0xff]
      %v2769 = vld [vmem:[#allocation2 + $0x48] sm:$0xff]
      %v2770 = vld [vmem:[#allocation2 + $0x50] sm:$0xff]
      %v2771 = vld [vmem:[#allocation2 + $0x58] sm:$0xff]
      %v2772 = vld [vmem:[#allocation2 + $0x60] sm:$0xff]
      %v2773 = vld [vmem:[#allocation2 + $0x68] sm:$0xff]
      %v2774 = vld [vmem:[#allocation2 + $0x70] sm:$0xff]
      %v2775 = vld [vmem:[#allocation2 + $0x78] sm:$0xff]
      %v2776 = vld [vmem:[#allocation2 + $0x80] sm:$0xff]
      %v2777 = vld [vmem:[#allocation2 + $0x88] sm:$0xff]
      %v2778 = vld [vmem:[#allocation2 + $0x90] sm:$0xff]
      %v2779 = vld [vmem:[#allocation2 + $0x98] sm:$0xff]
      %v2780 = vld [vmem:[#allocation2 + $0xa0] sm:$0xff]
      %v2781 = vld [vmem:[#allocation2 + $0xa8] sm:$0xff]
      %v2782 = vld [vmem:[#allocation2 + $0xb0] sm:$0xff]
      %v2783 = vld [vmem:[#allocation2 + $0xb8] sm:$0xff]
      %v2784 = vld [vmem:[#allocation2 + $0xc0] sm:$0xff]
      %v2785 = vld [vmem:[#allocation2 + $0xc8] sm:$0xff]
      %v2786 = vld [vmem:[#allocation2 + $0xd0] sm:$0xff]
      %v2787 = vld [vmem:[#allocation2 + $0xd8] sm:$0xff]
      %v2788 = vld [vmem:[#allocation2 + $0xe0] sm:$0xff]
      %v2789 = vld [vmem:[#allocation2 + $0xe8] sm:$0xff]
      %v2790 = vld [vmem:[#allocation2 + $0xf0] sm:$0xff]
      %v2791 = vld [vmem:[#allocation2 + $0xf8] sm:$0xff]
      %v2792 = vld [vmem:[#allocation2 + $0x100] sm:$0xff]
      %v2793 = vld [vmem:[#allocation2 + $0x108] sm:$0xff]
      %v2794 = vld [vmem:[%s3 + $0x200] sm:$0xff]
      %v2795 = vld [vmem:[%s3 + $0x208] sm:$0xff]
      %v2796 = vld [vmem:[%s3 + $0x210] sm:$0xff]
      %v2797 = vld [vmem:[%s3 + $0x218] sm:$0xff]
      %v2798 = vld [vmem:[%s3 + $0x220] sm:$0xff]
      %v2799 = vld [vmem:[%s3 + $0x228] sm:$0xff]
      %v2800 = vld [vmem:[%s3 + $0x230] sm:$0xff]
      %v2801 = vld [vmem:[%s3 + $0x238] sm:$0xff]
      %v2802 = vld [vmem:[%s3 + $0x240] sm:$0xff]
      %v2803 = vld [vmem:[%s3 + $0x248] sm:$0xff]
      %v2804 = vld [vmem:[%s3 + $0x250] sm:$0xff]
      %v2805 = vld [vmem:[%s3 + $0x258] sm:$0xff]
      %v2806 = vld [vmem:[%s3 + $0x260] sm:$0xff]
      %v2807 = vld [vmem:[%s3 + $0x268] sm:$0xff]
      %v2808 = vld [vmem:[%s3 + $0x270] sm:$0xff]
      %v2809 = vld [vmem:[%s3 + $0x278] sm:$0xff]
      %2810 = vmatprep.subr.mxu0 0.0
      %2811 = vmatpush1.msra.mxu0 %v2794
      %2812 = vmatprep.subr.mxu0 0.0
      %2813 = vmatpush1.msra.mxu0 %v2795
      %2814 = vmatprep.subr.mxu0 0.0
      %2815 = vmatpush1.msra.mxu0 %v2796
      %2816 = vmatprep.subr.mxu0 0.0
      %2817 = vmatpush1.msra.mxu0 %v2797
      %2818 = vmatprep.subr.mxu0 0.0
      %2819 = vmatpush1.msra.mxu0 %v2798
      %2820 = vmatprep.subr.mxu0 0.0
      %2821 = vmatpush1.msra.mxu0 %v2799
      %2822 = vmatprep.subr.mxu0 0.0
      %2823 = vmatpush1.msra.mxu0 %v2800
      %2824 = vmatprep.subr.mxu0 0.0
      %2825 = vmatpush1.msra.mxu0 %v2801
      %2826 = vmatprep.subr.mxu0 0.0
      %2827 = vmatpush1.msra.mxu0 %v2802
      %2828 = vmatprep.subr.mxu0 0.0
      %2829 = vmatpush1.msra.mxu0 %v2803
      %2830 = vmatprep.subr.mxu0 0.0
      %2831 = vmatpush1.msra.mxu0 %v2804
      %2832 = vmatprep.subr.mxu0 0.0
      %2833 = vmatpush1.msra.mxu0 %v2805
      %2834 = vmatprep.subr.mxu0 0.0
      %2835 = vmatpush1.msra.mxu0 %v2806
      %2836 = vmatprep.subr.mxu0 0.0
      %2837 = vmatpush1.msra.mxu0 %v2807
      %2838 = vmatprep.subr.mxu0 0.0
      %2839 = vmatpush1.msra.mxu0 %v2808
      %2840 = vmatprep.subr.mxu0 0.0
      %2841 = vmatpush1.msra.mxu0 %v2809
      %2842 = vmatprep.subr.mxu0 0.0
      %2843 = vmatpush1.msra.mxu0 0.0
      %2844 = vmatprep.subr.mxu0 0.0
      %2845 = vmatpush1.msra.mxu0 0.0
      %2846 = vmatprep.subr.mxu0 0.0
      %2847 = vmatpush1.msra.mxu0 0.0
      %2848 = vmatprep.subr.mxu0 0.0
      %2849 = vmatpush1.msra.mxu0 0.0
      %2850 = vmatprep.subr.mxu0 0.0
      %2851 = vmatpush1.msra.mxu0 0.0
      %2852 = vmatprep.subr.mxu0 0.0
      %2853 = vmatpush1.msra.mxu0 0.0
      %2854 = vmatprep.subr.mxu0 0.0
      %2855 = vmatpush1.msra.mxu0 0.0
      %2856 = vmatprep.subr.mxu0 0.0
      %2857 = vmatpush1.msra.mxu0 0.0
      %2858 = vmatprep.subr.mxu0 0.0
      %2859 = vmatpush1.msra.mxu0 0.0
      %2860 = vmatprep.subr.mxu0 0.0
      %2861 = vmatpush1.msra.mxu0 0.0
      %2862 = vmatprep.subr.mxu0 0.0
      %2863 = vmatpush1.msra.mxu0 0.0
      %2864 = vmatprep.subr.mxu0 0.0
      %2865 = vmatpush1.msra.mxu0 0.0
      %2866 = vmatprep.subr.mxu0 0.0
      %2867 = vmatpush1.msra.mxu0 0.0
      %2868 = vmatprep.subr.mxu0 0.0
      %2869 = vmatpush1.msra.mxu0 0.0
      %2870 = vmatprep.subr.mxu0 0.0
      %2871 = vmatpush1.msra.mxu0 0.0
      %2872 = vmatprep.subr.mxu0 0.0
      %2873 = vmatpush1.msra.mxu0 0.0
      %2874 = vmatprep.mubr.f32.mxu0 0.0
      %2875 = vmatmul.mubr.f32.gmra.mrb[0].mxu0 %v2762
      %v2876 = vpop.f32.mrb[0].mxu0
      %v2877 = vadd.f32 0.0, %v2876
      %v2878 = vpop.f32.mrb[0].mxu0
      %2879 = vmatprep.mubr.f32.mxu0 0.0
      %2880 = vmatmul.mubr.f32.gmra.mrb[0].mxu0 %v2763
      %v2881 = vpop.f32.mrb[0].mxu0
      %v2882 = vadd.f32 0.0, %v2881
      %v2883 = vpop.f32.mrb[0].mxu0
      %2884 = vmatprep.mubr.f32.mxu0 0.0
      %2885 = vmatmul.mubr.f32.gmra.mrb[0].mxu0 %v2764
      %v2886 = vpop.f32.mrb[0].mxu0
      %v2887 = vadd.f32 0.0, %v2886
      %v2888 = vpop.f32.mrb[0].mxu0
      %2889 = vmatprep.mubr.f32.mxu0 0.0
      %2890 = vmatmul.mubr.f32.gmra.mrb[0].mxu0 %v2765
      %v2891 = vpop.f32.mrb[0].mxu0
      %v2892 = vadd.f32 0.0, %v2891
      %v2893 = vpop.f32.mrb[0].mxu0
      %2894 = vmatprep.mubr.f32.mxu0 0.0
      %2895 = vmatmul.mubr.f32.gmra.mrb[0].mxu0 %v2766
      %v2896 = vpop.f32.mrb[0].mxu0
      %v2897 = vadd.f32 0.0, %v2896
      %v2898 = vpop.f32.mrb[0].mxu0
      %2899 = vmatprep.mubr.f32.mxu0 0.0
      %2900 = vmatmul.mubr.f32.gmra.mrb[0].mxu0 %v2767
      %v2901 = vpop.f32.mrb[0].mxu0
      %v2902 = vadd.f32 0.0, %v2901
      %v2903 = vpop.f32.mrb[0].mxu0
      %2904 = vmatprep.mubr.f32.mxu0 0.0
      %2905 = vmatmul.mubr.f32.gmra.mrb[0].mxu0 %v2768
      %v2906 = vpop.f32.mrb[0].mxu0
      %v2907 = vadd.f32 0.0, %v2906
      %v2908 = vpop.f32.mrb[0].mxu0
      %2909 = vmatprep.mubr.f32.mxu0 0.0
      %2910 = vmatmul.mubr.f32.gmra.mrb[0].mxu0 %v2769
      %v2911 = vpop.f32.mrb[0].mxu0
      %v2912 = vadd.f32 0.0, %v2911
      %v2913 = vpop.f32.mrb[0].mxu0
      %2914 = vmatprep.mubr.f32.mxu0 0.0
      %2915 = vmatmul.mubr.f32.gmra.mrb[0].mxu0 %v2770
      %v2916 = vpop.f32.mrb[0].mxu0
      %v2917 = vadd.f32 0.0, %v2916
      %v2918 = vpop.f32.mrb[0].mxu0
      %2919 = vmatprep.mubr.f32.mxu0 0.0
      %2920 = vmatmul.mubr.f32.gmra.mrb[0].mxu0 %v2771
      %v2921 = vpop.f32.mrb[0].mxu0
      %v2922 = vadd.f32 0.0, %v2921
      %v2923 = vpop.f32.mrb[0].mxu0
      %2924 = vmatprep.mubr.f32.mxu0 0.0
      %2925 = vmatmul.mubr.f32.gmra.mrb[0].mxu0 %v2772
      %v2926 = vpop.f32.mrb[0].mxu0
      %v2927 = vadd.f32 0.0, %v2926
      %v2928 = vpop.f32.mrb[0].mxu0
      %2929 = vmatprep.mubr.f32.mxu0 0.0
      %2930 = vmatmul.mubr.f32.gmra.mrb[0].mxu0 %v2773
      %v2931 = vpop.f32.mrb[0].mxu0
      %v2932 = vadd.f32 0.0, %v2931
      %v2933 = vpop.f32.mrb[0].mxu0
      %2934 = vmatprep.mubr.f32.mxu0 0.0
      %2935 = vmatmul.mubr.f32.gmra.mrb[0].mxu0 %v2774
      %v2936 = vpop.f32.mrb[0].mxu0
      %v2937 = vadd.f32 0.0, %v2936
      %v2938 = vpop.f32.mrb[0].mxu0
      %2939 = vmatprep.mubr.f32.mxu0 0.0
      %2940 = vmatmul.mubr.f32.gmra.mrb[0].mxu0 %v2775
      %v2941 = vpop.f32.mrb[0].mxu0
      %v2942 = vadd.f32 0.0, %v2941
      %v2943 = vpop.f32.mrb[0].mxu0
      %2944 = vmatprep.mubr.f32.mxu0 0.0
      %2945 = vmatmul.mubr.f32.gmra.mrb[0].mxu0 %v2776
      %v2946 = vpop.f32.mrb[0].mxu0
      %v2947 = vadd.f32 0.0, %v2946
      %v2948 = vpop.f32.mrb[0].mxu0
      %2949 = vmatprep.mubr.f32.mxu0 0.0
      %2950 = vmatmul.mubr.f32.gmra.mrb[0].mxu0 %v2777
      %v2951 = vpop.f32.mrb[0].mxu0
      %v2952 = vadd.f32 0.0, %v2951
      %v2953 = vpop.f32.mrb[0].mxu0
      %2954 = vmatprep.mubr.f32.mxu0 0.0
      %2955 = vmatmul.mubr.f32.gmra.mrb[0].mxu0 %v2778
      %v2956 = vpop.f32.mrb[0].mxu0
      %v2957 = vadd.f32 0.0, %v2956
      %v2958 = vpop.f32.mrb[0].mxu0
      %2959 = vmatprep.mubr.f32.mxu0 0.0
      %2960 = vmatmul.mubr.f32.gmra.mrb[0].mxu0 %v2779
      %v2961 = vpop.f32.mrb[0].mxu0
      %v2962 = vadd.f32 0.0, %v2961
      %v2963 = vpop.f32.mrb[0].mxu0
      %2964 = vmatprep.mubr.f32.mxu0 0.0
      %2965 = vmatmul.mubr.f32.gmra.mrb[0].mxu0 %v2780
      %v2966 = vpop.f32.mrb[0].mxu0
      %v2967 = vadd.f32 0.0, %v2966
      %v2968 = vpop.f32.mrb[0].mxu0
      %2969 = vmatprep.mubr.f32.mxu0 0.0
      %2970 = vmatmul.mubr.f32.gmra.mrb[0].mxu0 %v2781
      %v2971 = vpop.f32.mrb[0].mxu0
      %v2972 = vadd.f32 0.0, %v2971
      %v2973 = vpop.f32.mrb[0].mxu0
      %2974 = vmatprep.mubr.f32.mxu0 0.0
      %2975 = vmatmul.mubr.f32.gmra.mrb[0].mxu0 %v2782
      %v2976 = vpop.f32.mrb[0].mxu0
      %v2977 = vadd.f32 0.0, %v2976
      %v2978 = vpop.f32.mrb[0].mxu0
      %2979 = vmatprep.mubr.f32.mxu0 0.0
      %2980 = vmatmul.mubr.f32.gmra.mrb[0].mxu0 %v2783
      %v2981 = vpop.f32.mrb[0].mxu0
      %v2982 = vadd.f32 0.0, %v2981
      %v2983 = vpop.f32.mrb[0].mxu0
      %2984 = vmatprep.mubr.f32.mxu0 0.0
      %2985 = vmatmul.mubr.f32.gmra.mrb[0].mxu0 %v2784
      %v2986 = vpop.f32.mrb[0].mxu0
      %v2987 = vadd.f32 0.0, %v2986
      %v2988 = vpop.f32.mrb[0].mxu0
      %2989 = vmatprep.mubr.f32.mxu0 0.0
      %2990 = vmatmul.mubr.f32.gmra.mrb[0].mxu0 %v2785
      %v2991 = vpop.f32.mrb[0].mxu0
      %v2992 = vadd.f32 0.0, %v2991
      %v2993 = vpop.f32.mrb[0].mxu0
      %2994 = vmatprep.mubr.f32.mxu0 0.0
      %2995 = vmatmul.mubr.f32.gmra.mrb[0].mxu0 %v2786
      %v2996 = vpop.f32.mrb[0].mxu0
      %v2997 = vadd.f32 0.0, %v2996
      %v2998 = vpop.f32.mrb[0].mxu0
      %2999 = vmatprep.mubr.f32.mxu0 0.0
      %3000 = vmatmul.mubr.f32.gmra.mrb[0].mxu0 %v2787
      %v3001 = vpop.f32.mrb[0].mxu0
      %v3002 = vadd.f32 0.0, %v3001
      %v3003 = vpop.f32.mrb[0].mxu0
      %3004 = vmatprep.mubr.f32.mxu0 0.0
      %3005 = vmatmul.mubr.f32.gmra.mrb[0].mxu0 %v2788
      %v3006 = vpop.f32.mrb[0].mxu0
      %v3007 = vadd.f32 0.0, %v3006
      %v3008 = vpop.f32.mrb[0].mxu0
      %3009 = vmatprep.mubr.f32.mxu0 0.0
      %3010 = vmatmul.mubr.f32.gmra.mrb[0].mxu0 %v2789
      %v3011 = vpop.f32.mrb[0].mxu0
      %v3012 = vadd.f32 0.0, %v3011
      %v3013 = vpop.f32.mrb[0].mxu0
      %3014 = vmatprep.mubr.f32.mxu0 0.0
      %3015 = vmatmul.mubr.f32.gmra.mrb[0].mxu0 %v2790
      %v3016 = vpop.f32.mrb[0].mxu0
      %v3017 = vadd.f32 0.0, %v3016
      %v3018 = vpop.f32.mrb[0].mxu0
      %3019 = vmatprep.mubr.f32.mxu0 0.0
      %3020 = vmatmul.mubr.f32.gmra.mrb[0].mxu0 %v2791
      %v3021 = vpop.f32.mrb[0].mxu0
      %v3022 = vadd.f32 0.0, %v3021
      %v3023 = vpop.f32.mrb[0].mxu0
      %3024 = vmatprep.mubr.f32.mxu0 0.0
      %3025 = vmatmul.mubr.f32.gmra.mrb[0].mxu0 %v2792
      %v3026 = vpop.f32.mrb[0].mxu0
      %v3027 = vadd.f32 0.0, %v3026
      %v3028 = vpop.f32.mrb[0].mxu0
      %3029 = vmatprep.mubr.f32.mxu0 0.0
      %3030 = vmatmul.mubr.f32.gmra.mrb[0].mxu0 %v2793
      %v3031 = vpop.f32.mrb[0].mxu0
      %v3032 = vadd.f32 0.0, %v3031
      %v3033 = vpop.f32.mrb[0].mxu0
      %3034 = vdwg.mxu0
      %v3035 = vld [vmem:[#allocation3] sm:$0xff]
      %v3036 = vld [vmem:[#allocation3 + $0x8] sm:$0xff]
      %v3037 = vld [vmem:[#allocation3 + $0x10] sm:$0xff]
      %v3038 = vld [vmem:[#allocation3 + $0x18] sm:$0xff]
      %v3039 = vld [vmem:[#allocation3 + $0x20] sm:$0xff]
      %v3040 = vld [vmem:[#allocation3 + $0x28] sm:$0xff]
      %v3041 = vld [vmem:[#allocation3 + $0x30] sm:$0xff]
      %v3042 = vld [vmem:[#allocation3 + $0x38] sm:$0xff]
      %v3043 = vld [vmem:[#allocation3 + $0x40] sm:$0xff]
      %v3044 = vld [vmem:[#allocation3 + $0x48] sm:$0xff]
      %v3045 = vld [vmem:[#allocation3 + $0x50] sm:$0xff]
      %v3046 = vld [vmem:[#allocation3 + $0x58] sm:$0xff]
      %v3047 = vld [vmem:[#allocation3 + $0x60] sm:$0xff]
      %v3048 = vld [vmem:[#allocation3 + $0x68] sm:$0xff]
      %v3049 = vld [vmem:[#allocation3 + $0x70] sm:$0xff]
      %v3050 = vld [vmem:[#allocation3 + $0x78] sm:$0xff]
      %v3051 = vld [vmem:[#allocation3 + $0x80] sm:$0xff]
      %v3052 = vld [vmem:[#allocation3 + $0x88] sm:$0xff]
      %v3053 = vld [vmem:[#allocation3 + $0x90] sm:$0xff]
      %v3054 = vld [vmem:[#allocation3 + $0x98] sm:$0xff]
      %v3055 = vld [vmem:[#allocation3 + $0xa0] sm:$0xff]
      %v3056 = vld [vmem:[#allocation3 + $0xa8] sm:$0xff]
      %v3057 = vld [vmem:[#allocation3 + $0xb0] sm:$0xff]
      %v3058 = vld [vmem:[#allocation3 + $0xb8] sm:$0xff]
      %v3059 = vld [vmem:[#allocation3 + $0xc0] sm:$0xff]
      %v3060 = vld [vmem:[#allocation3 + $0xc8] sm:$0xff]
      %v3061 = vld [vmem:[#allocation3 + $0xd0] sm:$0xff]
      %v3062 = vld [vmem:[#allocation3 + $0xd8] sm:$0xff]
      %v3063 = vld [vmem:[#allocation3 + $0xe0] sm:$0xff]
      %v3064 = vld [vmem:[#allocation3 + $0xe8] sm:$0xff]
      %v3065 = vld [vmem:[#allocation3 + $0xf0] sm:$0xff]
      %v3066 = vld [vmem:[#allocation3 + $0xf8] sm:$0xff]
      %v3067 = vadd.f32 %v3035, %v2877
      %v3068 = vadd.f32 %v3036, %v2882
      %v3069 = vadd.f32 %v3037, %v2887
      %v3070 = vadd.f32 %v3038, %v2892
      %v3071 = vadd.f32 %v3039, %v2897
      %v3072 = vadd.f32 %v3040, %v2902
      %v3073 = vadd.f32 %v3041, %v2907
      %v3074 = vadd.f32 %v3042, %v2912
      %v3075 = vadd.f32 %v3043, %v2917
      %v3076 = vadd.f32 %v3044, %v2922
      %v3077 = vadd.f32 %v3045, %v2927
      %v3078 = vadd.f32 %v3046, %v2932
      %v3079 = vadd.f32 %v3047, %v2937
      %v3080 = vadd.f32 %v3048, %v2942
      %v3081 = vadd.f32 %v3049, %v2947
      %v3082 = vadd.f32 %v3050, %v2952
      %v3083 = vadd.f32 %v3051, %v2957
      %v3084 = vadd.f32 %v3052, %v2962
      %v3085 = vadd.f32 %v3053, %v2967
      %v3086 = vadd.f32 %v3054, %v2972
      %v3087 = vadd.f32 %v3055, %v2977
      %v3088 = vadd.f32 %v3056, %v2982
      %v3089 = vadd.f32 %v3057, %v2987
      %v3090 = vadd.f32 %v3058, %v2992
      %v3091 = vadd.f32 %v3059, %v2997
      %v3092 = vadd.f32 %v3060, %v3002
      %v3093 = vadd.f32 %v3061, %v3007
      %v3094 = vadd.f32 %v3062, %v3012
      %v3095 = vadd.f32 %v3063, %v3017
      %v3096 = vadd.f32 %v3064, %v3022
      %v3097 = vadd.f32 %v3065, %v3027
      %v3098 = vadd.f32 %v3066, %v3032
      %3099 = vst [vmem:[#allocation3] sm:$0xff] %v3067
      %3100 = vst [vmem:[#allocation3 + $0x8] sm:$0xff] %v3068
      %3101 = vst [vmem:[#allocation3 + $0x10] sm:$0xff] %v3069
      %3102 = vst [vmem:[#allocation3 + $0x18] sm:$0xff] %v3070
      %3103 = vst [vmem:[#allocation3 + $0x20] sm:$0xff] %v3071
      %3104 = vst [vmem:[#allocation3 + $0x28] sm:$0xff] %v3072
      %3105 = vst [vmem:[#allocation3 + $0x30] sm:$0xff] %v3073
      %3106 = vst [vmem:[#allocation3 + $0x38] sm:$0xff] %v3074
      %3107 = vst [vmem:[#allocation3 + $0x40] sm:$0xff] %v3075
      %3108 = vst [vmem:[#allocation3 + $0x48] sm:$0xff] %v3076
      %3109 = vst [vmem:[#allocation3 + $0x50] sm:$0xff] %v3077
      %3110 = vst [vmem:[#allocation3 + $0x58] sm:$0xff] %v3078
      %3111 = vst [vmem:[#allocation3 + $0x60] sm:$0xff] %v3079
      %3112 = vst [vmem:[#allocation3 + $0x68] sm:$0xff] %v3080
      %3113 = vst [vmem:[#allocation3 + $0x70] sm:$0xff] %v3081
      %3114 = vst [vmem:[#allocation3 + $0x78] sm:$0xff] %v3082
      %3115 = vst [vmem:[#allocation3 + $0x80] sm:$0xff] %v3083
      %3116 = vst [vmem:[#allocation3 + $0x88] sm:$0xff] %v3084
      %3117 = vst [vmem:[#allocation3 + $0x90] sm:$0xff] %v3085
      %3118 = vst [vmem:[#allocation3 + $0x98] sm:$0xff] %v3086
      %3119 = vst [vmem:[#allocation3 + $0xa0] sm:$0xff] %v3087
      %3120 = vst [vmem:[#allocation3 + $0xa8] sm:$0xff] %v3088
      %3121 = vst [vmem:[#allocation3 + $0xb0] sm:$0xff] %v3089
      %3122 = vst [vmem:[#allocation3 + $0xb8] sm:$0xff] %v3090
      %3123 = vst [vmem:[#allocation3 + $0xc0] sm:$0xff] %v3091
      %3124 = vst [vmem:[#allocation3 + $0xc8] sm:$0xff] %v3092
      %3125 = vst [vmem:[#allocation3 + $0xd0] sm:$0xff] %v3093
      %3126 = vst [vmem:[#allocation3 + $0xd8] sm:$0xff] %v3094
      %3127 = vst [vmem:[#allocation3 + $0xe0] sm:$0xff] %v3095
      %3128 = vst [vmem:[#allocation3 + $0xe8] sm:$0xff] %v3096
      %3129 = vst [vmem:[#allocation3 + $0xf0] sm:$0xff] %v3097
      %3130 = vst [vmem:[#allocation3 + $0xf8] sm:$0xff] %v3098
      %v3131 = vld [vmem:[#allocation2 + $0x10] sm:$0xff]
      %v3132 = vld [vmem:[#allocation2 + $0x18] sm:$0xff]
      %v3133 = vld [vmem:[#allocation2 + $0x20] sm:$0xff]
      %v3134 = vld [vmem:[#allocation2 + $0x28] sm:$0xff]
      %v3135 = vld [vmem:[#allocation2 + $0x30] sm:$0xff]
      %v3136 = vld [vmem:[#allocation2 + $0x38] sm:$0xff]
      %v3137 = vld [vmem:[#allocation2 + $0x40] sm:$0xff]
      %v3138 = vld [vmem:[#allocation2 + $0x48] sm:$0xff]
      %v3139 = vld [vmem:[#allocation2 + $0x50] sm:$0xff]
      %v3140 = vld [vmem:[#allocation2 + $0x58] sm:$0xff]
      %v3141 = vld [vmem:[#allocation2 + $0x60] sm:$0xff]
      %v3142 = vld [vmem:[#allocation2 + $0x68] sm:$0xff]
      %v3143 = vld [vmem:[#allocation2 + $0x70] sm:$0xff]
      %v3144 = vld [vmem:[#allocation2 + $0x78] sm:$0xff]
      %v3145 = vld [vmem:[#allocation2 + $0x80] sm:$0xff]
      %v3146 = vld [vmem:[#allocation2 + $0x88] sm:$0xff]
      %v3147 = vld [vmem:[#allocation2 + $0x90] sm:$0xff]
      %v3148 = vld [vmem:[#allocation2 + $0x98] sm:$0xff]
      %v3149 = vld [vmem:[#allocation2 + $0xa0] sm:$0xff]
      %v3150 = vld [vmem:[#allocation2 + $0xa8] sm:$0xff]
      %v3151 = vld [vmem:[#allocation2 + $0xb0] sm:$0xff]
      %v3152 = vld [vmem:[#allocation2 + $0xb8] sm:$0xff]
      %v3153 = vld [vmem:[#allocation2 + $0xc0] sm:$0xff]
      %v3154 = vld [vmem:[#allocation2 + $0xc8] sm:$0xff]
      %v3155 = vld [vmem:[#allocation2 + $0xd0] sm:$0xff]
      %v3156 = vld [vmem:[#allocation2 + $0xd8] sm:$0xff]
      %v3157 = vld [vmem:[#allocation2 + $0xe0] sm:$0xff]
      %v3158 = vld [vmem:[#allocation2 + $0xe8] sm:$0xff]
      %v3159 = vld [vmem:[#allocation2 + $0xf0] sm:$0xff]
      %v3160 = vld [vmem:[#allocation2 + $0xf8] sm:$0xff]
      %v3161 = vld [vmem:[#allocation2 + $0x100] sm:$0xff]
      %v3162 = vld [vmem:[#allocation2 + $0x108] sm:$0xff]
      %v3163 = vrot.slane %v3131, 1
      %v3164 = vrot.slane %v3132, 1
      %v3165 = vrot.slane %v3133, 1
      %v3166 = vrot.slane %v3134, 1
      %v3167 = vrot.slane %v3135, 1
      %v3168 = vrot.slane %v3136, 1
      %v3169 = vrot.slane %v3137, 1
      %v3170 = vrot.slane %v3138, 1
      %v3171 = vrot.slane %v3139, 1
      %v3172 = vrot.slane %v3140, 1
      %v3173 = vrot.slane %v3141, 1
      %v3174 = vrot.slane %v3142, 1
      %v3175 = vrot.slane %v3143, 1
      %v3176 = vrot.slane %v3144, 1
      %v3177 = vrot.slane %v3145, 1
      %v3178 = vrot.slane %v3146, 1
      %v3179 = vrot.slane %v3147, 1
      %v3180 = vrot.slane %v3148, 1
      %v3181 = vrot.slane %v3149, 1
      %v3182 = vrot.slane %v3150, 1
      %v3183 = vrot.slane %v3151, 1
      %v3184 = vrot.slane %v3152, 1
      %v3185 = vrot.slane %v3153, 1
      %v3186 = vrot.slane %v3154, 1
      %v3187 = vrot.slane %v3155, 1
      %v3188 = vrot.slane %v3156, 1
      %v3189 = vrot.slane %v3157, 1
      %v3190 = vrot.slane %v3158, 1
      %v3191 = vrot.slane %v3159, 1
      %v3192 = vrot.slane %v3160, 1
      %v3193 = vrot.slane %v3161, 1
      %v3194 = vrot.slane %v3162, 1
      %v3195 = vsel %vm1831, %v3193, %v3194
      %v3196 = vsel %vm1831, %v3192, %v3193
      %v3197 = vsel %vm1831, %v3191, %v3192
      %v3198 = vsel %vm1831, %v3190, %v3191
      %v3199 = vsel %vm1831, %v3189, %v3190
      %v3200 = vsel %vm1831, %v3188, %v3189
      %v3201 = vsel %vm1831, %v3187, %v3188
      %v3202 = vsel %vm1831, %v3186, %v3187
      %v3203 = vsel %vm1831, %v3185, %v3186
      %v3204 = vsel %vm1831, %v3184, %v3185
      %v3205 = vsel %vm1831, %v3183, %v3184
      %v3206 = vsel %vm1831, %v3182, %v3183
      %v3207 = vsel %vm1831, %v3181, %v3182
      %v3208 = vsel %vm1831, %v3180, %v3181
      %v3209 = vsel %vm1831, %v3179, %v3180
      %v3210 = vsel %vm1831, %v3178, %v3179
      %v3211 = vsel %vm1831, %v3177, %v3178
      %v3212 = vsel %vm1831, %v3176, %v3177
      %v3213 = vsel %vm1831, %v3175, %v3176
      %v3214 = vsel %vm1831, %v3174, %v3175
      %v3215 = vsel %vm1831, %v3173, %v3174
      %v3216 = vsel %vm1831, %v3172, %v3173
      %v3217 = vsel %vm1831, %v3171, %v3172
      %v3218 = vsel %vm1831, %v3170, %v3171
      %v3219 = vsel %vm1831, %v3169, %v3170
      %v3220 = vsel %vm1831, %v3168, %v3169
      %v3221 = vsel %vm1831, %v3167, %v3168
      %v3222 = vsel %vm1831, %v3166, %v3167
      %v3223 = vsel %vm1831, %v3165, %v3166
      %v3224 = vsel %vm1831, %v3164, %v3165
      %v3225 = vsel %vm1831, %v3163, %v3164
      %v3226 = vsel %vm1831, %v3194, %v3163
      %v3227 = vsel %vm1896, %v3225, 0.0
      %v3228 = vsel %vm1897, %v3224, 0.0
      %v3229 = vsel %vm1898, %v3223, 0.0
      %v3230 = vsel %vm1899, %v3222, 0.0
      %v3231 = vsel %vm1900, %v3221, 0.0
      %v3232 = vsel %vm1901, %v3220, 0.0
      %v3233 = vsel %vm1902, %v3219, 0.0
      %v3234 = vsel %vm1903, %v3218, 0.0
      %v3235 = vsel %vm1904, %v3217, 0.0
      %v3236 = vsel %vm1905, %v3216, 0.0
      %v3237 = vsel %vm1906, %v3215, 0.0
      %v3238 = vsel %vm1907, %v3214, 0.0
      %v3239 = vsel %vm1908, %v3213, 0.0
      %v3240 = vsel %vm1909, %v3212, 0.0
      %v3241 = vsel %vm1910, %v3211, 0.0
      %v3242 = vsel %vm1911, %v3210, 0.0
      %v3243 = vsel %vm1912, %v3209, 0.0
      %v3244 = vsel %vm1913, %v3208, 0.0
      %v3245 = vsel %vm1914, %v3207, 0.0
      %v3246 = vsel %vm1915, %v3206, 0.0
      %v3247 = vsel %vm1916, %v3205, 0.0
      %v3248 = vsel %vm1917, %v3204, 0.0
      %v3249 = vsel %vm1918, %v3203, 0.0
      %v3250 = vsel %vm1919, %v3202, 0.0
      %v3251 = vsel %vm1920, %v3201, 0.0
      %v3252 = vsel %vm1921, %v3200, 0.0
      %v3253 = vsel %vm1922, %v3199, 0.0
      %v3254 = vsel %vm1923, %v3198, 0.0
      %v3255 = vsel %vm1924, %v3197, 0.0
      %v3256 = vsel %vm1925, %v3196, 0.0
      %v3257 = vsel %vm1926, %v3195, 0.0
      %v3258 = vsel %vm1927, %v3226, 0.0
      %v3259 = vld [vmem:[%s3 + $0x280] sm:$0xff]
      %v3260 = vld [vmem:[%s3 + $0x288] sm:$0xff]
      %v3261 = vld [vmem:[%s3 + $0x290] sm:$0xff]
      %v3262 = vld [vmem:[%s3 + $0x298] sm:$0xff]
      %v3263 = vld [vmem:[%s3 + $0x2a0] sm:$0xff]
      %v3264 = vld [vmem:[%s3 + $0x2a8] sm:$0xff]
      %v3265 = vld [vmem:[%s3 + $0x2b0] sm:$0xff]
      %v3266 = vld [vmem:[%s3 + $0x2b8] sm:$0xff]
      %v3267 = vld [vmem:[%s3 + $0x2c0] sm:$0xff]
      %v3268 = vld [vmem:[%s3 + $0x2c8] sm:$0xff]
      %v3269 = vld [vmem:[%s3 + $0x2d0] sm:$0xff]
      %v3270 = vld [vmem:[%s3 + $0x2d8] sm:$0xff]
      %v3271 = vld [vmem:[%s3 + $0x2e0] sm:$0xff]
      %v3272 = vld [vmem:[%s3 + $0x2e8] sm:$0xff]
      %v3273 = vld [vmem:[%s3 + $0x2f0] sm:$0xff]
      %v3274 = vld [vmem:[%s3 + $0x2f8] sm:$0xff]
      %3275 = vmatprep.subr.mxu0 0.0
      %3276 = vmatpush1.msra.mxu0 %v3259
      %3277 = vmatprep.subr.mxu0 0.0
      %3278 = vmatpush1.msra.mxu0 %v3260
      %3279 = vmatprep.subr.mxu0 0.0
      %3280 = vmatpush1.msra.mxu0 %v3261
      %3281 = vmatprep.subr.mxu0 0.0
      %3282 = vmatpush1.msra.mxu0 %v3262
      %3283 = vmatprep.subr.mxu0 0.0
      %3284 = vmatpush1.msra.mxu0 %v3263
      %3285 = vmatprep.subr.mxu0 0.0
      %3286 = vmatpush1.msra.mxu0 %v3264
      %3287 = vmatprep.subr.mxu0 0.0
      %3288 = vmatpush1.msra.mxu0 %v3265
      %3289 = vmatprep.subr.mxu0 0.0
      %3290 = vmatpush1.msra.mxu0 %v3266
      %3291 = vmatprep.subr.mxu0 0.0
      %3292 = vmatpush1.msra.mxu0 %v3267
      %3293 = vmatprep.subr.mxu0 0.0
      %3294 = vmatpush1.msra.mxu0 %v3268
      %3295 = vmatprep.subr.mxu0 0.0
      %3296 = vmatpush1.msra.mxu0 %v3269
      %3297 = vmatprep.subr.mxu0 0.0
      %3298 = vmatpush1.msra.mxu0 %v3270
      %3299 = vmatprep.subr.mxu0 0.0
      %3300 = vmatpush1.msra.mxu0 %v3271
      %3301 = vmatprep.subr.mxu0 0.0
      %3302 = vmatpush1.msra.mxu0 %v3272
      %3303 = vmatprep.subr.mxu0 0.0
      %3304 = vmatpush1.msra.mxu0 %v3273
      %3305 = vmatprep.subr.mxu0 0.0
      %3306 = vmatpush1.msra.mxu0 %v3274
      %3307 = vmatprep.subr.mxu0 0.0
      %3308 = vmatpush1.msra.mxu0 0.0
      %3309 = vmatprep.subr.mxu0 0.0
      %3310 = vmatpush1.msra.mxu0 0.0
      %3311 = vmatprep.subr.mxu0 0.0
      %3312 = vmatpush1.msra.mxu0 0.0
      %3313 = vmatprep.subr.mxu0 0.0
      %3314 = vmatpush1.msra.mxu0 0.0
      %3315 = vmatprep.subr.mxu0 0.0
      %3316 = vmatpush1.msra.mxu0 0.0
      %3317 = vmatprep.subr.mxu0 0.0
      %3318 = vmatpush1.msra.mxu0 0.0
      %3319 = vmatprep.subr.mxu0 0.0
      %3320 = vmatpush1.msra.mxu0 0.0
      %3321 = vmatprep.subr.mxu0 0.0
      %3322 = vmatpush1.msra.mxu0 0.0
      %3323 = vmatprep.subr.mxu0 0.0
      %3324 = vmatpush1.msra.mxu0 0.0
      %3325 = vmatprep.subr.mxu0 0.0
      %3326 = vmatpush1.msra.mxu0 0.0
      %3327 = vmatprep.subr.mxu0 0.0
      %3328 = vmatpush1.msra.mxu0 0.0
      %3329 = vmatprep.subr.mxu0 0.0
      %3330 = vmatpush1.msra.mxu0 0.0
      %3331 = vmatprep.subr.mxu0 0.0
      %3332 = vmatpush1.msra.mxu0 0.0
      %3333 = vmatprep.subr.mxu0 0.0
      %3334 = vmatpush1.msra.mxu0 0.0
      %3335 = vmatprep.subr.mxu0 0.0
      %3336 = vmatpush1.msra.mxu0 0.0
      %3337 = vmatprep.subr.mxu0 0.0
      %3338 = vmatpush1.msra.mxu0 0.0
      %3339 = vmatprep.mubr.f32.mxu0 0.0
      %3340 = vmatmul.mubr.f32.gmra.mrb[0].mxu0 %v3227
      %v3341 = vpop.f32.mrb[0].mxu0
      %v3342 = vadd.f32 0.0, %v3341
      %v3343 = vpop.f32.mrb[0].mxu0
      %3344 = vmatprep.mubr.f32.mxu0 0.0
      %3345 = vmatmul.mubr.f32.gmra.mrb[0].mxu0 %v3228
      %v3346 = vpop.f32.mrb[0].mxu0
      %v3347 = vadd.f32 0.0, %v3346
      %v3348 = vpop.f32.mrb[0].mxu0
      %3349 = vmatprep.mubr.f32.mxu0 0.0
      %3350 = vmatmul.mubr.f32.gmra.mrb[0].mxu0 %v3229
      %v3351 = vpop.f32.mrb[0].mxu0
      %v3352 = vadd.f32 0.0, %v3351
      %v3353 = vpop.f32.mrb[0].mxu0
      %3354 = vmatprep.mubr.f32.mxu0 0.0
      %3355 = vmatmul.mubr.f32.gmra.mrb[0].mxu0 %v3230
      %v3356 = vpop.f32.mrb[0].mxu0
      %v3357 = vadd.f32 0.0, %v3356
      %v3358 = vpop.f32.mrb[0].mxu0
      %3359 = vmatprep.mubr.f32.mxu0 0.0
      %3360 = vmatmul.mubr.f32.gmra.mrb[0].mxu0 %v3231
      %v3361 = vpop.f32.mrb[0].mxu0
      %v3362 = vadd.f32 0.0, %v3361
      %v3363 = vpop.f32.mrb[0].mxu0
      %3364 = vmatprep.mubr.f32.mxu0 0.0
      %3365 = vmatmul.mubr.f32.gmra.mrb[0].mxu0 %v3232
      %v3366 = vpop.f32.mrb[0].mxu0
      %v3367 = vadd.f32 0.0, %v3366
      %v3368 = vpop.f32.mrb[0].mxu0
      %3369 = vmatprep.mubr.f32.mxu0 0.0
      %3370 = vmatmul.mubr.f32.gmra.mrb[0].mxu0 %v3233
      %v3371 = vpop.f32.mrb[0].mxu0
      %v3372 = vadd.f32 0.0, %v3371
      %v3373 = vpop.f32.mrb[0].mxu0
      %3374 = vmatprep.mubr.f32.mxu0 0.0
      %3375 = vmatmul.mubr.f32.gmra.mrb[0].mxu0 %v3234
      %v3376 = vpop.f32.mrb[0].mxu0
      %v3377 = vadd.f32 0.0, %v3376
      %v3378 = vpop.f32.mrb[0].mxu0
      %3379 = vmatprep.mubr.f32.mxu0 0.0
      %3380 = vmatmul.mubr.f32.gmra.mrb[0].mxu0 %v3235
      %v3381 = vpop.f32.mrb[0].mxu0
      %v3382 = vadd.f32 0.0, %v3381
      %v3383 = vpop.f32.mrb[0].mxu0
      %3384 = vmatprep.mubr.f32.mxu0 0.0
      %3385 = vmatmul.mubr.f32.gmra.mrb[0].mxu0 %v3236
      %v3386 = vpop.f32.mrb[0].mxu0
      %v3387 = vadd.f32 0.0, %v3386
      %v3388 = vpop.f32.mrb[0].mxu0
      %3389 = vmatprep.mubr.f32.mxu0 0.0
      %3390 = vmatmul.mubr.f32.gmra.mrb[0].mxu0 %v3237
      %v3391 = vpop.f32.mrb[0].mxu0
      %v3392 = vadd.f32 0.0, %v3391
      %v3393 = vpop.f32.mrb[0].mxu0
      %3394 = vmatprep.mubr.f32.mxu0 0.0
      %3395 = vmatmul.mubr.f32.gmra.mrb[0].mxu0 %v3238
      %v3396 = vpop.f32.mrb[0].mxu0
      %v3397 = vadd.f32 0.0, %v3396
      %v3398 = vpop.f32.mrb[0].mxu0
      %3399 = vmatprep.mubr.f32.mxu0 0.0
      %3400 = vmatmul.mubr.f32.gmra.mrb[0].mxu0 %v3239
      %v3401 = vpop.f32.mrb[0].mxu0
      %v3402 = vadd.f32 0.0, %v3401
      %v3403 = vpop.f32.mrb[0].mxu0
      %3404 = vmatprep.mubr.f32.mxu0 0.0
      %3405 = vmatmul.mubr.f32.gmra.mrb[0].mxu0 %v3240
      %v3406 = vpop.f32.mrb[0].mxu0
      %v3407 = vadd.f32 0.0, %v3406
      %v3408 = vpop.f32.mrb[0].mxu0
      %3409 = vmatprep.mubr.f32.mxu0 0.0
      %3410 = vmatmul.mubr.f32.gmra.mrb[0].mxu0 %v3241
      %v3411 = vpop.f32.mrb[0].mxu0
      %v3412 = vadd.f32 0.0, %v3411
      %v3413 = vpop.f32.mrb[0].mxu0
      %3414 = vmatprep.mubr.f32.mxu0 0.0
      %3415 = vmatmul.mubr.f32.gmra.mrb[0].mxu0 %v3242
      %v3416 = vpop.f32.mrb[0].mxu0
      %v3417 = vadd.f32 0.0, %v3416
      %v3418 = vpop.f32.mrb[0].mxu0
      %3419 = vmatprep.mubr.f32.mxu0 0.0
      %3420 = vmatmul.mubr.f32.gmra.mrb[0].mxu0 %v3243
      %v3421 = vpop.f32.mrb[0].mxu0
      %v3422 = vadd.f32 0.0, %v3421
      %v3423 = vpop.f32.mrb[0].mxu0
      %3424 = vmatprep.mubr.f32.mxu0 0.0
      %3425 = vmatmul.mubr.f32.gmra.mrb[0].mxu0 %v3244
      %v3426 = vpop.f32.mrb[0].mxu0
      %v3427 = vadd.f32 0.0, %v3426
      %v3428 = vpop.f32.mrb[0].mxu0
      %3429 = vmatprep.mubr.f32.mxu0 0.0
      %3430 = vmatmul.mubr.f32.gmra.mrb[0].mxu0 %v3245
      %v3431 = vpop.f32.mrb[0].mxu0
      %v3432 = vadd.f32 0.0, %v3431
      %v3433 = vpop.f32.mrb[0].mxu0
      %3434 = vmatprep.mubr.f32.mxu0 0.0
      %3435 = vmatmul.mubr.f32.gmra.mrb[0].mxu0 %v3246
      %v3436 = vpop.f32.mrb[0].mxu0
      %v3437 = vadd.f32 0.0, %v3436
      %v3438 = vpop.f32.mrb[0].mxu0
      %3439 = vmatprep.mubr.f32.mxu0 0.0
      %3440 = vmatmul.mubr.f32.gmra.mrb[0].mxu0 %v3247
      %v3441 = vpop.f32.mrb[0].mxu0
      %v3442 = vadd.f32 0.0, %v3441
      %v3443 = vpop.f32.mrb[0].mxu0
      %3444 = vmatprep.mubr.f32.mxu0 0.0
      %3445 = vmatmul.mubr.f32.gmra.mrb[0].mxu0 %v3248
      %v3446 = vpop.f32.mrb[0].mxu0
      %v3447 = vadd.f32 0.0, %v3446
      %v3448 = vpop.f32.mrb[0].mxu0
      %3449 = vmatprep.mubr.f32.mxu0 0.0
      %3450 = vmatmul.mubr.f32.gmra.mrb[0].mxu0 %v3249
      %v3451 = vpop.f32.mrb[0].mxu0
      %v3452 = vadd.f32 0.0, %v3451
      %v3453 = vpop.f32.mrb[0].mxu0
      %3454 = vmatprep.mubr.f32.mxu0 0.0
      %3455 = vmatmul.mubr.f32.gmra.mrb[0].mxu0 %v3250
      %v3456 = vpop.f32.mrb[0].mxu0
      %v3457 = vadd.f32 0.0, %v3456
      %v3458 = vpop.f32.mrb[0].mxu0
      %3459 = vmatprep.mubr.f32.mxu0 0.0
      %3460 = vmatmul.mubr.f32.gmra.mrb[0].mxu0 %v3251
      %v3461 = vpop.f32.mrb[0].mxu0
      %v3462 = vadd.f32 0.0, %v3461
      %v3463 = vpop.f32.mrb[0].mxu0
      %3464 = vmatprep.mubr.f32.mxu0 0.0
      %3465 = vmatmul.mubr.f32.gmra.mrb[0].mxu0 %v3252
      %v3466 = vpop.f32.mrb[0].mxu0
      %v3467 = vadd.f32 0.0, %v3466
      %v3468 = vpop.f32.mrb[0].mxu0
      %3469 = vmatprep.mubr.f32.mxu0 0.0
      %3470 = vmatmul.mubr.f32.gmra.mrb[0].mxu0 %v3253
      %v3471 = vpop.f32.mrb[0].mxu0
      %v3472 = vadd.f32 0.0, %v3471
      %v3473 = vpop.f32.mrb[0].mxu0
      %3474 = vmatprep.mubr.f32.mxu0 0.0
      %3475 = vmatmul.mubr.f32.gmra.mrb[0].mxu0 %v3254
      %v3476 = vpop.f32.mrb[0].mxu0
      %v3477 = vadd.f32 0.0, %v3476
      %v3478 = vpop.f32.mrb[0].mxu0
      %3479 = vmatprep.mubr.f32.mxu0 0.0
      %3480 = vmatmul.mubr.f32.gmra.mrb[0].mxu0 %v3255
      %v3481 = vpop.f32.mrb[0].mxu0
      %v3482 = vadd.f32 0.0, %v3481
      %v3483 = vpop.f32.mrb[0].mxu0
      %3484 = vmatprep.mubr.f32.mxu0 0.0
      %3485 = vmatmul.mubr.f32.gmra.mrb[0].mxu0 %v3256
      %v3486 = vpop.f32.mrb[0].mxu0
      %v3487 = vadd.f32 0.0, %v3486
      %v3488 = vpop.f32.mrb[0].mxu0
      %3489 = vmatprep.mubr.f32.mxu0 0.0
      %3490 = vmatmul.mubr.f32.gmra.mrb[0].mxu0 %v3257
      %v3491 = vpop.f32.mrb[0].mxu0
      %v3492 = vadd.f32 0.0, %v3491
      %v3493 = vpop.f32.mrb[0].mxu0
      %3494 = vmatprep.mubr.f32.mxu0 0.0
      %3495 = vmatmul.mubr.f32.gmra.mrb[0].mxu0 %v3258
      %v3496 = vpop.f32.mrb[0].mxu0
      %v3497 = vadd.f32 0.0, %v3496
      %v3498 = vpop.f32.mrb[0].mxu0
      %3499 = vdwg.mxu0
      %v3500 = vld [vmem:[#allocation3] sm:$0xff]
      %v3501 = vld [vmem:[#allocation3 + $0x8] sm:$0xff]
      %v3502 = vld [vmem:[#allocation3 + $0x10] sm:$0xff]
      %v3503 = vld [vmem:[#allocation3 + $0x18] sm:$0xff]
      %v3504 = vld [vmem:[#allocation3 + $0x20] sm:$0xff]
      %v3505 = vld [vmem:[#allocation3 + $0x28] sm:$0xff]
      %v3506 = vld [vmem:[#allocation3 + $0x30] sm:$0xff]
      %v3507 = vld [vmem:[#allocation3 + $0x38] sm:$0xff]
      %v3508 = vld [vmem:[#allocation3 + $0x40] sm:$0xff]
      %v3509 = vld [vmem:[#allocation3 + $0x48] sm:$0xff]
      %v3510 = vld [vmem:[#allocation3 + $0x50] sm:$0xff]
      %v3511 = vld [vmem:[#allocation3 + $0x58] sm:$0xff]
      %v3512 = vld [vmem:[#allocation3 + $0x60] sm:$0xff]
      %v3513 = vld [vmem:[#allocation3 + $0x68] sm:$0xff]
      %v3514 = vld [vmem:[#allocation3 + $0x70] sm:$0xff]
      %v3515 = vld [vmem:[#allocation3 + $0x78] sm:$0xff]
      %v3516 = vld [vmem:[#allocation3 + $0x80] sm:$0xff]
      %v3517 = vld [vmem:[#allocation3 + $0x88] sm:$0xff]
      %v3518 = vld [vmem:[#allocation3 + $0x90] sm:$0xff]
      %v3519 = vld [vmem:[#allocation3 + $0x98] sm:$0xff]
      %v3520 = vld [vmem:[#allocation3 + $0xa0] sm:$0xff]
      %v3521 = vld [vmem:[#allocation3 + $0xa8] sm:$0xff]
      %v3522 = vld [vmem:[#allocation3 + $0xb0] sm:$0xff]
      %v3523 = vld [vmem:[#allocation3 + $0xb8] sm:$0xff]
      %v3524 = vld [vmem:[#allocation3 + $0xc0] sm:$0xff]
      %v3525 = vld [vmem:[#allocation3 + $0xc8] sm:$0xff]
      %v3526 = vld [vmem:[#allocation3 + $0xd0] sm:$0xff]
      %v3527 = vld [vmem:[#allocation3 + $0xd8] sm:$0xff]
      %v3528 = vld [vmem:[#allocation3 + $0xe0] sm:$0xff]
      %v3529 = vld [vmem:[#allocation3 + $0xe8] sm:$0xff]
      %v3530 = vld [vmem:[#allocation3 + $0xf0] sm:$0xff]
      %v3531 = vld [vmem:[#allocation3 + $0xf8] sm:$0xff]
      %v3532 = vadd.f32 %v3500, %v3342
      %v3533 = vadd.f32 %v3501, %v3347
      %v3534 = vadd.f32 %v3502, %v3352
      %v3535 = vadd.f32 %v3503, %v3357
      %v3536 = vadd.f32 %v3504, %v3362
      %v3537 = vadd.f32 %v3505, %v3367
      %v3538 = vadd.f32 %v3506, %v3372
      %v3539 = vadd.f32 %v3507, %v3377
      %v3540 = vadd.f32 %v3508, %v3382
      %v3541 = vadd.f32 %v3509, %v3387
      %v3542 = vadd.f32 %v3510, %v3392
      %v3543 = vadd.f32 %v3511, %v3397
      %v3544 = vadd.f32 %v3512, %v3402
      %v3545 = vadd.f32 %v3513, %v3407
      %v3546 = vadd.f32 %v3514, %v3412
      %v3547 = vadd.f32 %v3515, %v3417
      %v3548 = vadd.f32 %v3516, %v3422
      %v3549 = vadd.f32 %v3517, %v3427
      %v3550 = vadd.f32 %v3518, %v3432
      %v3551 = vadd.f32 %v3519, %v3437
      %v3552 = vadd.f32 %v3520, %v3442
      %v3553 = vadd.f32 %v3521, %v3447
      %v3554 = vadd.f32 %v3522, %v3452
      %v3555 = vadd.f32 %v3523, %v3457
      %v3556 = vadd.f32 %v3524, %v3462
      %v3557 = vadd.f32 %v3525, %v3467
      %v3558 = vadd.f32 %v3526, %v3472
      %v3559 = vadd.f32 %v3527, %v3477
      %v3560 = vadd.f32 %v3528, %v3482
      %v3561 = vadd.f32 %v3529, %v3487
      %v3562 = vadd.f32 %v3530, %v3492
      %v3563 = vadd.f32 %v3531, %v3497
      %3564 = vst [vmem:[#allocation3] sm:$0xff] %v3532
      %3565 = vst [vmem:[#allocation3 + $0x8] sm:$0xff] %v3533
      %3566 = vst [vmem:[#allocation3 + $0x10] sm:$0xff] %v3534
      %3567 = vst [vmem:[#allocation3 + $0x18] sm:$0xff] %v3535
      %3568 = vst [vmem:[#allocation3 + $0x20] sm:$0xff] %v3536
      %3569 = vst [vmem:[#allocation3 + $0x28] sm:$0xff] %v3537
      %3570 = vst [vmem:[#allocation3 + $0x30] sm:$0xff] %v3538
      %3571 = vst [vmem:[#allocation3 + $0x38] sm:$0xff] %v3539
      %3572 = vst [vmem:[#allocation3 + $0x40] sm:$0xff] %v3540
      %3573 = vst [vmem:[#allocation3 + $0x48] sm:$0xff] %v3541
      %3574 = vst [vmem:[#allocation3 + $0x50] sm:$0xff] %v3542
      %3575 = vst [vmem:[#allocation3 + $0x58] sm:$0xff] %v3543
      %3576 = vst [vmem:[#allocation3 + $0x60] sm:$0xff] %v3544
      %3577 = vst [vmem:[#allocation3 + $0x68] sm:$0xff] %v3545
      %3578 = vst [vmem:[#allocation3 + $0x70] sm:$0xff] %v3546
      %3579 = vst [vmem:[#allocation3 + $0x78] sm:$0xff] %v3547
      %3580 = vst [vmem:[#allocation3 + $0x80] sm:$0xff] %v3548
      %3581 = vst [vmem:[#allocation3 + $0x88] sm:$0xff] %v3549
      %3582 = vst [vmem:[#allocation3 + $0x90] sm:$0xff] %v3550
      %3583 = vst [vmem:[#allocation3 + $0x98] sm:$0xff] %v3551
      %3584 = vst [vmem:[#allocation3 + $0xa0] sm:$0xff] %v3552
      %3585 = vst [vmem:[#allocation3 + $0xa8] sm:$0xff] %v3553
      %3586 = vst [vmem:[#allocation3 + $0xb0] sm:$0xff] %v3554
      %3587 = vst [vmem:[#allocation3 + $0xb8] sm:$0xff] %v3555
      %3588 = vst [vmem:[#allocation3 + $0xc0] sm:$0xff] %v3556
      %3589 = vst [vmem:[#allocation3 + $0xc8] sm:$0xff] %v3557
      %3590 = vst [vmem:[#allocation3 + $0xd0] sm:$0xff] %v3558
      %3591 = vst [vmem:[#allocation3 + $0xd8] sm:$0xff] %v3559
      %3592 = vst [vmem:[#allocation3 + $0xe0] sm:$0xff] %v3560
      %3593 = vst [vmem:[#allocation3 + $0xe8] sm:$0xff] %v3561
      %3594 = vst [vmem:[#allocation3 + $0xf0] sm:$0xff] %v3562
      %3595 = vst [vmem:[#allocation3 + $0xf8] sm:$0xff] %v3563
      %v3596 = vld [vmem:[#allocation2 + $0x20] sm:$0xff]
      %v3597 = vld [vmem:[#allocation2 + $0x28] sm:$0xff]
      %v3598 = vld [vmem:[#allocation2 + $0x30] sm:$0xff]
      %v3599 = vld [vmem:[#allocation2 + $0x38] sm:$0xff]
      %v3600 = vld [vmem:[#allocation2 + $0x40] sm:$0xff]
      %v3601 = vld [vmem:[#allocation2 + $0x48] sm:$0xff]
      %v3602 = vld [vmem:[#allocation2 + $0x50] sm:$0xff]
      %v3603 = vld [vmem:[#allocation2 + $0x58] sm:$0xff]
      %v3604 = vld [vmem:[#allocation2 + $0x60] sm:$0xff]
      %v3605 = vld [vmem:[#allocation2 + $0x68] sm:$0xff]
      %v3606 = vld [vmem:[#allocation2 + $0x70] sm:$0xff]
      %v3607 = vld [vmem:[#allocation2 + $0x78] sm:$0xff]
      %v3608 = vld [vmem:[#allocation2 + $0x80] sm:$0xff]
      %v3609 = vld [vmem:[#allocation2 + $0x88] sm:$0xff]
      %v3610 = vld [vmem:[#allocation2 + $0x90] sm:$0xff]
      %v3611 = vld [vmem:[#allocation2 + $0x98] sm:$0xff]
      %v3612 = vld [vmem:[#allocation2 + $0xa0] sm:$0xff]
      %v3613 = vld [vmem:[#allocation2 + $0xa8] sm:$0xff]
      %v3614 = vld [vmem:[#allocation2 + $0xb0] sm:$0xff]
      %v3615 = vld [vmem:[#allocation2 + $0xb8] sm:$0xff]
      %v3616 = vld [vmem:[#allocation2 + $0xc0] sm:$0xff]
      %v3617 = vld [vmem:[#allocation2 + $0xc8] sm:$0xff]
      %v3618 = vld [vmem:[#allocation2 + $0xd0] sm:$0xff]
      %v3619 = vld [vmem:[#allocation2 + $0xd8] sm:$0xff]
      %v3620 = vld [vmem:[#allocation2 + $0xe0] sm:$0xff]
      %v3621 = vld [vmem:[#allocation2 + $0xe8] sm:$0xff]
      %v3622 = vld [vmem:[#allocation2 + $0xf0] sm:$0xff]
      %v3623 = vld [vmem:[#allocation2 + $0xf8] sm:$0xff]
      %v3624 = vld [vmem:[#allocation2 + $0x100] sm:$0xff]
      %v3625 = vld [vmem:[#allocation2 + $0x108] sm:$0xff]
      %v3626 = vld [vmem:[#allocation2 + $0x110] sm:$0xff]
      %v3627 = vld [vmem:[#allocation2 + $0x118] sm:$0xff]
      %v3628 = vrot.slane %v3596, 7
      %v3629 = vrot.slane %v3597, 7
      %v3630 = vrot.slane %v3598, 7
      %v3631 = vrot.slane %v3599, 7
      %v3632 = vrot.slane %v3600, 7
      %v3633 = vrot.slane %v3601, 7
      %v3634 = vrot.slane %v3602, 7
      %v3635 = vrot.slane %v3603, 7
      %v3636 = vrot.slane %v3604, 7
      %v3637 = vrot.slane %v3605, 7
      %v3638 = vrot.slane %v3606, 7
      %v3639 = vrot.slane %v3607, 7
      %v3640 = vrot.slane %v3608, 7
      %v3641 = vrot.slane %v3609, 7
      %v3642 = vrot.slane %v3610, 7
      %v3643 = vrot.slane %v3611, 7
      %v3644 = vrot.slane %v3612, 7
      %v3645 = vrot.slane %v3613, 7
      %v3646 = vrot.slane %v3614, 7
      %v3647 = vrot.slane %v3615, 7
      %v3648 = vrot.slane %v3616, 7
      %v3649 = vrot.slane %v3617, 7
      %v3650 = vrot.slane %v3618, 7
      %v3651 = vrot.slane %v3619, 7
      %v3652 = vrot.slane %v3620, 7
      %v3653 = vrot.slane %v3621, 7
      %v3654 = vrot.slane %v3622, 7
      %v3655 = vrot.slane %v3623, 7
      %v3656 = vrot.slane %v3624, 7
      %v3657 = vrot.slane %v3625, 7
      %v3658 = vrot.slane %v3626, 7
      %v3659 = vrot.slane %v3627, 7
      %v3660 = vsel %vm996, %v3658, %v3659
      %v3661 = vsel %vm996, %v3657, %v3658
      %v3662 = vsel %vm996, %v3656, %v3657
      %v3663 = vsel %vm996, %v3655, %v3656
      %v3664 = vsel %vm996, %v3654, %v3655
      %v3665 = vsel %vm996, %v3653, %v3654
      %v3666 = vsel %vm996, %v3652, %v3653
      %v3667 = vsel %vm996, %v3651, %v3652
      %v3668 = vsel %vm996, %v3650, %v3651
      %v3669 = vsel %vm996, %v3649, %v3650
      %v3670 = vsel %vm996, %v3648, %v3649
      %v3671 = vsel %vm996, %v3647, %v3648
      %v3672 = vsel %vm996, %v3646, %v3647
      %v3673 = vsel %vm996, %v3645, %v3646
      %v3674 = vsel %vm996, %v3644, %v3645
      %v3675 = vsel %vm996, %v3643, %v3644
      %v3676 = vsel %vm996, %v3642, %v3643
      %v3677 = vsel %vm996, %v3641, %v3642
      %v3678 = vsel %vm996, %v3640, %v3641
      %v3679 = vsel %vm996, %v3639, %v3640
      %v3680 = vsel %vm996, %v3638, %v3639
      %v3681 = vsel %vm996, %v3637, %v3638
      %v3682 = vsel %vm996, %v3636, %v3637
      %v3683 = vsel %vm996, %v3635, %v3636
      %v3684 = vsel %vm996, %v3634, %v3635
      %v3685 = vsel %vm996, %v3633, %v3634
      %v3686 = vsel %vm996, %v3632, %v3633
      %v3687 = vsel %vm996, %v3631, %v3632
      %v3688 = vsel %vm996, %v3630, %v3631
      %v3689 = vsel %vm996, %v3629, %v3630
      %v3690 = vsel %vm996, %v3628, %v3629
      %v3691 = vsel %vm996, %v3659, %v3628
      %v3692 = vsel %vm1061, %v3691, 0.0
      %v3693 = vsel %vm1062, %v3690, 0.0
      %v3694 = vsel %vm1063, %v3689, 0.0
      %v3695 = vsel %vm1064, %v3688, 0.0
      %v3696 = vsel %vm1065, %v3687, 0.0
      %v3697 = vsel %vm1066, %v3686, 0.0
      %v3698 = vsel %vm1067, %v3685, 0.0
      %v3699 = vsel %vm1068, %v3684, 0.0
      %v3700 = vsel %vm1069, %v3683, 0.0
      %v3701 = vsel %vm1070, %v3682, 0.0
      %v3702 = vsel %vm1071, %v3681, 0.0
      %v3703 = vsel %vm1072, %v3680, 0.0
      %v3704 = vsel %vm1073, %v3679, 0.0
      %v3705 = vsel %vm1074, %v3678, 0.0
      %v3706 = vsel %vm1075, %v3677, 0.0
      %v3707 = vsel %vm1076, %v3676, 0.0
      %v3708 = vsel %vm1077, %v3675, 0.0
      %v3709 = vsel %vm1078, %v3674, 0.0
      %v3710 = vsel %vm1079, %v3673, 0.0
      %v3711 = vsel %vm1080, %v3672, 0.0
      %v3712 = vsel %vm1081, %v3671, 0.0
      %v3713 = vsel %vm1082, %v3670, 0.0
      %v3714 = vsel %vm1083, %v3669, 0.0
      %v3715 = vsel %vm1084, %v3668, 0.0
      %v3716 = vsel %vm1085, %v3667, 0.0
      %v3717 = vsel %vm1086, %v3666, 0.0
      %v3718 = vsel %vm1087, %v3665, 0.0
      %v3719 = vsel %vm1088, %v3664, 0.0
      %v3720 = vsel %vm1089, %v3663, 0.0
      %v3721 = vsel %vm1090, %v3662, 0.0
      %v3722 = vsel %vm1091, %v3661, 0.0
      %v3723 = vsel %vm1092, %v3660, 0.0
      %v3724 = vld [vmem:[%s3 + $0x300] sm:$0xff]
      %v3725 = vld [vmem:[%s3 + $0x308] sm:$0xff]
      %v3726 = vld [vmem:[%s3 + $0x310] sm:$0xff]
      %v3727 = vld [vmem:[%s3 + $0x318] sm:$0xff]
      %v3728 = vld [vmem:[%s3 + $0x320] sm:$0xff]
      %v3729 = vld [vmem:[%s3 + $0x328] sm:$0xff]
      %v3730 = vld [vmem:[%s3 + $0x330] sm:$0xff]
      %v3731 = vld [vmem:[%s3 + $0x338] sm:$0xff]
      %v3732 = vld [vmem:[%s3 + $0x340] sm:$0xff]
      %v3733 = vld [vmem:[%s3 + $0x348] sm:$0xff]
      %v3734 = vld [vmem:[%s3 + $0x350] sm:$0xff]
      %v3735 = vld [vmem:[%s3 + $0x358] sm:$0xff]
      %v3736 = vld [vmem:[%s3 + $0x360] sm:$0xff]
      %v3737 = vld [vmem:[%s3 + $0x368] sm:$0xff]
      %v3738 = vld [vmem:[%s3 + $0x370] sm:$0xff]
      %v3739 = vld [vmem:[%s3 + $0x378] sm:$0xff]
      %3740 = vmatprep.subr.mxu0 0.0
      %3741 = vmatpush1.msra.mxu0 %v3724
      %3742 = vmatprep.subr.mxu0 0.0
      %3743 = vmatpush1.msra.mxu0 %v3725
      %3744 = vmatprep.subr.mxu0 0.0
      %3745 = vmatpush1.msra.mxu0 %v3726
      %3746 = vmatprep.subr.mxu0 0.0
      %3747 = vmatpush1.msra.mxu0 %v3727
      %3748 = vmatprep.subr.mxu0 0.0
      %3749 = vmatpush1.msra.mxu0 %v3728
      %3750 = vmatprep.subr.mxu0 0.0
      %3751 = vmatpush1.msra.mxu0 %v3729
      %3752 = vmatprep.subr.mxu0 0.0
      %3753 = vmatpush1.msra.mxu0 %v3730
      %3754 = vmatprep.subr.mxu0 0.0
      %3755 = vmatpush1.msra.mxu0 %v3731
      %3756 = vmatprep.subr.mxu0 0.0
      %3757 = vmatpush1.msra.mxu0 %v3732
      %3758 = vmatprep.subr.mxu0 0.0
      %3759 = vmatpush1.msra.mxu0 %v3733
      %3760 = vmatprep.subr.mxu0 0.0
      %3761 = vmatpush1.msra.mxu0 %v3734
      %3762 = vmatprep.subr.mxu0 0.0
      %3763 = vmatpush1.msra.mxu0 %v3735
      %3764 = vmatprep.subr.mxu0 0.0
      %3765 = vmatpush1.msra.mxu0 %v3736
      %3766 = vmatprep.subr.mxu0 0.0
      %3767 = vmatpush1.msra.mxu0 %v3737
      %3768 = vmatprep.subr.mxu0 0.0
      %3769 = vmatpush1.msra.mxu0 %v3738
      %3770 = vmatprep.subr.mxu0 0.0
      %3771 = vmatpush1.msra.mxu0 %v3739
      %3772 = vmatprep.subr.mxu0 0.0
      %3773 = vmatpush1.msra.mxu0 0.0
      %3774 = vmatprep.subr.mxu0 0.0
      %3775 = vmatpush1.msra.mxu0 0.0
      %3776 = vmatprep.subr.mxu0 0.0
      %3777 = vmatpush1.msra.mxu0 0.0
      %3778 = vmatprep.subr.mxu0 0.0
      %3779 = vmatpush1.msra.mxu0 0.0
      %3780 = vmatprep.subr.mxu0 0.0
      %3781 = vmatpush1.msra.mxu0 0.0
      %3782 = vmatprep.subr.mxu0 0.0
      %3783 = vmatpush1.msra.mxu0 0.0
      %3784 = vmatprep.subr.mxu0 0.0
      %3785 = vmatpush1.msra.mxu0 0.0
      %3786 = vmatprep.subr.mxu0 0.0
      %3787 = vmatpush1.msra.mxu0 0.0
      %3788 = vmatprep.subr.mxu0 0.0
      %3789 = vmatpush1.msra.mxu0 0.0
      %3790 = vmatprep.subr.mxu0 0.0
      %3791 = vmatpush1.msra.mxu0 0.0
      %3792 = vmatprep.subr.mxu0 0.0
      %3793 = vmatpush1.msra.mxu0 0.0
      %3794 = vmatprep.subr.mxu0 0.0
      %3795 = vmatpush1.msra.mxu0 0.0
      %3796 = vmatprep.subr.mxu0 0.0
      %3797 = vmatpush1.msra.mxu0 0.0
      %3798 = vmatprep.subr.mxu0 0.0
      %3799 = vmatpush1.msra.mxu0 0.0
      %3800 = vmatprep.subr.mxu0 0.0
      %3801 = vmatpush1.msra.mxu0 0.0
      %3802 = vmatprep.subr.mxu0 0.0
      %3803 = vmatpush1.msra.mxu0 0.0
      %3804 = vmatprep.mubr.f32.mxu0 0.0
      %3805 = vmatmul.mubr.f32.gmra.mrb[0].mxu0 %v3692
      %v3806 = vpop.f32.mrb[0].mxu0
      %v3807 = vadd.f32 0.0, %v3806
      %v3808 = vpop.f32.mrb[0].mxu0
      %3809 = vmatprep.mubr.f32.mxu0 0.0
      %3810 = vmatmul.mubr.f32.gmra.mrb[0].mxu0 %v3693
      %v3811 = vpop.f32.mrb[0].mxu0
      %v3812 = vadd.f32 0.0, %v3811
      %v3813 = vpop.f32.mrb[0].mxu0
      %3814 = vmatprep.mubr.f32.mxu0 0.0
      %3815 = vmatmul.mubr.f32.gmra.mrb[0].mxu0 %v3694
      %v3816 = vpop.f32.mrb[0].mxu0
      %v3817 = vadd.f32 0.0, %v3816
      %v3818 = vpop.f32.mrb[0].mxu0
      %3819 = vmatprep.mubr.f32.mxu0 0.0
      %3820 = vmatmul.mubr.f32.gmra.mrb[0].mxu0 %v3695
      %v3821 = vpop.f32.mrb[0].mxu0
      %v3822 = vadd.f32 0.0, %v3821
      %v3823 = vpop.f32.mrb[0].mxu0
      %3824 = vmatprep.mubr.f32.mxu0 0.0
      %3825 = vmatmul.mubr.f32.gmra.mrb[0].mxu0 %v3696
      %v3826 = vpop.f32.mrb[0].mxu0
      %v3827 = vadd.f32 0.0, %v3826
      %v3828 = vpop.f32.mrb[0].mxu0
      %3829 = vmatprep.mubr.f32.mxu0 0.0
      %3830 = vmatmul.mubr.f32.gmra.mrb[0].mxu0 %v3697
      %v3831 = vpop.f32.mrb[0].mxu0
      %v3832 = vadd.f32 0.0, %v3831
      %v3833 = vpop.f32.mrb[0].mxu0
      %3834 = vmatprep.mubr.f32.mxu0 0.0
      %3835 = vmatmul.mubr.f32.gmra.mrb[0].mxu0 %v3698
      %v3836 = vpop.f32.mrb[0].mxu0
      %v3837 = vadd.f32 0.0, %v3836
      %v3838 = vpop.f32.mrb[0].mxu0
      %3839 = vmatprep.mubr.f32.mxu0 0.0
      %3840 = vmatmul.mubr.f32.gmra.mrb[0].mxu0 %v3699
      %v3841 = vpop.f32.mrb[0].mxu0
      %v3842 = vadd.f32 0.0, %v3841
      %v3843 = vpop.f32.mrb[0].mxu0
      %3844 = vmatprep.mubr.f32.mxu0 0.0
      %3845 = vmatmul.mubr.f32.gmra.mrb[0].mxu0 %v3700
      %v3846 = vpop.f32.mrb[0].mxu0
      %v3847 = vadd.f32 0.0, %v3846
      %v3848 = vpop.f32.mrb[0].mxu0
      %3849 = vmatprep.mubr.f32.mxu0 0.0
      %3850 = vmatmul.mubr.f32.gmra.mrb[0].mxu0 %v3701
      %v3851 = vpop.f32.mrb[0].mxu0
      %v3852 = vadd.f32 0.0, %v3851
      %v3853 = vpop.f32.mrb[0].mxu0
      %3854 = vmatprep.mubr.f32.mxu0 0.0
      %3855 = vmatmul.mubr.f32.gmra.mrb[0].mxu0 %v3702
      %v3856 = vpop.f32.mrb[0].mxu0
      %v3857 = vadd.f32 0.0, %v3856
      %v3858 = vpop.f32.mrb[0].mxu0
      %3859 = vmatprep.mubr.f32.mxu0 0.0
      %3860 = vmatmul.mubr.f32.gmra.mrb[0].mxu0 %v3703
      %v3861 = vpop.f32.mrb[0].mxu0
      %v3862 = vadd.f32 0.0, %v3861
      %v3863 = vpop.f32.mrb[0].mxu0
      %3864 = vmatprep.mubr.f32.mxu0 0.0
      %3865 = vmatmul.mubr.f32.gmra.mrb[0].mxu0 %v3704
      %v3866 = vpop.f32.mrb[0].mxu0
      %v3867 = vadd.f32 0.0, %v3866
      %v3868 = vpop.f32.mrb[0].mxu0
      %3869 = vmatprep.mubr.f32.mxu0 0.0
      %3870 = vmatmul.mubr.f32.gmra.mrb[0].mxu0 %v3705
      %v3871 = vpop.f32.mrb[0].mxu0
      %v3872 = vadd.f32 0.0, %v3871
      %v3873 = vpop.f32.mrb[0].mxu0
      %3874 = vmatprep.mubr.f32.mxu0 0.0
      %3875 = vmatmul.mubr.f32.gmra.mrb[0].mxu0 %v3706
      %v3876 = vpop.f32.mrb[0].mxu0
      %v3877 = vadd.f32 0.0, %v3876
      %v3878 = vpop.f32.mrb[0].mxu0
      %3879 = vmatprep.mubr.f32.mxu0 0.0
      %3880 = vmatmul.mubr.f32.gmra.mrb[0].mxu0 %v3707
      %v3881 = vpop.f32.mrb[0].mxu0
      %v3882 = vadd.f32 0.0, %v3881
      %v3883 = vpop.f32.mrb[0].mxu0
      %3884 = vmatprep.mubr.f32.mxu0 0.0
      %3885 = vmatmul.mubr.f32.gmra.mrb[0].mxu0 %v3708
      %v3886 = vpop.f32.mrb[0].mxu0
      %v3887 = vadd.f32 0.0, %v3886
      %v3888 = vpop.f32.mrb[0].mxu0
      %3889 = vmatprep.mubr.f32.mxu0 0.0
      %3890 = vmatmul.mubr.f32.gmra.mrb[0].mxu0 %v3709
      %v3891 = vpop.f32.mrb[0].mxu0
      %v3892 = vadd.f32 0.0, %v3891
      %v3893 = vpop.f32.mrb[0].mxu0
      %3894 = vmatprep.mubr.f32.mxu0 0.0
      %3895 = vmatmul.mubr.f32.gmra.mrb[0].mxu0 %v3710
      %v3896 = vpop.f32.mrb[0].mxu0
      %v3897 = vadd.f32 0.0, %v3896
      %v3898 = vpop.f32.mrb[0].mxu0
      %3899 = vmatprep.mubr.f32.mxu0 0.0
      %3900 = vmatmul.mubr.f32.gmra.mrb[0].mxu0 %v3711
      %v3901 = vpop.f32.mrb[0].mxu0
      %v3902 = vadd.f32 0.0, %v3901
      %v3903 = vpop.f32.mrb[0].mxu0
      %3904 = vmatprep.mubr.f32.mxu0 0.0
      %3905 = vmatmul.mubr.f32.gmra.mrb[0].mxu0 %v3712
      %v3906 = vpop.f32.mrb[0].mxu0
      %v3907 = vadd.f32 0.0, %v3906
      %v3908 = vpop.f32.mrb[0].mxu0
      %3909 = vmatprep.mubr.f32.mxu0 0.0
      %3910 = vmatmul.mubr.f32.gmra.mrb[0].mxu0 %v3713
      %v3911 = vpop.f32.mrb[0].mxu0
      %v3912 = vadd.f32 0.0, %v3911
      %v3913 = vpop.f32.mrb[0].mxu0
      %3914 = vmatprep.mubr.f32.mxu0 0.0
      %3915 = vmatmul.mubr.f32.gmra.mrb[0].mxu0 %v3714
      %v3916 = vpop.f32.mrb[0].mxu0
      %v3917 = vadd.f32 0.0, %v3916
      %v3918 = vpop.f32.mrb[0].mxu0
      %3919 = vmatprep.mubr.f32.mxu0 0.0
      %3920 = vmatmul.mubr.f32.gmra.mrb[0].mxu0 %v3715
      %v3921 = vpop.f32.mrb[0].mxu0
      %v3922 = vadd.f32 0.0, %v3921
      %v3923 = vpop.f32.mrb[0].mxu0
      %3924 = vmatprep.mubr.f32.mxu0 0.0
      %3925 = vmatmul.mubr.f32.gmra.mrb[0].mxu0 %v3716
      %v3926 = vpop.f32.mrb[0].mxu0
      %v3927 = vadd.f32 0.0, %v3926
      %v3928 = vpop.f32.mrb[0].mxu0
      %3929 = vmatprep.mubr.f32.mxu0 0.0
      %3930 = vmatmul.mubr.f32.gmra.mrb[0].mxu0 %v3717
      %v3931 = vpop.f32.mrb[0].mxu0
      %v3932 = vadd.f32 0.0, %v3931
      %v3933 = vpop.f32.mrb[0].mxu0
      %3934 = vmatprep.mubr.f32.mxu0 0.0
      %3935 = vmatmul.mubr.f32.gmra.mrb[0].mxu0 %v3718
      %v3936 = vpop.f32.mrb[0].mxu0
      %v3937 = vadd.f32 0.0, %v3936
      %v3938 = vpop.f32.mrb[0].mxu0
      %3939 = vmatprep.mubr.f32.mxu0 0.0
      %3940 = vmatmul.mubr.f32.gmra.mrb[0].mxu0 %v3719
      %v3941 = vpop.f32.mrb[0].mxu0
      %v3942 = vadd.f32 0.0, %v3941
      %v3943 = vpop.f32.mrb[0].mxu0
      %3944 = vmatprep.mubr.f32.mxu0 0.0
      %3945 = vmatmul.mubr.f32.gmra.mrb[0].mxu0 %v3720
      %v3946 = vpop.f32.mrb[0].mxu0
      %v3947 = vadd.f32 0.0, %v3946
      %v3948 = vpop.f32.mrb[0].mxu0
      %3949 = vmatprep.mubr.f32.mxu0 0.0
      %3950 = vmatmul.mubr.f32.gmra.mrb[0].mxu0 %v3721
      %v3951 = vpop.f32.mrb[0].mxu0
      %v3952 = vadd.f32 0.0, %v3951
      %v3953 = vpop.f32.mrb[0].mxu0
      %3954 = vmatprep.mubr.f32.mxu0 0.0
      %3955 = vmatmul.mubr.f32.gmra.mrb[0].mxu0 %v3722
      %v3956 = vpop.f32.mrb[0].mxu0
      %v3957 = vadd.f32 0.0, %v3956
      %v3958 = vpop.f32.mrb[0].mxu0
      %3959 = vmatprep.mubr.f32.mxu0 0.0
      %3960 = vmatmul.mubr.f32.gmra.mrb[0].mxu0 %v3723
      %v3961 = vpop.f32.mrb[0].mxu0
      %v3962 = vadd.f32 0.0, %v3961
      %v3963 = vpop.f32.mrb[0].mxu0
      %3964 = vdwg.mxu0
      %v3965 = vld [vmem:[#allocation3] sm:$0xff]
      %v3966 = vld [vmem:[#allocation3 + $0x8] sm:$0xff]
      %v3967 = vld [vmem:[#allocation3 + $0x10] sm:$0xff]
      %v3968 = vld [vmem:[#allocation3 + $0x18] sm:$0xff]
      %v3969 = vld [vmem:[#allocation3 + $0x20] sm:$0xff]
      %v3970 = vld [vmem:[#allocation3 + $0x28] sm:$0xff]
      %v3971 = vld [vmem:[#allocation3 + $0x30] sm:$0xff]
      %v3972 = vld [vmem:[#allocation3 + $0x38] sm:$0xff]
      %v3973 = vld [vmem:[#allocation3 + $0x40] sm:$0xff]
      %v3974 = vld [vmem:[#allocation3 + $0x48] sm:$0xff]
      %v3975 = vld [vmem:[#allocation3 + $0x50] sm:$0xff]
      %v3976 = vld [vmem:[#allocation3 + $0x58] sm:$0xff]
      %v3977 = vld [vmem:[#allocation3 + $0x60] sm:$0xff]
      %v3978 = vld [vmem:[#allocation3 + $0x68] sm:$0xff]
      %v3979 = vld [vmem:[#allocation3 + $0x70] sm:$0xff]
      %v3980 = vld [vmem:[#allocation3 + $0x78] sm:$0xff]
      %v3981 = vld [vmem:[#allocation3 + $0x80] sm:$0xff]
      %v3982 = vld [vmem:[#allocation3 + $0x88] sm:$0xff]
      %v3983 = vld [vmem:[#allocation3 + $0x90] sm:$0xff]
      %v3984 = vld [vmem:[#allocation3 + $0x98] sm:$0xff]
      %v3985 = vld [vmem:[#allocation3 + $0xa0] sm:$0xff]
      %v3986 = vld [vmem:[#allocation3 + $0xa8] sm:$0xff]
      %v3987 = vld [vmem:[#allocation3 + $0xb0] sm:$0xff]
      %v3988 = vld [vmem:[#allocation3 + $0xb8] sm:$0xff]
      %v3989 = vld [vmem:[#allocation3 + $0xc0] sm:$0xff]
      %v3990 = vld [vmem:[#allocation3 + $0xc8] sm:$0xff]
      %v3991 = vld [vmem:[#allocation3 + $0xd0] sm:$0xff]
      %v3992 = vld [vmem:[#allocation3 + $0xd8] sm:$0xff]
      %v3993 = vld [vmem:[#allocation3 + $0xe0] sm:$0xff]
      %v3994 = vld [vmem:[#allocation3 + $0xe8] sm:$0xff]
      %v3995 = vld [vmem:[#allocation3 + $0xf0] sm:$0xff]
      %v3996 = vld [vmem:[#allocation3 + $0xf8] sm:$0xff]
      %v3997 = vadd.f32 %v3965, %v3807
      %v3998 = vadd.f32 %v3966, %v3812
      %v3999 = vadd.f32 %v3967, %v3817
      %v4000 = vadd.f32 %v3968, %v3822
      %v4001 = vadd.f32 %v3969, %v3827
      %v4002 = vadd.f32 %v3970, %v3832
      %v4003 = vadd.f32 %v3971, %v3837
      %v4004 = vadd.f32 %v3972, %v3842
      %v4005 = vadd.f32 %v3973, %v3847
      %v4006 = vadd.f32 %v3974, %v3852
      %v4007 = vadd.f32 %v3975, %v3857
      %v4008 = vadd.f32 %v3976, %v3862
      %v4009 = vadd.f32 %v3977, %v3867
      %v4010 = vadd.f32 %v3978, %v3872
      %v4011 = vadd.f32 %v3979, %v3877
      %v4012 = vadd.f32 %v3980, %v3882
      %v4013 = vadd.f32 %v3981, %v3887
      %v4014 = vadd.f32 %v3982, %v3892
      %v4015 = vadd.f32 %v3983, %v3897
      %v4016 = vadd.f32 %v3984, %v3902
      %v4017 = vadd.f32 %v3985, %v3907
      %v4018 = vadd.f32 %v3986, %v3912
      %v4019 = vadd.f32 %v3987, %v3917
      %v4020 = vadd.f32 %v3988, %v3922
      %v4021 = vadd.f32 %v3989, %v3927
      %v4022 = vadd.f32 %v3990, %v3932
      %v4023 = vadd.f32 %v3991, %v3937
      %v4024 = vadd.f32 %v3992, %v3942
      %v4025 = vadd.f32 %v3993, %v3947
      %v4026 = vadd.f32 %v3994, %v3952
      %v4027 = vadd.f32 %v3995, %v3957
      %v4028 = vadd.f32 %v3996, %v3962
      %4029 = vst [vmem:[#allocation3] sm:$0xff] %v3997
      %4030 = vst [vmem:[#allocation3 + $0x8] sm:$0xff] %v3998
      %4031 = vst [vmem:[#allocation3 + $0x10] sm:$0xff] %v3999
      %4032 = vst [vmem:[#allocation3 + $0x18] sm:$0xff] %v4000
      %4033 = vst [vmem:[#allocation3 + $0x20] sm:$0xff] %v4001
      %4034 = vst [vmem:[#allocation3 + $0x28] sm:$0xff] %v4002
      %4035 = vst [vmem:[#allocation3 + $0x30] sm:$0xff] %v4003
      %4036 = vst [vmem:[#allocation3 + $0x38] sm:$0xff] %v4004
      %4037 = vst [vmem:[#allocation3 + $0x40] sm:$0xff] %v4005
      %4038 = vst [vmem:[#allocation3 + $0x48] sm:$0xff] %v4006
      %4039 = vst [vmem:[#allocation3 + $0x50] sm:$0xff] %v4007
      %4040 = vst [vmem:[#allocation3 + $0x58] sm:$0xff] %v4008
      %4041 = vst [vmem:[#allocation3 + $0x60] sm:$0xff] %v4009
      %4042 = vst [vmem:[#allocation3 + $0x68] sm:$0xff] %v4010
      %4043 = vst [vmem:[#allocation3 + $0x70] sm:$0xff] %v4011
      %4044 = vst [vmem:[#allocation3 + $0x78] sm:$0xff] %v4012
      %4045 = vst [vmem:[#allocation3 + $0x80] sm:$0xff] %v4013
      %4046 = vst [vmem:[#allocation3 + $0x88] sm:$0xff] %v4014
      %4047 = vst [vmem:[#allocation3 + $0x90] sm:$0xff] %v4015
      %4048 = vst [vmem:[#allocation3 + $0x98] sm:$0xff] %v4016
      %4049 = vst [vmem:[#allocation3 + $0xa0] sm:$0xff] %v4017
      %4050 = vst [vmem:[#allocation3 + $0xa8] sm:$0xff] %v4018
      %4051 = vst [vmem:[#allocation3 + $0xb0] sm:$0xff] %v4019
      %4052 = vst [vmem:[#allocation3 + $0xb8] sm:$0xff] %v4020
      %4053 = vst [vmem:[#allocation3 + $0xc0] sm:$0xff] %v4021
      %4054 = vst [vmem:[#allocation3 + $0xc8] sm:$0xff] %v4022
      %4055 = vst [vmem:[#allocation3 + $0xd0] sm:$0xff] %v4023
      %4056 = vst [vmem:[#allocation3 + $0xd8] sm:$0xff] %v4024
      %4057 = vst [vmem:[#allocation3 + $0xe0] sm:$0xff] %v4025
      %4058 = vst [vmem:[#allocation3 + $0xe8] sm:$0xff] %v4026
      %4059 = vst [vmem:[#allocation3 + $0xf0] sm:$0xff] %v4027
      %4060 = vst [vmem:[#allocation3 + $0xf8] sm:$0xff] %v4028
      %v4061 = vld [vmem:[#allocation2 + $0x20] sm:$0xff]
      %v4062 = vld [vmem:[#allocation2 + $0x28] sm:$0xff]
      %v4063 = vld [vmem:[#allocation2 + $0x30] sm:$0xff]
      %v4064 = vld [vmem:[#allocation2 + $0x38] sm:$0xff]
      %v4065 = vld [vmem:[#allocation2 + $0x40] sm:$0xff]
      %v4066 = vld [vmem:[#allocation2 + $0x48] sm:$0xff]
      %v4067 = vld [vmem:[#allocation2 + $0x50] sm:$0xff]
      %v4068 = vld [vmem:[#allocation2 + $0x58] sm:$0xff]
      %v4069 = vld [vmem:[#allocation2 + $0x60] sm:$0xff]
      %v4070 = vld [vmem:[#allocation2 + $0x68] sm:$0xff]
      %v4071 = vld [vmem:[#allocation2 + $0x70] sm:$0xff]
      %v4072 = vld [vmem:[#allocation2 + $0x78] sm:$0xff]
      %v4073 = vld [vmem:[#allocation2 + $0x80] sm:$0xff]
      %v4074 = vld [vmem:[#allocation2 + $0x88] sm:$0xff]
      %v4075 = vld [vmem:[#allocation2 + $0x90] sm:$0xff]
      %v4076 = vld [vmem:[#allocation2 + $0x98] sm:$0xff]
      %v4077 = vld [vmem:[#allocation2 + $0xa0] sm:$0xff]
      %v4078 = vld [vmem:[#allocation2 + $0xa8] sm:$0xff]
      %v4079 = vld [vmem:[#allocation2 + $0xb0] sm:$0xff]
      %v4080 = vld [vmem:[#allocation2 + $0xb8] sm:$0xff]
      %v4081 = vld [vmem:[#allocation2 + $0xc0] sm:$0xff]
      %v4082 = vld [vmem:[#allocation2 + $0xc8] sm:$0xff]
      %v4083 = vld [vmem:[#allocation2 + $0xd0] sm:$0xff]
      %v4084 = vld [vmem:[#allocation2 + $0xd8] sm:$0xff]
      %v4085 = vld [vmem:[#allocation2 + $0xe0] sm:$0xff]
      %v4086 = vld [vmem:[#allocation2 + $0xe8] sm:$0xff]
      %v4087 = vld [vmem:[#allocation2 + $0xf0] sm:$0xff]
      %v4088 = vld [vmem:[#allocation2 + $0xf8] sm:$0xff]
      %v4089 = vld [vmem:[#allocation2 + $0x100] sm:$0xff]
      %v4090 = vld [vmem:[#allocation2 + $0x108] sm:$0xff]
      %v4091 = vld [vmem:[#allocation2 + $0x110] sm:$0xff]
      %v4092 = vld [vmem:[#allocation2 + $0x118] sm:$0xff]
      %v4093 = vld [vmem:[%s3 + $0x380] sm:$0xff]
      %v4094 = vld [vmem:[%s3 + $0x388] sm:$0xff]
      %v4095 = vld [vmem:[%s3 + $0x390] sm:$0xff]
      %v4096 = vld [vmem:[%s3 + $0x398] sm:$0xff]
      %v4097 = vld [vmem:[%s3 + $0x3a0] sm:$0xff]
      %v4098 = vld [vmem:[%s3 + $0x3a8] sm:$0xff]
      %v4099 = vld [vmem:[%s3 + $0x3b0] sm:$0xff]
      %v4100 = vld [vmem:[%s3 + $0x3b8] sm:$0xff]
      %v4101 = vld [vmem:[%s3 + $0x3c0] sm:$0xff]
      %v4102 = vld [vmem:[%s3 + $0x3c8] sm:$0xff]
      %v4103 = vld [vmem:[%s3 + $0x3d0] sm:$0xff]
      %v4104 = vld [vmem:[%s3 + $0x3d8] sm:$0xff]
      %v4105 = vld [vmem:[%s3 + $0x3e0] sm:$0xff]
      %v4106 = vld [vmem:[%s3 + $0x3e8] sm:$0xff]
      %v4107 = vld [vmem:[%s3 + $0x3f0] sm:$0xff]
      %v4108 = vld [vmem:[%s3 + $0x3f8] sm:$0xff]
      %4109 = vmatprep.subr.mxu0 0.0
      %4110 = vmatpush1.msra.mxu0 %v4093
      %4111 = vmatprep.subr.mxu0 0.0
      %4112 = vmatpush1.msra.mxu0 %v4094
      %4113 = vmatprep.subr.mxu0 0.0
      %4114 = vmatpush1.msra.mxu0 %v4095
      %4115 = vmatprep.subr.mxu0 0.0
      %4116 = vmatpush1.msra.mxu0 %v4096
      %4117 = vmatprep.subr.mxu0 0.0
      %4118 = vmatpush1.msra.mxu0 %v4097
      %4119 = vmatprep.subr.mxu0 0.0
      %4120 = vmatpush1.msra.mxu0 %v4098
      %4121 = vmatprep.subr.mxu0 0.0
      %4122 = vmatpush1.msra.mxu0 %v4099
      %4123 = vmatprep.subr.mxu0 0.0
      %4124 = vmatpush1.msra.mxu0 %v4100
      %4125 = vmatprep.subr.mxu0 0.0
      %4126 = vmatpush1.msra.mxu0 %v4101
      %4127 = vmatprep.subr.mxu0 0.0
      %4128 = vmatpush1.msra.mxu0 %v4102
      %4129 = vmatprep.subr.mxu0 0.0
      %4130 = vmatpush1.msra.mxu0 %v4103
      %4131 = vmatprep.subr.mxu0 0.0
      %4132 = vmatpush1.msra.mxu0 %v4104
      %4133 = vmatprep.subr.mxu0 0.0
      %4134 = vmatpush1.msra.mxu0 %v4105
      %4135 = vmatprep.subr.mxu0 0.0
      %4136 = vmatpush1.msra.mxu0 %v4106
      %4137 = vmatprep.subr.mxu0 0.0
      %4138 = vmatpush1.msra.mxu0 %v4107
      %4139 = vmatprep.subr.mxu0 0.0
      %4140 = vmatpush1.msra.mxu0 %v4108
      %4141 = vmatprep.subr.mxu0 0.0
      %4142 = vmatpush1.msra.mxu0 0.0
      %4143 = vmatprep.subr.mxu0 0.0
      %4144 = vmatpush1.msra.mxu0 0.0
      %4145 = vmatprep.subr.mxu0 0.0
      %4146 = vmatpush1.msra.mxu0 0.0
      %4147 = vmatprep.subr.mxu0 0.0
      %4148 = vmatpush1.msra.mxu0 0.0
      %4149 = vmatprep.subr.mxu0 0.0
      %4150 = vmatpush1.msra.mxu0 0.0
      %4151 = vmatprep.subr.mxu0 0.0
      %4152 = vmatpush1.msra.mxu0 0.0
      %4153 = vmatprep.subr.mxu0 0.0
      %4154 = vmatpush1.msra.mxu0 0.0
      %4155 = vmatprep.subr.mxu0 0.0
      %4156 = vmatpush1.msra.mxu0 0.0
      %4157 = vmatprep.subr.mxu0 0.0
      %4158 = vmatpush1.msra.mxu0 0.0
      %4159 = vmatprep.subr.mxu0 0.0
      %4160 = vmatpush1.msra.mxu0 0.0
      %4161 = vmatprep.subr.mxu0 0.0
      %4162 = vmatpush1.msra.mxu0 0.0
      %4163 = vmatprep.subr.mxu0 0.0
      %4164 = vmatpush1.msra.mxu0 0.0
      %4165 = vmatprep.subr.mxu0 0.0
      %4166 = vmatpush1.msra.mxu0 0.0
      %4167 = vmatprep.subr.mxu0 0.0
      %4168 = vmatpush1.msra.mxu0 0.0
      %4169 = vmatprep.subr.mxu0 0.0
      %4170 = vmatpush1.msra.mxu0 0.0
      %4171 = vmatprep.subr.mxu0 0.0
      %4172 = vmatpush1.msra.mxu0 0.0
      %4173 = vmatprep.mubr.f32.mxu0 0.0
      %4174 = vmatmul.mubr.f32.gmra.mrb[0].mxu0 %v4061
      %v4175 = vpop.f32.mrb[0].mxu0
      %v4176 = vadd.f32 0.0, %v4175
      %v4177 = vpop.f32.mrb[0].mxu0
      %4178 = vmatprep.mubr.f32.mxu0 0.0
      %4179 = vmatmul.mubr.f32.gmra.mrb[0].mxu0 %v4062
      %v4180 = vpop.f32.mrb[0].mxu0
      %v4181 = vadd.f32 0.0, %v4180
      %v4182 = vpop.f32.mrb[0].mxu0
      %4183 = vmatprep.mubr.f32.mxu0 0.0
      %4184 = vmatmul.mubr.f32.gmra.mrb[0].mxu0 %v4063
      %v4185 = vpop.f32.mrb[0].mxu0
      %v4186 = vadd.f32 0.0, %v4185
      %v4187 = vpop.f32.mrb[0].mxu0
      %4188 = vmatprep.mubr.f32.mxu0 0.0
      %4189 = vmatmul.mubr.f32.gmra.mrb[0].mxu0 %v4064
      %v4190 = vpop.f32.mrb[0].mxu0
      %v4191 = vadd.f32 0.0, %v4190
      %v4192 = vpop.f32.mrb[0].mxu0
      %4193 = vmatprep.mubr.f32.mxu0 0.0
      %4194 = vmatmul.mubr.f32.gmra.mrb[0].mxu0 %v4065
      %v4195 = vpop.f32.mrb[0].mxu0
      %v4196 = vadd.f32 0.0, %v4195
      %v4197 = vpop.f32.mrb[0].mxu0
      %4198 = vmatprep.mubr.f32.mxu0 0.0
      %4199 = vmatmul.mubr.f32.gmra.mrb[0].mxu0 %v4066
      %v4200 = vpop.f32.mrb[0].mxu0
      %v4201 = vadd.f32 0.0, %v4200
      %v4202 = vpop.f32.mrb[0].mxu0
      %4203 = vmatprep.mubr.f32.mxu0 0.0
      %4204 = vmatmul.mubr.f32.gmra.mrb[0].mxu0 %v4067
      %v4205 = vpop.f32.mrb[0].mxu0
      %v4206 = vadd.f32 0.0, %v4205
      %v4207 = vpop.f32.mrb[0].mxu0
      %4208 = vmatprep.mubr.f32.mxu0 0.0
      %4209 = vmatmul.mubr.f32.gmra.mrb[0].mxu0 %v4068
      %v4210 = vpop.f32.mrb[0].mxu0
      %v4211 = vadd.f32 0.0, %v4210
      %v4212 = vpop.f32.mrb[0].mxu0
      %4213 = vmatprep.mubr.f32.mxu0 0.0
      %4214 = vmatmul.mubr.f32.gmra.mrb[0].mxu0 %v4069
      %v4215 = vpop.f32.mrb[0].mxu0
      %v4216 = vadd.f32 0.0, %v4215
      %v4217 = vpop.f32.mrb[0].mxu0
      %4218 = vmatprep.mubr.f32.mxu0 0.0
      %4219 = vmatmul.mubr.f32.gmra.mrb[0].mxu0 %v4070
      %v4220 = vpop.f32.mrb[0].mxu0
      %v4221 = vadd.f32 0.0, %v4220
      %v4222 = vpop.f32.mrb[0].mxu0
      %4223 = vmatprep.mubr.f32.mxu0 0.0
      %4224 = vmatmul.mubr.f32.gmra.mrb[0].mxu0 %v4071
      %v4225 = vpop.f32.mrb[0].mxu0
      %v4226 = vadd.f32 0.0, %v4225
      %v4227 = vpop.f32.mrb[0].mxu0
      %4228 = vmatprep.mubr.f32.mxu0 0.0
      %4229 = vmatmul.mubr.f32.gmra.mrb[0].mxu0 %v4072
      %v4230 = vpop.f32.mrb[0].mxu0
      %v4231 = vadd.f32 0.0, %v4230
      %v4232 = vpop.f32.mrb[0].mxu0
      %4233 = vmatprep.mubr.f32.mxu0 0.0
      %4234 = vmatmul.mubr.f32.gmra.mrb[0].mxu0 %v4073
      %v4235 = vpop.f32.mrb[0].mxu0
      %v4236 = vadd.f32 0.0, %v4235
      %v4237 = vpop.f32.mrb[0].mxu0
      %4238 = vmatprep.mubr.f32.mxu0 0.0
      %4239 = vmatmul.mubr.f32.gmra.mrb[0].mxu0 %v4074
      %v4240 = vpop.f32.mrb[0].mxu0
      %v4241 = vadd.f32 0.0, %v4240
      %v4242 = vpop.f32.mrb[0].mxu0
      %4243 = vmatprep.mubr.f32.mxu0 0.0
      %4244 = vmatmul.mubr.f32.gmra.mrb[0].mxu0 %v4075
      %v4245 = vpop.f32.mrb[0].mxu0
      %v4246 = vadd.f32 0.0, %v4245
      %v4247 = vpop.f32.mrb[0].mxu0
      %4248 = vmatprep.mubr.f32.mxu0 0.0
      %4249 = vmatmul.mubr.f32.gmra.mrb[0].mxu0 %v4076
      %v4250 = vpop.f32.mrb[0].mxu0
      %v4251 = vadd.f32 0.0, %v4250
      %v4252 = vpop.f32.mrb[0].mxu0
      %4253 = vmatprep.mubr.f32.mxu0 0.0
      %4254 = vmatmul.mubr.f32.gmra.mrb[0].mxu0 %v4077
      %v4255 = vpop.f32.mrb[0].mxu0
      %v4256 = vadd.f32 0.0, %v4255
      %v4257 = vpop.f32.mrb[0].mxu0
      %4258 = vmatprep.mubr.f32.mxu0 0.0
      %4259 = vmatmul.mubr.f32.gmra.mrb[0].mxu0 %v4078
      %v4260 = vpop.f32.mrb[0].mxu0
      %v4261 = vadd.f32 0.0, %v4260
      %v4262 = vpop.f32.mrb[0].mxu0
      %4263 = vmatprep.mubr.f32.mxu0 0.0
      %4264 = vmatmul.mubr.f32.gmra.mrb[0].mxu0 %v4079
      %v4265 = vpop.f32.mrb[0].mxu0
      %v4266 = vadd.f32 0.0, %v4265
      %v4267 = vpop.f32.mrb[0].mxu0
      %4268 = vmatprep.mubr.f32.mxu0 0.0
      %4269 = vmatmul.mubr.f32.gmra.mrb[0].mxu0 %v4080
      %v4270 = vpop.f32.mrb[0].mxu0
      %v4271 = vadd.f32 0.0, %v4270
      %v4272 = vpop.f32.mrb[0].mxu0
      %4273 = vmatprep.mubr.f32.mxu0 0.0
      %4274 = vmatmul.mubr.f32.gmra.mrb[0].mxu0 %v4081
      %v4275 = vpop.f32.mrb[0].mxu0
      %v4276 = vadd.f32 0.0, %v4275
      %v4277 = vpop.f32.mrb[0].mxu0
      %4278 = vmatprep.mubr.f32.mxu0 0.0
      %4279 = vmatmul.mubr.f32.gmra.mrb[0].mxu0 %v4082
      %v4280 = vpop.f32.mrb[0].mxu0
      %v4281 = vadd.f32 0.0, %v4280
      %v4282 = vpop.f32.mrb[0].mxu0
      %4283 = vmatprep.mubr.f32.mxu0 0.0
      %4284 = vmatmul.mubr.f32.gmra.mrb[0].mxu0 %v4083
      %v4285 = vpop.f32.mrb[0].mxu0
      %v4286 = vadd.f32 0.0, %v4285
      %v4287 = vpop.f32.mrb[0].mxu0
      %4288 = vmatprep.mubr.f32.mxu0 0.0
      %4289 = vmatmul.mubr.f32.gmra.mrb[0].mxu0 %v4084
      %v4290 = vpop.f32.mrb[0].mxu0
      %v4291 = vadd.f32 0.0, %v4290
      %v4292 = vpop.f32.mrb[0].mxu0
      %4293 = vmatprep.mubr.f32.mxu0 0.0
      %4294 = vmatmul.mubr.f32.gmra.mrb[0].mxu0 %v4085
      %v4295 = vpop.f32.mrb[0].mxu0
      %v4296 = vadd.f32 0.0, %v4295
      %v4297 = vpop.f32.mrb[0].mxu0
      %4298 = vmatprep.mubr.f32.mxu0 0.0
      %4299 = vmatmul.mubr.f32.gmra.mrb[0].mxu0 %v4086
      %v4300 = vpop.f32.mrb[0].mxu0
      %v4301 = vadd.f32 0.0, %v4300
      %v4302 = vpop.f32.mrb[0].mxu0
      %4303 = vmatprep.mubr.f32.mxu0 0.0
      %4304 = vmatmul.mubr.f32.gmra.mrb[0].mxu0 %v4087
      %v4305 = vpop.f32.mrb[0].mxu0
      %v4306 = vadd.f32 0.0, %v4305
      %v4307 = vpop.f32.mrb[0].mxu0
      %4308 = vmatprep.mubr.f32.mxu0 0.0
      %4309 = vmatmul.mubr.f32.gmra.mrb[0].mxu0 %v4088
      %v4310 = vpop.f32.mrb[0].mxu0
      %v4311 = vadd.f32 0.0, %v4310
      %v4312 = vpop.f32.mrb[0].mxu0
      %4313 = vmatprep.mubr.f32.mxu0 0.0
      %4314 = vmatmul.mubr.f32.gmra.mrb[0].mxu0 %v4089
      %v4315 = vpop.f32.mrb[0].mxu0
      %v4316 = vadd.f32 0.0, %v4315
      %v4317 = vpop.f32.mrb[0].mxu0
      %4318 = vmatprep.mubr.f32.mxu0 0.0
      %4319 = vmatmul.mubr.f32.gmra.mrb[0].mxu0 %v4090
      %v4320 = vpop.f32.mrb[0].mxu0
      %v4321 = vadd.f32 0.0, %v4320
      %v4322 = vpop.f32.mrb[0].mxu0
      %4323 = vmatprep.mubr.f32.mxu0 0.0
      %4324 = vmatmul.mubr.f32.gmra.mrb[0].mxu0 %v4091
      %v4325 = vpop.f32.mrb[0].mxu0
      %v4326 = vadd.f32 0.0, %v4325
      %v4327 = vpop.f32.mrb[0].mxu0
      %4328 = vmatprep.mubr.f32.mxu0 0.0
      %4329 = vmatmul.mubr.f32.gmra.mrb[0].mxu0 %v4092
      %v4330 = vpop.f32.mrb[0].mxu0
      %v4331 = vadd.f32 0.0, %v4330
      %v4332 = vpop.f32.mrb[0].mxu0
      %4333 = vdwg.mxu0
      %v4334 = vld [vmem:[#allocation3] sm:$0xff]
      %v4335 = vld [vmem:[#allocation3 + $0x8] sm:$0xff]
      %v4336 = vld [vmem:[#allocation3 + $0x10] sm:$0xff]
      %v4337 = vld [vmem:[#allocation3 + $0x18] sm:$0xff]
      %v4338 = vld [vmem:[#allocation3 + $0x20] sm:$0xff]
      %v4339 = vld [vmem:[#allocation3 + $0x28] sm:$0xff]
      %v4340 = vld [vmem:[#allocation3 + $0x30] sm:$0xff]
      %v4341 = vld [vmem:[#allocation3 + $0x38] sm:$0xff]
      %v4342 = vld [vmem:[#allocation3 + $0x40] sm:$0xff]
      %v4343 = vld [vmem:[#allocation3 + $0x48] sm:$0xff]
      %v4344 = vld [vmem:[#allocation3 + $0x50] sm:$0xff]
      %v4345 = vld [vmem:[#allocation3 + $0x58] sm:$0xff]
      %v4346 = vld [vmem:[#allocation3 + $0x60] sm:$0xff]
      %v4347 = vld [vmem:[#allocation3 + $0x68] sm:$0xff]
      %v4348 = vld [vmem:[#allocation3 + $0x70] sm:$0xff]
      %v4349 = vld [vmem:[#allocation3 + $0x78] sm:$0xff]
      %v4350 = vld [vmem:[#allocation3 + $0x80] sm:$0xff]
      %v4351 = vld [vmem:[#allocation3 + $0x88] sm:$0xff]
      %v4352 = vld [vmem:[#allocation3 + $0x90] sm:$0xff]
      %v4353 = vld [vmem:[#allocation3 + $0x98] sm:$0xff]
      %v4354 = vld [vmem:[#allocation3 + $0xa0] sm:$0xff]
      %v4355 = vld [vmem:[#allocation3 + $0xa8] sm:$0xff]
      %v4356 = vld [vmem:[#allocation3 + $0xb0] sm:$0xff]
      %v4357 = vld [vmem:[#allocation3 + $0xb8] sm:$0xff]
      %v4358 = vld [vmem:[#allocation3 + $0xc0] sm:$0xff]
      %v4359 = vld [vmem:[#allocation3 + $0xc8] sm:$0xff]
      %v4360 = vld [vmem:[#allocation3 + $0xd0] sm:$0xff]
      %v4361 = vld [vmem:[#allocation3 + $0xd8] sm:$0xff]
      %v4362 = vld [vmem:[#allocation3 + $0xe0] sm:$0xff]
      %v4363 = vld [vmem:[#allocation3 + $0xe8] sm:$0xff]
      %v4364 = vld [vmem:[#allocation3 + $0xf0] sm:$0xff]
      %v4365 = vld [vmem:[#allocation3 + $0xf8] sm:$0xff]
      %v4366 = vadd.f32 %v4334, %v4176
      %v4367 = vadd.f32 %v4335, %v4181
      %v4368 = vadd.f32 %v4336, %v4186
      %v4369 = vadd.f32 %v4337, %v4191
      %v4370 = vadd.f32 %v4338, %v4196
      %v4371 = vadd.f32 %v4339, %v4201
      %v4372 = vadd.f32 %v4340, %v4206
      %v4373 = vadd.f32 %v4341, %v4211
      %v4374 = vadd.f32 %v4342, %v4216
      %v4375 = vadd.f32 %v4343, %v4221
      %v4376 = vadd.f32 %v4344, %v4226
      %v4377 = vadd.f32 %v4345, %v4231
      %v4378 = vadd.f32 %v4346, %v4236
      %v4379 = vadd.f32 %v4347, %v4241
      %v4380 = vadd.f32 %v4348, %v4246
      %v4381 = vadd.f32 %v4349, %v4251
      %v4382 = vadd.f32 %v4350, %v4256
      %v4383 = vadd.f32 %v4351, %v4261
      %v4384 = vadd.f32 %v4352, %v4266
      %v4385 = vadd.f32 %v4353, %v4271
      %v4386 = vadd.f32 %v4354, %v4276
      %v4387 = vadd.f32 %v4355, %v4281
      %v4388 = vadd.f32 %v4356, %v4286
      %v4389 = vadd.f32 %v4357, %v4291
      %v4390 = vadd.f32 %v4358, %v4296
      %v4391 = vadd.f32 %v4359, %v4301
      %v4392 = vadd.f32 %v4360, %v4306
      %v4393 = vadd.f32 %v4361, %v4311
      %v4394 = vadd.f32 %v4362, %v4316
      %v4395 = vadd.f32 %v4363, %v4321
      %v4396 = vadd.f32 %v4364, %v4326
      %v4397 = vadd.f32 %v4365, %v4331
      %4398 = vst [vmem:[#allocation3] sm:$0xff] %v4366
      %4399 = vst [vmem:[#allocation3 + $0x8] sm:$0xff] %v4367
      %4400 = vst [vmem:[#allocation3 + $0x10] sm:$0xff] %v4368
      %4401 = vst [vmem:[#allocation3 + $0x18] sm:$0xff] %v4369
      %4402 = vst [vmem:[#allocation3 + $0x20] sm:$0xff] %v4370
      %4403 = vst [vmem:[#allocation3 + $0x28] sm:$0xff] %v4371
      %4404 = vst [vmem:[#allocation3 + $0x30] sm:$0xff] %v4372
      %4405 = vst [vmem:[#allocation3 + $0x38] sm:$0xff] %v4373
      %4406 = vst [vmem:[#allocation3 + $0x40] sm:$0xff] %v4374
      %4407 = vst [vmem:[#allocation3 + $0x48] sm:$0xff] %v4375
      %4408 = vst [vmem:[#allocation3 + $0x50] sm:$0xff] %v4376
      %4409 = vst [vmem:[#allocation3 + $0x58] sm:$0xff] %v4377
      %4410 = vst [vmem:[#allocation3 + $0x60] sm:$0xff] %v4378
      %4411 = vst [vmem:[#allocation3 + $0x68] sm:$0xff] %v4379
      %4412 = vst [vmem:[#allocation3 + $0x70] sm:$0xff] %v4380
      %4413 = vst [vmem:[#allocation3 + $0x78] sm:$0xff] %v4381
      %4414 = vst [vmem:[#allocation3 + $0x80] sm:$0xff] %v4382
      %4415 = vst [vmem:[#allocation3 + $0x88] sm:$0xff] %v4383
      %4416 = vst [vmem:[#allocation3 + $0x90] sm:$0xff] %v4384
      %4417 = vst [vmem:[#allocation3 + $0x98] sm:$0xff] %v4385
      %4418 = vst [vmem:[#allocation3 + $0xa0] sm:$0xff] %v4386
      %4419 = vst [vmem:[#allocation3 + $0xa8] sm:$0xff] %v4387
      %4420 = vst [vmem:[#allocation3 + $0xb0] sm:$0xff] %v4388
      %4421 = vst [vmem:[#allocation3 + $0xb8] sm:$0xff] %v4389
      %4422 = vst [vmem:[#allocation3 + $0xc0] sm:$0xff] %v4390
      %4423 = vst [vmem:[#allocation3 + $0xc8] sm:$0xff] %v4391
      %4424 = vst [vmem:[#allocation3 + $0xd0] sm:$0xff] %v4392
      %4425 = vst [vmem:[#allocation3 + $0xd8] sm:$0xff] %v4393
      %4426 = vst [vmem:[#allocation3 + $0xe0] sm:$0xff] %v4394
      %4427 = vst [vmem:[#allocation3 + $0xe8] sm:$0xff] %v4395
      %4428 = vst [vmem:[#allocation3 + $0xf0] sm:$0xff] %v4396
      %4429 = vst [vmem:[#allocation3 + $0xf8] sm:$0xff] %v4397
      %v4430 = vld [vmem:[#allocation2 + $0x20] sm:$0xff]
      %v4431 = vld [vmem:[#allocation2 + $0x28] sm:$0xff]
      %v4432 = vld [vmem:[#allocation2 + $0x30] sm:$0xff]
      %v4433 = vld [vmem:[#allocation2 + $0x38] sm:$0xff]
      %v4434 = vld [vmem:[#allocation2 + $0x40] sm:$0xff]
      %v4435 = vld [vmem:[#allocation2 + $0x48] sm:$0xff]
      %v4436 = vld [vmem:[#allocation2 + $0x50] sm:$0xff]
      %v4437 = vld [vmem:[#allocation2 + $0x58] sm:$0xff]
      %v4438 = vld [vmem:[#allocation2 + $0x60] sm:$0xff]
      %v4439 = vld [vmem:[#allocation2 + $0x68] sm:$0xff]
      %v4440 = vld [vmem:[#allocation2 + $0x70] sm:$0xff]
      %v4441 = vld [vmem:[#allocation2 + $0x78] sm:$0xff]
      %v4442 = vld [vmem:[#allocation2 + $0x80] sm:$0xff]
      %v4443 = vld [vmem:[#allocation2 + $0x88] sm:$0xff]
      %v4444 = vld [vmem:[#allocation2 + $0x90] sm:$0xff]
      %v4445 = vld [vmem:[#allocation2 + $0x98] sm:$0xff]
      %v4446 = vld [vmem:[#allocation2 + $0xa0] sm:$0xff]
      %v4447 = vld [vmem:[#allocation2 + $0xa8] sm:$0xff]
      %v4448 = vld [vmem:[#allocation2 + $0xb0] sm:$0xff]
      %v4449 = vld [vmem:[#allocation2 + $0xb8] sm:$0xff]
      %v4450 = vld [vmem:[#allocation2 + $0xc0] sm:$0xff]
      %v4451 = vld [vmem:[#allocation2 + $0xc8] sm:$0xff]
      %v4452 = vld [vmem:[#allocation2 + $0xd0] sm:$0xff]
      %v4453 = vld [vmem:[#allocation2 + $0xd8] sm:$0xff]
      %v4454 = vld [vmem:[#allocation2 + $0xe0] sm:$0xff]
      %v4455 = vld [vmem:[#allocation2 + $0xe8] sm:$0xff]
      %v4456 = vld [vmem:[#allocation2 + $0xf0] sm:$0xff]
      %v4457 = vld [vmem:[#allocation2 + $0xf8] sm:$0xff]
      %v4458 = vld [vmem:[#allocation2 + $0x100] sm:$0xff]
      %v4459 = vld [vmem:[#allocation2 + $0x108] sm:$0xff]
      %v4460 = vld [vmem:[#allocation2 + $0x110] sm:$0xff]
      %v4461 = vld [vmem:[#allocation2 + $0x118] sm:$0xff]
      %v4462 = vrot.slane %v4430, 1
      %v4463 = vrot.slane %v4431, 1
      %v4464 = vrot.slane %v4432, 1
      %v4465 = vrot.slane %v4433, 1
      %v4466 = vrot.slane %v4434, 1
      %v4467 = vrot.slane %v4435, 1
      %v4468 = vrot.slane %v4436, 1
      %v4469 = vrot.slane %v4437, 1
      %v4470 = vrot.slane %v4438, 1
      %v4471 = vrot.slane %v4439, 1
      %v4472 = vrot.slane %v4440, 1
      %v4473 = vrot.slane %v4441, 1
      %v4474 = vrot.slane %v4442, 1
      %v4475 = vrot.slane %v4443, 1
      %v4476 = vrot.slane %v4444, 1
      %v4477 = vrot.slane %v4445, 1
      %v4478 = vrot.slane %v4446, 1
      %v4479 = vrot.slane %v4447, 1
      %v4480 = vrot.slane %v4448, 1
      %v4481 = vrot.slane %v4449, 1
      %v4482 = vrot.slane %v4450, 1
      %v4483 = vrot.slane %v4451, 1
      %v4484 = vrot.slane %v4452, 1
      %v4485 = vrot.slane %v4453, 1
      %v4486 = vrot.slane %v4454, 1
      %v4487 = vrot.slane %v4455, 1
      %v4488 = vrot.slane %v4456, 1
      %v4489 = vrot.slane %v4457, 1
      %v4490 = vrot.slane %v4458, 1
      %v4491 = vrot.slane %v4459, 1
      %v4492 = vrot.slane %v4460, 1
      %v4493 = vrot.slane %v4461, 1
      %v4494 = vsel %vm1831, %v4492, %v4493
      %v4495 = vsel %vm1831, %v4491, %v4492
      %v4496 = vsel %vm1831, %v4490, %v4491
      %v4497 = vsel %vm1831, %v4489, %v4490
      %v4498 = vsel %vm1831, %v4488, %v4489
      %v4499 = vsel %vm1831, %v4487, %v4488
      %v4500 = vsel %vm1831, %v4486, %v4487
      %v4501 = vsel %vm1831, %v4485, %v4486
      %v4502 = vsel %vm1831, %v4484, %v4485
      %v4503 = vsel %vm1831, %v4483, %v4484
      %v4504 = vsel %vm1831, %v4482, %v4483
      %v4505 = vsel %vm1831, %v4481, %v4482
      %v4506 = vsel %vm1831, %v4480, %v4481
      %v4507 = vsel %vm1831, %v4479, %v4480
      %v4508 = vsel %vm1831, %v4478, %v4479
      %v4509 = vsel %vm1831, %v4477, %v4478
      %v4510 = vsel %vm1831, %v4476, %v4477
      %v4511 = vsel %vm1831, %v4475, %v4476
      %v4512 = vsel %vm1831, %v4474, %v4475
      %v4513 = vsel %vm1831, %v4473, %v4474
      %v4514 = vsel %vm1831, %v4472, %v4473
      %v4515 = vsel %vm1831, %v4471, %v4472
      %v4516 = vsel %vm1831, %v4470, %v4471
      %v4517 = vsel %vm1831, %v4469, %v4470
      %v4518 = vsel %vm1831, %v4468, %v4469
      %v4519 = vsel %vm1831, %v4467, %v4468
      %v4520 = vsel %vm1831, %v4466, %v4467
      %v4521 = vsel %vm1831, %v4465, %v4466
      %v4522 = vsel %vm1831, %v4464, %v4465
      %v4523 = vsel %vm1831, %v4463, %v4464
      %v4524 = vsel %vm1831, %v4462, %v4463
      %v4525 = vsel %vm1831, %v4493, %v4462
      %v4526 = vsel %vm1896, %v4524, 0.0
      %v4527 = vsel %vm1897, %v4523, 0.0
      %v4528 = vsel %vm1898, %v4522, 0.0
      %v4529 = vsel %vm1899, %v4521, 0.0
      %v4530 = vsel %vm1900, %v4520, 0.0
      %v4531 = vsel %vm1901, %v4519, 0.0
      %v4532 = vsel %vm1902, %v4518, 0.0
      %v4533 = vsel %vm1903, %v4517, 0.0
      %v4534 = vsel %vm1904, %v4516, 0.0
      %v4535 = vsel %vm1905, %v4515, 0.0
      %v4536 = vsel %vm1906, %v4514, 0.0
      %v4537 = vsel %vm1907, %v4513, 0.0
      %v4538 = vsel %vm1908, %v4512, 0.0
      %v4539 = vsel %vm1909, %v4511, 0.0
      %v4540 = vsel %vm1910, %v4510, 0.0
      %v4541 = vsel %vm1911, %v4509, 0.0
      %v4542 = vsel %vm1912, %v4508, 0.0
      %v4543 = vsel %vm1913, %v4507, 0.0
      %v4544 = vsel %vm1914, %v4506, 0.0
      %v4545 = vsel %vm1915, %v4505, 0.0
      %v4546 = vsel %vm1916, %v4504, 0.0
      %v4547 = vsel %vm1917, %v4503, 0.0
      %v4548 = vsel %vm1918, %v4502, 0.0
      %v4549 = vsel %vm1919, %v4501, 0.0
      %v4550 = vsel %vm1920, %v4500, 0.0
      %v4551 = vsel %vm1921, %v4499, 0.0
      %v4552 = vsel %vm1922, %v4498, 0.0
      %v4553 = vsel %vm1923, %v4497, 0.0
      %v4554 = vsel %vm1924, %v4496, 0.0
      %v4555 = vsel %vm1925, %v4495, 0.0
      %v4556 = vsel %vm1926, %v4494, 0.0
      %v4557 = vsel %vm1927, %v4525, 0.0
      %v4558 = vld [vmem:[%s3 + $0x400] sm:$0xff]
      %v4559 = vld [vmem:[%s3 + $0x408] sm:$0xff]
      %v4560 = vld [vmem:[%s3 + $0x410] sm:$0xff]
      %v4561 = vld [vmem:[%s3 + $0x418] sm:$0xff]
      %v4562 = vld [vmem:[%s3 + $0x420] sm:$0xff]
      %v4563 = vld [vmem:[%s3 + $0x428] sm:$0xff]
      %v4564 = vld [vmem:[%s3 + $0x430] sm:$0xff]
      %v4565 = vld [vmem:[%s3 + $0x438] sm:$0xff]
      %v4566 = vld [vmem:[%s3 + $0x440] sm:$0xff]
      %v4567 = vld [vmem:[%s3 + $0x448] sm:$0xff]
      %v4568 = vld [vmem:[%s3 + $0x450] sm:$0xff]
      %v4569 = vld [vmem:[%s3 + $0x458] sm:$0xff]
      %v4570 = vld [vmem:[%s3 + $0x460] sm:$0xff]
      %v4571 = vld [vmem:[%s3 + $0x468] sm:$0xff]
      %v4572 = vld [vmem:[%s3 + $0x470] sm:$0xff]
      %v4573 = vld [vmem:[%s3 + $0x478] sm:$0xff]
      %4574 = vmatprep.subr.mxu0 0.0
      %4575 = vmatpush1.msra.mxu0 %v4558
      %4576 = vmatprep.subr.mxu0 0.0
      %4577 = vmatpush1.msra.mxu0 %v4559
      %4578 = vmatprep.subr.mxu0 0.0
      %4579 = vmatpush1.msra.mxu0 %v4560
      %4580 = vmatprep.subr.mxu0 0.0
      %4581 = vmatpush1.msra.mxu0 %v4561
      %4582 = vmatprep.subr.mxu0 0.0
      %4583 = vmatpush1.msra.mxu0 %v4562
      %4584 = vmatprep.subr.mxu0 0.0
      %4585 = vmatpush1.msra.mxu0 %v4563
      %4586 = vmatprep.subr.mxu0 0.0
      %4587 = vmatpush1.msra.mxu0 %v4564
      %4588 = vmatprep.subr.mxu0 0.0
      %4589 = vmatpush1.msra.mxu0 %v4565
      %4590 = vmatprep.subr.mxu0 0.0
      %4591 = vmatpush1.msra.mxu0 %v4566
      %4592 = vmatprep.subr.mxu0 0.0
      %4593 = vmatpush1.msra.mxu0 %v4567
      %4594 = vmatprep.subr.mxu0 0.0
      %4595 = vmatpush1.msra.mxu0 %v4568
      %4596 = vmatprep.subr.mxu0 0.0
      %4597 = vmatpush1.msra.mxu0 %v4569
      %4598 = vmatprep.subr.mxu0 0.0
      %4599 = vmatpush1.msra.mxu0 %v4570
      %4600 = vmatprep.subr.mxu0 0.0
      %4601 = vmatpush1.msra.mxu0 %v4571
      %4602 = vmatprep.subr.mxu0 0.0
      %4603 = vmatpush1.msra.mxu0 %v4572
      %4604 = vmatprep.subr.mxu0 0.0
      %4605 = vmatpush1.msra.mxu0 %v4573
      %4606 = vmatprep.subr.mxu0 0.0
      %4607 = vmatpush1.msra.mxu0 0.0
      %4608 = vmatprep.subr.mxu0 0.0
      %4609 = vmatpush1.msra.mxu0 0.0
      %4610 = vmatprep.subr.mxu0 0.0
      %4611 = vmatpush1.msra.mxu0 0.0
      %4612 = vmatprep.subr.mxu0 0.0
      %4613 = vmatpush1.msra.mxu0 0.0
      %4614 = vmatprep.subr.mxu0 0.0
      %4615 = vmatpush1.msra.mxu0 0.0
      %4616 = vmatprep.subr.mxu0 0.0
      %4617 = vmatpush1.msra.mxu0 0.0
      %4618 = vmatprep.subr.mxu0 0.0
      %4619 = vmatpush1.msra.mxu0 0.0
      %4620 = vmatprep.subr.mxu0 0.0
      %4621 = vmatpush1.msra.mxu0 0.0
      %4622 = vmatprep.subr.mxu0 0.0
      %4623 = vmatpush1.msra.mxu0 0.0
      %4624 = vmatprep.subr.mxu0 0.0
      %4625 = vmatpush1.msra.mxu0 0.0
      %4626 = vmatprep.subr.mxu0 0.0
      %4627 = vmatpush1.msra.mxu0 0.0
      %4628 = vmatprep.subr.mxu0 0.0
      %4629 = vmatpush1.msra.mxu0 0.0
      %4630 = vmatprep.subr.mxu0 0.0
      %4631 = vmatpush1.msra.mxu0 0.0
      %4632 = vmatprep.subr.mxu0 0.0
      %4633 = vmatpush1.msra.mxu0 0.0
      %4634 = vmatprep.subr.mxu0 0.0
      %4635 = vmatpush1.msra.mxu0 0.0
      %4636 = vmatprep.subr.mxu0 0.0
      %4637 = vmatpush1.msra.mxu0 0.0
      %4638 = vmatprep.mubr.f32.mxu0 0.0
      %4639 = vmatmul.mubr.f32.gmra.mrb[0].mxu0 %v4526
      %v4640 = vpop.f32.mrb[0].mxu0
      %v4641 = vadd.f32 0.0, %v4640
      %v4642 = vpop.f32.mrb[0].mxu0
      %4643 = vmatprep.mubr.f32.mxu0 0.0
      %4644 = vmatmul.mubr.f32.gmra.mrb[0].mxu0 %v4527
      %v4645 = vpop.f32.mrb[0].mxu0
      %v4646 = vadd.f32 0.0, %v4645
      %v4647 = vpop.f32.mrb[0].mxu0
      %4648 = vmatprep.mubr.f32.mxu0 0.0
      %4649 = vmatmul.mubr.f32.gmra.mrb[0].mxu0 %v4528
      %v4650 = vpop.f32.mrb[0].mxu0
      %v4651 = vadd.f32 0.0, %v4650
      %v4652 = vpop.f32.mrb[0].mxu0
      %4653 = vmatprep.mubr.f32.mxu0 0.0
      %4654 = vmatmul.mubr.f32.gmra.mrb[0].mxu0 %v4529
      %v4655 = vpop.f32.mrb[0].mxu0
      %v4656 = vadd.f32 0.0, %v4655
      %v4657 = vpop.f32.mrb[0].mxu0
      %4658 = vmatprep.mubr.f32.mxu0 0.0
      %4659 = vmatmul.mubr.f32.gmra.mrb[0].mxu0 %v4530
      %v4660 = vpop.f32.mrb[0].mxu0
      %v4661 = vadd.f32 0.0, %v4660
      %v4662 = vpop.f32.mrb[0].mxu0
      %4663 = vmatprep.mubr.f32.mxu0 0.0
      %4664 = vmatmul.mubr.f32.gmra.mrb[0].mxu0 %v4531
      %v4665 = vpop.f32.mrb[0].mxu0
      %v4666 = vadd.f32 0.0, %v4665
      %v4667 = vpop.f32.mrb[0].mxu0
      %4668 = vmatprep.mubr.f32.mxu0 0.0
      %4669 = vmatmul.mubr.f32.gmra.mrb[0].mxu0 %v4532
      %v4670 = vpop.f32.mrb[0].mxu0
      %v4671 = vadd.f32 0.0, %v4670
      %v4672 = vpop.f32.mrb[0].mxu0
      %4673 = vmatprep.mubr.f32.mxu0 0.0
      %4674 = vmatmul.mubr.f32.gmra.mrb[0].mxu0 %v4533
      %v4675 = vpop.f32.mrb[0].mxu0
      %v4676 = vadd.f32 0.0, %v4675
      %v4677 = vpop.f32.mrb[0].mxu0
      %4678 = vmatprep.mubr.f32.mxu0 0.0
      %4679 = vmatmul.mubr.f32.gmra.mrb[0].mxu0 %v4534
      %v4680 = vpop.f32.mrb[0].mxu0
      %v4681 = vadd.f32 0.0, %v4680
      %v4682 = vpop.f32.mrb[0].mxu0
      %4683 = vmatprep.mubr.f32.mxu0 0.0
      %4684 = vmatmul.mubr.f32.gmra.mrb[0].mxu0 %v4535
      %v4685 = vpop.f32.mrb[0].mxu0
      %v4686 = vadd.f32 0.0, %v4685
      %v4687 = vpop.f32.mrb[0].mxu0
      %4688 = vmatprep.mubr.f32.mxu0 0.0
      %4689 = vmatmul.mubr.f32.gmra.mrb[0].mxu0 %v4536
      %v4690 = vpop.f32.mrb[0].mxu0
      %v4691 = vadd.f32 0.0, %v4690
      %v4692 = vpop.f32.mrb[0].mxu0
      %4693 = vmatprep.mubr.f32.mxu0 0.0
      %4694 = vmatmul.mubr.f32.gmra.mrb[0].mxu0 %v4537
      %v4695 = vpop.f32.mrb[0].mxu0
      %v4696 = vadd.f32 0.0, %v4695
      %v4697 = vpop.f32.mrb[0].mxu0
      %4698 = vmatprep.mubr.f32.mxu0 0.0
      %4699 = vmatmul.mubr.f32.gmra.mrb[0].mxu0 %v4538
      %v4700 = vpop.f32.mrb[0].mxu0
      %v4701 = vadd.f32 0.0, %v4700
      %v4702 = vpop.f32.mrb[0].mxu0
      %4703 = vmatprep.mubr.f32.mxu0 0.0
      %4704 = vmatmul.mubr.f32.gmra.mrb[0].mxu0 %v4539
      %v4705 = vpop.f32.mrb[0].mxu0
      %v4706 = vadd.f32 0.0, %v4705
      %v4707 = vpop.f32.mrb[0].mxu0
      %4708 = vmatprep.mubr.f32.mxu0 0.0
      %4709 = vmatmul.mubr.f32.gmra.mrb[0].mxu0 %v4540
      %v4710 = vpop.f32.mrb[0].mxu0
      %v4711 = vadd.f32 0.0, %v4710
      %v4712 = vpop.f32.mrb[0].mxu0
      %4713 = vmatprep.mubr.f32.mxu0 0.0
      %4714 = vmatmul.mubr.f32.gmra.mrb[0].mxu0 %v4541
      %v4715 = vpop.f32.mrb[0].mxu0
      %v4716 = vadd.f32 0.0, %v4715
      %v4717 = vpop.f32.mrb[0].mxu0
      %4718 = vmatprep.mubr.f32.mxu0 0.0
      %4719 = vmatmul.mubr.f32.gmra.mrb[0].mxu0 %v4542
      %v4720 = vpop.f32.mrb[0].mxu0
      %v4721 = vadd.f32 0.0, %v4720
      %v4722 = vpop.f32.mrb[0].mxu0
      %4723 = vmatprep.mubr.f32.mxu0 0.0
      %4724 = vmatmul.mubr.f32.gmra.mrb[0].mxu0 %v4543
      %v4725 = vpop.f32.mrb[0].mxu0
      %v4726 = vadd.f32 0.0, %v4725
      %v4727 = vpop.f32.mrb[0].mxu0
      %4728 = vmatprep.mubr.f32.mxu0 0.0
      %4729 = vmatmul.mubr.f32.gmra.mrb[0].mxu0 %v4544
      %v4730 = vpop.f32.mrb[0].mxu0
      %v4731 = vadd.f32 0.0, %v4730
      %v4732 = vpop.f32.mrb[0].mxu0
      %4733 = vmatprep.mubr.f32.mxu0 0.0
      %4734 = vmatmul.mubr.f32.gmra.mrb[0].mxu0 %v4545
      %v4735 = vpop.f32.mrb[0].mxu0
      %v4736 = vadd.f32 0.0, %v4735
      %v4737 = vpop.f32.mrb[0].mxu0
      %4738 = vmatprep.mubr.f32.mxu0 0.0
      %4739 = vmatmul.mubr.f32.gmra.mrb[0].mxu0 %v4546
      %v4740 = vpop.f32.mrb[0].mxu0
      %v4741 = vadd.f32 0.0, %v4740
      %v4742 = vpop.f32.mrb[0].mxu0
      %4743 = vmatprep.mubr.f32.mxu0 0.0
      %4744 = vmatmul.mubr.f32.gmra.mrb[0].mxu0 %v4547
      %v4745 = vpop.f32.mrb[0].mxu0
      %v4746 = vadd.f32 0.0, %v4745
      %v4747 = vpop.f32.mrb[0].mxu0
      %4748 = vmatprep.mubr.f32.mxu0 0.0
      %4749 = vmatmul.mubr.f32.gmra.mrb[0].mxu0 %v4548
      %v4750 = vpop.f32.mrb[0].mxu0
      %v4751 = vadd.f32 0.0, %v4750
      %v4752 = vpop.f32.mrb[0].mxu0
      %4753 = vmatprep.mubr.f32.mxu0 0.0
      %4754 = vmatmul.mubr.f32.gmra.mrb[0].mxu0 %v4549
      %v4755 = vpop.f32.mrb[0].mxu0
      %v4756 = vadd.f32 0.0, %v4755
      %v4757 = vpop.f32.mrb[0].mxu0
      %4758 = vmatprep.mubr.f32.mxu0 0.0
      %4759 = vmatmul.mubr.f32.gmra.mrb[0].mxu0 %v4550
      %v4760 = vpop.f32.mrb[0].mxu0
      %v4761 = vadd.f32 0.0, %v4760
      %v4762 = vpop.f32.mrb[0].mxu0
      %4763 = vmatprep.mubr.f32.mxu0 0.0
      %4764 = vmatmul.mubr.f32.gmra.mrb[0].mxu0 %v4551
      %v4765 = vpop.f32.mrb[0].mxu0
      %v4766 = vadd.f32 0.0, %v4765
      %v4767 = vpop.f32.mrb[0].mxu0
      %4768 = vmatprep.mubr.f32.mxu0 0.0
      %4769 = vmatmul.mubr.f32.gmra.mrb[0].mxu0 %v4552
      %v4770 = vpop.f32.mrb[0].mxu0
      %v4771 = vadd.f32 0.0, %v4770
      %v4772 = vpop.f32.mrb[0].mxu0
      %4773 = vmatprep.mubr.f32.mxu0 0.0
      %4774 = vmatmul.mubr.f32.gmra.mrb[0].mxu0 %v4553
      %v4775 = vpop.f32.mrb[0].mxu0
      %v4776 = vadd.f32 0.0, %v4775
      %v4777 = vpop.f32.mrb[0].mxu0
      %4778 = vmatprep.mubr.f32.mxu0 0.0
      %4779 = vmatmul.mubr.f32.gmra.mrb[0].mxu0 %v4554
      %v4780 = vpop.f32.mrb[0].mxu0
      %v4781 = vadd.f32 0.0, %v4780
      %v4782 = vpop.f32.mrb[0].mxu0
      %4783 = vmatprep.mubr.f32.mxu0 0.0
      %4784 = vmatmul.mubr.f32.gmra.mrb[0].mxu0 %v4555
      %v4785 = vpop.f32.mrb[0].mxu0
      %v4786 = vadd.f32 0.0, %v4785
      %v4787 = vpop.f32.mrb[0].mxu0
      %4788 = vmatprep.mubr.f32.mxu0 0.0
      %4789 = vmatmul.mubr.f32.gmra.mrb[0].mxu0 %v4556
      %v4790 = vpop.f32.mrb[0].mxu0
      %v4791 = vadd.f32 0.0, %v4790
      %v4792 = vpop.f32.mrb[0].mxu0
      %4793 = vmatprep.mubr.f32.mxu0 0.0
      %4794 = vmatmul.mubr.f32.gmra.mrb[0].mxu0 %v4557
      %v4795 = vpop.f32.mrb[0].mxu0
      %v4796 = vadd.f32 0.0, %v4795
      %v4797 = vpop.f32.mrb[0].mxu0
      %4798 = vdwg.mxu0
      %v4799 = vld [vmem:[#allocation3] sm:$0xff]
      %v4800 = vld [vmem:[#allocation3 + $0x8] sm:$0xff]
      %v4801 = vld [vmem:[#allocation3 + $0x10] sm:$0xff]
      %v4802 = vld [vmem:[#allocation3 + $0x18] sm:$0xff]
      %v4803 = vld [vmem:[#allocation3 + $0x20] sm:$0xff]
      %v4804 = vld [vmem:[#allocation3 + $0x28] sm:$0xff]
      %v4805 = vld [vmem:[#allocation3 + $0x30] sm:$0xff]
      %v4806 = vld [vmem:[#allocation3 + $0x38] sm:$0xff]
      %v4807 = vld [vmem:[#allocation3 + $0x40] sm:$0xff]
      %v4808 = vld [vmem:[#allocation3 + $0x48] sm:$0xff]
      %v4809 = vld [vmem:[#allocation3 + $0x50] sm:$0xff]
      %v4810 = vld [vmem:[#allocation3 + $0x58] sm:$0xff]
      %v4811 = vld [vmem:[#allocation3 + $0x60] sm:$0xff]
      %v4812 = vld [vmem:[#allocation3 + $0x68] sm:$0xff]
      %v4813 = vld [vmem:[#allocation3 + $0x70] sm:$0xff]
      %v4814 = vld [vmem:[#allocation3 + $0x78] sm:$0xff]
      %v4815 = vld [vmem:[#allocation3 + $0x80] sm:$0xff]
      %v4816 = vld [vmem:[#allocation3 + $0x88] sm:$0xff]
      %v4817 = vld [vmem:[#allocation3 + $0x90] sm:$0xff]
      %v4818 = vld [vmem:[#allocation3 + $0x98] sm:$0xff]
      %v4819 = vld [vmem:[#allocation3 + $0xa0] sm:$0xff]
      %v4820 = vld [vmem:[#allocation3 + $0xa8] sm:$0xff]
      %v4821 = vld [vmem:[#allocation3 + $0xb0] sm:$0xff]
      %v4822 = vld [vmem:[#allocation3 + $0xb8] sm:$0xff]
      %v4823 = vld [vmem:[#allocation3 + $0xc0] sm:$0xff]
      %v4824 = vld [vmem:[#allocation3 + $0xc8] sm:$0xff]
      %v4825 = vld [vmem:[#allocation3 + $0xd0] sm:$0xff]
      %v4826 = vld [vmem:[#allocation3 + $0xd8] sm:$0xff]
      %v4827 = vld [vmem:[#allocation3 + $0xe0] sm:$0xff]
      %v4828 = vld [vmem:[#allocation3 + $0xe8] sm:$0xff]
      %v4829 = vld [vmem:[#allocation3 + $0xf0] sm:$0xff]
      %v4830 = vld [vmem:[#allocation3 + $0xf8] sm:$0xff]
      %v4831 = vadd.f32 %v4799, %v4641
      %v4832 = vadd.f32 %v4800, %v4646
      %v4833 = vadd.f32 %v4801, %v4651
      %v4834 = vadd.f32 %v4802, %v4656
      %v4835 = vadd.f32 %v4803, %v4661
      %v4836 = vadd.f32 %v4804, %v4666
      %v4837 = vadd.f32 %v4805, %v4671
      %v4838 = vadd.f32 %v4806, %v4676
      %v4839 = vadd.f32 %v4807, %v4681
      %v4840 = vadd.f32 %v4808, %v4686
      %v4841 = vadd.f32 %v4809, %v4691
      %v4842 = vadd.f32 %v4810, %v4696
      %v4843 = vadd.f32 %v4811, %v4701
      %v4844 = vadd.f32 %v4812, %v4706
      %v4845 = vadd.f32 %v4813, %v4711
      %v4846 = vadd.f32 %v4814, %v4716
      %v4847 = vadd.f32 %v4815, %v4721
      %v4848 = vadd.f32 %v4816, %v4726
      %v4849 = vadd.f32 %v4817, %v4731
      %v4850 = vadd.f32 %v4818, %v4736
      %v4851 = vadd.f32 %v4819, %v4741
      %v4852 = vadd.f32 %v4820, %v4746
      %v4853 = vadd.f32 %v4821, %v4751
      %v4854 = vadd.f32 %v4822, %v4756
      %v4855 = vadd.f32 %v4823, %v4761
      %v4856 = vadd.f32 %v4824, %v4766
      %v4857 = vadd.f32 %v4825, %v4771
      %v4858 = vadd.f32 %v4826, %v4776
      %v4859 = vadd.f32 %v4827, %v4781
      %v4860 = vadd.f32 %v4828, %v4786
      %v4861 = vadd.f32 %v4829, %v4791
      %v4862 = vadd.f32 %v4830, %v4796
      %4863 = vst [vmem:[#allocation3] sm:$0xff] %v4831
      %4864 = vst [vmem:[#allocation3 + $0x8] sm:$0xff] %v4832
      %4865 = vst [vmem:[#allocation3 + $0x10] sm:$0xff] %v4833
      %4866 = vst [vmem:[#allocation3 + $0x18] sm:$0xff] %v4834
      %4867 = vst [vmem:[#allocation3 + $0x20] sm:$0xff] %v4835
      %4868 = vst [vmem:[#allocation3 + $0x28] sm:$0xff] %v4836
      %4869 = vst [vmem:[#allocation3 + $0x30] sm:$0xff] %v4837
      %4870 = vst [vmem:[#allocation3 + $0x38] sm:$0xff] %v4838
      %4871 = vst [vmem:[#allocation3 + $0x40] sm:$0xff] %v4839
      %4872 = vst [vmem:[#allocation3 + $0x48] sm:$0xff] %v4840
      %4873 = vst [vmem:[#allocation3 + $0x50] sm:$0xff] %v4841
      %4874 = vst [vmem:[#allocation3 + $0x58] sm:$0xff] %v4842
      %4875 = vst [vmem:[#allocation3 + $0x60] sm:$0xff] %v4843
      %4876 = vst [vmem:[#allocation3 + $0x68] sm:$0xff] %v4844
      %4877 = vst [vmem:[#allocation3 + $0x70] sm:$0xff] %v4845
      %4878 = vst [vmem:[#allocation3 + $0x78] sm:$0xff] %v4846
      %4879 = vst [vmem:[#allocation3 + $0x80] sm:$0xff] %v4847
      %4880 = vst [vmem:[#allocation3 + $0x88] sm:$0xff] %v4848
      %4881 = vst [vmem:[#allocation3 + $0x90] sm:$0xff] %v4849
      %4882 = vst [vmem:[#allocation3 + $0x98] sm:$0xff] %v4850
      %4883 = vst [vmem:[#allocation3 + $0xa0] sm:$0xff] %v4851
      %4884 = vst [vmem:[#allocation3 + $0xa8] sm:$0xff] %v4852
      %4885 = vst [vmem:[#allocation3 + $0xb0] sm:$0xff] %v4853
      %4886 = vst [vmem:[#allocation3 + $0xb8] sm:$0xff] %v4854
      %4887 = vst [vmem:[#allocation3 + $0xc0] sm:$0xff] %v4855
      %4888 = vst [vmem:[#allocation3 + $0xc8] sm:$0xff] %v4856
      %4889 = vst [vmem:[#allocation3 + $0xd0] sm:$0xff] %v4857
      %4890 = vst [vmem:[#allocation3 + $0xd8] sm:$0xff] %v4858
      %4891 = vst [vmem:[#allocation3 + $0xe0] sm:$0xff] %v4859
      %4892 = vst [vmem:[#allocation3 + $0xe8] sm:$0xff] %v4860
      %4893 = vst [vmem:[#allocation3 + $0xf0] sm:$0xff] %v4861
      %4894 = vst [vmem:[#allocation3 + $0xf8] sm:$0xff] %v4862
      %v4895 = vld [vmem:[#allocation3] sm:$0xff]
      %v4896 = vld [vmem:[#allocation3 + $0x8] sm:$0xff]
      %v4897 = vld [vmem:[#allocation3 + $0x10] sm:$0xff]
      %v4898 = vld [vmem:[#allocation3 + $0x18] sm:$0xff]
      %v4899 = vld [vmem:[#allocation3 + $0x20] sm:$0xff]
      %v4900 = vld [vmem:[#allocation3 + $0x28] sm:$0xff]
      %v4901 = vld [vmem:[#allocation3 + $0x30] sm:$0xff]
      %v4902 = vld [vmem:[#allocation3 + $0x38] sm:$0xff]
      %v4903 = vld [vmem:[#allocation3 + $0x40] sm:$0xff]
      %v4904 = vld [vmem:[#allocation3 + $0x48] sm:$0xff]
      %v4905 = vld [vmem:[#allocation3 + $0x50] sm:$0xff]
      %v4906 = vld [vmem:[#allocation3 + $0x58] sm:$0xff]
      %v4907 = vld [vmem:[#allocation3 + $0x60] sm:$0xff]
      %v4908 = vld [vmem:[#allocation3 + $0x68] sm:$0xff]
      %v4909 = vld [vmem:[#allocation3 + $0x70] sm:$0xff]
      %v4910 = vld [vmem:[#allocation3 + $0x78] sm:$0xff]
      %v4911 = vld [vmem:[#allocation3 + $0x80] sm:$0xff]
      %v4912 = vld [vmem:[#allocation3 + $0x88] sm:$0xff]
      %v4913 = vld [vmem:[#allocation3 + $0x90] sm:$0xff]
      %v4914 = vld [vmem:[#allocation3 + $0x98] sm:$0xff]
      %v4915 = vld [vmem:[#allocation3 + $0xa0] sm:$0xff]
      %v4916 = vld [vmem:[#allocation3 + $0xa8] sm:$0xff]
      %v4917 = vld [vmem:[#allocation3 + $0xb0] sm:$0xff]
      %v4918 = vld [vmem:[#allocation3 + $0xb8] sm:$0xff]
      %v4919 = vld [vmem:[#allocation3 + $0xc0] sm:$0xff]
      %v4920 = vld [vmem:[#allocation3 + $0xc8] sm:$0xff]
      %v4921 = vld [vmem:[#allocation3 + $0xd0] sm:$0xff]
      %v4922 = vld [vmem:[#allocation3 + $0xd8] sm:$0xff]
      %v4923 = vld [vmem:[#allocation3 + $0xe0] sm:$0xff]
      %v4924 = vld [vmem:[#allocation3 + $0xe8] sm:$0xff]
      %v4925 = vld [vmem:[#allocation3 + $0xf0] sm:$0xff]
      %v4926 = vld [vmem:[#allocation3 + $0xf8] sm:$0xff]
      %4927 = vst [vmem:[%s264] sm:$0xff] %v4895
      %4928 = vst [vmem:[%s264 + $0x8] sm:$0xff] %v4896
      %4929 = vst [vmem:[%s264 + $0x10] sm:$0xff] %v4897
      %4930 = vst [vmem:[%s264 + $0x18] sm:$0xff] %v4898
      %4931 = vst [vmem:[%s264 + $0x20] sm:$0xff] %v4899
      %4932 = vst [vmem:[%s264 + $0x28] sm:$0xff] %v4900
      %4933 = vst [vmem:[%s264 + $0x30] sm:$0xff] %v4901
      %4934 = vst [vmem:[%s264 + $0x38] sm:$0xff] %v4902
      %4935 = vst [vmem:[%s264 + $0x40] sm:$0xff] %v4903
      %4936 = vst [vmem:[%s264 + $0x48] sm:$0xff] %v4904
      %4937 = vst [vmem:[%s264 + $0x50] sm:$0xff] %v4905
      %4938 = vst [vmem:[%s264 + $0x58] sm:$0xff] %v4906
      %4939 = vst [vmem:[%s264 + $0x60] sm:$0xff] %v4907
      %4940 = vst [vmem:[%s264 + $0x68] sm:$0xff] %v4908
      %4941 = vst [vmem:[%s264 + $0x70] sm:$0xff] %v4909
      %4942 = vst [vmem:[%s264 + $0x78] sm:$0xff] %v4910
      %4943 = vst [vmem:[%s264 + $0x80] sm:$0xff] %v4911
      %4944 = vst [vmem:[%s264 + $0x88] sm:$0xff] %v4912
      %4945 = vst [vmem:[%s264 + $0x90] sm:$0xff] %v4913
      %4946 = vst [vmem:[%s264 + $0x98] sm:$0xff] %v4914
      %4947 = vst [vmem:[%s264 + $0xa0] sm:$0xff] %v4915
      %4948 = vst [vmem:[%s264 + $0xa8] sm:$0xff] %v4916
      %4949 = vst [vmem:[%s264 + $0xb0] sm:$0xff] %v4917
      %4950 = vst [vmem:[%s264 + $0xb8] sm:$0xff] %v4918
      %4951 = vst [vmem:[%s264 + $0xc0] sm:$0xff] %v4919
      %4952 = vst [vmem:[%s264 + $0xc8] sm:$0xff] %v4920
      %4953 = vst [vmem:[%s264 + $0xd0] sm:$0xff] %v4921
      %4954 = vst [vmem:[%s264 + $0xd8] sm:$0xff] %v4922
      %4955 = vst [vmem:[%s264 + $0xe0] sm:$0xff] %v4923
      %4956 = vst [vmem:[%s264 + $0xe8] sm:$0xff] %v4924
      %4957 = vst [vmem:[%s264 + $0xf0] sm:$0xff] %v4925
      %4958 = vst [vmem:[%s264 + $0xf8] sm:$0xff] %v4926
      %v4959 = vadd.f32 %v4895, %v4896
      %v4960 = vadd.f32 %v4959, %v4897
      %v4961 = vadd.f32 %v4960, %v4898
      %v4962 = vadd.f32 %v4961, %v4899
      %v4963 = vadd.f32 %v4962, %v4900
      %v4964 = vadd.f32 %v4963, %v4901
      %v4965 = vadd.f32 %v4964, %v4902
      %v4966 = vadd.f32 %v4965, %v4903
      %v4967 = vadd.f32 %v4966, %v4904
      %v4968 = vadd.f32 %v4967, %v4905
      %v4969 = vadd.f32 %v4968, %v4906
      %v4970 = vadd.f32 %v4969, %v4907
      %v4971 = vadd.f32 %v4970, %v4908
      %v4972 = vadd.f32 %v4971, %v4909
      %v4973 = vadd.f32 %v4972, %v4910
      %v4974 = vadd.f32 %v4973, %v4911
      %v4975 = vadd.f32 %v4974, %v4912
      %v4976 = vadd.f32 %v4975, %v4913
      %v4977 = vadd.f32 %v4976, %v4914
      %v4978 = vadd.f32 %v4977, %v4915
      %v4979 = vadd.f32 %v4978, %v4916
      %v4980 = vadd.f32 %v4979, %v4917
      %v4981 = vadd.f32 %v4980, %v4918
      %v4982 = vadd.f32 %v4981, %v4919
      %v4983 = vadd.f32 %v4982, %v4920
      %v4984 = vadd.f32 %v4983, %v4921
      %v4985 = vadd.f32 %v4984, %v4922
      %v4986 = vadd.f32 %v4985, %v4923
      %v4987 = vadd.f32 %v4986, %v4924
      %v4988 = vadd.f32 %v4987, %v4925
      %v4989 = vadd.f32 %v4988, %v4926
      %v4990 = vrot.slane %v4989, 4
      %v4991 = vadd.f32 %v4989, %v4990
      %v4992 = vrot.slane %v4991, 2
      %v4993 = vadd.f32 %v4991, %v4992
      %v4994 = vrot.slane %v4993, 1
      %v4995 = vadd.f32 %v4993, %v4994
      %4996 = vst [vmem:[%s268] sm:$0xff] %v4995
      %v4997 = vmul.f32 %v4895, %v4895
      %v4998 = vmul.f32 %v4896, %v4896
      %v4999 = vmul.f32 %v4897, %v4897
      %v5000 = vmul.f32 %v4898, %v4898
      %v5001 = vmul.f32 %v4899, %v4899
      %v5002 = vmul.f32 %v4900, %v4900
      %v5003 = vmul.f32 %v4901, %v4901
      %v5004 = vmul.f32 %v4902, %v4902
      %v5005 = vmul.f32 %v4903, %v4903
      %v5006 = vmul.f32 %v4904, %v4904
      %v5007 = vmul.f32 %v4905, %v4905
      %v5008 = vmul.f32 %v4906, %v4906
      %v5009 = vmul.f32 %v4907, %v4907
      %v5010 = vmul.f32 %v4908, %v4908
      %v5011 = vmul.f32 %v4909, %v4909
      %v5012 = vmul.f32 %v4910, %v4910
      %v5013 = vmul.f32 %v4911, %v4911
      %v5014 = vmul.f32 %v4912, %v4912
      %v5015 = vmul.f32 %v4913, %v4913
      %v5016 = vmul.f32 %v4914, %v4914
      %v5017 = vmul.f32 %v4915, %v4915
      %v5018 = vmul.f32 %v4916, %v4916
      %v5019 = vmul.f32 %v4917, %v4917
      %v5020 = vmul.f32 %v4918, %v4918
      %v5021 = vmul.f32 %v4919, %v4919
      %v5022 = vmul.f32 %v4920, %v4920
      %v5023 = vmul.f32 %v4921, %v4921
      %v5024 = vmul.f32 %v4922, %v4922
      %v5025 = vmul.f32 %v4923, %v4923
      %v5026 = vmul.f32 %v4924, %v4924
      %v5027 = vmul.f32 %v4925, %v4925
      %v5028 = vmul.f32 %v4926, %v4926
      %v5029 = vadd.f32 %v4997, %v4998
      %v5030 = vadd.f32 %v5029, %v4999
      %v5031 = vadd.f32 %v5030, %v5000
      %v5032 = vadd.f32 %v5031, %v5001
      %v5033 = vadd.f32 %v5032, %v5002
      %v5034 = vadd.f32 %v5033, %v5003
      %v5035 = vadd.f32 %v5034, %v5004
      %v5036 = vadd.f32 %v5035, %v5005
      %v5037 = vadd.f32 %v5036, %v5006
      %v5038 = vadd.f32 %v5037, %v5007
      %v5039 = vadd.f32 %v5038, %v5008
      %v5040 = vadd.f32 %v5039, %v5009
      %v5041 = vadd.f32 %v5040, %v5010
      %v5042 = vadd.f32 %v5041, %v5011
      %v5043 = vadd.f32 %v5042, %v5012
      %v5044 = vadd.f32 %v5043, %v5013
      %v5045 = vadd.f32 %v5044, %v5014
      %v5046 = vadd.f32 %v5045, %v5015
      %v5047 = vadd.f32 %v5046, %v5016
      %v5048 = vadd.f32 %v5047, %v5017
      %v5049 = vadd.f32 %v5048, %v5018
      %v5050 = vadd.f32 %v5049, %v5019
      %v5051 = vadd.f32 %v5050, %v5020
      %v5052 = vadd.f32 %v5051, %v5021
      %v5053 = vadd.f32 %v5052, %v5022
      %v5054 = vadd.f32 %v5053, %v5023
      %v5055 = vadd.f32 %v5054, %v5024
      %v5056 = vadd.f32 %v5055, %v5025
      %v5057 = vadd.f32 %v5056, %v5026
      %v5058 = vadd.f32 %v5057, %v5027
      %v5059 = vadd.f32 %v5058, %v5028
      %v5060 = vrot.slane %v5059, 4
      %v5061 = vadd.f32 %v5059, %v5060
      %v5062 = vrot.slane %v5061, 2
      %v5063 = vadd.f32 %v5061, %v5062
      %v5064 = vrot.slane %v5063, 1
      %v5065 = vadd.f32 %v5063, %v5064
      %5066 = vst [vmem:[%s272] sm:$0xff] %v5065
      %p5067 = scmp.lt.s32.totalorder %s18, 1
      %s5068 = scalar_select %p5067, %s18, 1
      %s5069 = smul.addr %s5068, 32
      %s5070 = smul.addr %s5069, 8
      %s5071 = scalar_lea.vmem %s4, %s5070
      %p5072 = scmp.lt.s32.totalorder %s18, 1
      %s5073 = scalar_select %p5072, %s18, 1
      %s5074 = smul.addr %s5073, 8
      %s5075 = scalar_lea.vmem %s5, %s5074
      %p5076 = scmp.lt.s32.totalorder %s18, 1
      %s5077 = scalar_select %p5076, %s18, 1
      %s5078 = smul.addr %s5077, 8
      %s5079 = scalar_lea.vmem %s6, %s5078
      // Predicated region
      $region37: #{bottleneck_forward.5} parent=35 // pred_check
        %p5080 = pneg %p125
      $region38: #{bottleneck_forward.5} parent=35 // pred_check_branch
        %5082 = sbr.rel (%p5080) target = $region40
      $region39: #{bottleneck_forward.5} parent=35 // pred_region
        _
      $region40: #{bottleneck_forward.5} parent=35 // pred_fallthru
        _
      // Predicated region
      $region41: #{bottleneck_forward.5} parent=35 // pred_check
        %p5083 = pneg %p151
      $region42: #{bottleneck_forward.5} parent=35 // pred_check_branch
        %5085 = sbr.rel (%p5083) target = $region44
      $region43: #{bottleneck_forward.5} parent=35 // pred_region
        _
      $region44: #{bottleneck_forward.5} parent=35 // pred_fallthru
        _
      // Predicated region
      $region45: #{bottleneck_forward.5} parent=35 // pred_check
        %p5086 = pneg %p177
      $region46: #{bottleneck_forward.5} parent=35 // pred_check_branch
        %5088 = sbr.rel (%p5086) target = $region48
      $region47: #{bottleneck_forward.5} parent=35 // pred_region
        _
      $region48: #{bottleneck_forward.5} parent=35 // pred_fallthru
        _
    $region36: #{bottleneck_forward.5} parent=5 // pred_fallthru
      _
    %p5089 = scmp.le.s32.totalorder 2, %s13
    // Predicated region
    $region49: #{bottleneck_forward.5} parent=5 // pred_check
      %p5090 = pneg %p5089
    $region50: #{bottleneck_forward.5} parent=5 // pred_check_branch
      %5092 = sbr.rel (%p5090) target = $region52
    $region51: #{bottleneck_forward.5} parent=5 // pred_region
      %s5093 = ssub.s32 %s13, 2
      // Predicated region
      $region53: #{bottleneck_forward.5} parent=51 // pred_check
        %p5094 = pneg %p131
      $region54: #{bottleneck_forward.5} parent=51 // pred_check_branch
        %5096 = sbr.rel (%p5094) target = $region56
      $region55: #{bottleneck_forward.5} parent=51 // pred_region
        %p5097 = scmp.lt.s32.totalorder %s19, 1
        %s5098 = scalar_select %p5097, %s19, 1
        %s5099 = smul.addr %s5098, 32
        %s5100 = smul.addr %s5099, 8
        %s5101 = scalar_lea.vmem %s4, %s5100
      $region56: #{bottleneck_forward.5} parent=51 // pred_fallthru
        _
      // Predicated region
      $region57: #{bottleneck_forward.5} parent=51 // pred_check
        %p5102 = pneg %p157
      $region58: #{bottleneck_forward.5} parent=51 // pred_check_branch
        %5104 = sbr.rel (%p5102) target = $region60
      $region59: #{bottleneck_forward.5} parent=51 // pred_region
        %p5105 = scmp.lt.s32.totalorder %s19, 1
        %s5106 = scalar_select %p5105, %s19, 1
        %s5107 = smul.addr %s5106, 8
        %s5108 = scalar_lea.vmem %s5, %s5107
      $region60: #{bottleneck_forward.5} parent=51 // pred_fallthru
        _
      // Predicated region
      $region61: #{bottleneck_forward.5} parent=51 // pred_check
        %p5109 = pneg %p183
      $region62: #{bottleneck_forward.5} parent=51 // pred_check_branch
        %5111 = sbr.rel (%p5109) target = $region64
      $region63: #{bottleneck_forward.5} parent=51 // pred_region
        %p5112 = scmp.lt.s32.totalorder %s19, 1
        %s5113 = scalar_select %p5112, %s19, 1
        %s5114 = smul.addr %s5113, 8
        %s5115 = scalar_lea.vmem %s6, %s5114
      $region64: #{bottleneck_forward.5} parent=51 // pred_fallthru
        _
    $region52: #{bottleneck_forward.5} parent=5 // pred_fallthru
      _
  $region6: #{bottleneck_forward.5} parent=0 // loop_footer
    %s17 = sadd.s32 1, %s13
  $region7: #{bottleneck_forward.5} parent=0 // loop_footer_branch
    %12 = sbr.rel target = $region3
  $region8: #{bottleneck_forward.5} parent=0 // loop_exit
    _

</llo_original>
